<compile_context>
chip_gen: v5e
topology: v5e:2x2
jax: 0.10.0
libtpu: 0.0.40
codegen_flags: <defaults>
</compile_context>

<pallas_src>
import jax
import jax.numpy as jnp
from jax import lax
from jax.experimental import pallas as pl
from jax.experimental.pallas import tpu as pltpu

EPS = 1e-5


# --------------------------------------------------------------------------- #
# Fused kernel                                                                 #
# --------------------------------------------------------------------------- #
def _fused_block_kernel(x_ref, w1_ref, w2_ref, g1_ref, b1_ref, g2_ref, b2_ref,
                        out_ref, xp_ref, acc_ref):
    """Whole ResNetBlockEnc forward on VMEM-resident activations.

    x_ref   : (N, H, W, C)       f32   input (NHWC)
    w1_ref  : (9, C, C)          bf16  conv1 weights, tap-major (dy*3+dx, cin, cout)
    w2_ref  : (9, C, C)          bf16  conv2 weights
    g*/b*   : (1, C)             f32   BatchNorm gamma / beta
    out_ref : (N, H, W, C)       f32   output
    xp_ref  : (N, H+2, W+2, C)   f32   scratch: zero-padded conv input (reused)
    acc_ref : (N*H*W, C)         f32   scratch: conv accumulator (reused)
    """
    n, h, w, c = x_ref.shape
    m = n * h * w
    inv_m = 1.0 / m

    # Zero the padded buffer once; only the interior is rewritten afterwards,
    # so the 1-pixel zero border survives both conv stages.
    xp_ref[...] = jnp.zeros_like(xp_ref)
    xp_ref[:, 1:h + 1, 1:w + 1, :] = x_ref[...]

    def conv3x3(w_ref):
        # 3x3 "same" conv as 9 accumulated MXU matmuls:
        #   (N*H*W, C) x (C, C), bf16 operands, f32 accumulation in VMEM.
        for dy in range(3):
            part = None
            for dx in range(3):
                lhs = (xp_ref[:, dy:dy + h, dx:dx + w, :]
                       .reshape(m, c).astype(jnp.bfloat16))
                d = jnp.dot(lhs, w_ref[dy * 3 + dx],
                            preferred_element_type=jnp.float32)
                part = d if part is None else part + d
            if dy == 0:
                acc_ref[...] = part
            else:
                acc_ref[...] += part

    def bn_fold(z, g_ref, b_ref):
        # Training-mode BatchNorm2d: biased batch statistics over (N, H, W),
        # folded into a per-channel scale/shift.  All in f32.
        mean = jnp.sum(z, axis=0, keepdims=True) * inv_m
        var = jnp.sum(z * z, axis=0, keepdims=True) * inv_m - mean * mean
        scale = g_ref[...] * lax.rsqrt(var + EPS)
        shift = b_ref[...] - mean * scale
        return scale, shift

    # ---- conv1 -> BN1 -> ReLU -> back into the padded buffer interior ------
    conv3x3(w1_ref)
    z1 = acc_ref[...]                                   # (m, c) f32
    s1, t1 = bn_fold(z1, g1_ref, b1_ref)
    a1 = jnp.maximum(z1 * s1 + t1, 0.0)
    xp_ref[:, 1:h + 1, 1:w + 1, :] = a1.reshape(n, h, w, c)

    # ---- conv2 -> BN2 -> + residual -> ReLU ---------------------------------
    conv3x3(w2_ref)
    z2 = acc_ref[...]
    s2, t2 = bn_fold(z2, g2_ref, b2_ref)
    out = jnp.maximum(z2 * s2 + t2 + x_ref[...].reshape(m, c), 0.0)
    out_ref[...] = out.reshape(n, h, w, c)


# --------------------------------------------------------------------------- #
# Wrapper                                                                      #
# --------------------------------------------------------------------------- #
def resnet_block_enc_forward(x_nchw, params):
    """ResNetBlockEnc(c_in, act_fn=nn.ReLU, subsample=False, deformable=False)
    forward, BatchNorm in training mode (batch statistics).  NCHW in / out."""
    w1, g1, b1, w2, g2, b2 = params
    n, c, h, w = x_nchw.shape

    x = jnp.transpose(x_nchw.astype(jnp.float32), (0, 2, 3, 1))       # NHWC

    w1f = w1.reshape(9, c, c).astype(jnp.bfloat16)     # HWIO -> (tap, cin, cout)
    w2f = w2.reshape(9, c, c).astype(jnp.bfloat16)
    g1v = g1.reshape(1, c).astype(jnp.float32)
    b1v = b1.reshape(1, c).astype(jnp.float32)
    g2v = g2.reshape(1, c).astype(jnp.float32)
    b2v = b2.reshape(1, c).astype(jnp.float32)

    # Whole-batch-resident plan: size-gate against the smallest VMEM generation
    # (v7x: 64 MiB physical / 32 MiB scoped default).  ~2.7 MiB at test shapes.
    # TODO(synk): tiled fallback (row-tiled grid + cross-step BN partial sums)
    # for activations that overflow VMEM.
    vmem_bytes = (
        2 * n * h * w * c * 4            # x       (double-buffered by pipeline)
        + 2 * n * h * w * c * 4          # out
        + 2 * 2 * 9 * c * c * 2          # two bf16 weight stacks
        + n * (h + 2) * (w + 2) * c * 4  # padded f32 scratch
        + n * h * w * c * 4)             # f32 conv accumulator scratch
    assert vmem_bytes < 24 * 1024 * 1024, (
        "activations too large for the fused single-step kernel")

    def full_spec(shape):
        zeros = (0,) * len(shape)

        def imap(i):
            return zeros

        return pl.BlockSpec(shape, imap)

    out = pl.pallas_call(
        _fused_block_kernel,
        out_shape=jax.ShapeDtypeStruct((n, h, w, c), jnp.float32),
        grid=(1,),
        in_specs=[full_spec((n, h, w, c)),
                  full_spec((9, c, c)), full_spec((9, c, c)),
                  full_spec((1, c)), full_spec((1, c)),
                  full_spec((1, c)), full_spec((1, c))],
        out_specs=full_spec((n, h, w, c)),
        scratch_shapes=[pltpu.VMEM((n, h + 2, w + 2, c), jnp.float32),
                        pltpu.VMEM((n * h * w, c), jnp.float32)],
        compiler_params=pltpu.CompilerParams(
            dimension_semantics=("arbitrary",),
            vmem_limit_bytes=32 * 1024 * 1024),
    )(x, w1f, w2f, g1v, b1v, g2v, b2v)

    return jnp.transpose(out, (0, 3, 1, 2))                           # NCHW


# --------------------------------------------------------------------------- #
# Pure-JAX reference (same semantics) for validation                           #
# --------------------------------------------------------------------------- #
def resnet_block_enc_ref(x_nchw, params):
    w1, g1, b1, w2, g2, b2 = params
    x = jnp.transpose(x_nchw.astype(jnp.float32), (0, 2, 3, 1))       # NHWC

    def conv(a, wgt):
        dn = lax.conv_dimension_numbers(a.shape, wgt.shape, ('NHWC', 'HWIO', 'NHWC'))
        return lax.conv_general_dilated(a, wgt, (1, 1), ((1, 1), (1, 1)),
                                        dimension_numbers=dn,
                                        precision=lax.Precision.HIGHEST)

    def bn(z, g, b):
        mean = jnp.mean(z, axis=(0, 1, 2))
        var = jnp.var(z, axis=(0, 1, 2))
        return (z - mean) * lax.rsqrt(var + EPS) * g + b

    z = jax.nn.relu(bn(conv(x, w1), g1, b1))
    z = bn(conv(z, w2), g2, b2)
    out = jax.nn.relu(z + x)
    return jnp.transpose(out, (0, 3, 1, 2))


def make_params(key, c):
    ks = jax.random.split(key, 6)
    wstd = (2.0 / (9 * c)) ** 0.5
    w1 = wstd * jax.random.normal(ks[0], (3, 3, c, c), jnp.float32)   # HWIO
    g1 = 1.0 + 0.1 * jax.random.normal(ks[1], (c,), jnp.float32)
    b1 = 0.1 * jax.random.normal(ks[2], (c,), jnp.float32)
    w2 = wstd * jax.random.normal(ks[3], (3, 3, c, c), jnp.float32)
    g2 = 1.0 + 0.1 * jax.random.normal(ks[4], (c,), jnp.float32)
    b2 = 0.1 * jax.random.normal(ks[5], (c,), jnp.float32)
    return (w1, g1, b1, w2, g2, b2)


if __name__ == "__main__":
    key = jax.random.PRNGKey(0)
    kp, kx = jax.random.split(key)

    # Small but lane-/MXU-friendly shapes: batch=2, channels=128, 16x16 spatial.
    N, C, H, W = 2, 128, 16, 16
    params = make_params(kp, C)
    x = jax.random.normal(kx, (N, C, H, W), jnp.float32)              # NCHW

    fwd = jax.jit(resnet_block_enc_forward)
    out = jax.block_until_ready(fwd(x, params))
    ref = jax.block_until_ready(resnet_block_enc_ref(x, params))

    assert out.shape == (N, C, H, W)
    max_err = float(jnp.max(jnp.abs(out - ref)))
    assert jnp.allclose(out, ref, rtol=3e-2, atol=7e-2), max_err
    print("KERNEL_OK")
</pallas_src>

<mosaic_0001>
module attributes {stable_mosaic.version = 11 : i64} {
  func.func @_fused_block_kernel(%arg0: i32, %arg1: memref<2x16x16x128xf32, #tpu.memory_space<vmem>>, %arg2: memref<9x128x128xbf16, #tpu.memory_space<vmem>>, %arg3: memref<9x128x128xbf16, #tpu.memory_space<vmem>>, %arg4: memref<1x128xf32, #tpu.memory_space<vmem>>, %arg5: memref<1x128xf32, #tpu.memory_space<vmem>>, %arg6: memref<1x128xf32, #tpu.memory_space<vmem>>, %arg7: memref<1x128xf32, #tpu.memory_space<vmem>>, %arg8: memref<2x16x16x128xf32, #tpu.memory_space<vmem>>, %arg9: memref<2x18x18x128xf32, #tpu.memory_space<vmem>>, %arg10: memref<512x128xf32, #tpu.memory_space<vmem>>) attributes {dimension_semantics = [#tpu.dimension_semantics<arbitrary>], iteration_bounds = array<i64: 1>, scalar_prefetch = 0 : i64, scratch_operands = 2 : i64, tpu.core_type = #tpu.core_type<tc>, window_params = [{pipeline_mode = #tpu.pipeline_mode<synchronous>, transform_indices = @transform_0, window_bounds = array<i64: 2, 16, 16, 128>}, {pipeline_mode = #tpu.pipeline_mode<synchronous>, transform_indices = @transform_1, window_bounds = array<i64: 9, 128, 128>}, {pipeline_mode = #tpu.pipeline_mode<synchronous>, transform_indices = @transform_2, window_bounds = array<i64: 9, 128, 128>}, {pipeline_mode = #tpu.pipeline_mode<synchronous>, transform_indices = @transform_3, window_bounds = array<i64: 1, 128>}, {pipeline_mode = #tpu.pipeline_mode<synchronous>, transform_indices = @transform_4, window_bounds = array<i64: 1, 128>}, {pipeline_mode = #tpu.pipeline_mode<synchronous>, transform_indices = @transform_5, window_bounds = array<i64: 1, 128>}, {pipeline_mode = #tpu.pipeline_mode<synchronous>, transform_indices = @transform_6, window_bounds = array<i64: 1, 128>}, {pipeline_mode = #tpu.pipeline_mode<synchronous>, transform_indices = @transform_7, window_bounds = array<i64: 2, 16, 16, 128>}]} {
    %cst = arith.constant 0.000000e+00 : f32
    %0 = vector.broadcast %cst : f32 to vector<2x18x18x128xf32>
    %c0 = arith.constant 0 : index
    %c0_0 = arith.constant 0 : index
    %c0_1 = arith.constant 0 : index
    %c0_2 = arith.constant 0 : index
    %1 = vector.load %arg9[%c0, %c0_0, %c0_1, %c0_2] : memref<2x18x18x128xf32, #tpu.memory_space<vmem>>, vector<2x18x18x128xf32>
    tpu.vector_store %arg9[%c0, %c0_0, %c0_1, %c0_2], %0 {strides = array<i32>} : memref<2x18x18x128xf32, #tpu.memory_space<vmem>>, vector<2x18x18x128xf32>,
    %c0_3 = arith.constant 0 : index
    %c0_4 = arith.constant 0 : index
    %c0_5 = arith.constant 0 : index
    %c0_6 = arith.constant 0 : index
    %2 = vector.load %arg1[%c0_3, %c0_4, %c0_5, %c0_6] : memref<2x16x16x128xf32, #tpu.memory_space<vmem>>, vector<2x16x16x128xf32>
    %c0_7 = arith.constant 0 : index
    %c1 = arith.constant 1 : index
    %c1_8 = arith.constant 1 : index
    %c0_9 = arith.constant 0 : index
    %3 = vector.load %arg9[%c0_7, %c1, %c1_8, %c0_9] : memref<2x18x18x128xf32, #tpu.memory_space<vmem>>, vector<2x16x16x128xf32>
    tpu.vector_store %arg9[%c0_7, %c1, %c1_8, %c0_9], %2 {strides = array<i32>} : memref<2x18x18x128xf32, #tpu.memory_space<vmem>>, vector<2x16x16x128xf32>,
    %c0_10 = arith.constant 0 : index
    %c0_11 = arith.constant 0 : index
    %c0_12 = arith.constant 0 : index
    %c0_13 = arith.constant 0 : index
    %4 = vector.load %arg9[%c0_10, %c0_11, %c0_12, %c0_13] : memref<2x18x18x128xf32, #tpu.memory_space<vmem>>, vector<2x16x16x128xf32>
    %5 = vector.shape_cast %4 : vector<2x16x16x128xf32> to vector<512x128xf32>
    %6 = arith.truncf %5 : vector<512x128xf32> to vector<512x128xbf16>
    %c0_14 = arith.constant 0 : index
    %c0_15 = arith.constant 0 : index
    %c0_16 = arith.constant 0 : index
    %7 = vector.load %arg2[%c0_14, %c0_15, %c0_16] : memref<9x128x128xbf16, #tpu.memory_space<vmem>>, vector<1x128x128xbf16>
    %8 = vector.shape_cast %7 : vector<1x128x128xbf16> to vector<128x128xbf16>
    %cst_17 = arith.constant dense<0.000000e+00> : vector<512x128xf32>
    %9 = tpu.matmul %6, %8, %cst_17 {dimension_numbers = #tpu.dot_dimension_numbers<[1], [0], [0], [1], [0, 0, 1, 1], [], []>} : vector<512x128xbf16>, vector<128x128xbf16>, vector<512x128xf32> -> vector<512x128xf32>
    %c0_18 = arith.constant 0 : index
    %c0_19 = arith.constant 0 : index
    %c1_20 = arith.constant 1 : index
    %c0_21 = arith.constant 0 : index
    %10 = vector.load %arg9[%c0_18, %c0_19, %c1_20, %c0_21] : memref<2x18x18x128xf32, #tpu.memory_space<vmem>>, vector<2x16x16x128xf32>
    %11 = vector.shape_cast %10 : vector<2x16x16x128xf32> to vector<512x128xf32>
    %12 = arith.truncf %11 : vector<512x128xf32> to vector<512x128xbf16>
    %c1_22 = arith.constant 1 : index
    %c0_23 = arith.constant 0 : index
    %c0_24 = arith.constant 0 : index
    %13 = vector.load %arg2[%c1_22, %c0_23, %c0_24] : memref<9x128x128xbf16, #tpu.memory_space<vmem>>, vector<1x128x128xbf16>
    %14 = vector.shape_cast %13 : vector<1x128x128xbf16> to vector<128x128xbf16>
    %cst_25 = arith.constant dense<0.000000e+00> : vector<512x128xf32>
    %15 = tpu.matmul %12, %14, %cst_25 {dimension_numbers = #tpu.dot_dimension_numbers<[1], [0], [0], [1], [0, 0, 1, 1], [], []>} : vector<512x128xbf16>, vector<128x128xbf16>, vector<512x128xf32> -> vector<512x128xf32>
    %16 = arith.addf %9, %15 : vector<512x128xf32>
    %c0_26 = arith.constant 0 : index
    %c0_27 = arith.constant 0 : index
    %c2 = arith.constant 2 : index
    %c0_28 = arith.constant 0 : index
    %17 = vector.load %arg9[%c0_26, %c0_27, %c2, %c0_28] : memref<2x18x18x128xf32, #tpu.memory_space<vmem>>, vector<2x16x16x128xf32>
    %18 = vector.shape_cast %17 : vector<2x16x16x128xf32> to vector<512x128xf32>
    %19 = arith.truncf %18 : vector<512x128xf32> to vector<512x128xbf16>
    %c2_29 = arith.constant 2 : index
    %c0_30 = arith.constant 0 : index
    %c0_31 = arith.constant 0 : index
    %20 = vector.load %arg2[%c2_29, %c0_30, %c0_31] : memref<9x128x128xbf16, #tpu.memory_space<vmem>>, vector<1x128x128xbf16>
    %21 = vector.shape_cast %20 : vector<1x128x128xbf16> to vector<128x128xbf16>
    %cst_32 = arith.constant dense<0.000000e+00> : vector<512x128xf32>
    %22 = tpu.matmul %19, %21, %cst_32 {dimension_numbers = #tpu.dot_dimension_numbers<[1], [0], [0], [1], [0, 0, 1, 1], [], []>} : vector<512x128xbf16>, vector<128x128xbf16>, vector<512x128xf32> -> vector<512x128xf32>
    %23 = arith.addf %16, %22 : vector<512x128xf32>
    %c0_33 = arith.constant 0 : index
    %c0_34 = arith.constant 0 : index
    %24 = vector.load %arg10[%c0_33, %c0_34] : memref<512x128xf32, #tpu.memory_space<vmem>>, vector<512x128xf32>
    tpu.vector_store %arg10[%c0_33, %c0_34], %23 {strides = array<i32>} : memref<512x128xf32, #tpu.memory_space<vmem>>, vector<512x128xf32>,
    %c0_35 = arith.constant 0 : index
    %c1_36 = arith.constant 1 : index
    %c0_37 = arith.constant 0 : index
    %c0_38 = arith.constant 0 : index
    %25 = vector.load %arg9[%c0_35, %c1_36, %c0_37, %c0_38] : memref<2x18x18x128xf32, #tpu.memory_space<vmem>>, vector<2x16x16x128xf32>
    %26 = vector.shape_cast %25 : vector<2x16x16x128xf32> to vector<512x128xf32>
    %27 = arith.truncf %26 : vector<512x128xf32> to vector<512x128xbf16>
    %c3 = arith.constant 3 : index
    %c0_39 = arith.constant 0 : index
    %c0_40 = arith.constant 0 : index
    %28 = vector.load %arg2[%c3, %c0_39, %c0_40] : memref<9x128x128xbf16, #tpu.memory_space<vmem>>, vector<1x128x128xbf16>
    %29 = vector.shape_cast %28 : vector<1x128x128xbf16> to vector<128x128xbf16>
    %cst_41 = arith.constant dense<0.000000e+00> : vector<512x128xf32>
    %30 = tpu.matmul %27, %29, %cst_41 {dimension_numbers = #tpu.dot_dimension_numbers<[1], [0], [0], [1], [0, 0, 1, 1], [], []>} : vector<512x128xbf16>, vector<128x128xbf16>, vector<512x128xf32> -> vector<512x128xf32>
    %c0_42 = arith.constant 0 : index
    %c1_43 = arith.constant 1 : index
    %c1_44 = arith.constant 1 : index
    %c0_45 = arith.constant 0 : index
    %31 = vector.load %arg9[%c0_42, %c1_43, %c1_44, %c0_45] : memref<2x18x18x128xf32, #tpu.memory_space<vmem>>, vector<2x16x16x128xf32>
    %32 = vector.shape_cast %31 : vector<2x16x16x128xf32> to vector<512x128xf32>
    %33 = arith.truncf %32 : vector<512x128xf32> to vector<512x128xbf16>
    %c4 = arith.constant 4 : index
    %c0_46 = arith.constant 0 : index
    %c0_47 = arith.constant 0 : index
    %34 = vector.load %arg2[%c4, %c0_46, %c0_47] : memref<9x128x128xbf16, #tpu.memory_space<vmem>>, vector<1x128x128xbf16>
    %35 = vector.shape_cast %34 : vector<1x128x128xbf16> to vector<128x128xbf16>
    %cst_48 = arith.constant dense<0.000000e+00> : vector<512x128xf32>
    %36 = tpu.matmul %33, %35, %cst_48 {dimension_numbers = #tpu.dot_dimension_numbers<[1], [0], [0], [1], [0, 0, 1, 1], [], []>} : vector<512x128xbf16>, vector<128x128xbf16>, vector<512x128xf32> -> vector<512x128xf32>
    %37 = arith.addf %30, %36 : vector<512x128xf32>
    %c0_49 = arith.constant 0 : index
    %c1_50 = arith.constant 1 : index
    %c2_51 = arith.constant 2 : index
    %c0_52 = arith.constant 0 : index
    %38 = vector.load %arg9[%c0_49, %c1_50, %c2_51, %c0_52] : memref<2x18x18x128xf32, #tpu.memory_space<vmem>>, vector<2x16x16x128xf32>
    %39 = vector.shape_cast %38 : vector<2x16x16x128xf32> to vector<512x128xf32>
    %40 = arith.truncf %39 : vector<512x128xf32> to vector<512x128xbf16>
    %c5 = arith.constant 5 : index
    %c0_53 = arith.constant 0 : index
    %c0_54 = arith.constant 0 : index
    %41 = vector.load %arg2[%c5, %c0_53, %c0_54] : memref<9x128x128xbf16, #tpu.memory_space<vmem>>, vector<1x128x128xbf16>
    %42 = vector.shape_cast %41 : vector<1x128x128xbf16> to vector<128x128xbf16>
    %cst_55 = arith.constant dense<0.000000e+00> : vector<512x128xf32>
    %43 = tpu.matmul %40, %42, %cst_55 {dimension_numbers = #tpu.dot_dimension_numbers<[1], [0], [0], [1], [0, 0, 1, 1], [], []>} : vector<512x128xbf16>, vector<128x128xbf16>, vector<512x128xf32> -> vector<512x128xf32>
    %44 = arith.addf %37, %43 : vector<512x128xf32>
    %c0_56 = arith.constant 0 : index
    %c0_57 = arith.constant 0 : index
    %45 = vector.load %arg10[%c0_56, %c0_57] : memref<512x128xf32, #tpu.memory_space<vmem>>, vector<512x128xf32>
    %46 = arith.addf %45, %44 : vector<512x128xf32>
    %c0_58 = arith.constant 0 : index
    %c0_59 = arith.constant 0 : index
    %47 = vector.load %arg10[%c0_58, %c0_59] : memref<512x128xf32, #tpu.memory_space<vmem>>, vector<512x128xf32>
    tpu.vector_store %arg10[%c0_58, %c0_59], %46 {strides = array<i32>} : memref<512x128xf32, #tpu.memory_space<vmem>>, vector<512x128xf32>,
    %c0_60 = arith.constant 0 : index
    %c2_61 = arith.constant 2 : index
    %c0_62 = arith.constant 0 : index
    %c0_63 = arith.constant 0 : index
    %48 = vector.load %arg9[%c0_60, %c2_61, %c0_62, %c0_63] : memref<2x18x18x128xf32, #tpu.memory_space<vmem>>, vector<2x16x16x128xf32>
    %49 = vector.shape_cast %48 : vector<2x16x16x128xf32> to vector<512x128xf32>
    %50 = arith.truncf %49 : vector<512x128xf32> to vector<512x128xbf16>
    %c6 = arith.constant 6 : index
    %c0_64 = arith.constant 0 : index
    %c0_65 = arith.constant 0 : index
    %51 = vector.load %arg2[%c6, %c0_64, %c0_65] : memref<9x128x128xbf16, #tpu.memory_space<vmem>>, vector<1x128x128xbf16>
    %52 = vector.shape_cast %51 : vector<1x128x128xbf16> to vector<128x128xbf16>
    %cst_66 = arith.constant dense<0.000000e+00> : vector<512x128xf32>
    %53 = tpu.matmul %50, %52, %cst_66 {dimension_numbers = #tpu.dot_dimension_numbers<[1], [0], [0], [1], [0, 0, 1, 1], [], []>} : vector<512x128xbf16>, vector<128x128xbf16>, vector<512x128xf32> -> vector<512x128xf32>
    %c0_67 = arith.constant 0 : index
    %c2_68 = arith.constant 2 : index
    %c1_69 = arith.constant 1 : index
    %c0_70 = arith.constant 0 : index
    %54 = vector.load %arg9[%c0_67, %c2_68, %c1_69, %c0_70] : memref<2x18x18x128xf32, #tpu.memory_space<vmem>>, vector<2x16x16x128xf32>
    %55 = vector.shape_cast %54 : vector<2x16x16x128xf32> to vector<512x128xf32>
    %56 = arith.truncf %55 : vector<512x128xf32> to vector<512x128xbf16>
    %c7 = arith.constant 7 : index
    %c0_71 = arith.constant 0 : index
    %c0_72 = arith.constant 0 : index
    %57 = vector.load %arg2[%c7, %c0_71, %c0_72] : memref<9x128x128xbf16, #tpu.memory_space<vmem>>, vector<1x128x128xbf16>
    %58 = vector.shape_cast %57 : vector<1x128x128xbf16> to vector<128x128xbf16>
    %cst_73 = arith.constant dense<0.000000e+00> : vector<512x128xf32>
    %59 = tpu.matmul %56, %58, %cst_73 {dimension_numbers = #tpu.dot_dimension_numbers<[1], [0], [0], [1], [0, 0, 1, 1], [], []>} : vector<512x128xbf16>, vector<128x128xbf16>, vector<512x128xf32> -> vector<512x128xf32>
    %60 = arith.addf %53, %59 : vector<512x128xf32>
    %c0_74 = arith.constant 0 : index
    %c2_75 = arith.constant 2 : index
    %c2_76 = arith.constant 2 : index
    %c0_77 = arith.constant 0 : index
    %61 = vector.load %arg9[%c0_74, %c2_75, %c2_76, %c0_77] : memref<2x18x18x128xf32, #tpu.memory_space<vmem>>, vector<2x16x16x128xf32>
    %62 = vector.shape_cast %61 : vector<2x16x16x128xf32> to vector<512x128xf32>
    %63 = arith.truncf %62 : vector<512x128xf32> to vector<512x128xbf16>
    %c8 = arith.constant 8 : index
    %c0_78 = arith.constant 0 : index
    %c0_79 = arith.constant 0 : index
    %64 = vector.load %arg2[%c8, %c0_78, %c0_79] : memref<9x128x128xbf16, #tpu.memory_space<vmem>>, vector<1x128x128xbf16>
    %65 = vector.shape_cast %64 : vector<1x128x128xbf16> to vector<128x128xbf16>
    %cst_80 = arith.constant dense<0.000000e+00> : vector<512x128xf32>
    %66 = tpu.matmul %63, %65, %cst_80 {dimension_numbers = #tpu.dot_dimension_numbers<[1], [0], [0], [1], [0, 0, 1, 1], [], []>} : vector<512x128xbf16>, vector<128x128xbf16>, vector<512x128xf32> -> vector<512x128xf32>
    %67 = arith.addf %60, %66 : vector<512x128xf32>
    %c0_81 = arith.constant 0 : index
    %c0_82 = arith.constant 0 : index
    %68 = vector.load %arg10[%c0_81, %c0_82] : memref<512x128xf32, #tpu.memory_space<vmem>>, vector<512x128xf32>
    %69 = arith.addf %68, %67 : vector<512x128xf32>
    %c0_83 = arith.constant 0 : index
    %c0_84 = arith.constant 0 : index
    %70 = vector.load %arg10[%c0_83, %c0_84] : memref<512x128xf32, #tpu.memory_space<vmem>>, vector<512x128xf32>
    tpu.vector_store %arg10[%c0_83, %c0_84], %69 {strides = array<i32>} : memref<512x128xf32, #tpu.memory_space<vmem>>, vector<512x128xf32>,
    %c0_85 = arith.constant 0 : index
    %c0_86 = arith.constant 0 : index
    %71 = vector.load %arg10[%c0_85, %c0_86] : memref<512x128xf32, #tpu.memory_space<vmem>>, vector<512x128xf32>
    %cst_87 = arith.constant dense<0.000000e+00> : vector<128xf32>
    %72 = vector.multi_reduction <add>, %71, %cst_87 [0] : vector<512x128xf32> to vector<128xf32>
    %73 = vector.shape_cast %72 : vector<128xf32> to vector<1x128xf32>
    %cst_88 = arith.constant 0.001953125 : f32
    %74 = vector.broadcast %cst_88 : f32 to vector<1x128xf32>
    %75 = arith.mulf %73, %74 : vector<1x128xf32>
    %76 = arith.mulf %71, %71 : vector<512x128xf32>
    %cst_89 = arith.constant dense<0.000000e+00> : vector<128xf32>
    %77 = vector.multi_reduction <add>, %76, %cst_89 [0] : vector<512x128xf32> to vector<128xf32>
    %78 = vector.shape_cast %77 : vector<128xf32> to vector<1x128xf32>
    %cst_90 = arith.constant 0.001953125 : f32
    %79 = vector.broadcast %cst_90 : f32 to vector<1x128xf32>
    %80 = arith.mulf %78, %79 : vector<1x128xf32>
    %81 = arith.mulf %75, %75 : vector<1x128xf32>
    %82 = arith.subf %80, %81 : vector<1x128xf32>
    %c0_91 = arith.constant 0 : index
    %c0_92 = arith.constant 0 : index
    %83 = vector.load %arg4[%c0_91, %c0_92] : memref<1x128xf32, #tpu.memory_space<vmem>>, vector<1x128xf32>
    %cst_93 = arith.constant 9.99999974E-6 : f32
    %84 = vector.broadcast %cst_93 : f32 to vector<1x128xf32>
    %85 = arith.addf %82, %84 : vector<1x128xf32>
    %86 = math.rsqrt %85 : vector<1x128xf32>
    %87 = arith.mulf %83, %86 : vector<1x128xf32>
    %c0_94 = arith.constant 0 : index
    %c0_95 = arith.constant 0 : index
    %88 = vector.load %arg5[%c0_94, %c0_95] : memref<1x128xf32, #tpu.memory_space<vmem>>, vector<1x128xf32>
    %89 = arith.mulf %75, %87 : vector<1x128xf32>
    %90 = arith.subf %88, %89 : vector<1x128xf32>
    %91 = vector.broadcast %87 : vector<1x128xf32> to vector<512x128xf32>
    %92 = arith.mulf %71, %91 : vector<512x128xf32>
    %93 = vector.broadcast %90 : vector<1x128xf32> to vector<512x128xf32>
    %94 = arith.addf %92, %93 : vector<512x128xf32>
    %cst_96 = arith.constant 0.000000e+00 : f32
    %95 = vector.broadcast %cst_96 : f32 to vector<512x128xf32>
    %96 = arith.maximumf %94, %95 : vector<512x128xf32>
    %97 = vector.shape_cast %96 : vector<512x128xf32> to vector<2x16x16x128xf32>
    %c0_97 = arith.constant 0 : index
    %c1_98 = arith.constant 1 : index
    %c1_99 = arith.constant 1 : index
    %c0_100 = arith.constant 0 : index
    %98 = vector.load %arg9[%c0_97, %c1_98, %c1_99, %c0_100] : memref<2x18x18x128xf32, #tpu.memory_space<vmem>>, vector<2x16x16x128xf32>
    tpu.vector_store %arg9[%c0_97, %c1_98, %c1_99, %c0_100], %97 {strides = array<i32>} : memref<2x18x18x128xf32, #tpu.memory_space<vmem>>, vector<2x16x16x128xf32>,
    %c0_101 = arith.constant 0 : index
    %c0_102 = arith.constant 0 : index
    %c0_103 = arith.constant 0 : index
    %c0_104 = arith.constant 0 : index
    %99 = vector.load %arg9[%c0_101, %c0_102, %c0_103, %c0_104] : memref<2x18x18x128xf32, #tpu.memory_space<vmem>>, vector<2x16x16x128xf32>
    %100 = vector.shape_cast %99 : vector<2x16x16x128xf32> to vector<512x128xf32>
    %101 = arith.truncf %100 : vector<512x128xf32> to vector<512x128xbf16>
    %c0_105 = arith.constant 0 : index
    %c0_106 = arith.constant 0 : index
    %c0_107 = arith.constant 0 : index
    %102 = vector.load %arg3[%c0_105, %c0_106, %c0_107] : memref<9x128x128xbf16, #tpu.memory_space<vmem>>, vector<1x128x128xbf16>
    %103 = vector.shape_cast %102 : vector<1x128x128xbf16> to vector<128x128xbf16>
    %cst_108 = arith.constant dense<0.000000e+00> : vector<512x128xf32>
    %104 = tpu.matmul %101, %103, %cst_108 {dimension_numbers = #tpu.dot_dimension_numbers<[1], [0], [0], [1], [0, 0, 1, 1], [], []>} : vector<512x128xbf16>, vector<128x128xbf16>, vector<512x128xf32> -> vector<512x128xf32>
    %c0_109 = arith.constant 0 : index
    %c0_110 = arith.constant 0 : index
    %c1_111 = arith.constant 1 : index
    %c0_112 = arith.constant 0 : index
    %105 = vector.load %arg9[%c0_109, %c0_110, %c1_111, %c0_112] : memref<2x18x18x128xf32, #tpu.memory_space<vmem>>, vector<2x16x16x128xf32>
    %106 = vector.shape_cast %105 : vector<2x16x16x128xf32> to vector<512x128xf32>
    %107 = arith.truncf %106 : vector<512x128xf32> to vector<512x128xbf16>
    %c1_113 = arith.constant 1 : index
    %c0_114 = arith.constant 0 : index
    %c0_115 = arith.constant 0 : index
    %108 = vector.load %arg3[%c1_113, %c0_114, %c0_115] : memref<9x128x128xbf16, #tpu.memory_space<vmem>>, vector<1x128x128xbf16>
    %109 = vector.shape_cast %108 : vector<1x128x128xbf16> to vector<128x128xbf16>
    %cst_116 = arith.constant dense<0.000000e+00> : vector<512x128xf32>
    %110 = tpu.matmul %107, %109, %cst_116 {dimension_numbers = #tpu.dot_dimension_numbers<[1], [0], [0], [1], [0, 0, 1, 1], [], []>} : vector<512x128xbf16>, vector<128x128xbf16>, vector<512x128xf32> -> vector<512x128xf32>
    %111 = arith.addf %104, %110 : vector<512x128xf32>
    %c0_117 = arith.constant 0 : index
    %c0_118 = arith.constant 0 : index
    %c2_119 = arith.constant 2 : index
    %c0_120 = arith.constant 0 : index
    %112 = vector.load %arg9[%c0_117, %c0_118, %c2_119, %c0_120] : memref<2x18x18x128xf32, #tpu.memory_space<vmem>>, vector<2x16x16x128xf32>
    %113 = vector.shape_cast %112 : vector<2x16x16x128xf32> to vector<512x128xf32>
    %114 = arith.truncf %113 : vector<512x128xf32> to vector<512x128xbf16>
    %c2_121 = arith.constant 2 : index
    %c0_122 = arith.constant 0 : index
    %c0_123 = arith.constant 0 : index
    %115 = vector.load %arg3[%c2_121, %c0_122, %c0_123] : memref<9x128x128xbf16, #tpu.memory_space<vmem>>, vector<1x128x128xbf16>
    %116 = vector.shape_cast %115 : vector<1x128x128xbf16> to vector<128x128xbf16>
    %cst_124 = arith.constant dense<0.000000e+00> : vector<512x128xf32>
    %117 = tpu.matmul %114, %116, %cst_124 {dimension_numbers = #tpu.dot_dimension_numbers<[1], [0], [0], [1], [0, 0, 1, 1], [], []>} : vector<512x128xbf16>, vector<128x128xbf16>, vector<512x128xf32> -> vector<512x128xf32>
    %118 = arith.addf %111, %117 : vector<512x128xf32>
    %c0_125 = arith.constant 0 : index
    %c0_126 = arith.constant 0 : index
    %119 = vector.load %arg10[%c0_125, %c0_126] : memref<512x128xf32, #tpu.memory_space<vmem>>, vector<512x128xf32>
    tpu.vector_store %arg10[%c0_125, %c0_126], %118 {strides = array<i32>} : memref<512x128xf32, #tpu.memory_space<vmem>>, vector<512x128xf32>,
    %c0_127 = arith.constant 0 : index
    %c1_128 = arith.constant 1 : index
    %c0_129 = arith.constant 0 : index
    %c0_130 = arith.constant 0 : index
    %120 = vector.load %arg9[%c0_127, %c1_128, %c0_129, %c0_130] : memref<2x18x18x128xf32, #tpu.memory_space<vmem>>, vector<2x16x16x128xf32>
    %121 = vector.shape_cast %120 : vector<2x16x16x128xf32> to vector<512x128xf32>
    %122 = arith.truncf %121 : vector<512x128xf32> to vector<512x128xbf16>
    %c3_131 = arith.constant 3 : index
    %c0_132 = arith.constant 0 : index
    %c0_133 = arith.constant 0 : index
    %123 = vector.load %arg3[%c3_131, %c0_132, %c0_133] : memref<9x128x128xbf16, #tpu.memory_space<vmem>>, vector<1x128x128xbf16>
    %124 = vector.shape_cast %123 : vector<1x128x128xbf16> to vector<128x128xbf16>
    %cst_134 = arith.constant dense<0.000000e+00> : vector<512x128xf32>
    %125 = tpu.matmul %122, %124, %cst_134 {dimension_numbers = #tpu.dot_dimension_numbers<[1], [0], [0], [1], [0, 0, 1, 1], [], []>} : vector<512x128xbf16>, vector<128x128xbf16>, vector<512x128xf32> -> vector<512x128xf32>
    %c0_135 = arith.constant 0 : index
    %c1_136 = arith.constant 1 : index
    %c1_137 = arith.constant 1 : index
    %c0_138 = arith.constant 0 : index
    %126 = vector.load %arg9[%c0_135, %c1_136, %c1_137, %c0_138] : memref<2x18x18x128xf32, #tpu.memory_space<vmem>>, vector<2x16x16x128xf32>
    %127 = vector.shape_cast %126 : vector<2x16x16x128xf32> to vector<512x128xf32>
    %128 = arith.truncf %127 : vector<512x128xf32> to vector<512x128xbf16>
    %c4_139 = arith.constant 4 : index
    %c0_140 = arith.constant 0 : index
    %c0_141 = arith.constant 0 : index
    %129 = vector.load %arg3[%c4_139, %c0_140, %c0_141] : memref<9x128x128xbf16, #tpu.memory_space<vmem>>, vector<1x128x128xbf16>
    %130 = vector.shape_cast %129 : vector<1x128x128xbf16> to vector<128x128xbf16>
    %cst_142 = arith.constant dense<0.000000e+00> : vector<512x128xf32>
    %131 = tpu.matmul %128, %130, %cst_142 {dimension_numbers = #tpu.dot_dimension_numbers<[1], [0], [0], [1], [0, 0, 1, 1], [], []>} : vector<512x128xbf16>, vector<128x128xbf16>, vector<512x128xf32> -> vector<512x128xf32>
    %132 = arith.addf %125, %131 : vector<512x128xf32>
    %c0_143 = arith.constant 0 : index
    %c1_144 = arith.constant 1 : index
    %c2_145 = arith.constant 2 : index
    %c0_146 = arith.constant 0 : index
    %133 = vector.load %arg9[%c0_143, %c1_144, %c2_145, %c0_146] : memref<2x18x18x128xf32, #tpu.memory_space<vmem>>, vector<2x16x16x128xf32>
    %134 = vector.shape_cast %133 : vector<2x16x16x128xf32> to vector<512x128xf32>
    %135 = arith.truncf %134 : vector<512x128xf32> to vector<512x128xbf16>
    %c5_147 = arith.constant 5 : index
    %c0_148 = arith.constant 0 : index
    %c0_149 = arith.constant 0 : index
    %136 = vector.load %arg3[%c5_147, %c0_148, %c0_149] : memref<9x128x128xbf16, #tpu.memory_space<vmem>>, vector<1x128x128xbf16>
    %137 = vector.shape_cast %136 : vector<1x128x128xbf16> to vector<128x128xbf16>
    %cst_150 = arith.constant dense<0.000000e+00> : vector<512x128xf32>
    %138 = tpu.matmul %135, %137, %cst_150 {dimension_numbers = #tpu.dot_dimension_numbers<[1], [0], [0], [1], [0, 0, 1, 1], [], []>} : vector<512x128xbf16>, vector<128x128xbf16>, vector<512x128xf32> -> vector<512x128xf32>
    %139 = arith.addf %132, %138 : vector<512x128xf32>
    %c0_151 = arith.constant 0 : index
    %c0_152 = arith.constant 0 : index
    %140 = vector.load %arg10[%c0_151, %c0_152] : memref<512x128xf32, #tpu.memory_space<vmem>>, vector<512x128xf32>
    %141 = arith.addf %140, %139 : vector<512x128xf32>
    %c0_153 = arith.constant 0 : index
    %c0_154 = arith.constant 0 : index
    %142 = vector.load %arg10[%c0_153, %c0_154] : memref<512x128xf32, #tpu.memory_space<vmem>>, vector<512x128xf32>
    tpu.vector_store %arg10[%c0_153, %c0_154], %141 {strides = array<i32>} : memref<512x128xf32, #tpu.memory_space<vmem>>, vector<512x128xf32>,
    %c0_155 = arith.constant 0 : index
    %c2_156 = arith.constant 2 : index
    %c0_157 = arith.constant 0 : index
    %c0_158 = arith.constant 0 : index
    %143 = vector.load %arg9[%c0_155, %c2_156, %c0_157, %c0_158] : memref<2x18x18x128xf32, #tpu.memory_space<vmem>>, vector<2x16x16x128xf32>
    %144 = vector.shape_cast %143 : vector<2x16x16x128xf32> to vector<512x128xf32>
    %145 = arith.truncf %144 : vector<512x128xf32> to vector<512x128xbf16>
    %c6_159 = arith.constant 6 : index
    %c0_160 = arith.constant 0 : index
    %c0_161 = arith.constant 0 : index
    %146 = vector.load %arg3[%c6_159, %c0_160, %c0_161] : memref<9x128x128xbf16, #tpu.memory_space<vmem>>, vector<1x128x128xbf16>
    %147 = vector.shape_cast %146 : vector<1x128x128xbf16> to vector<128x128xbf16>
    %cst_162 = arith.constant dense<0.000000e+00> : vector<512x128xf32>
    %148 = tpu.matmul %145, %147, %cst_162 {dimension_numbers = #tpu.dot_dimension_numbers<[1], [0], [0], [1], [0, 0, 1, 1], [], []>} : vector<512x128xbf16>, vector<128x128xbf16>, vector<512x128xf32> -> vector<512x128xf32>
    %c0_163 = arith.constant 0 : index
    %c2_164 = arith.constant 2 : index
    %c1_165 = arith.constant 1 : index
    %c0_166 = arith.constant 0 : index
    %149 = vector.load %arg9[%c0_163, %c2_164, %c1_165, %c0_166] : memref<2x18x18x128xf32, #tpu.memory_space<vmem>>, vector<2x16x16x128xf32>
    %150 = vector.shape_cast %149 : vector<2x16x16x128xf32> to vector<512x128xf32>
    %151 = arith.truncf %150 : vector<512x128xf32> to vector<512x128xbf16>
    %c7_167 = arith.constant 7 : index
    %c0_168 = arith.constant 0 : index
    %c0_169 = arith.constant 0 : index
    %152 = vector.load %arg3[%c7_167, %c0_168, %c0_169] : memref<9x128x128xbf16, #tpu.memory_space<vmem>>, vector<1x128x128xbf16>
    %153 = vector.shape_cast %152 : vector<1x128x128xbf16> to vector<128x128xbf16>
    %cst_170 = arith.constant dense<0.000000e+00> : vector<512x128xf32>
    %154 = tpu.matmul %151, %153, %cst_170 {dimension_numbers = #tpu.dot_dimension_numbers<[1], [0], [0], [1], [0, 0, 1, 1], [], []>} : vector<512x128xbf16>, vector<128x128xbf16>, vector<512x128xf32> -> vector<512x128xf32>
    %155 = arith.addf %148, %154 : vector<512x128xf32>
    %c0_171 = arith.constant 0 : index
    %c2_172 = arith.constant 2 : index
    %c2_173 = arith.constant 2 : index
    %c0_174 = arith.constant 0 : index
    %156 = vector.load %arg9[%c0_171, %c2_172, %c2_173, %c0_174] : memref<2x18x18x128xf32, #tpu.memory_space<vmem>>, vector<2x16x16x128xf32>
    %157 = vector.shape_cast %156 : vector<2x16x16x128xf32> to vector<512x128xf32>
    %158 = arith.truncf %157 : vector<512x128xf32> to vector<512x128xbf16>
    %c8_175 = arith.constant 8 : index
    %c0_176 = arith.constant 0 : index
    %c0_177 = arith.constant 0 : index
    %159 = vector.load %arg3[%c8_175, %c0_176, %c0_177] : memref<9x128x128xbf16, #tpu.memory_space<vmem>>, vector<1x128x128xbf16>
    %160 = vector.shape_cast %159 : vector<1x128x128xbf16> to vector<128x128xbf16>
    %cst_178 = arith.constant dense<0.000000e+00> : vector<512x128xf32>
    %161 = tpu.matmul %158, %160, %cst_178 {dimension_numbers = #tpu.dot_dimension_numbers<[1], [0], [0], [1], [0, 0, 1, 1], [], []>} : vector<512x128xbf16>, vector<128x128xbf16>, vector<512x128xf32> -> vector<512x128xf32>
    %162 = arith.addf %155, %161 : vector<512x128xf32>
    %c0_179 = arith.constant 0 : index
    %c0_180 = arith.constant 0 : index
    %163 = vector.load %arg10[%c0_179, %c0_180] : memref<512x128xf32, #tpu.memory_space<vmem>>, vector<512x128xf32>
    %164 = arith.addf %163, %162 : vector<512x128xf32>
    %c0_181 = arith.constant 0 : index
    %c0_182 = arith.constant 0 : index
    %165 = vector.load %arg10[%c0_181, %c0_182] : memref<512x128xf32, #tpu.memory_space<vmem>>, vector<512x128xf32>
    tpu.vector_store %arg10[%c0_181, %c0_182], %164 {strides = array<i32>} : memref<512x128xf32, #tpu.memory_space<vmem>>, vector<512x128xf32>,
    %c0_183 = arith.constant 0 : index
    %c0_184 = arith.constant 0 : index
    %166 = vector.load %arg10[%c0_183, %c0_184] : memref<512x128xf32, #tpu.memory_space<vmem>>, vector<512x128xf32>
    %cst_185 = arith.constant dense<0.000000e+00> : vector<128xf32>
    %167 = vector.multi_reduction <add>, %166, %cst_185 [0] : vector<512x128xf32> to vector<128xf32>
    %168 = vector.shape_cast %167 : vector<128xf32> to vector<1x128xf32>
    %cst_186 = arith.constant 0.001953125 : f32
    %169 = vector.broadcast %cst_186 : f32 to vector<1x128xf32>
    %170 = arith.mulf %168, %169 : vector<1x128xf32>
    %171 = arith.mulf %166, %166 : vector<512x128xf32>
    %cst_187 = arith.constant dense<0.000000e+00> : vector<128xf32>
    %172 = vector.multi_reduction <add>, %171, %cst_187 [0] : vector<512x128xf32> to vector<128xf32>
    %173 = vector.shape_cast %172 : vector<128xf32> to vector<1x128xf32>
    %cst_188 = arith.constant 0.001953125 : f32
    %174 = vector.broadcast %cst_188 : f32 to vector<1x128xf32>
    %175 = arith.mulf %173, %174 : vector<1x128xf32>
    %176 = arith.mulf %170, %170 : vector<1x128xf32>
    %177 = arith.subf %175, %176 : vector<1x128xf32>
    %c0_189 = arith.constant 0 : index
    %c0_190 = arith.constant 0 : index
    %178 = vector.load %arg6[%c0_189, %c0_190] : memref<1x128xf32, #tpu.memory_space<vmem>>, vector<1x128xf32>
    %cst_191 = arith.constant 9.99999974E-6 : f32
    %179 = vector.broadcast %cst_191 : f32 to vector<1x128xf32>
    %180 = arith.addf %177, %179 : vector<1x128xf32>
    %181 = math.rsqrt %180 : vector<1x128xf32>
    %182 = arith.mulf %178, %181 : vector<1x128xf32>
    %c0_192 = arith.constant 0 : index
    %c0_193 = arith.constant 0 : index
    %183 = vector.load %arg7[%c0_192, %c0_193] : memref<1x128xf32, #tpu.memory_space<vmem>>, vector<1x128xf32>
    %184 = arith.mulf %170, %182 : vector<1x128xf32>
    %185 = arith.subf %183, %184 : vector<1x128xf32>
    %186 = vector.broadcast %182 : vector<1x128xf32> to vector<512x128xf32>
    %187 = arith.mulf %166, %186 : vector<512x128xf32>
    %188 = vector.broadcast %185 : vector<1x128xf32> to vector<512x128xf32>
    %189 = arith.addf %187, %188 : vector<512x128xf32>
    %c0_194 = arith.constant 0 : index
    %c0_195 = arith.constant 0 : index
    %c0_196 = arith.constant 0 : index
    %c0_197 = arith.constant 0 : index
    %190 = vector.load %arg1[%c0_194, %c0_195, %c0_196, %c0_197] : memref<2x16x16x128xf32, #tpu.memory_space<vmem>>, vector<2x16x16x128xf32>
    %191 = vector.shape_cast %190 : vector<2x16x16x128xf32> to vector<512x128xf32>
    %192 = arith.addf %189, %191 : vector<512x128xf32>
    %cst_198 = arith.constant 0.000000e+00 : f32
    %193 = vector.broadcast %cst_198 : f32 to vector<512x128xf32>
    %194 = arith.maximumf %192, %193 : vector<512x128xf32>
    %195 = vector.shape_cast %194 : vector<512x128xf32> to vector<2x16x16x128xf32>
    %c0_199 = arith.constant 0 : index
    %c0_200 = arith.constant 0 : index
    %c0_201 = arith.constant 0 : index
    %c0_202 = arith.constant 0 : index
    %196 = vector.load %arg8[%c0_199, %c0_200, %c0_201, %c0_202] : memref<2x16x16x128xf32, #tpu.memory_space<vmem>>, vector<2x16x16x128xf32>
    tpu.vector_store %arg8[%c0_199, %c0_200, %c0_201, %c0_202], %195 {strides = array<i32>} : memref<2x16x16x128xf32, #tpu.memory_space<vmem>>, vector<2x16x16x128xf32>,
    return
  }
  func.func @transform_0(%arg0: i32) -> (i32, i32, i32, i32) {
    %c0_i32 = arith.constant 0 : i32
    %c0_i32_0 = arith.constant 0 : i32
    %c0_i32_1 = arith.constant 0 : i32
    %c0_i32_2 = arith.constant 0 : i32
    %c0_i32_3 = arith.constant 0 : i32
    return %c0_i32, %c0_i32_0, %c0_i32_1, %c0_i32_2 : i32, i32, i32, i32
  }
  func.func @transform_1(%arg0: i32) -> (i32, i32, i32) {
    %c0_i32 = arith.constant 0 : i32
    %c0_i32_0 = arith.constant 0 : i32
    %c0_i32_1 = arith.constant 0 : i32
    %c0_i32_2 = arith.constant 0 : i32
    return %c0_i32, %c0_i32_0, %c0_i32_1 : i32, i32, i32
  }
  func.func @transform_2(%arg0: i32) -> (i32, i32, i32) {
    %c0_i32 = arith.constant 0 : i32
    %c0_i32_0 = arith.constant 0 : i32
    %c0_i32_1 = arith.constant 0 : i32
    %c0_i32_2 = arith.constant 0 : i32
    return %c0_i32, %c0_i32_0, %c0_i32_1 : i32, i32, i32
  }
  func.func @transform_3(%arg0: i32) -> (i32, i32) {
    %c0_i32 = arith.constant 0 : i32
    %c0_i32_0 = arith.constant 0 : i32
    %c0_i32_1 = arith.constant 0 : i32
    return %c0_i32, %c0_i32_0 : i32, i32
  }
  func.func @transform_4(%arg0: i32) -> (i32, i32) {
    %c0_i32 = arith.constant 0 : i32
    %c0_i32_0 = arith.constant 0 : i32
    %c0_i32_1 = arith.constant 0 : i32
    return %c0_i32, %c0_i32_0 : i32, i32
  }
  func.func @transform_5(%arg0: i32) -> (i32, i32) {
    %c0_i32 = arith.constant 0 : i32
    %c0_i32_0 = arith.constant 0 : i32
    %c0_i32_1 = arith.constant 0 : i32
    return %c0_i32, %c0_i32_0 : i32, i32
  }
  func.func @transform_6(%arg0: i32) -> (i32, i32) {
    %c0_i32 = arith.constant 0 : i32
    %c0_i32_0 = arith.constant 0 : i32
    %c0_i32_1 = arith.constant 0 : i32
    return %c0_i32, %c0_i32_0 : i32, i32
  }
  func.func @transform_7(%arg0: i32) -> (i32, i32, i32, i32) {
    %c0_i32 = arith.constant 0 : i32
    %c0_i32_0 = arith.constant 0 : i32
    %c0_i32_1 = arith.constant 0 : i32
    %c0_i32_2 = arith.constant 0 : i32
    %c0_i32_3 = arith.constant 0 : i32
    return %c0_i32, %c0_i32_0, %c0_i32_1, %c0_i32_2 : i32, i32, i32, i32
  }
}

</mosaic_0001>

<llo_original>
// kernel: resnet_block_enc_forward.1
$region0: #{resnet_block_enc_forward.1}
  #allocation0 [shape = 'u32[]', space=smem, size = 0x4, offset = 0x4, fixed_abs, tag = 'smem constant byte address 0x4 - core index']
  #allocation1 [shape = 'u32[72,128]{1,0:T(1,128)}', space=vmem, size = 0x9000, scoped, tag = 'internal scratch']
  #allocation2 [shape = 'f32[2,18,18,128]{3,2,1,0:T(8,128)}', space=vmem, size = 0x6c000, scoped, tag = 'scratch operand']
  #allocation3 [shape = 'f32[512,128]{1,0:T(8,128)}', space=vmem, size = 0x40000, scoped, tag = 'scratch operand']
  %s0 = inlined_call_operand.vmem [shape: f32[2,16,16,128], index: 0, kind: input, shape index: {}]
  %s1 = inlined_call_operand.vmem [shape: bf16[9,128,128], index: 1, kind: input, shape index: {}]
  %s2 = inlined_call_operand.vmem [shape: bf16[9,128,128], index: 2, kind: input, shape index: {}]
  %s3 = inlined_call_operand.vmem [shape: f32[1,128], index: 3, kind: input, shape index: {}]
  %s4 = inlined_call_operand.vmem [shape: f32[1,128], index: 4, kind: input, shape index: {}]
  %s5 = inlined_call_operand.vmem [shape: f32[1,128], index: 5, kind: input, shape index: {}]
  %s6 = inlined_call_operand.vmem [shape: f32[1,128], index: 6, kind: input, shape index: {}]
  %s7 = inlined_call_operand.hbm [shape: f32[2,16,16,128], index: 7, kind: output, shape index: {}]
  %s8 = sld [smem:[#allocation0]]
  $region38: #{resnet_block_enc_forward.1} parent=0
    _
  %s10 = ssub.s32 1, %s8
  %s11 = scalar_select 0, %s10, %s8
  $region1: #{resnet_block_enc_forward.1} parent=0
    #allocation4 [shape = 'u8[262144]{0}', space=vmem, size = 0x40000, scoped, tag = 'output window, operand 0, single buffered']
    #allocation5 [shape = 's32[1]{0}', space=sflag, size = 0x4, scoped, tag = 'scoped memory for resnet_block_enc_forward.1']
    %12 = vsyncpa [#allocation5], 0
    // Predicated region
    $region2: #{resnet_block_enc_forward.1} parent=1 // pred_check
      _
    $region3: #{resnet_block_enc_forward.1} parent=1 // pred_check_branch
      %14 = sbr.rel (0) target = $region5
    $region4: #{resnet_block_enc_forward.1} parent=1 // pred_region
      _
    $region5: #{resnet_block_enc_forward.1} parent=1 // pred_fallthru
      _
    // Predicated region
    $region6: #{resnet_block_enc_forward.1} parent=1 // pred_check
      _
    $region7: #{resnet_block_enc_forward.1} parent=1 // pred_check_branch
      %16 = sbr.rel (0) target = $region9
    $region8: #{resnet_block_enc_forward.1} parent=1 // pred_region
      _
    $region9: #{resnet_block_enc_forward.1} parent=1 // pred_fallthru
      _
    // Predicated region
    $region10: #{resnet_block_enc_forward.1} parent=1 // pred_check
      _
    $region11: #{resnet_block_enc_forward.1} parent=1 // pred_check_branch
      %18 = sbr.rel (0) target = $region13
    $region12: #{resnet_block_enc_forward.1} parent=1 // pred_region
      _
    $region13: #{resnet_block_enc_forward.1} parent=1 // pred_fallthru
      _
    // Predicated region
    $region14: #{resnet_block_enc_forward.1} parent=1 // pred_check
      _
    $region15: #{resnet_block_enc_forward.1} parent=1 // pred_check_branch
      %20 = sbr.rel (0) target = $region17
    $region16: #{resnet_block_enc_forward.1} parent=1 // pred_region
      _
    $region17: #{resnet_block_enc_forward.1} parent=1 // pred_fallthru
      _
    // Predicated region
    $region18: #{resnet_block_enc_forward.1} parent=1 // pred_check
      _
    $region19: #{resnet_block_enc_forward.1} parent=1 // pred_check_branch
      %22 = sbr.rel (0) target = $region21
    $region20: #{resnet_block_enc_forward.1} parent=1 // pred_region
      _
    $region21: #{resnet_block_enc_forward.1} parent=1 // pred_fallthru
      _
    // Predicated region
    $region22: #{resnet_block_enc_forward.1} parent=1 // pred_check
      _
    $region23: #{resnet_block_enc_forward.1} parent=1 // pred_check_branch
      %24 = sbr.rel (0) target = $region25
    $region24: #{resnet_block_enc_forward.1} parent=1 // pred_region
      _
    $region25: #{resnet_block_enc_forward.1} parent=1 // pred_fallthru
      _
    // Predicated region
    $region26: #{resnet_block_enc_forward.1} parent=1 // pred_check
      _
    $region27: #{resnet_block_enc_forward.1} parent=1 // pred_check_branch
      %26 = sbr.rel (0) target = $region29
    $region28: #{resnet_block_enc_forward.1} parent=1 // pred_region
      _
    $region29: #{resnet_block_enc_forward.1} parent=1 // pred_fallthru
      _
    %27 = vst [vmem:[#allocation2] sm:$0xff] 0.0
    %28 = vst [vmem:[#allocation2 + $0x8] sm:$0xff] 0.0
    %29 = vst [vmem:[#allocation2 + $0x10] sm:$0x3] 0.0
    %30 = vst [vmem:[#allocation2 + $0x18] sm:$0xff] 0.0
    %31 = vst [vmem:[#allocation2 + $0x20] sm:$0xff] 0.0
    %32 = vst [vmem:[#allocation2 + $0x28] sm:$0x3] 0.0
    %33 = vst [vmem:[#allocation2 + $0x30] sm:$0xff] 0.0
    %34 = vst [vmem:[#allocation2 + $0x38] sm:$0xff] 0.0
    %35 = vst [vmem:[#allocation2 + $0x40] sm:$0x3] 0.0
    %36 = vst [vmem:[#allocation2 + $0x48] sm:$0xff] 0.0
    %37 = vst [vmem:[#allocation2 + $0x50] sm:$0xff] 0.0
    %38 = vst [vmem:[#allocation2 + $0x58] sm:$0x3] 0.0
    %39 = vst [vmem:[#allocation2 + $0x60] sm:$0xff] 0.0
    %40 = vst [vmem:[#allocation2 + $0x68] sm:$0xff] 0.0
    %41 = vst [vmem:[#allocation2 + $0x70] sm:$0x3] 0.0
    %42 = vst [vmem:[#allocation2 + $0x78] sm:$0xff] 0.0
    %43 = vst [vmem:[#allocation2 + $0x80] sm:$0xff] 0.0
    %44 = vst [vmem:[#allocation2 + $0x88] sm:$0x3] 0.0
    %45 = vst [vmem:[#allocation2 + $0x90] sm:$0xff] 0.0
    %46 = vst [vmem:[#allocation2 + $0x98] sm:$0xff] 0.0
    %47 = vst [vmem:[#allocation2 + $0xa0] sm:$0x3] 0.0
    %48 = vst [vmem:[#allocation2 + $0xa8] sm:$0xff] 0.0
    %49 = vst [vmem:[#allocation2 + $0xb0] sm:$0xff] 0.0
    %50 = vst [vmem:[#allocation2 + $0xb8] sm:$0x3] 0.0
    %51 = vst [vmem:[#allocation2 + $0xc0] sm:$0xff] 0.0
    %52 = vst [vmem:[#allocation2 + $0xc8] sm:$0xff] 0.0
    %53 = vst [vmem:[#allocation2 + $0xd0] sm:$0x3] 0.0
    %54 = vst [vmem:[#allocation2 + $0xd8] sm:$0xff] 0.0
    %55 = vst [vmem:[#allocation2 + $0xe0] sm:$0xff] 0.0
    %56 = vst [vmem:[#allocation2 + $0xe8] sm:$0x3] 0.0
    %57 = vst [vmem:[#allocation2 + $0xf0] sm:$0xff] 0.0
    %58 = vst [vmem:[#allocation2 + $0xf8] sm:$0xff] 0.0
    %59 = vst [vmem:[#allocation2 + $0x100] sm:$0x3] 0.0
    %60 = vst [vmem:[#allocation2 + $0x108] sm:$0xff] 0.0
    %61 = vst [vmem:[#allocation2 + $0x110] sm:$0xff] 0.0
    %62 = vst [vmem:[#allocation2 + $0x118] sm:$0x3] 0.0
    %63 = vst [vmem:[#allocation2 + $0x120] sm:$0xff] 0.0
    %64 = vst [vmem:[#allocation2 + $0x128] sm:$0xff] 0.0
    %65 = vst [vmem:[#allocation2 + $0x130] sm:$0x3] 0.0
    %66 = vst [vmem:[#allocation2 + $0x138] sm:$0xff] 0.0
    %67 = vst [vmem:[#allocation2 + $0x140] sm:$0xff] 0.0
    %68 = vst [vmem:[#allocation2 + $0x148] sm:$0x3] 0.0
    %69 = vst [vmem:[#allocation2 + $0x150] sm:$0xff] 0.0
    %70 = vst [vmem:[#allocation2 + $0x158] sm:$0xff] 0.0
    %71 = vst [vmem:[#allocation2 + $0x160] sm:$0x3] 0.0
    %72 = vst [vmem:[#allocation2 + $0x168] sm:$0xff] 0.0
    %73 = vst [vmem:[#allocation2 + $0x170] sm:$0xff] 0.0
    %74 = vst [vmem:[#allocation2 + $0x178] sm:$0x3] 0.0
    %75 = vst [vmem:[#allocation2 + $0x180] sm:$0xff] 0.0
    %76 = vst [vmem:[#allocation2 + $0x188] sm:$0xff] 0.0
    %77 = vst [vmem:[#allocation2 + $0x190] sm:$0x3] 0.0
    %78 = vst [vmem:[#allocation2 + $0x198] sm:$0xff] 0.0
    %79 = vst [vmem:[#allocation2 + $0x1a0] sm:$0xff] 0.0
    %80 = vst [vmem:[#allocation2 + $0x1a8] sm:$0x3] 0.0
    %81 = vst [vmem:[#allocation2 + $0x1b0] sm:$0xff] 0.0
    %82 = vst [vmem:[#allocation2 + $0x1b8] sm:$0xff] 0.0
    %83 = vst [vmem:[#allocation2 + $0x1c0] sm:$0x3] 0.0
    %84 = vst [vmem:[#allocation2 + $0x1c8] sm:$0xff] 0.0
    %85 = vst [vmem:[#allocation2 + $0x1d0] sm:$0xff] 0.0
    %86 = vst [vmem:[#allocation2 + $0x1d8] sm:$0x3] 0.0
    %87 = vst [vmem:[#allocation2 + $0x1e0] sm:$0xff] 0.0
    %88 = vst [vmem:[#allocation2 + $0x1e8] sm:$0xff] 0.0
    %89 = vst [vmem:[#allocation2 + $0x1f0] sm:$0x3] 0.0
    %90 = vst [vmem:[#allocation2 + $0x1f8] sm:$0xff] 0.0
    %91 = vst [vmem:[#allocation2 + $0x200] sm:$0xff] 0.0
    %92 = vst [vmem:[#allocation2 + $0x208] sm:$0x3] 0.0
    %93 = vst [vmem:[#allocation2 + $0x210] sm:$0xff] 0.0
    %94 = vst [vmem:[#allocation2 + $0x218] sm:$0xff] 0.0
    %95 = vst [vmem:[#allocation2 + $0x220] sm:$0x3] 0.0
    %96 = vst [vmem:[#allocation2 + $0x228] sm:$0xff] 0.0
    %97 = vst [vmem:[#allocation2 + $0x230] sm:$0xff] 0.0
    %98 = vst [vmem:[#allocation2 + $0x238] sm:$0x3] 0.0
    %99 = vst [vmem:[#allocation2 + $0x240] sm:$0xff] 0.0
    %100 = vst [vmem:[#allocation2 + $0x248] sm:$0xff] 0.0
    %101 = vst [vmem:[#allocation2 + $0x250] sm:$0x3] 0.0
    %102 = vst [vmem:[#allocation2 + $0x258] sm:$0xff] 0.0
    %103 = vst [vmem:[#allocation2 + $0x260] sm:$0xff] 0.0
    %104 = vst [vmem:[#allocation2 + $0x268] sm:$0x3] 0.0
    %105 = vst [vmem:[#allocation2 + $0x270] sm:$0xff] 0.0
    %106 = vst [vmem:[#allocation2 + $0x278] sm:$0xff] 0.0
    %107 = vst [vmem:[#allocation2 + $0x280] sm:$0x3] 0.0
    %108 = vst [vmem:[#allocation2 + $0x288] sm:$0xff] 0.0
    %109 = vst [vmem:[#allocation2 + $0x290] sm:$0xff] 0.0
    %110 = vst [vmem:[#allocation2 + $0x298] sm:$0x3] 0.0
    %111 = vst [vmem:[#allocation2 + $0x2a0] sm:$0xff] 0.0
    %112 = vst [vmem:[#allocation2 + $0x2a8] sm:$0xff] 0.0
    %113 = vst [vmem:[#allocation2 + $0x2b0] sm:$0x3] 0.0
    %114 = vst [vmem:[#allocation2 + $0x2b8] sm:$0xff] 0.0
    %115 = vst [vmem:[#allocation2 + $0x2c0] sm:$0xff] 0.0
    %116 = vst [vmem:[#allocation2 + $0x2c8] sm:$0x3] 0.0
    %117 = vst [vmem:[#allocation2 + $0x2d0] sm:$0xff] 0.0
    %118 = vst [vmem:[#allocation2 + $0x2d8] sm:$0xff] 0.0
    %119 = vst [vmem:[#allocation2 + $0x2e0] sm:$0x3] 0.0
    %120 = vst [vmem:[#allocation2 + $0x2e8] sm:$0xff] 0.0
    %121 = vst [vmem:[#allocation2 + $0x2f0] sm:$0xff] 0.0
    %122 = vst [vmem:[#allocation2 + $0x2f8] sm:$0x3] 0.0
    %123 = vst [vmem:[#allocation2 + $0x300] sm:$0xff] 0.0
    %124 = vst [vmem:[#allocation2 + $0x308] sm:$0xff] 0.0
    %125 = vst [vmem:[#allocation2 + $0x310] sm:$0x3] 0.0
    %126 = vst [vmem:[#allocation2 + $0x318] sm:$0xff] 0.0
    %127 = vst [vmem:[#allocation2 + $0x320] sm:$0xff] 0.0
    %128 = vst [vmem:[#allocation2 + $0x328] sm:$0x3] 0.0
    %129 = vst [vmem:[#allocation2 + $0x330] sm:$0xff] 0.0
    %130 = vst [vmem:[#allocation2 + $0x338] sm:$0xff] 0.0
    %131 = vst [vmem:[#allocation2 + $0x340] sm:$0x3] 0.0
    %132 = vst [vmem:[#allocation2 + $0x348] sm:$0xff] 0.0
    %133 = vst [vmem:[#allocation2 + $0x350] sm:$0xff] 0.0
    %134 = vst [vmem:[#allocation2 + $0x358] sm:$0x3] 0.0
    %v135 = vld [vmem:[%s0] sm:$0xff]
    %v136 = vld [vmem:[%s0 + $0x8] sm:$0xff]
    %v137 = vld [vmem:[%s0 + $0x10] sm:$0xff]
    %v138 = vld [vmem:[%s0 + $0x18] sm:$0xff]
    %v139 = vld [vmem:[%s0 + $0x20] sm:$0xff]
    %v140 = vld [vmem:[%s0 + $0x28] sm:$0xff]
    %v141 = vld [vmem:[%s0 + $0x30] sm:$0xff]
    %v142 = vld [vmem:[%s0 + $0x38] sm:$0xff]
    %v143 = vld [vmem:[%s0 + $0x40] sm:$0xff]
    %v144 = vld [vmem:[%s0 + $0x48] sm:$0xff]
    %v145 = vld [vmem:[%s0 + $0x50] sm:$0xff]
    %v146 = vld [vmem:[%s0 + $0x58] sm:$0xff]
    %v147 = vld [vmem:[%s0 + $0x60] sm:$0xff]
    %v148 = vld [vmem:[%s0 + $0x68] sm:$0xff]
    %v149 = vld [vmem:[%s0 + $0x70] sm:$0xff]
    %v150 = vld [vmem:[%s0 + $0x78] sm:$0xff]
    %v151 = vld [vmem:[%s0 + $0x80] sm:$0xff]
    %v152 = vld [vmem:[%s0 + $0x88] sm:$0xff]
    %v153 = vld [vmem:[%s0 + $0x90] sm:$0xff]
    %v154 = vld [vmem:[%s0 + $0x98] sm:$0xff]
    %v155 = vld [vmem:[%s0 + $0xa0] sm:$0xff]
    %v156 = vld [vmem:[%s0 + $0xa8] sm:$0xff]
    %v157 = vld [vmem:[%s0 + $0xb0] sm:$0xff]
    %v158 = vld [vmem:[%s0 + $0xb8] sm:$0xff]
    %v159 = vld [vmem:[%s0 + $0xc0] sm:$0xff]
    %v160 = vld [vmem:[%s0 + $0xc8] sm:$0xff]
    %v161 = vld [vmem:[%s0 + $0xd0] sm:$0xff]
    %v162 = vld [vmem:[%s0 + $0xd8] sm:$0xff]
    %v163 = vld [vmem:[%s0 + $0xe0] sm:$0xff]
    %v164 = vld [vmem:[%s0 + $0xe8] sm:$0xff]
    %v165 = vld [vmem:[%s0 + $0xf0] sm:$0xff]
    %v166 = vld [vmem:[%s0 + $0xf8] sm:$0xff]
    %v167 = vld [vmem:[%s0 + $0x100] sm:$0xff]
    %v168 = vld [vmem:[%s0 + $0x108] sm:$0xff]
    %v169 = vld [vmem:[%s0 + $0x110] sm:$0xff]
    %v170 = vld [vmem:[%s0 + $0x118] sm:$0xff]
    %v171 = vld [vmem:[%s0 + $0x120] sm:$0xff]
    %v172 = vld [vmem:[%s0 + $0x128] sm:$0xff]
    %v173 = vld [vmem:[%s0 + $0x130] sm:$0xff]
    %v174 = vld [vmem:[%s0 + $0x138] sm:$0xff]
    %v175 = vld [vmem:[%s0 + $0x140] sm:$0xff]
    %v176 = vld [vmem:[%s0 + $0x148] sm:$0xff]
    %v177 = vld [vmem:[%s0 + $0x150] sm:$0xff]
    %v178 = vld [vmem:[%s0 + $0x158] sm:$0xff]
    %v179 = vld [vmem:[%s0 + $0x160] sm:$0xff]
    %v180 = vld [vmem:[%s0 + $0x168] sm:$0xff]
    %v181 = vld [vmem:[%s0 + $0x170] sm:$0xff]
    %v182 = vld [vmem:[%s0 + $0x178] sm:$0xff]
    %v183 = vld [vmem:[%s0 + $0x180] sm:$0xff]
    %v184 = vld [vmem:[%s0 + $0x188] sm:$0xff]
    %v185 = vld [vmem:[%s0 + $0x190] sm:$0xff]
    %v186 = vld [vmem:[%s0 + $0x198] sm:$0xff]
    %v187 = vld [vmem:[%s0 + $0x1a0] sm:$0xff]
    %v188 = vld [vmem:[%s0 + $0x1a8] sm:$0xff]
    %v189 = vld [vmem:[%s0 + $0x1b0] sm:$0xff]
    %v190 = vld [vmem:[%s0 + $0x1b8] sm:$0xff]
    %v191 = vld [vmem:[%s0 + $0x1c0] sm:$0xff]
    %v192 = vld [vmem:[%s0 + $0x1c8] sm:$0xff]
    %v193 = vld [vmem:[%s0 + $0x1d0] sm:$0xff]
    %v194 = vld [vmem:[%s0 + $0x1d8] sm:$0xff]
    %v195 = vld [vmem:[%s0 + $0x1e0] sm:$0xff]
    %v196 = vld [vmem:[%s0 + $0x1e8] sm:$0xff]
    %v197 = vld [vmem:[%s0 + $0x1f0] sm:$0xff]
    %v198 = vld [vmem:[%s0 + $0x1f8] sm:$0xff]
    %s199 = scalar_lea.vmem [#allocation2], 24
    %200 = vst [vmem:[%s199 + $0x1] sm:$0xff] %v135
    %201 = vst [vmem:[%s199 + $0x9] sm:$0xff] %v136
    %202 = vst [vmem:[%s199 + $0x19] sm:$0xff] %v137
    %203 = vst [vmem:[%s199 + $0x21] sm:$0xff] %v138
    %204 = vst [vmem:[%s199 + $0x31] sm:$0xff] %v139
    %205 = vst [vmem:[%s199 + $0x39] sm:$0xff] %v140
    %206 = vst [vmem:[%s199 + $0x49] sm:$0xff] %v141
    %207 = vst [vmem:[%s199 + $0x51] sm:$0xff] %v142
    %208 = vst [vmem:[%s199 + $0x61] sm:$0xff] %v143
    %209 = vst [vmem:[%s199 + $0x69] sm:$0xff] %v144
    %210 = vst [vmem:[%s199 + $0x79] sm:$0xff] %v145
    %211 = vst [vmem:[%s199 + $0x81] sm:$0xff] %v146
    %212 = vst [vmem:[%s199 + $0x91] sm:$0xff] %v147
    %213 = vst [vmem:[%s199 + $0x99] sm:$0xff] %v148
    %214 = vst [vmem:[%s199 + $0xa9] sm:$0xff] %v149
    %215 = vst [vmem:[%s199 + $0xb1] sm:$0xff] %v150
    %216 = vst [vmem:[%s199 + $0xc1] sm:$0xff] %v151
    %217 = vst [vmem:[%s199 + $0xc9] sm:$0xff] %v152
    %218 = vst [vmem:[%s199 + $0xd9] sm:$0xff] %v153
    %219 = vst [vmem:[%s199 + $0xe1] sm:$0xff] %v154
    %220 = vst [vmem:[%s199 + $0xf1] sm:$0xff] %v155
    %221 = vst [vmem:[%s199 + $0xf9] sm:$0xff] %v156
    %222 = vst [vmem:[%s199 + $0x109] sm:$0xff] %v157
    %223 = vst [vmem:[%s199 + $0x111] sm:$0xff] %v158
    %224 = vst [vmem:[%s199 + $0x121] sm:$0xff] %v159
    %225 = vst [vmem:[%s199 + $0x129] sm:$0xff] %v160
    %226 = vst [vmem:[%s199 + $0x139] sm:$0xff] %v161
    %227 = vst [vmem:[%s199 + $0x141] sm:$0xff] %v162
    %228 = vst [vmem:[%s199 + $0x151] sm:$0xff] %v163
    %229 = vst [vmem:[%s199 + $0x159] sm:$0xff] %v164
    %230 = vst [vmem:[%s199 + $0x169] sm:$0xff] %v165
    %231 = vst [vmem:[%s199 + $0x171] sm:$0xff] %v166
    %232 = vst [vmem:[%s199 + $0x1b1] sm:$0xff] %v167
    %233 = vst [vmem:[%s199 + $0x1b9] sm:$0xff] %v168
    %234 = vst [vmem:[%s199 + $0x1c9] sm:$0xff] %v169
    %235 = vst [vmem:[%s199 + $0x1d1] sm:$0xff] %v170
    %236 = vst [vmem:[%s199 + $0x1e1] sm:$0xff] %v171
    %237 = vst [vmem:[%s199 + $0x1e9] sm:$0xff] %v172
    %238 = vst [vmem:[%s199 + $0x1f9] sm:$0xff] %v173
    %239 = vst [vmem:[%s199 + $0x201] sm:$0xff] %v174
    %240 = vst [vmem:[%s199 + $0x211] sm:$0xff] %v175
    %241 = vst [vmem:[%s199 + $0x219] sm:$0xff] %v176
    %242 = vst [vmem:[%s199 + $0x229] sm:$0xff] %v177
    %243 = vst [vmem:[%s199 + $0x231] sm:$0xff] %v178
    %244 = vst [vmem:[%s199 + $0x241] sm:$0xff] %v179
    %245 = vst [vmem:[%s199 + $0x249] sm:$0xff] %v180
    %246 = vst [vmem:[%s199 + $0x259] sm:$0xff] %v181
    %247 = vst [vmem:[%s199 + $0x261] sm:$0xff] %v182
    %248 = vst [vmem:[%s199 + $0x271] sm:$0xff] %v183
    %249 = vst [vmem:[%s199 + $0x279] sm:$0xff] %v184
    %250 = vst [vmem:[%s199 + $0x289] sm:$0xff] %v185
    %251 = vst [vmem:[%s199 + $0x291] sm:$0xff] %v186
    %252 = vst [vmem:[%s199 + $0x2a1] sm:$0xff] %v187
    %253 = vst [vmem:[%s199 + $0x2a9] sm:$0xff] %v188
    %254 = vst [vmem:[%s199 + $0x2b9] sm:$0xff] %v189
    %255 = vst [vmem:[%s199 + $0x2c1] sm:$0xff] %v190
    %256 = vst [vmem:[%s199 + $0x2d1] sm:$0xff] %v191
    %257 = vst [vmem:[%s199 + $0x2d9] sm:$0xff] %v192
    %258 = vst [vmem:[%s199 + $0x2e9] sm:$0xff] %v193
    %259 = vst [vmem:[%s199 + $0x2f1] sm:$0xff] %v194
    %260 = vst [vmem:[%s199 + $0x301] sm:$0xff] %v195
    %261 = vst [vmem:[%s199 + $0x309] sm:$0xff] %v196
    %262 = vst [vmem:[%s199 + $0x319] sm:$0xff] %v197
    %263 = vst [vmem:[%s199 + $0x321] sm:$0xff] %v198
    %v264 = vld [vmem:[#allocation2] sm:$0xff]
    %v265 = vld [vmem:[#allocation2 + $0x8] sm:$0xff]
    %v266 = vld [vmem:[#allocation2 + $0x18] sm:$0xff]
    %v267 = vld [vmem:[#allocation2 + $0x20] sm:$0xff]
    %v268 = vld [vmem:[#allocation2 + $0x30] sm:$0xff]
    %v269 = vld [vmem:[#allocation2 + $0x38] sm:$0xff]
    %v270 = vld [vmem:[#allocation2 + $0x48] sm:$0xff]
    %v271 = vld [vmem:[#allocation2 + $0x50] sm:$0xff]
    %v272 = vld [vmem:[#allocation2 + $0x60] sm:$0xff]
    %v273 = vld [vmem:[#allocation2 + $0x68] sm:$0xff]
    %v274 = vld [vmem:[#allocation2 + $0x78] sm:$0xff]
    %v275 = vld [vmem:[#allocation2 + $0x80] sm:$0xff]
    %v276 = vld [vmem:[#allocation2 + $0x90] sm:$0xff]
    %v277 = vld [vmem:[#allocation2 + $0x98] sm:$0xff]
    %v278 = vld [vmem:[#allocation2 + $0xa8] sm:$0xff]
    %v279 = vld [vmem:[#allocation2 + $0xb0] sm:$0xff]
    %v280 = vld [vmem:[#allocation2 + $0xc0] sm:$0xff]
    %v281 = vld [vmem:[#allocation2 + $0xc8] sm:$0xff]
    %v282 = vld [vmem:[#allocation2 + $0xd8] sm:$0xff]
    %v283 = vld [vmem:[#allocation2 + $0xe0] sm:$0xff]
    %v284 = vld [vmem:[#allocation2 + $0xf0] sm:$0xff]
    %v285 = vld [vmem:[#allocation2 + $0xf8] sm:$0xff]
    %v286 = vld [vmem:[#allocation2 + $0x108] sm:$0xff]
    %v287 = vld [vmem:[#allocation2 + $0x110] sm:$0xff]
    %v288 = vld [vmem:[#allocation2 + $0x120] sm:$0xff]
    %v289 = vld [vmem:[#allocation2 + $0x128] sm:$0xff]
    %v290 = vld [vmem:[#allocation2 + $0x138] sm:$0xff]
    %v291 = vld [vmem:[#allocation2 + $0x140] sm:$0xff]
    %v292 = vld [vmem:[#allocation2 + $0x150] sm:$0xff]
    %v293 = vld [vmem:[#allocation2 + $0x158] sm:$0xff]
    %v294 = vld [vmem:[#allocation2 + $0x168] sm:$0xff]
    %v295 = vld [vmem:[#allocation2 + $0x170] sm:$0xff]
    %v296 = vld [vmem:[#allocation2 + $0x1b0] sm:$0xff]
    %v297 = vld [vmem:[#allocation2 + $0x1b8] sm:$0xff]
    %v298 = vld [vmem:[#allocation2 + $0x1c8] sm:$0xff]
    %v299 = vld [vmem:[#allocation2 + $0x1d0] sm:$0xff]
    %v300 = vld [vmem:[#allocation2 + $0x1e0] sm:$0xff]
    %v301 = vld [vmem:[#allocation2 + $0x1e8] sm:$0xff]
    %v302 = vld [vmem:[#allocation2 + $0x1f8] sm:$0xff]
    %v303 = vld [vmem:[#allocation2 + $0x200] sm:$0xff]
    %v304 = vld [vmem:[#allocation2 + $0x210] sm:$0xff]
    %v305 = vld [vmem:[#allocation2 + $0x218] sm:$0xff]
    %v306 = vld [vmem:[#allocation2 + $0x228] sm:$0xff]
    %v307 = vld [vmem:[#allocation2 + $0x230] sm:$0xff]
    %v308 = vld [vmem:[#allocation2 + $0x240] sm:$0xff]
    %v309 = vld [vmem:[#allocation2 + $0x248] sm:$0xff]
    %v310 = vld [vmem:[#allocation2 + $0x258] sm:$0xff]
    %v311 = vld [vmem:[#allocation2 + $0x260] sm:$0xff]
    %v312 = vld [vmem:[#allocation2 + $0x270] sm:$0xff]
    %v313 = vld [vmem:[#allocation2 + $0x278] sm:$0xff]
    %v314 = vld [vmem:[#allocation2 + $0x288] sm:$0xff]
    %v315 = vld [vmem:[#allocation2 + $0x290] sm:$0xff]
    %v316 = vld [vmem:[#allocation2 + $0x2a0] sm:$0xff]
    %v317 = vld [vmem:[#allocation2 + $0x2a8] sm:$0xff]
    %v318 = vld [vmem:[#allocation2 + $0x2b8] sm:$0xff]
    %v319 = vld [vmem:[#allocation2 + $0x2c0] sm:$0xff]
    %v320 = vld [vmem:[#allocation2 + $0x2d0] sm:$0xff]
    %v321 = vld [vmem:[#allocation2 + $0x2d8] sm:$0xff]
    %v322 = vld [vmem:[#allocation2 + $0x2e8] sm:$0xff]
    %v323 = vld [vmem:[#allocation2 + $0x2f0] sm:$0xff]
    %v324 = vld [vmem:[#allocation2 + $0x300] sm:$0xff]
    %v325 = vld [vmem:[#allocation2 + $0x308] sm:$0xff]
    %v326 = vld [vmem:[#allocation2 + $0x318] sm:$0xff]
    %v327 = vld [vmem:[#allocation2 + $0x320] sm:$0xff]
    %v328 = vpack.c.bf16 %v265, %v264
    %v329 = vpack.c.bf16 %v267, %v266
    %v330 = vpack.c.bf16 %v269, %v268
    %v331 = vpack.c.bf16 %v271, %v270
    %v332 = vpack.c.bf16 %v273, %v272
    %v333 = vpack.c.bf16 %v275, %v274
    %v334 = vpack.c.bf16 %v277, %v276
    %v335 = vpack.c.bf16 %v279, %v278
    %v336 = vpack.c.bf16 %v281, %v280
    %v337 = vpack.c.bf16 %v283, %v282
    %v338 = vpack.c.bf16 %v285, %v284
    %v339 = vpack.c.bf16 %v287, %v286
    %v340 = vpack.c.bf16 %v289, %v288
    %v341 = vpack.c.bf16 %v291, %v290
    %v342 = vpack.c.bf16 %v293, %v292
    %v343 = vpack.c.bf16 %v295, %v294
    %v344 = vpack.c.bf16 %v297, %v296
    %v345 = vpack.c.bf16 %v299, %v298
    %v346 = vpack.c.bf16 %v301, %v300
    %v347 = vpack.c.bf16 %v303, %v302
    %v348 = vpack.c.bf16 %v305, %v304
    %v349 = vpack.c.bf16 %v307, %v306
    %v350 = vpack.c.bf16 %v309, %v308
    %v351 = vpack.c.bf16 %v311, %v310
    %v352 = vpack.c.bf16 %v313, %v312
    %v353 = vpack.c.bf16 %v315, %v314
    %v354 = vpack.c.bf16 %v317, %v316
    %v355 = vpack.c.bf16 %v319, %v318
    %v356 = vpack.c.bf16 %v321, %v320
    %v357 = vpack.c.bf16 %v323, %v322
    %v358 = vpack.c.bf16 %v325, %v324
    %v359 = vpack.c.bf16 %v327, %v326
    %v360 = vld [vmem:[%s1] sm:$0xf]
    %v361 = vld [vmem:[%s1 + $0x4] sm:$0xf]
    %v362 = vld [vmem:[%s1 + $0x8] sm:$0xf]
    %v363 = vld [vmem:[%s1 + $0xc] sm:$0xf]
    %v364 = vld [vmem:[%s1 + $0x10] sm:$0xf]
    %v365 = vld [vmem:[%s1 + $0x14] sm:$0xf]
    %v366 = vld [vmem:[%s1 + $0x18] sm:$0xf]
    %v367 = vld [vmem:[%s1 + $0x1c] sm:$0xf]
    %v368 = vld [vmem:[%s1 + $0x20] sm:$0xf]
    %v369 = vld [vmem:[%s1 + $0x24] sm:$0xf]
    %v370 = vld [vmem:[%s1 + $0x28] sm:$0xf]
    %v371 = vld [vmem:[%s1 + $0x2c] sm:$0xf]
    %v372 = vld [vmem:[%s1 + $0x30] sm:$0xf]
    %v373 = vld [vmem:[%s1 + $0x34] sm:$0xf]
    %v374 = vld [vmem:[%s1 + $0x38] sm:$0xf]
    %v375 = vld [vmem:[%s1 + $0x3c] sm:$0xf]
    %v376 = vld [vmem:[#allocation2 + $0x1] sm:$0xff]
    %v377 = vld [vmem:[#allocation2 + $0x9] sm:$0xff]
    %v378 = vld [vmem:[#allocation2 + $0x19] sm:$0xff]
    %v379 = vld [vmem:[#allocation2 + $0x21] sm:$0xff]
    %v380 = vld [vmem:[#allocation2 + $0x31] sm:$0xff]
    %v381 = vld [vmem:[#allocation2 + $0x39] sm:$0xff]
    %v382 = vld [vmem:[#allocation2 + $0x49] sm:$0xff]
    %v383 = vld [vmem:[#allocation2 + $0x51] sm:$0xff]
    %v384 = vld [vmem:[#allocation2 + $0x61] sm:$0xff]
    %v385 = vld [vmem:[#allocation2 + $0x69] sm:$0xff]
    %v386 = vld [vmem:[#allocation2 + $0x79] sm:$0xff]
    %v387 = vld [vmem:[#allocation2 + $0x81] sm:$0xff]
    %v388 = vld [vmem:[#allocation2 + $0x91] sm:$0xff]
    %v389 = vld [vmem:[#allocation2 + $0x99] sm:$0xff]
    %v390 = vld [vmem:[#allocation2 + $0xa9] sm:$0xff]
    %v391 = vld [vmem:[#allocation2 + $0xb1] sm:$0xff]
    %v392 = vld [vmem:[#allocation2 + $0xc1] sm:$0xff]
    %v393 = vld [vmem:[#allocation2 + $0xc9] sm:$0xff]
    %v394 = vld [vmem:[#allocation2 + $0xd9] sm:$0xff]
    %v395 = vld [vmem:[#allocation2 + $0xe1] sm:$0xff]
    %v396 = vld [vmem:[#allocation2 + $0xf1] sm:$0xff]
    %v397 = vld [vmem:[#allocation2 + $0xf9] sm:$0xff]
    %v398 = vld [vmem:[#allocation2 + $0x109] sm:$0xff]
    %v399 = vld [vmem:[#allocation2 + $0x111] sm:$0xff]
    %v400 = vld [vmem:[#allocation2 + $0x121] sm:$0xff]
    %v401 = vld [vmem:[#allocation2 + $0x129] sm:$0xff]
    %v402 = vld [vmem:[#allocation2 + $0x139] sm:$0xff]
    %v403 = vld [vmem:[#allocation2 + $0x141] sm:$0xff]
    %v404 = vld [vmem:[#allocation2 + $0x151] sm:$0xff]
    %v405 = vld [vmem:[#allocation2 + $0x159] sm:$0xff]
    %v406 = vld [vmem:[#allocation2 + $0x169] sm:$0xff]
    %v407 = vld [vmem:[#allocation2 + $0x171] sm:$0xff]
    %v408 = vld [vmem:[#allocation2 + $0x1b1] sm:$0xff]
    %v409 = vld [vmem:[#allocation2 + $0x1b9] sm:$0xff]
    %v410 = vld [vmem:[#allocation2 + $0x1c9] sm:$0xff]
    %v411 = vld [vmem:[#allocation2 + $0x1d1] sm:$0xff]
    %v412 = vld [vmem:[#allocation2 + $0x1e1] sm:$0xff]
    %v413 = vld [vmem:[#allocation2 + $0x1e9] sm:$0xff]
    %v414 = vld [vmem:[#allocation2 + $0x1f9] sm:$0xff]
    %v415 = vld [vmem:[#allocation2 + $0x201] sm:$0xff]
    %v416 = vld [vmem:[#allocation2 + $0x211] sm:$0xff]
    %v417 = vld [vmem:[#allocation2 + $0x219] sm:$0xff]
    %v418 = vld [vmem:[#allocation2 + $0x229] sm:$0xff]
    %v419 = vld [vmem:[#allocation2 + $0x231] sm:$0xff]
    %v420 = vld [vmem:[#allocation2 + $0x241] sm:$0xff]
    %v421 = vld [vmem:[#allocation2 + $0x249] sm:$0xff]
    %v422 = vld [vmem:[#allocation2 + $0x259] sm:$0xff]
    %v423 = vld [vmem:[#allocation2 + $0x261] sm:$0xff]
    %v424 = vld [vmem:[#allocation2 + $0x271] sm:$0xff]
    %v425 = vld [vmem:[#allocation2 + $0x279] sm:$0xff]
    %v426 = vld [vmem:[#allocation2 + $0x289] sm:$0xff]
    %v427 = vld [vmem:[#allocation2 + $0x291] sm:$0xff]
    %v428 = vld [vmem:[#allocation2 + $0x2a1] sm:$0xff]
    %v429 = vld [vmem:[#allocation2 + $0x2a9] sm:$0xff]
    %v430 = vld [vmem:[#allocation2 + $0x2b9] sm:$0xff]
    %v431 = vld [vmem:[#allocation2 + $0x2c1] sm:$0xff]
    %v432 = vld [vmem:[#allocation2 + $0x2d1] sm:$0xff]
    %v433 = vld [vmem:[#allocation2 + $0x2d9] sm:$0xff]
    %v434 = vld [vmem:[#allocation2 + $0x2e9] sm:$0xff]
    %v435 = vld [vmem:[#allocation2 + $0x2f1] sm:$0xff]
    %v436 = vld [vmem:[#allocation2 + $0x301] sm:$0xff]
    %v437 = vld [vmem:[#allocation2 + $0x309] sm:$0xff]
    %v438 = vld [vmem:[#allocation2 + $0x319] sm:$0xff]
    %v439 = vld [vmem:[#allocation2 + $0x321] sm:$0xff]
    %v440 = vpack.c.bf16 %v377, %v376
    %v441 = vpack.c.bf16 %v379, %v378
    %v442 = vpack.c.bf16 %v381, %v380
    %v443 = vpack.c.bf16 %v383, %v382
    %v444 = vpack.c.bf16 %v385, %v384
    %v445 = vpack.c.bf16 %v387, %v386
    %v446 = vpack.c.bf16 %v389, %v388
    %v447 = vpack.c.bf16 %v391, %v390
    %v448 = vpack.c.bf16 %v393, %v392
    %v449 = vpack.c.bf16 %v395, %v394
    %v450 = vpack.c.bf16 %v397, %v396
    %v451 = vpack.c.bf16 %v399, %v398
    %v452 = vpack.c.bf16 %v401, %v400
    %v453 = vpack.c.bf16 %v403, %v402
    %v454 = vpack.c.bf16 %v405, %v404
    %v455 = vpack.c.bf16 %v407, %v406
    %v456 = vpack.c.bf16 %v409, %v408
    %v457 = vpack.c.bf16 %v411, %v410
    %v458 = vpack.c.bf16 %v413, %v412
    %v459 = vpack.c.bf16 %v415, %v414
    %v460 = vpack.c.bf16 %v417, %v416
    %v461 = vpack.c.bf16 %v419, %v418
    %v462 = vpack.c.bf16 %v421, %v420
    %v463 = vpack.c.bf16 %v423, %v422
    %v464 = vpack.c.bf16 %v425, %v424
    %v465 = vpack.c.bf16 %v427, %v426
    %v466 = vpack.c.bf16 %v429, %v428
    %v467 = vpack.c.bf16 %v431, %v430
    %v468 = vpack.c.bf16 %v433, %v432
    %v469 = vpack.c.bf16 %v435, %v434
    %v470 = vpack.c.bf16 %v437, %v436
    %v471 = vpack.c.bf16 %v439, %v438
    %s472 = scalar_lea.vmem %s1, 64
    %v473 = vld [vmem:[%s472] sm:$0xf]
    %v474 = vld [vmem:[%s472 + $0x4] sm:$0xf]
    %v475 = vld [vmem:[%s472 + $0x8] sm:$0xf]
    %v476 = vld [vmem:[%s472 + $0xc] sm:$0xf]
    %v477 = vld [vmem:[%s472 + $0x10] sm:$0xf]
    %v478 = vld [vmem:[%s472 + $0x14] sm:$0xf]
    %v479 = vld [vmem:[%s472 + $0x18] sm:$0xf]
    %v480 = vld [vmem:[%s472 + $0x1c] sm:$0xf]
    %v481 = vld [vmem:[%s472 + $0x20] sm:$0xf]
    %v482 = vld [vmem:[%s472 + $0x24] sm:$0xf]
    %v483 = vld [vmem:[%s472 + $0x28] sm:$0xf]
    %v484 = vld [vmem:[%s472 + $0x2c] sm:$0xf]
    %v485 = vld [vmem:[%s472 + $0x30] sm:$0xf]
    %v486 = vld [vmem:[%s472 + $0x34] sm:$0xf]
    %v487 = vld [vmem:[%s472 + $0x38] sm:$0xf]
    %v488 = vld [vmem:[%s472 + $0x3c] sm:$0xf]
    %v505 = vunpack.c.l.b16 %v473
    %v506 = vunpack.c.l.b16 %v474
    %v507 = vunpack.c.l.b16 %v475
    %v508 = vunpack.c.l.b16 %v476
    %v509 = vunpack.c.l.b16 %v477
    %v510 = vunpack.c.l.b16 %v478
    %v511 = vunpack.c.l.b16 %v479
    %v512 = vunpack.c.l.b16 %v480
    %v513 = vunpack.c.l.b16 %v481
    %v514 = vunpack.c.l.b16 %v482
    %v515 = vunpack.c.l.b16 %v483
    %v516 = vunpack.c.l.b16 %v484
    %v517 = vunpack.c.l.b16 %v485
    %v518 = vunpack.c.l.b16 %v486
    %v519 = vunpack.c.l.b16 %v487
    %v520 = vunpack.c.l.b16 %v488
    %v521 = vpack.c.b16 %v506, %v505
    %v522 = vpack.c.b16 %v508, %v507
    %v523 = vpack.c.b16 %v510, %v509
    %v524 = vpack.c.b16 %v512, %v511
    %v525 = vpack.c.b16 %v514, %v513
    %v526 = vpack.c.b16 %v516, %v515
    %v527 = vpack.c.b16 %v518, %v517
    %v528 = vpack.c.b16 %v520, %v519
    %537 = vmatpush.bf16.msra.mxu0 %v528
    %538 = vmatpush.bf16.msra.mxu0 %v527
    %539 = vmatpush.bf16.msra.mxu0 %v526
    %540 = vmatpush.bf16.msra.mxu0 %v525
    %541 = vmatpush.bf16.msra.mxu0 %v524
    %542 = vmatpush.bf16.msra.mxu0 %v523
    %543 = vmatpush.bf16.msra.mxu0 %v522
    %544 = vmatpush.bf16.msra.mxu0 %v521
    %545 = vmatmul.bf16.gmra.mxu0 %v440
    %v546 = vpop.f32.mrf.mxu0
    %v547 = vadd.f32 0.0, %v546
    %v548 = vpop.f32.mrf.mxu0
    %v549 = vadd.f32 0.0, %v548
    %550 = vmatmul.bf16.gmra.mxu0 %v441
    %v551 = vpop.f32.mrf.mxu0
    %v552 = vadd.f32 0.0, %v551
    %v553 = vpop.f32.mrf.mxu0
    %v554 = vadd.f32 0.0, %v553
    %555 = vmatmul.bf16.gmra.mxu0 %v442
    %v556 = vpop.f32.mrf.mxu0
    %v557 = vadd.f32 0.0, %v556
    %v558 = vpop.f32.mrf.mxu0
    %v559 = vadd.f32 0.0, %v558
    %560 = vmatmul.bf16.gmra.mxu0 %v443
    %v561 = vpop.f32.mrf.mxu0
    %v562 = vadd.f32 0.0, %v561
    %v563 = vpop.f32.mrf.mxu0
    %v564 = vadd.f32 0.0, %v563
    %565 = vmatmul.bf16.gmra.mxu0 %v444
    %v566 = vpop.f32.mrf.mxu0
    %v567 = vadd.f32 0.0, %v566
    %v568 = vpop.f32.mrf.mxu0
    %v569 = vadd.f32 0.0, %v568
    %570 = vmatmul.bf16.gmra.mxu0 %v445
    %v571 = vpop.f32.mrf.mxu0
    %v572 = vadd.f32 0.0, %v571
    %v573 = vpop.f32.mrf.mxu0
    %v574 = vadd.f32 0.0, %v573
    %575 = vmatmul.bf16.gmra.mxu0 %v446
    %v576 = vpop.f32.mrf.mxu0
    %v577 = vadd.f32 0.0, %v576
    %v578 = vpop.f32.mrf.mxu0
    %v579 = vadd.f32 0.0, %v578
    %580 = vmatmul.bf16.gmra.mxu0 %v447
    %v581 = vpop.f32.mrf.mxu0
    %v582 = vadd.f32 0.0, %v581
    %v583 = vpop.f32.mrf.mxu0
    %v584 = vadd.f32 0.0, %v583
    %585 = vmatmul.bf16.gmra.mxu0 %v448
    %v586 = vpop.f32.mrf.mxu0
    %v587 = vadd.f32 0.0, %v586
    %v588 = vpop.f32.mrf.mxu0
    %v589 = vadd.f32 0.0, %v588
    %590 = vmatmul.bf16.gmra.mxu0 %v449
    %v591 = vpop.f32.mrf.mxu0
    %v592 = vadd.f32 0.0, %v591
    %v593 = vpop.f32.mrf.mxu0
    %v594 = vadd.f32 0.0, %v593
    %595 = vmatmul.bf16.gmra.mxu0 %v450
    %v596 = vpop.f32.mrf.mxu0
    %v597 = vadd.f32 0.0, %v596
    %v598 = vpop.f32.mrf.mxu0
    %v599 = vadd.f32 0.0, %v598
    %600 = vmatmul.bf16.gmra.mxu0 %v451
    %v601 = vpop.f32.mrf.mxu0
    %v602 = vadd.f32 0.0, %v601
    %v603 = vpop.f32.mrf.mxu0
    %v604 = vadd.f32 0.0, %v603
    %605 = vmatmul.bf16.gmra.mxu0 %v452
    %v606 = vpop.f32.mrf.mxu0
    %v607 = vadd.f32 0.0, %v606
    %v608 = vpop.f32.mrf.mxu0
    %v609 = vadd.f32 0.0, %v608
    %610 = vmatmul.bf16.gmra.mxu0 %v453
    %v611 = vpop.f32.mrf.mxu0
    %v612 = vadd.f32 0.0, %v611
    %v613 = vpop.f32.mrf.mxu0
    %v614 = vadd.f32 0.0, %v613
    %615 = vmatmul.bf16.gmra.mxu0 %v454
    %v616 = vpop.f32.mrf.mxu0
    %v617 = vadd.f32 0.0, %v616
    %v618 = vpop.f32.mrf.mxu0
    %v619 = vadd.f32 0.0, %v618
    %620 = vmatmul.bf16.gmra.mxu0 %v455
    %v621 = vpop.f32.mrf.mxu0
    %v622 = vadd.f32 0.0, %v621
    %v623 = vpop.f32.mrf.mxu0
    %v624 = vadd.f32 0.0, %v623
    %625 = vmatmul.bf16.gmra.mxu0 %v456
    %v626 = vpop.f32.mrf.mxu0
    %v627 = vadd.f32 0.0, %v626
    %v628 = vpop.f32.mrf.mxu0
    %v629 = vadd.f32 0.0, %v628
    %630 = vmatmul.bf16.gmra.mxu0 %v457
    %v631 = vpop.f32.mrf.mxu0
    %v632 = vadd.f32 0.0, %v631
    %v633 = vpop.f32.mrf.mxu0
    %v634 = vadd.f32 0.0, %v633
    %635 = vmatmul.bf16.gmra.mxu0 %v458
    %v636 = vpop.f32.mrf.mxu0
    %v637 = vadd.f32 0.0, %v636
    %v638 = vpop.f32.mrf.mxu0
    %v639 = vadd.f32 0.0, %v638
    %640 = vmatmul.bf16.gmra.mxu0 %v459
    %v641 = vpop.f32.mrf.mxu0
    %v642 = vadd.f32 0.0, %v641
    %v643 = vpop.f32.mrf.mxu0
    %v644 = vadd.f32 0.0, %v643
    %645 = vmatmul.bf16.gmra.mxu0 %v460
    %v646 = vpop.f32.mrf.mxu0
    %v647 = vadd.f32 0.0, %v646
    %v648 = vpop.f32.mrf.mxu0
    %v649 = vadd.f32 0.0, %v648
    %650 = vmatmul.bf16.gmra.mxu0 %v461
    %v651 = vpop.f32.mrf.mxu0
    %v652 = vadd.f32 0.0, %v651
    %v653 = vpop.f32.mrf.mxu0
    %v654 = vadd.f32 0.0, %v653
    %655 = vmatmul.bf16.gmra.mxu0 %v462
    %v656 = vpop.f32.mrf.mxu0
    %v657 = vadd.f32 0.0, %v656
    %v658 = vpop.f32.mrf.mxu0
    %v659 = vadd.f32 0.0, %v658
    %660 = vmatmul.bf16.gmra.mxu0 %v463
    %v661 = vpop.f32.mrf.mxu0
    %v662 = vadd.f32 0.0, %v661
    %v663 = vpop.f32.mrf.mxu0
    %v664 = vadd.f32 0.0, %v663
    %665 = vmatmul.bf16.gmra.mxu0 %v464
    %v666 = vpop.f32.mrf.mxu0
    %v667 = vadd.f32 0.0, %v666
    %v668 = vpop.f32.mrf.mxu0
    %v669 = vadd.f32 0.0, %v668
    %670 = vmatmul.bf16.gmra.mxu0 %v465
    %v671 = vpop.f32.mrf.mxu0
    %v672 = vadd.f32 0.0, %v671
    %v673 = vpop.f32.mrf.mxu0
    %v674 = vadd.f32 0.0, %v673
    %675 = vmatmul.bf16.gmra.mxu0 %v466
    %v676 = vpop.f32.mrf.mxu0
    %v677 = vadd.f32 0.0, %v676
    %v678 = vpop.f32.mrf.mxu0
    %v679 = vadd.f32 0.0, %v678
    %680 = vmatmul.bf16.gmra.mxu0 %v467
    %v681 = vpop.f32.mrf.mxu0
    %v682 = vadd.f32 0.0, %v681
    %v683 = vpop.f32.mrf.mxu0
    %v684 = vadd.f32 0.0, %v683
    %685 = vmatmul.bf16.gmra.mxu0 %v468
    %v686 = vpop.f32.mrf.mxu0
    %v687 = vadd.f32 0.0, %v686
    %v688 = vpop.f32.mrf.mxu0
    %v689 = vadd.f32 0.0, %v688
    %690 = vmatmul.bf16.gmra.mxu0 %v469
    %v691 = vpop.f32.mrf.mxu0
    %v692 = vadd.f32 0.0, %v691
    %v693 = vpop.f32.mrf.mxu0
    %v694 = vadd.f32 0.0, %v693
    %695 = vmatmul.bf16.gmra.mxu0 %v470
    %v696 = vpop.f32.mrf.mxu0
    %v697 = vadd.f32 0.0, %v696
    %v698 = vpop.f32.mrf.mxu0
    %v699 = vadd.f32 0.0, %v698
    %700 = vmatmul.bf16.gmra.mxu0 %v471
    %v701 = vpop.f32.mrf.mxu0
    %v702 = vadd.f32 0.0, %v701
    %v703 = vpop.f32.mrf.mxu0
    %v704 = vadd.f32 0.0, %v703
    %705 = vdwg.mxu0
    %v722 = vunpack.c.l.b16 %v360
    %v723 = vunpack.c.l.b16 %v361
    %v724 = vunpack.c.l.b16 %v362
    %v725 = vunpack.c.l.b16 %v363
    %v726 = vunpack.c.l.b16 %v364
    %v727 = vunpack.c.l.b16 %v365
    %v728 = vunpack.c.l.b16 %v366
    %v729 = vunpack.c.l.b16 %v367
    %v730 = vunpack.c.l.b16 %v368
    %v731 = vunpack.c.l.b16 %v369
    %v732 = vunpack.c.l.b16 %v370
    %v733 = vunpack.c.l.b16 %v371
    %v734 = vunpack.c.l.b16 %v372
    %v735 = vunpack.c.l.b16 %v373
    %v736 = vunpack.c.l.b16 %v374
    %v737 = vunpack.c.l.b16 %v375
    %v738 = vpack.c.b16 %v723, %v722
    %v739 = vpack.c.b16 %v725, %v724
    %v740 = vpack.c.b16 %v727, %v726
    %v741 = vpack.c.b16 %v729, %v728
    %v742 = vpack.c.b16 %v731, %v730
    %v743 = vpack.c.b16 %v733, %v732
    %v744 = vpack.c.b16 %v735, %v734
    %v745 = vpack.c.b16 %v737, %v736
    %754 = vmatpush.bf16.msra.mxu0 %v745
    %755 = vmatpush.bf16.msra.mxu0 %v744
    %756 = vmatpush.bf16.msra.mxu0 %v743
    %757 = vmatpush.bf16.msra.mxu0 %v742
    %758 = vmatpush.bf16.msra.mxu0 %v741
    %759 = vmatpush.bf16.msra.mxu0 %v740
    %760 = vmatpush.bf16.msra.mxu0 %v739
    %761 = vmatpush.bf16.msra.mxu0 %v738
    %762 = vmatmul.bf16.gmra.mxu0 %v328
    %v763 = vpop.f32.mrf.mxu0
    %v764 = vadd.f32 %v547, %v763
    %v765 = vpop.f32.mrf.mxu0
    %v766 = vadd.f32 %v549, %v765
    %767 = vmatmul.bf16.gmra.mxu0 %v329
    %v768 = vpop.f32.mrf.mxu0
    %v769 = vadd.f32 %v552, %v768
    %v770 = vpop.f32.mrf.mxu0
    %v771 = vadd.f32 %v554, %v770
    %772 = vmatmul.bf16.gmra.mxu0 %v330
    %v773 = vpop.f32.mrf.mxu0
    %v774 = vadd.f32 %v557, %v773
    %v775 = vpop.f32.mrf.mxu0
    %v776 = vadd.f32 %v559, %v775
    %777 = vmatmul.bf16.gmra.mxu0 %v331
    %v778 = vpop.f32.mrf.mxu0
    %v779 = vadd.f32 %v562, %v778
    %v780 = vpop.f32.mrf.mxu0
    %v781 = vadd.f32 %v564, %v780
    %782 = vmatmul.bf16.gmra.mxu0 %v332
    %v783 = vpop.f32.mrf.mxu0
    %v784 = vadd.f32 %v567, %v783
    %v785 = vpop.f32.mrf.mxu0
    %v786 = vadd.f32 %v569, %v785
    %787 = vmatmul.bf16.gmra.mxu0 %v333
    %v788 = vpop.f32.mrf.mxu0
    %v789 = vadd.f32 %v572, %v788
    %v790 = vpop.f32.mrf.mxu0
    %v791 = vadd.f32 %v574, %v790
    %792 = vmatmul.bf16.gmra.mxu0 %v334
    %v793 = vpop.f32.mrf.mxu0
    %v794 = vadd.f32 %v577, %v793
    %v795 = vpop.f32.mrf.mxu0
    %v796 = vadd.f32 %v579, %v795
    %797 = vmatmul.bf16.gmra.mxu0 %v335
    %v798 = vpop.f32.mrf.mxu0
    %v799 = vadd.f32 %v582, %v798
    %v800 = vpop.f32.mrf.mxu0
    %v801 = vadd.f32 %v584, %v800
    %802 = vmatmul.bf16.gmra.mxu0 %v336
    %v803 = vpop.f32.mrf.mxu0
    %v804 = vadd.f32 %v587, %v803
    %v805 = vpop.f32.mrf.mxu0
    %v806 = vadd.f32 %v589, %v805
    %807 = vmatmul.bf16.gmra.mxu0 %v337
    %v808 = vpop.f32.mrf.mxu0
    %v809 = vadd.f32 %v592, %v808
    %v810 = vpop.f32.mrf.mxu0
    %v811 = vadd.f32 %v594, %v810
    %812 = vmatmul.bf16.gmra.mxu0 %v338
    %v813 = vpop.f32.mrf.mxu0
    %v814 = vadd.f32 %v597, %v813
    %v815 = vpop.f32.mrf.mxu0
    %v816 = vadd.f32 %v599, %v815
    %817 = vmatmul.bf16.gmra.mxu0 %v339
    %v818 = vpop.f32.mrf.mxu0
    %v819 = vadd.f32 %v602, %v818
    %v820 = vpop.f32.mrf.mxu0
    %v821 = vadd.f32 %v604, %v820
    %822 = vmatmul.bf16.gmra.mxu0 %v340
    %v823 = vpop.f32.mrf.mxu0
    %v824 = vadd.f32 %v607, %v823
    %v825 = vpop.f32.mrf.mxu0
    %v826 = vadd.f32 %v609, %v825
    %827 = vmatmul.bf16.gmra.mxu0 %v341
    %v828 = vpop.f32.mrf.mxu0
    %v829 = vadd.f32 %v612, %v828
    %v830 = vpop.f32.mrf.mxu0
    %v831 = vadd.f32 %v614, %v830
    %832 = vmatmul.bf16.gmra.mxu0 %v342
    %v833 = vpop.f32.mrf.mxu0
    %v834 = vadd.f32 %v617, %v833
    %v835 = vpop.f32.mrf.mxu0
    %v836 = vadd.f32 %v619, %v835
    %837 = vmatmul.bf16.gmra.mxu0 %v343
    %v838 = vpop.f32.mrf.mxu0
    %v839 = vadd.f32 %v622, %v838
    %v840 = vpop.f32.mrf.mxu0
    %v841 = vadd.f32 %v624, %v840
    %842 = vmatmul.bf16.gmra.mxu0 %v344
    %v843 = vpop.f32.mrf.mxu0
    %v844 = vadd.f32 %v627, %v843
    %v845 = vpop.f32.mrf.mxu0
    %v846 = vadd.f32 %v629, %v845
    %847 = vmatmul.bf16.gmra.mxu0 %v345
    %v848 = vpop.f32.mrf.mxu0
    %v849 = vadd.f32 %v632, %v848
    %v850 = vpop.f32.mrf.mxu0
    %v851 = vadd.f32 %v634, %v850
    %852 = vmatmul.bf16.gmra.mxu0 %v346
    %v853 = vpop.f32.mrf.mxu0
    %v854 = vadd.f32 %v637, %v853
    %v855 = vpop.f32.mrf.mxu0
    %v856 = vadd.f32 %v639, %v855
    %857 = vmatmul.bf16.gmra.mxu0 %v347
    %v858 = vpop.f32.mrf.mxu0
    %v859 = vadd.f32 %v642, %v858
    %v860 = vpop.f32.mrf.mxu0
    %v861 = vadd.f32 %v644, %v860
    %862 = vmatmul.bf16.gmra.mxu0 %v348
    %v863 = vpop.f32.mrf.mxu0
    %v864 = vadd.f32 %v647, %v863
    %v865 = vpop.f32.mrf.mxu0
    %v866 = vadd.f32 %v649, %v865
    %867 = vmatmul.bf16.gmra.mxu0 %v349
    %v868 = vpop.f32.mrf.mxu0
    %v869 = vadd.f32 %v652, %v868
    %v870 = vpop.f32.mrf.mxu0
    %v871 = vadd.f32 %v654, %v870
    %872 = vmatmul.bf16.gmra.mxu0 %v350
    %v873 = vpop.f32.mrf.mxu0
    %v874 = vadd.f32 %v657, %v873
    %v875 = vpop.f32.mrf.mxu0
    %v876 = vadd.f32 %v659, %v875
    %877 = vmatmul.bf16.gmra.mxu0 %v351
    %v878 = vpop.f32.mrf.mxu0
    %v879 = vadd.f32 %v662, %v878
    %v880 = vpop.f32.mrf.mxu0
    %v881 = vadd.f32 %v664, %v880
    %882 = vmatmul.bf16.gmra.mxu0 %v352
    %v883 = vpop.f32.mrf.mxu0
    %v884 = vadd.f32 %v667, %v883
    %v885 = vpop.f32.mrf.mxu0
    %v886 = vadd.f32 %v669, %v885
    %887 = vmatmul.bf16.gmra.mxu0 %v353
    %v888 = vpop.f32.mrf.mxu0
    %v889 = vadd.f32 %v672, %v888
    %v890 = vpop.f32.mrf.mxu0
    %v891 = vadd.f32 %v674, %v890
    %892 = vmatmul.bf16.gmra.mxu0 %v354
    %v893 = vpop.f32.mrf.mxu0
    %v894 = vadd.f32 %v677, %v893
    %v895 = vpop.f32.mrf.mxu0
    %v896 = vadd.f32 %v679, %v895
    %897 = vmatmul.bf16.gmra.mxu0 %v355
    %v898 = vpop.f32.mrf.mxu0
    %v899 = vadd.f32 %v682, %v898
    %v900 = vpop.f32.mrf.mxu0
    %v901 = vadd.f32 %v684, %v900
    %902 = vmatmul.bf16.gmra.mxu0 %v356
    %v903 = vpop.f32.mrf.mxu0
    %v904 = vadd.f32 %v687, %v903
    %v905 = vpop.f32.mrf.mxu0
    %v906 = vadd.f32 %v689, %v905
    %907 = vmatmul.bf16.gmra.mxu0 %v357
    %v908 = vpop.f32.mrf.mxu0
    %v909 = vadd.f32 %v692, %v908
    %v910 = vpop.f32.mrf.mxu0
    %v911 = vadd.f32 %v694, %v910
    %912 = vmatmul.bf16.gmra.mxu0 %v358
    %v913 = vpop.f32.mrf.mxu0
    %v914 = vadd.f32 %v697, %v913
    %v915 = vpop.f32.mrf.mxu0
    %v916 = vadd.f32 %v699, %v915
    %917 = vmatmul.bf16.gmra.mxu0 %v359
    %v918 = vpop.f32.mrf.mxu0
    %v919 = vadd.f32 %v702, %v918
    %v920 = vpop.f32.mrf.mxu0
    %v921 = vadd.f32 %v704, %v920
    %922 = vdwg.mxu0
    %v923 = vld [vmem:[#allocation2 + $0x2] sm:$0xff]
    %v924 = vld [vmem:[#allocation2 + $0xa] sm:$0xff]
    %v925 = vld [vmem:[#allocation2 + $0x1a] sm:$0xff]
    %v926 = vld [vmem:[#allocation2 + $0x22] sm:$0xff]
    %v927 = vld [vmem:[#allocation2 + $0x32] sm:$0xff]
    %v928 = vld [vmem:[#allocation2 + $0x3a] sm:$0xff]
    %v929 = vld [vmem:[#allocation2 + $0x4a] sm:$0xff]
    %v930 = vld [vmem:[#allocation2 + $0x52] sm:$0xff]
    %v931 = vld [vmem:[#allocation2 + $0x62] sm:$0xff]
    %v932 = vld [vmem:[#allocation2 + $0x6a] sm:$0xff]
    %v933 = vld [vmem:[#allocation2 + $0x7a] sm:$0xff]
    %v934 = vld [vmem:[#allocation2 + $0x82] sm:$0xff]
    %v935 = vld [vmem:[#allocation2 + $0x92] sm:$0xff]
    %v936 = vld [vmem:[#allocation2 + $0x9a] sm:$0xff]
    %v937 = vld [vmem:[#allocation2 + $0xaa] sm:$0xff]
    %v938 = vld [vmem:[#allocation2 + $0xb2] sm:$0xff]
    %v939 = vld [vmem:[#allocation2 + $0xc2] sm:$0xff]
    %v940 = vld [vmem:[#allocation2 + $0xca] sm:$0xff]
    %v941 = vld [vmem:[#allocation2 + $0xda] sm:$0xff]
    %v942 = vld [vmem:[#allocation2 + $0xe2] sm:$0xff]
    %v943 = vld [vmem:[#allocation2 + $0xf2] sm:$0xff]
    %v944 = vld [vmem:[#allocation2 + $0xfa] sm:$0xff]
    %v945 = vld [vmem:[#allocation2 + $0x10a] sm:$0xff]
    %v946 = vld [vmem:[#allocation2 + $0x112] sm:$0xff]
    %v947 = vld [vmem:[#allocation2 + $0x122] sm:$0xff]
    %v948 = vld [vmem:[#allocation2 + $0x12a] sm:$0xff]
    %v949 = vld [vmem:[#allocation2 + $0x13a] sm:$0xff]
    %v950 = vld [vmem:[#allocation2 + $0x142] sm:$0xff]
    %v951 = vld [vmem:[#allocation2 + $0x152] sm:$0xff]
    %v952 = vld [vmem:[#allocation2 + $0x15a] sm:$0xff]
    %v953 = vld [vmem:[#allocation2 + $0x16a] sm:$0xff]
    %v954 = vld [vmem:[#allocation2 + $0x172] sm:$0xff]
    %v955 = vld [vmem:[#allocation2 + $0x1b2] sm:$0xff]
    %v956 = vld [vmem:[#allocation2 + $0x1ba] sm:$0xff]
    %v957 = vld [vmem:[#allocation2 + $0x1ca] sm:$0xff]
    %v958 = vld [vmem:[#allocation2 + $0x1d2] sm:$0xff]
    %v959 = vld [vmem:[#allocation2 + $0x1e2] sm:$0xff]
    %v960 = vld [vmem:[#allocation2 + $0x1ea] sm:$0xff]
    %v961 = vld [vmem:[#allocation2 + $0x1fa] sm:$0xff]
    %v962 = vld [vmem:[#allocation2 + $0x202] sm:$0xff]
    %v963 = vld [vmem:[#allocation2 + $0x212] sm:$0xff]
    %v964 = vld [vmem:[#allocation2 + $0x21a] sm:$0xff]
    %v965 = vld [vmem:[#allocation2 + $0x22a] sm:$0xff]
    %v966 = vld [vmem:[#allocation2 + $0x232] sm:$0xff]
    %v967 = vld [vmem:[#allocation2 + $0x242] sm:$0xff]
    %v968 = vld [vmem:[#allocation2 + $0x24a] sm:$0xff]
    %v969 = vld [vmem:[#allocation2 + $0x25a] sm:$0xff]
    %v970 = vld [vmem:[#allocation2 + $0x262] sm:$0xff]
    %v971 = vld [vmem:[#allocation2 + $0x272] sm:$0xff]
    %v972 = vld [vmem:[#allocation2 + $0x27a] sm:$0xff]
    %v973 = vld [vmem:[#allocation2 + $0x28a] sm:$0xff]
    %v974 = vld [vmem:[#allocation2 + $0x292] sm:$0xff]
    %v975 = vld [vmem:[#allocation2 + $0x2a2] sm:$0xff]
    %v976 = vld [vmem:[#allocation2 + $0x2aa] sm:$0xff]
    %v977 = vld [vmem:[#allocation2 + $0x2ba] sm:$0xff]
    %v978 = vld [vmem:[#allocation2 + $0x2c2] sm:$0xff]
    %v979 = vld [vmem:[#allocation2 + $0x2d2] sm:$0xff]
    %v980 = vld [vmem:[#allocation2 + $0x2da] sm:$0xff]
    %v981 = vld [vmem:[#allocation2 + $0x2ea] sm:$0xff]
    %v982 = vld [vmem:[#allocation2 + $0x2f2] sm:$0xff]
    %v983 = vld [vmem:[#allocation2 + $0x302] sm:$0xff]
    %v984 = vld [vmem:[#allocation2 + $0x30a] sm:$0xff]
    %v985 = vld [vmem:[#allocation2 + $0x31a] sm:$0xff]
    %v986 = vld [vmem:[#allocation2 + $0x322] sm:$0xff]
    %v987 = vpack.c.bf16 %v924, %v923
    %v988 = vpack.c.bf16 %v926, %v925
    %v989 = vpack.c.bf16 %v928, %v927
    %v990 = vpack.c.bf16 %v930, %v929
    %v991 = vpack.c.bf16 %v932, %v931
    %v992 = vpack.c.bf16 %v934, %v933
    %v993 = vpack.c.bf16 %v936, %v935
    %v994 = vpack.c.bf16 %v938, %v937
    %v995 = vpack.c.bf16 %v940, %v939
    %v996 = vpack.c.bf16 %v942, %v941
    %v997 = vpack.c.bf16 %v944, %v943
    %v998 = vpack.c.bf16 %v946, %v945
    %v999 = vpack.c.bf16 %v948, %v947
    %v1000 = vpack.c.bf16 %v950, %v949
    %v1001 = vpack.c.bf16 %v952, %v951
    %v1002 = vpack.c.bf16 %v954, %v953
    %v1003 = vpack.c.bf16 %v956, %v955
    %v1004 = vpack.c.bf16 %v958, %v957
    %v1005 = vpack.c.bf16 %v960, %v959
    %v1006 = vpack.c.bf16 %v962, %v961
    %v1007 = vpack.c.bf16 %v964, %v963
    %v1008 = vpack.c.bf16 %v966, %v965
    %v1009 = vpack.c.bf16 %v968, %v967
    %v1010 = vpack.c.bf16 %v970, %v969
    %v1011 = vpack.c.bf16 %v972, %v971
    %v1012 = vpack.c.bf16 %v974, %v973
    %v1013 = vpack.c.bf16 %v976, %v975
    %v1014 = vpack.c.bf16 %v978, %v977
    %v1015 = vpack.c.bf16 %v980, %v979
    %v1016 = vpack.c.bf16 %v982, %v981
    %v1017 = vpack.c.bf16 %v984, %v983
    %v1018 = vpack.c.bf16 %v986, %v985
    %s1019 = scalar_lea.vmem %s1, 128
    %v1020 = vld [vmem:[%s1019] sm:$0xf]
    %v1021 = vld [vmem:[%s1019 + $0x4] sm:$0xf]
    %v1022 = vld [vmem:[%s1019 + $0x8] sm:$0xf]
    %v1023 = vld [vmem:[%s1019 + $0xc] sm:$0xf]
    %v1024 = vld [vmem:[%s1019 + $0x10] sm:$0xf]
    %v1025 = vld [vmem:[%s1019 + $0x14] sm:$0xf]
    %v1026 = vld [vmem:[%s1019 + $0x18] sm:$0xf]
    %v1027 = vld [vmem:[%s1019 + $0x1c] sm:$0xf]
    %v1028 = vld [vmem:[%s1019 + $0x20] sm:$0xf]
    %v1029 = vld [vmem:[%s1019 + $0x24] sm:$0xf]
    %v1030 = vld [vmem:[%s1019 + $0x28] sm:$0xf]
    %v1031 = vld [vmem:[%s1019 + $0x2c] sm:$0xf]
    %v1032 = vld [vmem:[%s1019 + $0x30] sm:$0xf]
    %v1033 = vld [vmem:[%s1019 + $0x34] sm:$0xf]
    %v1034 = vld [vmem:[%s1019 + $0x38] sm:$0xf]
    %v1035 = vld [vmem:[%s1019 + $0x3c] sm:$0xf]
    %v1052 = vunpack.c.l.b16 %v1020
    %v1053 = vunpack.c.l.b16 %v1021
    %v1054 = vunpack.c.l.b16 %v1022
    %v1055 = vunpack.c.l.b16 %v1023
    %v1056 = vunpack.c.l.b16 %v1024
    %v1057 = vunpack.c.l.b16 %v1025
    %v1058 = vunpack.c.l.b16 %v1026
    %v1059 = vunpack.c.l.b16 %v1027
    %v1060 = vunpack.c.l.b16 %v1028
    %v1061 = vunpack.c.l.b16 %v1029
    %v1062 = vunpack.c.l.b16 %v1030
    %v1063 = vunpack.c.l.b16 %v1031
    %v1064 = vunpack.c.l.b16 %v1032
    %v1065 = vunpack.c.l.b16 %v1033
    %v1066 = vunpack.c.l.b16 %v1034
    %v1067 = vunpack.c.l.b16 %v1035
    %v1068 = vpack.c.b16 %v1053, %v1052
    %v1069 = vpack.c.b16 %v1055, %v1054
    %v1070 = vpack.c.b16 %v1057, %v1056
    %v1071 = vpack.c.b16 %v1059, %v1058
    %v1072 = vpack.c.b16 %v1061, %v1060
    %v1073 = vpack.c.b16 %v1063, %v1062
    %v1074 = vpack.c.b16 %v1065, %v1064
    %v1075 = vpack.c.b16 %v1067, %v1066
    %1084 = vmatpush.bf16.msra.mxu0 %v1075
    %1085 = vmatpush.bf16.msra.mxu0 %v1074
    %1086 = vmatpush.bf16.msra.mxu0 %v1073
    %1087 = vmatpush.bf16.msra.mxu0 %v1072
    %1088 = vmatpush.bf16.msra.mxu0 %v1071
    %1089 = vmatpush.bf16.msra.mxu0 %v1070
    %1090 = vmatpush.bf16.msra.mxu0 %v1069
    %1091 = vmatpush.bf16.msra.mxu0 %v1068
    %1092 = vmatmul.bf16.gmra.mxu0 %v987
    %v1093 = vpop.f32.mrf.mxu0
    %v1094 = vadd.f32 0.0, %v1093
    %v1095 = vpop.f32.mrf.mxu0
    %v1096 = vadd.f32 0.0, %v1095
    %1097 = vmatmul.bf16.gmra.mxu0 %v988
    %v1098 = vpop.f32.mrf.mxu0
    %v1099 = vadd.f32 0.0, %v1098
    %v1100 = vpop.f32.mrf.mxu0
    %v1101 = vadd.f32 0.0, %v1100
    %1102 = vmatmul.bf16.gmra.mxu0 %v989
    %v1103 = vpop.f32.mrf.mxu0
    %v1104 = vadd.f32 0.0, %v1103
    %v1105 = vpop.f32.mrf.mxu0
    %v1106 = vadd.f32 0.0, %v1105
    %1107 = vmatmul.bf16.gmra.mxu0 %v990
    %v1108 = vpop.f32.mrf.mxu0
    %v1109 = vadd.f32 0.0, %v1108
    %v1110 = vpop.f32.mrf.mxu0
    %v1111 = vadd.f32 0.0, %v1110
    %1112 = vmatmul.bf16.gmra.mxu0 %v991
    %v1113 = vpop.f32.mrf.mxu0
    %v1114 = vadd.f32 0.0, %v1113
    %v1115 = vpop.f32.mrf.mxu0
    %v1116 = vadd.f32 0.0, %v1115
    %1117 = vmatmul.bf16.gmra.mxu0 %v992
    %v1118 = vpop.f32.mrf.mxu0
    %v1119 = vadd.f32 0.0, %v1118
    %v1120 = vpop.f32.mrf.mxu0
    %v1121 = vadd.f32 0.0, %v1120
    %1122 = vmatmul.bf16.gmra.mxu0 %v993
    %v1123 = vpop.f32.mrf.mxu0
    %v1124 = vadd.f32 0.0, %v1123
    %v1125 = vpop.f32.mrf.mxu0
    %v1126 = vadd.f32 0.0, %v1125
    %1127 = vmatmul.bf16.gmra.mxu0 %v994
    %v1128 = vpop.f32.mrf.mxu0
    %v1129 = vadd.f32 0.0, %v1128
    %v1130 = vpop.f32.mrf.mxu0
    %v1131 = vadd.f32 0.0, %v1130
    %1132 = vmatmul.bf16.gmra.mxu0 %v995
    %v1133 = vpop.f32.mrf.mxu0
    %v1134 = vadd.f32 0.0, %v1133
    %v1135 = vpop.f32.mrf.mxu0
    %v1136 = vadd.f32 0.0, %v1135
    %1137 = vmatmul.bf16.gmra.mxu0 %v996
    %v1138 = vpop.f32.mrf.mxu0
    %v1139 = vadd.f32 0.0, %v1138
    %v1140 = vpop.f32.mrf.mxu0
    %v1141 = vadd.f32 0.0, %v1140
    %1142 = vmatmul.bf16.gmra.mxu0 %v997
    %v1143 = vpop.f32.mrf.mxu0
    %v1144 = vadd.f32 0.0, %v1143
    %v1145 = vpop.f32.mrf.mxu0
    %v1146 = vadd.f32 0.0, %v1145
    %1147 = vmatmul.bf16.gmra.mxu0 %v998
    %v1148 = vpop.f32.mrf.mxu0
    %v1149 = vadd.f32 0.0, %v1148
    %v1150 = vpop.f32.mrf.mxu0
    %v1151 = vadd.f32 0.0, %v1150
    %1152 = vmatmul.bf16.gmra.mxu0 %v999
    %v1153 = vpop.f32.mrf.mxu0
    %v1154 = vadd.f32 0.0, %v1153
    %v1155 = vpop.f32.mrf.mxu0
    %v1156 = vadd.f32 0.0, %v1155
    %1157 = vmatmul.bf16.gmra.mxu0 %v1000
    %v1158 = vpop.f32.mrf.mxu0
    %v1159 = vadd.f32 0.0, %v1158
    %v1160 = vpop.f32.mrf.mxu0
    %v1161 = vadd.f32 0.0, %v1160
    %1162 = vmatmul.bf16.gmra.mxu0 %v1001
    %v1163 = vpop.f32.mrf.mxu0
    %v1164 = vadd.f32 0.0, %v1163
    %v1165 = vpop.f32.mrf.mxu0
    %v1166 = vadd.f32 0.0, %v1165
    %1167 = vmatmul.bf16.gmra.mxu0 %v1002
    %v1168 = vpop.f32.mrf.mxu0
    %v1169 = vadd.f32 0.0, %v1168
    %v1170 = vpop.f32.mrf.mxu0
    %v1171 = vadd.f32 0.0, %v1170
    %1172 = vmatmul.bf16.gmra.mxu0 %v1003
    %v1173 = vpop.f32.mrf.mxu0
    %v1174 = vadd.f32 0.0, %v1173
    %v1175 = vpop.f32.mrf.mxu0
    %v1176 = vadd.f32 0.0, %v1175
    %1177 = vmatmul.bf16.gmra.mxu0 %v1004
    %v1178 = vpop.f32.mrf.mxu0
    %v1179 = vadd.f32 0.0, %v1178
    %v1180 = vpop.f32.mrf.mxu0
    %v1181 = vadd.f32 0.0, %v1180
    %1182 = vmatmul.bf16.gmra.mxu0 %v1005
    %v1183 = vpop.f32.mrf.mxu0
    %v1184 = vadd.f32 0.0, %v1183
    %v1185 = vpop.f32.mrf.mxu0
    %v1186 = vadd.f32 0.0, %v1185
    %1187 = vmatmul.bf16.gmra.mxu0 %v1006
    %v1188 = vpop.f32.mrf.mxu0
    %v1189 = vadd.f32 0.0, %v1188
    %v1190 = vpop.f32.mrf.mxu0
    %v1191 = vadd.f32 0.0, %v1190
    %1192 = vmatmul.bf16.gmra.mxu0 %v1007
    %v1193 = vpop.f32.mrf.mxu0
    %v1194 = vadd.f32 0.0, %v1193
    %v1195 = vpop.f32.mrf.mxu0
    %v1196 = vadd.f32 0.0, %v1195
    %1197 = vmatmul.bf16.gmra.mxu0 %v1008
    %v1198 = vpop.f32.mrf.mxu0
    %v1199 = vadd.f32 0.0, %v1198
    %v1200 = vpop.f32.mrf.mxu0
    %v1201 = vadd.f32 0.0, %v1200
    %1202 = vmatmul.bf16.gmra.mxu0 %v1009
    %v1203 = vpop.f32.mrf.mxu0
    %v1204 = vadd.f32 0.0, %v1203
    %v1205 = vpop.f32.mrf.mxu0
    %v1206 = vadd.f32 0.0, %v1205
    %1207 = vmatmul.bf16.gmra.mxu0 %v1010
    %v1208 = vpop.f32.mrf.mxu0
    %v1209 = vadd.f32 0.0, %v1208
    %v1210 = vpop.f32.mrf.mxu0
    %v1211 = vadd.f32 0.0, %v1210
    %1212 = vmatmul.bf16.gmra.mxu0 %v1011
    %v1213 = vpop.f32.mrf.mxu0
    %v1214 = vadd.f32 0.0, %v1213
    %v1215 = vpop.f32.mrf.mxu0
    %v1216 = vadd.f32 0.0, %v1215
    %1217 = vmatmul.bf16.gmra.mxu0 %v1012
    %v1218 = vpop.f32.mrf.mxu0
    %v1219 = vadd.f32 0.0, %v1218
    %v1220 = vpop.f32.mrf.mxu0
    %v1221 = vadd.f32 0.0, %v1220
    %1222 = vmatmul.bf16.gmra.mxu0 %v1013
    %v1223 = vpop.f32.mrf.mxu0
    %v1224 = vadd.f32 0.0, %v1223
    %v1225 = vpop.f32.mrf.mxu0
    %v1226 = vadd.f32 0.0, %v1225
    %1227 = vmatmul.bf16.gmra.mxu0 %v1014
    %v1228 = vpop.f32.mrf.mxu0
    %v1229 = vadd.f32 0.0, %v1228
    %v1230 = vpop.f32.mrf.mxu0
    %v1231 = vadd.f32 0.0, %v1230
    %1232 = vmatmul.bf16.gmra.mxu0 %v1015
    %v1233 = vpop.f32.mrf.mxu0
    %v1234 = vadd.f32 0.0, %v1233
    %v1235 = vpop.f32.mrf.mxu0
    %v1236 = vadd.f32 0.0, %v1235
    %1237 = vmatmul.bf16.gmra.mxu0 %v1016
    %v1238 = vpop.f32.mrf.mxu0
    %v1239 = vadd.f32 0.0, %v1238
    %v1240 = vpop.f32.mrf.mxu0
    %v1241 = vadd.f32 0.0, %v1240
    %1242 = vmatmul.bf16.gmra.mxu0 %v1017
    %v1243 = vpop.f32.mrf.mxu0
    %v1244 = vadd.f32 0.0, %v1243
    %v1245 = vpop.f32.mrf.mxu0
    %v1246 = vadd.f32 0.0, %v1245
    %1247 = vmatmul.bf16.gmra.mxu0 %v1018
    %v1248 = vpop.f32.mrf.mxu0
    %v1249 = vadd.f32 0.0, %v1248
    %v1250 = vpop.f32.mrf.mxu0
    %v1251 = vadd.f32 0.0, %v1250
    %1252 = vdwg.mxu0
    %v1253 = vadd.f32 %v764, %v1094
    %v1254 = vadd.f32 %v766, %v1096
    %v1255 = vadd.f32 %v769, %v1099
    %v1256 = vadd.f32 %v771, %v1101
    %v1257 = vadd.f32 %v774, %v1104
    %v1258 = vadd.f32 %v776, %v1106
    %v1259 = vadd.f32 %v779, %v1109
    %v1260 = vadd.f32 %v781, %v1111
    %v1261 = vadd.f32 %v784, %v1114
    %v1262 = vadd.f32 %v786, %v1116
    %v1263 = vadd.f32 %v789, %v1119
    %v1264 = vadd.f32 %v791, %v1121
    %v1265 = vadd.f32 %v794, %v1124
    %v1266 = vadd.f32 %v796, %v1126
    %v1267 = vadd.f32 %v799, %v1129
    %v1268 = vadd.f32 %v801, %v1131
    %v1269 = vadd.f32 %v804, %v1134
    %v1270 = vadd.f32 %v806, %v1136
    %v1271 = vadd.f32 %v809, %v1139
    %v1272 = vadd.f32 %v811, %v1141
    %v1273 = vadd.f32 %v814, %v1144
    %v1274 = vadd.f32 %v816, %v1146
    %v1275 = vadd.f32 %v819, %v1149
    %v1276 = vadd.f32 %v821, %v1151
    %v1277 = vadd.f32 %v824, %v1154
    %v1278 = vadd.f32 %v826, %v1156
    %v1279 = vadd.f32 %v829, %v1159
    %v1280 = vadd.f32 %v831, %v1161
    %v1281 = vadd.f32 %v834, %v1164
    %v1282 = vadd.f32 %v836, %v1166
    %v1283 = vadd.f32 %v839, %v1169
    %v1284 = vadd.f32 %v841, %v1171
    %v1285 = vadd.f32 %v844, %v1174
    %v1286 = vadd.f32 %v846, %v1176
    %v1287 = vadd.f32 %v849, %v1179
    %v1288 = vadd.f32 %v851, %v1181
    %v1289 = vadd.f32 %v854, %v1184
    %v1290 = vadd.f32 %v856, %v1186
    %v1291 = vadd.f32 %v859, %v1189
    %v1292 = vadd.f32 %v861, %v1191
    %v1293 = vadd.f32 %v864, %v1194
    %v1294 = vadd.f32 %v866, %v1196
    %v1295 = vadd.f32 %v869, %v1199
    %v1296 = vadd.f32 %v871, %v1201
    %v1297 = vadd.f32 %v874, %v1204
    %v1298 = vadd.f32 %v876, %v1206
    %v1299 = vadd.f32 %v879, %v1209
    %v1300 = vadd.f32 %v881, %v1211
    %v1301 = vadd.f32 %v884, %v1214
    %v1302 = vadd.f32 %v886, %v1216
    %v1303 = vadd.f32 %v889, %v1219
    %v1304 = vadd.f32 %v891, %v1221
    %v1305 = vadd.f32 %v894, %v1224
    %v1306 = vadd.f32 %v896, %v1226
    %v1307 = vadd.f32 %v899, %v1229
    %v1308 = vadd.f32 %v901, %v1231
    %v1309 = vadd.f32 %v904, %v1234
    %v1310 = vadd.f32 %v906, %v1236
    %v1311 = vadd.f32 %v909, %v1239
    %v1312 = vadd.f32 %v911, %v1241
    %v1313 = vadd.f32 %v914, %v1244
    %v1314 = vadd.f32 %v916, %v1246
    %v1315 = vadd.f32 %v919, %v1249
    %v1316 = vadd.f32 %v921, %v1251
    %1317 = vst [vmem:[#allocation3] sm:$0xff] %v1253
    %1318 = vst [vmem:[#allocation3 + $0x8] sm:$0xff] %v1254
    %1319 = vst [vmem:[#allocation3 + $0x10] sm:$0xff] %v1255
    %1320 = vst [vmem:[#allocation3 + $0x18] sm:$0xff] %v1256
    %1321 = vst [vmem:[#allocation3 + $0x20] sm:$0xff] %v1257
    %1322 = vst [vmem:[#allocation3 + $0x28] sm:$0xff] %v1258
    %1323 = vst [vmem:[#allocation3 + $0x30] sm:$0xff] %v1259
    %1324 = vst [vmem:[#allocation3 + $0x38] sm:$0xff] %v1260
    %1325 = vst [vmem:[#allocation3 + $0x40] sm:$0xff] %v1261
    %1326 = vst [vmem:[#allocation3 + $0x48] sm:$0xff] %v1262
    %1327 = vst [vmem:[#allocation3 + $0x50] sm:$0xff] %v1263
    %1328 = vst [vmem:[#allocation3 + $0x58] sm:$0xff] %v1264
    %1329 = vst [vmem:[#allocation3 + $0x60] sm:$0xff] %v1265
    %1330 = vst [vmem:[#allocation3 + $0x68] sm:$0xff] %v1266
    %1331 = vst [vmem:[#allocation3 + $0x70] sm:$0xff] %v1267
    %1332 = vst [vmem:[#allocation3 + $0x78] sm:$0xff] %v1268
    %1333 = vst [vmem:[#allocation3 + $0x80] sm:$0xff] %v1269
    %1334 = vst [vmem:[#allocation3 + $0x88] sm:$0xff] %v1270
    %1335 = vst [vmem:[#allocation3 + $0x90] sm:$0xff] %v1271
    %1336 = vst [vmem:[#allocation3 + $0x98] sm:$0xff] %v1272
    %1337 = vst [vmem:[#allocation3 + $0xa0] sm:$0xff] %v1273
    %1338 = vst [vmem:[#allocation3 + $0xa8] sm:$0xff] %v1274
    %1339 = vst [vmem:[#allocation3 + $0xb0] sm:$0xff] %v1275
    %1340 = vst [vmem:[#allocation3 + $0xb8] sm:$0xff] %v1276
    %1341 = vst [vmem:[#allocation3 + $0xc0] sm:$0xff] %v1277
    %1342 = vst [vmem:[#allocation3 + $0xc8] sm:$0xff] %v1278
    %1343 = vst [vmem:[#allocation3 + $0xd0] sm:$0xff] %v1279
    %1344 = vst [vmem:[#allocation3 + $0xd8] sm:$0xff] %v1280
    %1345 = vst [vmem:[#allocation3 + $0xe0] sm:$0xff] %v1281
    %1346 = vst [vmem:[#allocation3 + $0xe8] sm:$0xff] %v1282
    %1347 = vst [vmem:[#allocation3 + $0xf0] sm:$0xff] %v1283
    %1348 = vst [vmem:[#allocation3 + $0xf8] sm:$0xff] %v1284
    %1349 = vst [vmem:[#allocation3 + $0x100] sm:$0xff] %v1285
    %1350 = vst [vmem:[#allocation3 + $0x108] sm:$0xff] %v1286
    %1351 = vst [vmem:[#allocation3 + $0x110] sm:$0xff] %v1287
    %1352 = vst [vmem:[#allocation3 + $0x118] sm:$0xff] %v1288
    %1353 = vst [vmem:[#allocation3 + $0x120] sm:$0xff] %v1289
    %1354 = vst [vmem:[#allocation3 + $0x128] sm:$0xff] %v1290
    %1355 = vst [vmem:[#allocation3 + $0x130] sm:$0xff] %v1291
    %1356 = vst [vmem:[#allocation3 + $0x138] sm:$0xff] %v1292
    %1357 = vst [vmem:[#allocation3 + $0x140] sm:$0xff] %v1293
    %1358 = vst [vmem:[#allocation3 + $0x148] sm:$0xff] %v1294
    %1359 = vst [vmem:[#allocation3 + $0x150] sm:$0xff] %v1295
    %1360 = vst [vmem:[#allocation3 + $0x158] sm:$0xff] %v1296
    %1361 = vst [vmem:[#allocation3 + $0x160] sm:$0xff] %v1297
    %1362 = vst [vmem:[#allocation3 + $0x168] sm:$0xff] %v1298
    %1363 = vst [vmem:[#allocation3 + $0x170] sm:$0xff] %v1299
    %1364 = vst [vmem:[#allocation3 + $0x178] sm:$0xff] %v1300
    %1365 = vst [vmem:[#allocation3 + $0x180] sm:$0xff] %v1301
    %1366 = vst [vmem:[#allocation3 + $0x188] sm:$0xff] %v1302
    %1367 = vst [vmem:[#allocation3 + $0x190] sm:$0xff] %v1303
    %1368 = vst [vmem:[#allocation3 + $0x198] sm:$0xff] %v1304
    %1369 = vst [vmem:[#allocation3 + $0x1a0] sm:$0xff] %v1305
    %1370 = vst [vmem:[#allocation3 + $0x1a8] sm:$0xff] %v1306
    %1371 = vst [vmem:[#allocation3 + $0x1b0] sm:$0xff] %v1307
    %1372 = vst [vmem:[#allocation3 + $0x1b8] sm:$0xff] %v1308
    %1373 = vst [vmem:[#allocation3 + $0x1c0] sm:$0xff] %v1309
    %1374 = vst [vmem:[#allocation3 + $0x1c8] sm:$0xff] %v1310
    %1375 = vst [vmem:[#allocation3 + $0x1d0] sm:$0xff] %v1311
    %1376 = vst [vmem:[#allocation3 + $0x1d8] sm:$0xff] %v1312
    %1377 = vst [vmem:[#allocation3 + $0x1e0] sm:$0xff] %v1313
    %1378 = vst [vmem:[#allocation3 + $0x1e8] sm:$0xff] %v1314
    %1379 = vst [vmem:[#allocation3 + $0x1f0] sm:$0xff] %v1315
    %1380 = vst [vmem:[#allocation3 + $0x1f8] sm:$0xff] %v1316
    %v1381 = vld [vmem:[%s199] sm:$0xff]
    %v1382 = vld [vmem:[%s199 + $0x8] sm:$0xff]
    %v1383 = vld [vmem:[%s199 + $0x18] sm:$0xff]
    %v1384 = vld [vmem:[%s199 + $0x20] sm:$0xff]
    %v1385 = vld [vmem:[%s199 + $0x30] sm:$0xff]
    %v1386 = vld [vmem:[%s199 + $0x38] sm:$0xff]
    %v1387 = vld [vmem:[%s199 + $0x48] sm:$0xff]
    %v1388 = vld [vmem:[%s199 + $0x50] sm:$0xff]
    %v1389 = vld [vmem:[%s199 + $0x60] sm:$0xff]
    %v1390 = vld [vmem:[%s199 + $0x68] sm:$0xff]
    %v1391 = vld [vmem:[%s199 + $0x78] sm:$0xff]
    %v1392 = vld [vmem:[%s199 + $0x80] sm:$0xff]
    %v1393 = vld [vmem:[%s199 + $0x90] sm:$0xff]
    %v1394 = vld [vmem:[%s199 + $0x98] sm:$0xff]
    %v1395 = vld [vmem:[%s199 + $0xa8] sm:$0xff]
    %v1396 = vld [vmem:[%s199 + $0xb0] sm:$0xff]
    %v1397 = vld [vmem:[%s199 + $0xc0] sm:$0xff]
    %v1398 = vld [vmem:[%s199 + $0xc8] sm:$0xff]
    %v1399 = vld [vmem:[%s199 + $0xd8] sm:$0xff]
    %v1400 = vld [vmem:[%s199 + $0xe0] sm:$0xff]
    %v1401 = vld [vmem:[%s199 + $0xf0] sm:$0xff]
    %v1402 = vld [vmem:[%s199 + $0xf8] sm:$0xff]
    %v1403 = vld [vmem:[%s199 + $0x108] sm:$0xff]
    %v1404 = vld [vmem:[%s199 + $0x110] sm:$0xff]
    %v1405 = vld [vmem:[%s199 + $0x120] sm:$0xff]
    %v1406 = vld [vmem:[%s199 + $0x128] sm:$0xff]
    %v1407 = vld [vmem:[%s199 + $0x138] sm:$0xff]
    %v1408 = vld [vmem:[%s199 + $0x140] sm:$0xff]
    %v1409 = vld [vmem:[%s199 + $0x150] sm:$0xff]
    %v1410 = vld [vmem:[%s199 + $0x158] sm:$0xff]
    %v1411 = vld [vmem:[%s199 + $0x168] sm:$0xff]
    %v1412 = vld [vmem:[%s199 + $0x170] sm:$0xff]
    %v1413 = vld [vmem:[%s199 + $0x1b0] sm:$0xff]
    %v1414 = vld [vmem:[%s199 + $0x1b8] sm:$0xff]
    %v1415 = vld [vmem:[%s199 + $0x1c8] sm:$0xff]
    %v1416 = vld [vmem:[%s199 + $0x1d0] sm:$0xff]
    %v1417 = vld [vmem:[%s199 + $0x1e0] sm:$0xff]
    %v1418 = vld [vmem:[%s199 + $0x1e8] sm:$0xff]
    %v1419 = vld [vmem:[%s199 + $0x1f8] sm:$0xff]
    %v1420 = vld [vmem:[%s199 + $0x200] sm:$0xff]
    %v1421 = vld [vmem:[%s199 + $0x210] sm:$0xff]
    %v1422 = vld [vmem:[%s199 + $0x218] sm:$0xff]
    %v1423 = vld [vmem:[%s199 + $0x228] sm:$0xff]
    %v1424 = vld [vmem:[%s199 + $0x230] sm:$0xff]
    %v1425 = vld [vmem:[%s199 + $0x240] sm:$0xff]
    %v1426 = vld [vmem:[%s199 + $0x248] sm:$0xff]
    %v1427 = vld [vmem:[%s199 + $0x258] sm:$0xff]
    %v1428 = vld [vmem:[%s199 + $0x260] sm:$0xff]
    %v1429 = vld [vmem:[%s199 + $0x270] sm:$0xff]
    %v1430 = vld [vmem:[%s199 + $0x278] sm:$0xff]
    %v1431 = vld [vmem:[%s199 + $0x288] sm:$0xff]
    %v1432 = vld [vmem:[%s199 + $0x290] sm:$0xff]
    %v1433 = vld [vmem:[%s199 + $0x2a0] sm:$0xff]
    %v1434 = vld [vmem:[%s199 + $0x2a8] sm:$0xff]
    %v1435 = vld [vmem:[%s199 + $0x2b8] sm:$0xff]
    %v1436 = vld [vmem:[%s199 + $0x2c0] sm:$0xff]
    %v1437 = vld [vmem:[%s199 + $0x2d0] sm:$0xff]
    %v1438 = vld [vmem:[%s199 + $0x2d8] sm:$0xff]
    %v1439 = vld [vmem:[%s199 + $0x2e8] sm:$0xff]
    %v1440 = vld [vmem:[%s199 + $0x2f0] sm:$0xff]
    %v1441 = vld [vmem:[%s199 + $0x300] sm:$0xff]
    %v1442 = vld [vmem:[%s199 + $0x308] sm:$0xff]
    %v1443 = vld [vmem:[%s199 + $0x318] sm:$0xff]
    %v1444 = vld [vmem:[%s199 + $0x320] sm:$0xff]
    %v1445 = vpack.c.bf16 %v1382, %v1381
    %v1446 = vpack.c.bf16 %v1384, %v1383
    %v1447 = vpack.c.bf16 %v1386, %v1385
    %v1448 = vpack.c.bf16 %v1388, %v1387
    %v1449 = vpack.c.bf16 %v1390, %v1389
    %v1450 = vpack.c.bf16 %v1392, %v1391
    %v1451 = vpack.c.bf16 %v1394, %v1393
    %v1452 = vpack.c.bf16 %v1396, %v1395
    %v1453 = vpack.c.bf16 %v1398, %v1397
    %v1454 = vpack.c.bf16 %v1400, %v1399
    %v1455 = vpack.c.bf16 %v1402, %v1401
    %v1456 = vpack.c.bf16 %v1404, %v1403
    %v1457 = vpack.c.bf16 %v1406, %v1405
    %v1458 = vpack.c.bf16 %v1408, %v1407
    %v1459 = vpack.c.bf16 %v1410, %v1409
    %v1460 = vpack.c.bf16 %v1412, %v1411
    %v1461 = vpack.c.bf16 %v1414, %v1413
    %v1462 = vpack.c.bf16 %v1416, %v1415
    %v1463 = vpack.c.bf16 %v1418, %v1417
    %v1464 = vpack.c.bf16 %v1420, %v1419
    %v1465 = vpack.c.bf16 %v1422, %v1421
    %v1466 = vpack.c.bf16 %v1424, %v1423
    %v1467 = vpack.c.bf16 %v1426, %v1425
    %v1468 = vpack.c.bf16 %v1428, %v1427
    %v1469 = vpack.c.bf16 %v1430, %v1429
    %v1470 = vpack.c.bf16 %v1432, %v1431
    %v1471 = vpack.c.bf16 %v1434, %v1433
    %v1472 = vpack.c.bf16 %v1436, %v1435
    %v1473 = vpack.c.bf16 %v1438, %v1437
    %v1474 = vpack.c.bf16 %v1440, %v1439
    %v1475 = vpack.c.bf16 %v1442, %v1441
    %v1476 = vpack.c.bf16 %v1444, %v1443
    %s1477 = scalar_lea.vmem %s1, 192
    %v1478 = vld [vmem:[%s1477] sm:$0xf]
    %v1479 = vld [vmem:[%s1477 + $0x4] sm:$0xf]
    %v1480 = vld [vmem:[%s1477 + $0x8] sm:$0xf]
    %v1481 = vld [vmem:[%s1477 + $0xc] sm:$0xf]
    %v1482 = vld [vmem:[%s1477 + $0x10] sm:$0xf]
    %v1483 = vld [vmem:[%s1477 + $0x14] sm:$0xf]
    %v1484 = vld [vmem:[%s1477 + $0x18] sm:$0xf]
    %v1485 = vld [vmem:[%s1477 + $0x1c] sm:$0xf]
    %v1486 = vld [vmem:[%s1477 + $0x20] sm:$0xf]
    %v1487 = vld [vmem:[%s1477 + $0x24] sm:$0xf]
    %v1488 = vld [vmem:[%s1477 + $0x28] sm:$0xf]
    %v1489 = vld [vmem:[%s1477 + $0x2c] sm:$0xf]
    %v1490 = vld [vmem:[%s1477 + $0x30] sm:$0xf]
    %v1491 = vld [vmem:[%s1477 + $0x34] sm:$0xf]
    %v1492 = vld [vmem:[%s1477 + $0x38] sm:$0xf]
    %v1493 = vld [vmem:[%s1477 + $0x3c] sm:$0xf]
    %v1494 = vld [vmem:[%s199 + $0x1] sm:$0xff]
    %v1495 = vld [vmem:[%s199 + $0x9] sm:$0xff]
    %v1496 = vld [vmem:[%s199 + $0x19] sm:$0xff]
    %v1497 = vld [vmem:[%s199 + $0x21] sm:$0xff]
    %v1498 = vld [vmem:[%s199 + $0x31] sm:$0xff]
    %v1499 = vld [vmem:[%s199 + $0x39] sm:$0xff]
    %v1500 = vld [vmem:[%s199 + $0x49] sm:$0xff]
    %v1501 = vld [vmem:[%s199 + $0x51] sm:$0xff]
    %v1502 = vld [vmem:[%s199 + $0x61] sm:$0xff]
    %v1503 = vld [vmem:[%s199 + $0x69] sm:$0xff]
    %v1504 = vld [vmem:[%s199 + $0x79] sm:$0xff]
    %v1505 = vld [vmem:[%s199 + $0x81] sm:$0xff]
    %v1506 = vld [vmem:[%s199 + $0x91] sm:$0xff]
    %v1507 = vld [vmem:[%s199 + $0x99] sm:$0xff]
    %v1508 = vld [vmem:[%s199 + $0xa9] sm:$0xff]
    %v1509 = vld [vmem:[%s199 + $0xb1] sm:$0xff]
    %v1510 = vld [vmem:[%s199 + $0xc1] sm:$0xff]
    %v1511 = vld [vmem:[%s199 + $0xc9] sm:$0xff]
    %v1512 = vld [vmem:[%s199 + $0xd9] sm:$0xff]
    %v1513 = vld [vmem:[%s199 + $0xe1] sm:$0xff]
    %v1514 = vld [vmem:[%s199 + $0xf1] sm:$0xff]
    %v1515 = vld [vmem:[%s199 + $0xf9] sm:$0xff]
    %v1516 = vld [vmem:[%s199 + $0x109] sm:$0xff]
    %v1517 = vld [vmem:[%s199 + $0x111] sm:$0xff]
    %v1518 = vld [vmem:[%s199 + $0x121] sm:$0xff]
    %v1519 = vld [vmem:[%s199 + $0x129] sm:$0xff]
    %v1520 = vld [vmem:[%s199 + $0x139] sm:$0xff]
    %v1521 = vld [vmem:[%s199 + $0x141] sm:$0xff]
    %v1522 = vld [vmem:[%s199 + $0x151] sm:$0xff]
    %v1523 = vld [vmem:[%s199 + $0x159] sm:$0xff]
    %v1524 = vld [vmem:[%s199 + $0x169] sm:$0xff]
    %v1525 = vld [vmem:[%s199 + $0x171] sm:$0xff]
    %v1526 = vld [vmem:[%s199 + $0x1b1] sm:$0xff]
    %v1527 = vld [vmem:[%s199 + $0x1b9] sm:$0xff]
    %v1528 = vld [vmem:[%s199 + $0x1c9] sm:$0xff]
    %v1529 = vld [vmem:[%s199 + $0x1d1] sm:$0xff]
    %v1530 = vld [vmem:[%s199 + $0x1e1] sm:$0xff]
    %v1531 = vld [vmem:[%s199 + $0x1e9] sm:$0xff]
    %v1532 = vld [vmem:[%s199 + $0x1f9] sm:$0xff]
    %v1533 = vld [vmem:[%s199 + $0x201] sm:$0xff]
    %v1534 = vld [vmem:[%s199 + $0x211] sm:$0xff]
    %v1535 = vld [vmem:[%s199 + $0x219] sm:$0xff]
    %v1536 = vld [vmem:[%s199 + $0x229] sm:$0xff]
    %v1537 = vld [vmem:[%s199 + $0x231] sm:$0xff]
    %v1538 = vld [vmem:[%s199 + $0x241] sm:$0xff]
    %v1539 = vld [vmem:[%s199 + $0x249] sm:$0xff]
    %v1540 = vld [vmem:[%s199 + $0x259] sm:$0xff]
    %v1541 = vld [vmem:[%s199 + $0x261] sm:$0xff]
    %v1542 = vld [vmem:[%s199 + $0x271] sm:$0xff]
    %v1543 = vld [vmem:[%s199 + $0x279] sm:$0xff]
    %v1544 = vld [vmem:[%s199 + $0x289] sm:$0xff]
    %v1545 = vld [vmem:[%s199 + $0x291] sm:$0xff]
    %v1546 = vld [vmem:[%s199 + $0x2a1] sm:$0xff]
    %v1547 = vld [vmem:[%s199 + $0x2a9] sm:$0xff]
    %v1548 = vld [vmem:[%s199 + $0x2b9] sm:$0xff]
    %v1549 = vld [vmem:[%s199 + $0x2c1] sm:$0xff]
    %v1550 = vld [vmem:[%s199 + $0x2d1] sm:$0xff]
    %v1551 = vld [vmem:[%s199 + $0x2d9] sm:$0xff]
    %v1552 = vld [vmem:[%s199 + $0x2e9] sm:$0xff]
    %v1553 = vld [vmem:[%s199 + $0x2f1] sm:$0xff]
    %v1554 = vld [vmem:[%s199 + $0x301] sm:$0xff]
    %v1555 = vld [vmem:[%s199 + $0x309] sm:$0xff]
    %v1556 = vld [vmem:[%s199 + $0x319] sm:$0xff]
    %v1557 = vld [vmem:[%s199 + $0x321] sm:$0xff]
    %v1558 = vpack.c.bf16 %v1495, %v1494
    %v1559 = vpack.c.bf16 %v1497, %v1496
    %v1560 = vpack.c.bf16 %v1499, %v1498
    %v1561 = vpack.c.bf16 %v1501, %v1500
    %v1562 = vpack.c.bf16 %v1503, %v1502
    %v1563 = vpack.c.bf16 %v1505, %v1504
    %v1564 = vpack.c.bf16 %v1507, %v1506
    %v1565 = vpack.c.bf16 %v1509, %v1508
    %v1566 = vpack.c.bf16 %v1511, %v1510
    %v1567 = vpack.c.bf16 %v1513, %v1512
    %v1568 = vpack.c.bf16 %v1515, %v1514
    %v1569 = vpack.c.bf16 %v1517, %v1516
    %v1570 = vpack.c.bf16 %v1519, %v1518
    %v1571 = vpack.c.bf16 %v1521, %v1520
    %v1572 = vpack.c.bf16 %v1523, %v1522
    %v1573 = vpack.c.bf16 %v1525, %v1524
    %v1574 = vpack.c.bf16 %v1527, %v1526
    %v1575 = vpack.c.bf16 %v1529, %v1528
    %v1576 = vpack.c.bf16 %v1531, %v1530
    %v1577 = vpack.c.bf16 %v1533, %v1532
    %v1578 = vpack.c.bf16 %v1535, %v1534
    %v1579 = vpack.c.bf16 %v1537, %v1536
    %v1580 = vpack.c.bf16 %v1539, %v1538
    %v1581 = vpack.c.bf16 %v1541, %v1540
    %v1582 = vpack.c.bf16 %v1543, %v1542
    %v1583 = vpack.c.bf16 %v1545, %v1544
    %v1584 = vpack.c.bf16 %v1547, %v1546
    %v1585 = vpack.c.bf16 %v1549, %v1548
    %v1586 = vpack.c.bf16 %v1551, %v1550
    %v1587 = vpack.c.bf16 %v1553, %v1552
    %v1588 = vpack.c.bf16 %v1555, %v1554
    %v1589 = vpack.c.bf16 %v1557, %v1556
    %s1590 = scalar_lea.vmem %s1, 256
    %v1591 = vld [vmem:[%s1590] sm:$0xf]
    %v1592 = vld [vmem:[%s1590 + $0x4] sm:$0xf]
    %v1593 = vld [vmem:[%s1590 + $0x8] sm:$0xf]
    %v1594 = vld [vmem:[%s1590 + $0xc] sm:$0xf]
    %v1595 = vld [vmem:[%s1590 + $0x10] sm:$0xf]
    %v1596 = vld [vmem:[%s1590 + $0x14] sm:$0xf]
    %v1597 = vld [vmem:[%s1590 + $0x18] sm:$0xf]
    %v1598 = vld [vmem:[%s1590 + $0x1c] sm:$0xf]
    %v1599 = vld [vmem:[%s1590 + $0x20] sm:$0xf]
    %v1600 = vld [vmem:[%s1590 + $0x24] sm:$0xf]
    %v1601 = vld [vmem:[%s1590 + $0x28] sm:$0xf]
    %v1602 = vld [vmem:[%s1590 + $0x2c] sm:$0xf]
    %v1603 = vld [vmem:[%s1590 + $0x30] sm:$0xf]
    %v1604 = vld [vmem:[%s1590 + $0x34] sm:$0xf]
    %v1605 = vld [vmem:[%s1590 + $0x38] sm:$0xf]
    %v1606 = vld [vmem:[%s1590 + $0x3c] sm:$0xf]
    %v1623 = vunpack.c.l.b16 %v1591
    %v1624 = vunpack.c.l.b16 %v1592
    %v1625 = vunpack.c.l.b16 %v1593
    %v1626 = vunpack.c.l.b16 %v1594
    %v1627 = vunpack.c.l.b16 %v1595
    %v1628 = vunpack.c.l.b16 %v1596
    %v1629 = vunpack.c.l.b16 %v1597
    %v1630 = vunpack.c.l.b16 %v1598
    %v1631 = vunpack.c.l.b16 %v1599
    %v1632 = vunpack.c.l.b16 %v1600
    %v1633 = vunpack.c.l.b16 %v1601
    %v1634 = vunpack.c.l.b16 %v1602
    %v1635 = vunpack.c.l.b16 %v1603
    %v1636 = vunpack.c.l.b16 %v1604
    %v1637 = vunpack.c.l.b16 %v1605
    %v1638 = vunpack.c.l.b16 %v1606
    %v1639 = vpack.c.b16 %v1624, %v1623
    %v1640 = vpack.c.b16 %v1626, %v1625
    %v1641 = vpack.c.b16 %v1628, %v1627
    %v1642 = vpack.c.b16 %v1630, %v1629
    %v1643 = vpack.c.b16 %v1632, %v1631
    %v1644 = vpack.c.b16 %v1634, %v1633
    %v1645 = vpack.c.b16 %v1636, %v1635
    %v1646 = vpack.c.b16 %v1638, %v1637
    %1655 = vmatpush.bf16.msra.mxu0 %v1646
    %1656 = vmatpush.bf16.msra.mxu0 %v1645
    %1657 = vmatpush.bf16.msra.mxu0 %v1644
    %1658 = vmatpush.bf16.msra.mxu0 %v1643
    %1659 = vmatpush.bf16.msra.mxu0 %v1642
    %1660 = vmatpush.bf16.msra.mxu0 %v1641
    %1661 = vmatpush.bf16.msra.mxu0 %v1640
    %1662 = vmatpush.bf16.msra.mxu0 %v1639
    %1663 = vmatmul.bf16.gmra.mxu0 %v1558
    %v1664 = vpop.f32.mrf.mxu0
    %v1665 = vadd.f32 0.0, %v1664
    %v1666 = vpop.f32.mrf.mxu0
    %v1667 = vadd.f32 0.0, %v1666
    %1668 = vmatmul.bf16.gmra.mxu0 %v1559
    %v1669 = vpop.f32.mrf.mxu0
    %v1670 = vadd.f32 0.0, %v1669
    %v1671 = vpop.f32.mrf.mxu0
    %v1672 = vadd.f32 0.0, %v1671
    %1673 = vmatmul.bf16.gmra.mxu0 %v1560
    %v1674 = vpop.f32.mrf.mxu0
    %v1675 = vadd.f32 0.0, %v1674
    %v1676 = vpop.f32.mrf.mxu0
    %v1677 = vadd.f32 0.0, %v1676
    %1678 = vmatmul.bf16.gmra.mxu0 %v1561
    %v1679 = vpop.f32.mrf.mxu0
    %v1680 = vadd.f32 0.0, %v1679
    %v1681 = vpop.f32.mrf.mxu0
    %v1682 = vadd.f32 0.0, %v1681
    %1683 = vmatmul.bf16.gmra.mxu0 %v1562
    %v1684 = vpop.f32.mrf.mxu0
    %v1685 = vadd.f32 0.0, %v1684
    %v1686 = vpop.f32.mrf.mxu0
    %v1687 = vadd.f32 0.0, %v1686
    %1688 = vmatmul.bf16.gmra.mxu0 %v1563
    %v1689 = vpop.f32.mrf.mxu0
    %v1690 = vadd.f32 0.0, %v1689
    %v1691 = vpop.f32.mrf.mxu0
    %v1692 = vadd.f32 0.0, %v1691
    %1693 = vmatmul.bf16.gmra.mxu0 %v1564
    %v1694 = vpop.f32.mrf.mxu0
    %v1695 = vadd.f32 0.0, %v1694
    %v1696 = vpop.f32.mrf.mxu0
    %v1697 = vadd.f32 0.0, %v1696
    %1698 = vmatmul.bf16.gmra.mxu0 %v1565
    %v1699 = vpop.f32.mrf.mxu0
    %v1700 = vadd.f32 0.0, %v1699
    %v1701 = vpop.f32.mrf.mxu0
    %v1702 = vadd.f32 0.0, %v1701
    %1703 = vmatmul.bf16.gmra.mxu0 %v1566
    %v1704 = vpop.f32.mrf.mxu0
    %v1705 = vadd.f32 0.0, %v1704
    %v1706 = vpop.f32.mrf.mxu0
    %v1707 = vadd.f32 0.0, %v1706
    %1708 = vmatmul.bf16.gmra.mxu0 %v1567
    %v1709 = vpop.f32.mrf.mxu0
    %v1710 = vadd.f32 0.0, %v1709
    %v1711 = vpop.f32.mrf.mxu0
    %v1712 = vadd.f32 0.0, %v1711
    %1713 = vmatmul.bf16.gmra.mxu0 %v1568
    %v1714 = vpop.f32.mrf.mxu0
    %v1715 = vadd.f32 0.0, %v1714
    %v1716 = vpop.f32.mrf.mxu0
    %v1717 = vadd.f32 0.0, %v1716
    %1718 = vmatmul.bf16.gmra.mxu0 %v1569
    %v1719 = vpop.f32.mrf.mxu0
    %v1720 = vadd.f32 0.0, %v1719
    %v1721 = vpop.f32.mrf.mxu0
    %v1722 = vadd.f32 0.0, %v1721
    %1723 = vmatmul.bf16.gmra.mxu0 %v1570
    %v1724 = vpop.f32.mrf.mxu0
    %v1725 = vadd.f32 0.0, %v1724
    %v1726 = vpop.f32.mrf.mxu0
    %v1727 = vadd.f32 0.0, %v1726
    %1728 = vmatmul.bf16.gmra.mxu0 %v1571
    %v1729 = vpop.f32.mrf.mxu0
    %v1730 = vadd.f32 0.0, %v1729
    %v1731 = vpop.f32.mrf.mxu0
    %v1732 = vadd.f32 0.0, %v1731
    %1733 = vmatmul.bf16.gmra.mxu0 %v1572
    %v1734 = vpop.f32.mrf.mxu0
    %v1735 = vadd.f32 0.0, %v1734
    %v1736 = vpop.f32.mrf.mxu0
    %v1737 = vadd.f32 0.0, %v1736
    %1738 = vmatmul.bf16.gmra.mxu0 %v1573
    %v1739 = vpop.f32.mrf.mxu0
    %v1740 = vadd.f32 0.0, %v1739
    %v1741 = vpop.f32.mrf.mxu0
    %v1742 = vadd.f32 0.0, %v1741
    %1743 = vmatmul.bf16.gmra.mxu0 %v1574
    %v1744 = vpop.f32.mrf.mxu0
    %v1745 = vadd.f32 0.0, %v1744
    %v1746 = vpop.f32.mrf.mxu0
    %v1747 = vadd.f32 0.0, %v1746
    %1748 = vmatmul.bf16.gmra.mxu0 %v1575
    %v1749 = vpop.f32.mrf.mxu0
    %v1750 = vadd.f32 0.0, %v1749
    %v1751 = vpop.f32.mrf.mxu0
    %v1752 = vadd.f32 0.0, %v1751
    %1753 = vmatmul.bf16.gmra.mxu0 %v1576
    %v1754 = vpop.f32.mrf.mxu0
    %v1755 = vadd.f32 0.0, %v1754
    %v1756 = vpop.f32.mrf.mxu0
    %v1757 = vadd.f32 0.0, %v1756
    %1758 = vmatmul.bf16.gmra.mxu0 %v1577
    %v1759 = vpop.f32.mrf.mxu0
    %v1760 = vadd.f32 0.0, %v1759
    %v1761 = vpop.f32.mrf.mxu0
    %v1762 = vadd.f32 0.0, %v1761
    %1763 = vmatmul.bf16.gmra.mxu0 %v1578
    %v1764 = vpop.f32.mrf.mxu0
    %v1765 = vadd.f32 0.0, %v1764
    %v1766 = vpop.f32.mrf.mxu0
    %v1767 = vadd.f32 0.0, %v1766
    %1768 = vmatmul.bf16.gmra.mxu0 %v1579
    %v1769 = vpop.f32.mrf.mxu0
    %v1770 = vadd.f32 0.0, %v1769
    %v1771 = vpop.f32.mrf.mxu0
    %v1772 = vadd.f32 0.0, %v1771
    %1773 = vmatmul.bf16.gmra.mxu0 %v1580
    %v1774 = vpop.f32.mrf.mxu0
    %v1775 = vadd.f32 0.0, %v1774
    %v1776 = vpop.f32.mrf.mxu0
    %v1777 = vadd.f32 0.0, %v1776
    %1778 = vmatmul.bf16.gmra.mxu0 %v1581
    %v1779 = vpop.f32.mrf.mxu0
    %v1780 = vadd.f32 0.0, %v1779
    %v1781 = vpop.f32.mrf.mxu0
    %v1782 = vadd.f32 0.0, %v1781
    %1783 = vmatmul.bf16.gmra.mxu0 %v1582
    %v1784 = vpop.f32.mrf.mxu0
    %v1785 = vadd.f32 0.0, %v1784
    %v1786 = vpop.f32.mrf.mxu0
    %v1787 = vadd.f32 0.0, %v1786
    %1788 = vmatmul.bf16.gmra.mxu0 %v1583
    %v1789 = vpop.f32.mrf.mxu0
    %v1790 = vadd.f32 0.0, %v1789
    %v1791 = vpop.f32.mrf.mxu0
    %v1792 = vadd.f32 0.0, %v1791
    %1793 = vmatmul.bf16.gmra.mxu0 %v1584
    %v1794 = vpop.f32.mrf.mxu0
    %v1795 = vadd.f32 0.0, %v1794
    %v1796 = vpop.f32.mrf.mxu0
    %v1797 = vadd.f32 0.0, %v1796
    %1798 = vmatmul.bf16.gmra.mxu0 %v1585
    %v1799 = vpop.f32.mrf.mxu0
    %v1800 = vadd.f32 0.0, %v1799
    %v1801 = vpop.f32.mrf.mxu0
    %v1802 = vadd.f32 0.0, %v1801
    %1803 = vmatmul.bf16.gmra.mxu0 %v1586
    %v1804 = vpop.f32.mrf.mxu0
    %v1805 = vadd.f32 0.0, %v1804
    %v1806 = vpop.f32.mrf.mxu0
    %v1807 = vadd.f32 0.0, %v1806
    %1808 = vmatmul.bf16.gmra.mxu0 %v1587
    %v1809 = vpop.f32.mrf.mxu0
    %v1810 = vadd.f32 0.0, %v1809
    %v1811 = vpop.f32.mrf.mxu0
    %v1812 = vadd.f32 0.0, %v1811
    %1813 = vmatmul.bf16.gmra.mxu0 %v1588
    %v1814 = vpop.f32.mrf.mxu0
    %v1815 = vadd.f32 0.0, %v1814
    %v1816 = vpop.f32.mrf.mxu0
    %v1817 = vadd.f32 0.0, %v1816
    %1818 = vmatmul.bf16.gmra.mxu0 %v1589
    %v1819 = vpop.f32.mrf.mxu0
    %v1820 = vadd.f32 0.0, %v1819
    %v1821 = vpop.f32.mrf.mxu0
    %v1822 = vadd.f32 0.0, %v1821
    %1823 = vdwg.mxu0
    %v1840 = vunpack.c.l.b16 %v1478
    %v1841 = vunpack.c.l.b16 %v1479
    %v1842 = vunpack.c.l.b16 %v1480
    %v1843 = vunpack.c.l.b16 %v1481
    %v1844 = vunpack.c.l.b16 %v1482
    %v1845 = vunpack.c.l.b16 %v1483
    %v1846 = vunpack.c.l.b16 %v1484
    %v1847 = vunpack.c.l.b16 %v1485
    %v1848 = vunpack.c.l.b16 %v1486
    %v1849 = vunpack.c.l.b16 %v1487
    %v1850 = vunpack.c.l.b16 %v1488
    %v1851 = vunpack.c.l.b16 %v1489
    %v1852 = vunpack.c.l.b16 %v1490
    %v1853 = vunpack.c.l.b16 %v1491
    %v1854 = vunpack.c.l.b16 %v1492
    %v1855 = vunpack.c.l.b16 %v1493
    %v1856 = vpack.c.b16 %v1841, %v1840
    %v1857 = vpack.c.b16 %v1843, %v1842
    %v1858 = vpack.c.b16 %v1845, %v1844
    %v1859 = vpack.c.b16 %v1847, %v1846
    %v1860 = vpack.c.b16 %v1849, %v1848
    %v1861 = vpack.c.b16 %v1851, %v1850
    %v1862 = vpack.c.b16 %v1853, %v1852
    %v1863 = vpack.c.b16 %v1855, %v1854
    %1872 = vmatpush.bf16.msra.mxu0 %v1863
    %1873 = vmatpush.bf16.msra.mxu0 %v1862
    %1874 = vmatpush.bf16.msra.mxu0 %v1861
    %1875 = vmatpush.bf16.msra.mxu0 %v1860
    %1876 = vmatpush.bf16.msra.mxu0 %v1859
    %1877 = vmatpush.bf16.msra.mxu0 %v1858
    %1878 = vmatpush.bf16.msra.mxu0 %v1857
    %1879 = vmatpush.bf16.msra.mxu0 %v1856
    %1880 = vmatmul.bf16.gmra.mxu0 %v1445
    %v1881 = vpop.f32.mrf.mxu0
    %v1882 = vadd.f32 %v1665, %v1881
    %v1883 = vpop.f32.mrf.mxu0
    %v1884 = vadd.f32 %v1667, %v1883
    %1885 = vmatmul.bf16.gmra.mxu0 %v1446
    %v1886 = vpop.f32.mrf.mxu0
    %v1887 = vadd.f32 %v1670, %v1886
    %v1888 = vpop.f32.mrf.mxu0
    %v1889 = vadd.f32 %v1672, %v1888
    %1890 = vmatmul.bf16.gmra.mxu0 %v1447
    %v1891 = vpop.f32.mrf.mxu0
    %v1892 = vadd.f32 %v1675, %v1891
    %v1893 = vpop.f32.mrf.mxu0
    %v1894 = vadd.f32 %v1677, %v1893
    %1895 = vmatmul.bf16.gmra.mxu0 %v1448
    %v1896 = vpop.f32.mrf.mxu0
    %v1897 = vadd.f32 %v1680, %v1896
    %v1898 = vpop.f32.mrf.mxu0
    %v1899 = vadd.f32 %v1682, %v1898
    %1900 = vmatmul.bf16.gmra.mxu0 %v1449
    %v1901 = vpop.f32.mrf.mxu0
    %v1902 = vadd.f32 %v1685, %v1901
    %v1903 = vpop.f32.mrf.mxu0
    %v1904 = vadd.f32 %v1687, %v1903
    %1905 = vmatmul.bf16.gmra.mxu0 %v1450
    %v1906 = vpop.f32.mrf.mxu0
    %v1907 = vadd.f32 %v1690, %v1906
    %v1908 = vpop.f32.mrf.mxu0
    %v1909 = vadd.f32 %v1692, %v1908
    %1910 = vmatmul.bf16.gmra.mxu0 %v1451
    %v1911 = vpop.f32.mrf.mxu0
    %v1912 = vadd.f32 %v1695, %v1911
    %v1913 = vpop.f32.mrf.mxu0
    %v1914 = vadd.f32 %v1697, %v1913
    %1915 = vmatmul.bf16.gmra.mxu0 %v1452
    %v1916 = vpop.f32.mrf.mxu0
    %v1917 = vadd.f32 %v1700, %v1916
    %v1918 = vpop.f32.mrf.mxu0
    %v1919 = vadd.f32 %v1702, %v1918
    %1920 = vmatmul.bf16.gmra.mxu0 %v1453
    %v1921 = vpop.f32.mrf.mxu0
    %v1922 = vadd.f32 %v1705, %v1921
    %v1923 = vpop.f32.mrf.mxu0
    %v1924 = vadd.f32 %v1707, %v1923
    %1925 = vmatmul.bf16.gmra.mxu0 %v1454
    %v1926 = vpop.f32.mrf.mxu0
    %v1927 = vadd.f32 %v1710, %v1926
    %v1928 = vpop.f32.mrf.mxu0
    %v1929 = vadd.f32 %v1712, %v1928
    %1930 = vmatmul.bf16.gmra.mxu0 %v1455
    %v1931 = vpop.f32.mrf.mxu0
    %v1932 = vadd.f32 %v1715, %v1931
    %v1933 = vpop.f32.mrf.mxu0
    %v1934 = vadd.f32 %v1717, %v1933
    %1935 = vmatmul.bf16.gmra.mxu0 %v1456
    %v1936 = vpop.f32.mrf.mxu0
    %v1937 = vadd.f32 %v1720, %v1936
    %v1938 = vpop.f32.mrf.mxu0
    %v1939 = vadd.f32 %v1722, %v1938
    %1940 = vmatmul.bf16.gmra.mxu0 %v1457
    %v1941 = vpop.f32.mrf.mxu0
    %v1942 = vadd.f32 %v1725, %v1941
    %v1943 = vpop.f32.mrf.mxu0
    %v1944 = vadd.f32 %v1727, %v1943
    %1945 = vmatmul.bf16.gmra.mxu0 %v1458
    %v1946 = vpop.f32.mrf.mxu0
    %v1947 = vadd.f32 %v1730, %v1946
    %v1948 = vpop.f32.mrf.mxu0
    %v1949 = vadd.f32 %v1732, %v1948
    %1950 = vmatmul.bf16.gmra.mxu0 %v1459
    %v1951 = vpop.f32.mrf.mxu0
    %v1952 = vadd.f32 %v1735, %v1951
    %v1953 = vpop.f32.mrf.mxu0
    %v1954 = vadd.f32 %v1737, %v1953
    %1955 = vmatmul.bf16.gmra.mxu0 %v1460
    %v1956 = vpop.f32.mrf.mxu0
    %v1957 = vadd.f32 %v1740, %v1956
    %v1958 = vpop.f32.mrf.mxu0
    %v1959 = vadd.f32 %v1742, %v1958
    %1960 = vmatmul.bf16.gmra.mxu0 %v1461
    %v1961 = vpop.f32.mrf.mxu0
    %v1962 = vadd.f32 %v1745, %v1961
    %v1963 = vpop.f32.mrf.mxu0
    %v1964 = vadd.f32 %v1747, %v1963
    %1965 = vmatmul.bf16.gmra.mxu0 %v1462
    %v1966 = vpop.f32.mrf.mxu0
    %v1967 = vadd.f32 %v1750, %v1966
    %v1968 = vpop.f32.mrf.mxu0
    %v1969 = vadd.f32 %v1752, %v1968
    %1970 = vmatmul.bf16.gmra.mxu0 %v1463
    %v1971 = vpop.f32.mrf.mxu0
    %v1972 = vadd.f32 %v1755, %v1971
    %v1973 = vpop.f32.mrf.mxu0
    %v1974 = vadd.f32 %v1757, %v1973
    %1975 = vmatmul.bf16.gmra.mxu0 %v1464
    %v1976 = vpop.f32.mrf.mxu0
    %v1977 = vadd.f32 %v1760, %v1976
    %v1978 = vpop.f32.mrf.mxu0
    %v1979 = vadd.f32 %v1762, %v1978
    %1980 = vmatmul.bf16.gmra.mxu0 %v1465
    %v1981 = vpop.f32.mrf.mxu0
    %v1982 = vadd.f32 %v1765, %v1981
    %v1983 = vpop.f32.mrf.mxu0
    %v1984 = vadd.f32 %v1767, %v1983
    %1985 = vmatmul.bf16.gmra.mxu0 %v1466
    %v1986 = vpop.f32.mrf.mxu0
    %v1987 = vadd.f32 %v1770, %v1986
    %v1988 = vpop.f32.mrf.mxu0
    %v1989 = vadd.f32 %v1772, %v1988
    %1990 = vmatmul.bf16.gmra.mxu0 %v1467
    %v1991 = vpop.f32.mrf.mxu0
    %v1992 = vadd.f32 %v1775, %v1991
    %v1993 = vpop.f32.mrf.mxu0
    %v1994 = vadd.f32 %v1777, %v1993
    %1995 = vmatmul.bf16.gmra.mxu0 %v1468
    %v1996 = vpop.f32.mrf.mxu0
    %v1997 = vadd.f32 %v1780, %v1996
    %v1998 = vpop.f32.mrf.mxu0
    %v1999 = vadd.f32 %v1782, %v1998
    %2000 = vmatmul.bf16.gmra.mxu0 %v1469
    %v2001 = vpop.f32.mrf.mxu0
    %v2002 = vadd.f32 %v1785, %v2001
    %v2003 = vpop.f32.mrf.mxu0
    %v2004 = vadd.f32 %v1787, %v2003
    %2005 = vmatmul.bf16.gmra.mxu0 %v1470
    %v2006 = vpop.f32.mrf.mxu0
    %v2007 = vadd.f32 %v1790, %v2006
    %v2008 = vpop.f32.mrf.mxu0
    %v2009 = vadd.f32 %v1792, %v2008
    %2010 = vmatmul.bf16.gmra.mxu0 %v1471
    %v2011 = vpop.f32.mrf.mxu0
    %v2012 = vadd.f32 %v1795, %v2011
    %v2013 = vpop.f32.mrf.mxu0
    %v2014 = vadd.f32 %v1797, %v2013
    %2015 = vmatmul.bf16.gmra.mxu0 %v1472
    %v2016 = vpop.f32.mrf.mxu0
    %v2017 = vadd.f32 %v1800, %v2016
    %v2018 = vpop.f32.mrf.mxu0
    %v2019 = vadd.f32 %v1802, %v2018
    %2020 = vmatmul.bf16.gmra.mxu0 %v1473
    %v2021 = vpop.f32.mrf.mxu0
    %v2022 = vadd.f32 %v1805, %v2021
    %v2023 = vpop.f32.mrf.mxu0
    %v2024 = vadd.f32 %v1807, %v2023
    %2025 = vmatmul.bf16.gmra.mxu0 %v1474
    %v2026 = vpop.f32.mrf.mxu0
    %v2027 = vadd.f32 %v1810, %v2026
    %v2028 = vpop.f32.mrf.mxu0
    %v2029 = vadd.f32 %v1812, %v2028
    %2030 = vmatmul.bf16.gmra.mxu0 %v1475
    %v2031 = vpop.f32.mrf.mxu0
    %v2032 = vadd.f32 %v1815, %v2031
    %v2033 = vpop.f32.mrf.mxu0
    %v2034 = vadd.f32 %v1817, %v2033
    %2035 = vmatmul.bf16.gmra.mxu0 %v1476
    %v2036 = vpop.f32.mrf.mxu0
    %v2037 = vadd.f32 %v1820, %v2036
    %v2038 = vpop.f32.mrf.mxu0
    %v2039 = vadd.f32 %v1822, %v2038
    %2040 = vdwg.mxu0
    %v2041 = vld [vmem:[%s199 + $0x2] sm:$0xff]
    %v2042 = vld [vmem:[%s199 + $0xa] sm:$0xff]
    %v2043 = vld [vmem:[%s199 + $0x1a] sm:$0xff]
    %v2044 = vld [vmem:[%s199 + $0x22] sm:$0xff]
    %v2045 = vld [vmem:[%s199 + $0x32] sm:$0xff]
    %v2046 = vld [vmem:[%s199 + $0x3a] sm:$0xff]
    %v2047 = vld [vmem:[%s199 + $0x4a] sm:$0xff]
    %v2048 = vld [vmem:[%s199 + $0x52] sm:$0xff]
    %v2049 = vld [vmem:[%s199 + $0x62] sm:$0xff]
    %v2050 = vld [vmem:[%s199 + $0x6a] sm:$0xff]
    %v2051 = vld [vmem:[%s199 + $0x7a] sm:$0xff]
    %v2052 = vld [vmem:[%s199 + $0x82] sm:$0xff]
    %v2053 = vld [vmem:[%s199 + $0x92] sm:$0xff]
    %v2054 = vld [vmem:[%s199 + $0x9a] sm:$0xff]
    %v2055 = vld [vmem:[%s199 + $0xaa] sm:$0xff]
    %v2056 = vld [vmem:[%s199 + $0xb2] sm:$0xff]
    %v2057 = vld [vmem:[%s199 + $0xc2] sm:$0xff]
    %v2058 = vld [vmem:[%s199 + $0xca] sm:$0xff]
    %v2059 = vld [vmem:[%s199 + $0xda] sm:$0xff]
    %v2060 = vld [vmem:[%s199 + $0xe2] sm:$0xff]
    %v2061 = vld [vmem:[%s199 + $0xf2] sm:$0xff]
    %v2062 = vld [vmem:[%s199 + $0xfa] sm:$0xff]
    %v2063 = vld [vmem:[%s199 + $0x10a] sm:$0xff]
    %v2064 = vld [vmem:[%s199 + $0x112] sm:$0xff]
    %v2065 = vld [vmem:[%s199 + $0x122] sm:$0xff]
    %v2066 = vld [vmem:[%s199 + $0x12a] sm:$0xff]
    %v2067 = vld [vmem:[%s199 + $0x13a] sm:$0xff]
    %v2068 = vld [vmem:[%s199 + $0x142] sm:$0xff]
    %v2069 = vld [vmem:[%s199 + $0x152] sm:$0xff]
    %v2070 = vld [vmem:[%s199 + $0x15a] sm:$0xff]
    %v2071 = vld [vmem:[%s199 + $0x16a] sm:$0xff]
    %v2072 = vld [vmem:[%s199 + $0x172] sm:$0xff]
    %v2073 = vld [vmem:[%s199 + $0x1b2] sm:$0xff]
    %v2074 = vld [vmem:[%s199 + $0x1ba] sm:$0xff]
    %v2075 = vld [vmem:[%s199 + $0x1ca] sm:$0xff]
    %v2076 = vld [vmem:[%s199 + $0x1d2] sm:$0xff]
    %v2077 = vld [vmem:[%s199 + $0x1e2] sm:$0xff]
    %v2078 = vld [vmem:[%s199 + $0x1ea] sm:$0xff]
    %v2079 = vld [vmem:[%s199 + $0x1fa] sm:$0xff]
    %v2080 = vld [vmem:[%s199 + $0x202] sm:$0xff]
    %v2081 = vld [vmem:[%s199 + $0x212] sm:$0xff]
    %v2082 = vld [vmem:[%s199 + $0x21a] sm:$0xff]
    %v2083 = vld [vmem:[%s199 + $0x22a] sm:$0xff]
    %v2084 = vld [vmem:[%s199 + $0x232] sm:$0xff]
    %v2085 = vld [vmem:[%s199 + $0x242] sm:$0xff]
    %v2086 = vld [vmem:[%s199 + $0x24a] sm:$0xff]
    %v2087 = vld [vmem:[%s199 + $0x25a] sm:$0xff]
    %v2088 = vld [vmem:[%s199 + $0x262] sm:$0xff]
    %v2089 = vld [vmem:[%s199 + $0x272] sm:$0xff]
    %v2090 = vld [vmem:[%s199 + $0x27a] sm:$0xff]
    %v2091 = vld [vmem:[%s199 + $0x28a] sm:$0xff]
    %v2092 = vld [vmem:[%s199 + $0x292] sm:$0xff]
    %v2093 = vld [vmem:[%s199 + $0x2a2] sm:$0xff]
    %v2094 = vld [vmem:[%s199 + $0x2aa] sm:$0xff]
    %v2095 = vld [vmem:[%s199 + $0x2ba] sm:$0xff]
    %v2096 = vld [vmem:[%s199 + $0x2c2] sm:$0xff]
    %v2097 = vld [vmem:[%s199 + $0x2d2] sm:$0xff]
    %v2098 = vld [vmem:[%s199 + $0x2da] sm:$0xff]
    %v2099 = vld [vmem:[%s199 + $0x2ea] sm:$0xff]
    %v2100 = vld [vmem:[%s199 + $0x2f2] sm:$0xff]
    %v2101 = vld [vmem:[%s199 + $0x302] sm:$0xff]
    %v2102 = vld [vmem:[%s199 + $0x30a] sm:$0xff]
    %v2103 = vld [vmem:[%s199 + $0x31a] sm:$0xff]
    %v2104 = vld [vmem:[%s199 + $0x322] sm:$0xff]
    %v2105 = vpack.c.bf16 %v2042, %v2041
    %v2106 = vpack.c.bf16 %v2044, %v2043
    %v2107 = vpack.c.bf16 %v2046, %v2045
    %v2108 = vpack.c.bf16 %v2048, %v2047
    %v2109 = vpack.c.bf16 %v2050, %v2049
    %v2110 = vpack.c.bf16 %v2052, %v2051
    %v2111 = vpack.c.bf16 %v2054, %v2053
    %v2112 = vpack.c.bf16 %v2056, %v2055
    %v2113 = vpack.c.bf16 %v2058, %v2057
    %v2114 = vpack.c.bf16 %v2060, %v2059
    %v2115 = vpack.c.bf16 %v2062, %v2061
    %v2116 = vpack.c.bf16 %v2064, %v2063
    %v2117 = vpack.c.bf16 %v2066, %v2065
    %v2118 = vpack.c.bf16 %v2068, %v2067
    %v2119 = vpack.c.bf16 %v2070, %v2069
    %v2120 = vpack.c.bf16 %v2072, %v2071
    %v2121 = vpack.c.bf16 %v2074, %v2073
    %v2122 = vpack.c.bf16 %v2076, %v2075
    %v2123 = vpack.c.bf16 %v2078, %v2077
    %v2124 = vpack.c.bf16 %v2080, %v2079
    %v2125 = vpack.c.bf16 %v2082, %v2081
    %v2126 = vpack.c.bf16 %v2084, %v2083
    %v2127 = vpack.c.bf16 %v2086, %v2085
    %v2128 = vpack.c.bf16 %v2088, %v2087
    %v2129 = vpack.c.bf16 %v2090, %v2089
    %v2130 = vpack.c.bf16 %v2092, %v2091
    %v2131 = vpack.c.bf16 %v2094, %v2093
    %v2132 = vpack.c.bf16 %v2096, %v2095
    %v2133 = vpack.c.bf16 %v2098, %v2097
    %v2134 = vpack.c.bf16 %v2100, %v2099
    %v2135 = vpack.c.bf16 %v2102, %v2101
    %v2136 = vpack.c.bf16 %v2104, %v2103
    %s2137 = scalar_lea.vmem %s1, 320
    %v2138 = vld [vmem:[%s2137] sm:$0xf]
    %v2139 = vld [vmem:[%s2137 + $0x4] sm:$0xf]
    %v2140 = vld [vmem:[%s2137 + $0x8] sm:$0xf]
    %v2141 = vld [vmem:[%s2137 + $0xc] sm:$0xf]
    %v2142 = vld [vmem:[%s2137 + $0x10] sm:$0xf]
    %v2143 = vld [vmem:[%s2137 + $0x14] sm:$0xf]
    %v2144 = vld [vmem:[%s2137 + $0x18] sm:$0xf]
    %v2145 = vld [vmem:[%s2137 + $0x1c] sm:$0xf]
    %v2146 = vld [vmem:[%s2137 + $0x20] sm:$0xf]
    %v2147 = vld [vmem:[%s2137 + $0x24] sm:$0xf]
    %v2148 = vld [vmem:[%s2137 + $0x28] sm:$0xf]
    %v2149 = vld [vmem:[%s2137 + $0x2c] sm:$0xf]
    %v2150 = vld [vmem:[%s2137 + $0x30] sm:$0xf]
    %v2151 = vld [vmem:[%s2137 + $0x34] sm:$0xf]
    %v2152 = vld [vmem:[%s2137 + $0x38] sm:$0xf]
    %v2153 = vld [vmem:[%s2137 + $0x3c] sm:$0xf]
    %v2170 = vunpack.c.l.b16 %v2138
    %v2171 = vunpack.c.l.b16 %v2139
    %v2172 = vunpack.c.l.b16 %v2140
    %v2173 = vunpack.c.l.b16 %v2141
    %v2174 = vunpack.c.l.b16 %v2142
    %v2175 = vunpack.c.l.b16 %v2143
    %v2176 = vunpack.c.l.b16 %v2144
    %v2177 = vunpack.c.l.b16 %v2145
    %v2178 = vunpack.c.l.b16 %v2146
    %v2179 = vunpack.c.l.b16 %v2147
    %v2180 = vunpack.c.l.b16 %v2148
    %v2181 = vunpack.c.l.b16 %v2149
    %v2182 = vunpack.c.l.b16 %v2150
    %v2183 = vunpack.c.l.b16 %v2151
    %v2184 = vunpack.c.l.b16 %v2152
    %v2185 = vunpack.c.l.b16 %v2153
    %v2186 = vpack.c.b16 %v2171, %v2170
    %v2187 = vpack.c.b16 %v2173, %v2172
    %v2188 = vpack.c.b16 %v2175, %v2174
    %v2189 = vpack.c.b16 %v2177, %v2176
    %v2190 = vpack.c.b16 %v2179, %v2178
    %v2191 = vpack.c.b16 %v2181, %v2180
    %v2192 = vpack.c.b16 %v2183, %v2182
    %v2193 = vpack.c.b16 %v2185, %v2184
    %2202 = vmatpush.bf16.msra.mxu0 %v2193
    %2203 = vmatpush.bf16.msra.mxu0 %v2192
    %2204 = vmatpush.bf16.msra.mxu0 %v2191
    %2205 = vmatpush.bf16.msra.mxu0 %v2190
    %2206 = vmatpush.bf16.msra.mxu0 %v2189
    %2207 = vmatpush.bf16.msra.mxu0 %v2188
    %2208 = vmatpush.bf16.msra.mxu0 %v2187
    %2209 = vmatpush.bf16.msra.mxu0 %v2186
    %2210 = vmatmul.bf16.gmra.mxu0 %v2105
    %v2211 = vpop.f32.mrf.mxu0
    %v2212 = vadd.f32 0.0, %v2211
    %v2213 = vpop.f32.mrf.mxu0
    %v2214 = vadd.f32 0.0, %v2213
    %2215 = vmatmul.bf16.gmra.mxu0 %v2106
    %v2216 = vpop.f32.mrf.mxu0
    %v2217 = vadd.f32 0.0, %v2216
    %v2218 = vpop.f32.mrf.mxu0
    %v2219 = vadd.f32 0.0, %v2218
    %2220 = vmatmul.bf16.gmra.mxu0 %v2107
    %v2221 = vpop.f32.mrf.mxu0
    %v2222 = vadd.f32 0.0, %v2221
    %v2223 = vpop.f32.mrf.mxu0
    %v2224 = vadd.f32 0.0, %v2223
    %2225 = vmatmul.bf16.gmra.mxu0 %v2108
    %v2226 = vpop.f32.mrf.mxu0
    %v2227 = vadd.f32 0.0, %v2226
    %v2228 = vpop.f32.mrf.mxu0
    %v2229 = vadd.f32 0.0, %v2228
    %2230 = vmatmul.bf16.gmra.mxu0 %v2109
    %v2231 = vpop.f32.mrf.mxu0
    %v2232 = vadd.f32 0.0, %v2231
    %v2233 = vpop.f32.mrf.mxu0
    %v2234 = vadd.f32 0.0, %v2233
    %2235 = vmatmul.bf16.gmra.mxu0 %v2110
    %v2236 = vpop.f32.mrf.mxu0
    %v2237 = vadd.f32 0.0, %v2236
    %v2238 = vpop.f32.mrf.mxu0
    %v2239 = vadd.f32 0.0, %v2238
    %2240 = vmatmul.bf16.gmra.mxu0 %v2111
    %v2241 = vpop.f32.mrf.mxu0
    %v2242 = vadd.f32 0.0, %v2241
    %v2243 = vpop.f32.mrf.mxu0
    %v2244 = vadd.f32 0.0, %v2243
    %2245 = vmatmul.bf16.gmra.mxu0 %v2112
    %v2246 = vpop.f32.mrf.mxu0
    %v2247 = vadd.f32 0.0, %v2246
    %v2248 = vpop.f32.mrf.mxu0
    %v2249 = vadd.f32 0.0, %v2248
    %2250 = vmatmul.bf16.gmra.mxu0 %v2113
    %v2251 = vpop.f32.mrf.mxu0
    %v2252 = vadd.f32 0.0, %v2251
    %v2253 = vpop.f32.mrf.mxu0
    %v2254 = vadd.f32 0.0, %v2253
    %2255 = vmatmul.bf16.gmra.mxu0 %v2114
    %v2256 = vpop.f32.mrf.mxu0
    %v2257 = vadd.f32 0.0, %v2256
    %v2258 = vpop.f32.mrf.mxu0
    %v2259 = vadd.f32 0.0, %v2258
    %2260 = vmatmul.bf16.gmra.mxu0 %v2115
    %v2261 = vpop.f32.mrf.mxu0
    %v2262 = vadd.f32 0.0, %v2261
    %v2263 = vpop.f32.mrf.mxu0
    %v2264 = vadd.f32 0.0, %v2263
    %2265 = vmatmul.bf16.gmra.mxu0 %v2116
    %v2266 = vpop.f32.mrf.mxu0
    %v2267 = vadd.f32 0.0, %v2266
    %v2268 = vpop.f32.mrf.mxu0
    %v2269 = vadd.f32 0.0, %v2268
    %2270 = vmatmul.bf16.gmra.mxu0 %v2117
    %v2271 = vpop.f32.mrf.mxu0
    %v2272 = vadd.f32 0.0, %v2271
    %v2273 = vpop.f32.mrf.mxu0
    %v2274 = vadd.f32 0.0, %v2273
    %2275 = vmatmul.bf16.gmra.mxu0 %v2118
    %v2276 = vpop.f32.mrf.mxu0
    %v2277 = vadd.f32 0.0, %v2276
    %v2278 = vpop.f32.mrf.mxu0
    %v2279 = vadd.f32 0.0, %v2278
    %2280 = vmatmul.bf16.gmra.mxu0 %v2119
    %v2281 = vpop.f32.mrf.mxu0
    %v2282 = vadd.f32 0.0, %v2281
    %v2283 = vpop.f32.mrf.mxu0
    %v2284 = vadd.f32 0.0, %v2283
    %2285 = vmatmul.bf16.gmra.mxu0 %v2120
    %v2286 = vpop.f32.mrf.mxu0
    %v2287 = vadd.f32 0.0, %v2286
    %v2288 = vpop.f32.mrf.mxu0
    %v2289 = vadd.f32 0.0, %v2288
    %2290 = vmatmul.bf16.gmra.mxu0 %v2121
    %v2291 = vpop.f32.mrf.mxu0
    %v2292 = vadd.f32 0.0, %v2291
    %v2293 = vpop.f32.mrf.mxu0
    %v2294 = vadd.f32 0.0, %v2293
    %2295 = vmatmul.bf16.gmra.mxu0 %v2122
    %v2296 = vpop.f32.mrf.mxu0
    %v2297 = vadd.f32 0.0, %v2296
    %v2298 = vpop.f32.mrf.mxu0
    %v2299 = vadd.f32 0.0, %v2298
    %2300 = vmatmul.bf16.gmra.mxu0 %v2123
    %v2301 = vpop.f32.mrf.mxu0
    %v2302 = vadd.f32 0.0, %v2301
    %v2303 = vpop.f32.mrf.mxu0
    %v2304 = vadd.f32 0.0, %v2303
    %2305 = vmatmul.bf16.gmra.mxu0 %v2124
    %v2306 = vpop.f32.mrf.mxu0
    %v2307 = vadd.f32 0.0, %v2306
    %v2308 = vpop.f32.mrf.mxu0
    %v2309 = vadd.f32 0.0, %v2308
    %2310 = vmatmul.bf16.gmra.mxu0 %v2125
    %v2311 = vpop.f32.mrf.mxu0
    %v2312 = vadd.f32 0.0, %v2311
    %v2313 = vpop.f32.mrf.mxu0
    %v2314 = vadd.f32 0.0, %v2313
    %2315 = vmatmul.bf16.gmra.mxu0 %v2126
    %v2316 = vpop.f32.mrf.mxu0
    %v2317 = vadd.f32 0.0, %v2316
    %v2318 = vpop.f32.mrf.mxu0
    %v2319 = vadd.f32 0.0, %v2318
    %2320 = vmatmul.bf16.gmra.mxu0 %v2127
    %v2321 = vpop.f32.mrf.mxu0
    %v2322 = vadd.f32 0.0, %v2321
    %v2323 = vpop.f32.mrf.mxu0
    %v2324 = vadd.f32 0.0, %v2323
    %2325 = vmatmul.bf16.gmra.mxu0 %v2128
    %v2326 = vpop.f32.mrf.mxu0
    %v2327 = vadd.f32 0.0, %v2326
    %v2328 = vpop.f32.mrf.mxu0
    %v2329 = vadd.f32 0.0, %v2328
    %2330 = vmatmul.bf16.gmra.mxu0 %v2129
    %v2331 = vpop.f32.mrf.mxu0
    %v2332 = vadd.f32 0.0, %v2331
    %v2333 = vpop.f32.mrf.mxu0
    %v2334 = vadd.f32 0.0, %v2333
    %2335 = vmatmul.bf16.gmra.mxu0 %v2130
    %v2336 = vpop.f32.mrf.mxu0
    %v2337 = vadd.f32 0.0, %v2336
    %v2338 = vpop.f32.mrf.mxu0
    %v2339 = vadd.f32 0.0, %v2338
    %2340 = vmatmul.bf16.gmra.mxu0 %v2131
    %v2341 = vpop.f32.mrf.mxu0
    %v2342 = vadd.f32 0.0, %v2341
    %v2343 = vpop.f32.mrf.mxu0
    %v2344 = vadd.f32 0.0, %v2343
    %2345 = vmatmul.bf16.gmra.mxu0 %v2132
    %v2346 = vpop.f32.mrf.mxu0
    %v2347 = vadd.f32 0.0, %v2346
    %v2348 = vpop.f32.mrf.mxu0
    %v2349 = vadd.f32 0.0, %v2348
    %2350 = vmatmul.bf16.gmra.mxu0 %v2133
    %v2351 = vpop.f32.mrf.mxu0
    %v2352 = vadd.f32 0.0, %v2351
    %v2353 = vpop.f32.mrf.mxu0
    %v2354 = vadd.f32 0.0, %v2353
    %2355 = vmatmul.bf16.gmra.mxu0 %v2134
    %v2356 = vpop.f32.mrf.mxu0
    %v2357 = vadd.f32 0.0, %v2356
    %v2358 = vpop.f32.mrf.mxu0
    %v2359 = vadd.f32 0.0, %v2358
    %2360 = vmatmul.bf16.gmra.mxu0 %v2135
    %v2361 = vpop.f32.mrf.mxu0
    %v2362 = vadd.f32 0.0, %v2361
    %v2363 = vpop.f32.mrf.mxu0
    %v2364 = vadd.f32 0.0, %v2363
    %2365 = vmatmul.bf16.gmra.mxu0 %v2136
    %v2366 = vpop.f32.mrf.mxu0
    %v2367 = vadd.f32 0.0, %v2366
    %v2368 = vpop.f32.mrf.mxu0
    %v2369 = vadd.f32 0.0, %v2368
    %2370 = vdwg.mxu0
    %v2371 = vadd.f32 %v1882, %v2212
    %v2372 = vadd.f32 %v1884, %v2214
    %v2373 = vadd.f32 %v1887, %v2217
    %v2374 = vadd.f32 %v1889, %v2219
    %v2375 = vadd.f32 %v1892, %v2222
    %v2376 = vadd.f32 %v1894, %v2224
    %v2377 = vadd.f32 %v1897, %v2227
    %v2378 = vadd.f32 %v1899, %v2229
    %v2379 = vadd.f32 %v1902, %v2232
    %v2380 = vadd.f32 %v1904, %v2234
    %v2381 = vadd.f32 %v1907, %v2237
    %v2382 = vadd.f32 %v1909, %v2239
    %v2383 = vadd.f32 %v1912, %v2242
    %v2384 = vadd.f32 %v1914, %v2244
    %v2385 = vadd.f32 %v1917, %v2247
    %v2386 = vadd.f32 %v1919, %v2249
    %v2387 = vadd.f32 %v1922, %v2252
    %v2388 = vadd.f32 %v1924, %v2254
    %v2389 = vadd.f32 %v1927, %v2257
    %v2390 = vadd.f32 %v1929, %v2259
    %v2391 = vadd.f32 %v1932, %v2262
    %v2392 = vadd.f32 %v1934, %v2264
    %v2393 = vadd.f32 %v1937, %v2267
    %v2394 = vadd.f32 %v1939, %v2269
    %v2395 = vadd.f32 %v1942, %v2272
    %v2396 = vadd.f32 %v1944, %v2274
    %v2397 = vadd.f32 %v1947, %v2277
    %v2398 = vadd.f32 %v1949, %v2279
    %v2399 = vadd.f32 %v1952, %v2282
    %v2400 = vadd.f32 %v1954, %v2284
    %v2401 = vadd.f32 %v1957, %v2287
    %v2402 = vadd.f32 %v1959, %v2289
    %v2403 = vadd.f32 %v1962, %v2292
    %v2404 = vadd.f32 %v1964, %v2294
    %v2405 = vadd.f32 %v1967, %v2297
    %v2406 = vadd.f32 %v1969, %v2299
    %v2407 = vadd.f32 %v1972, %v2302
    %v2408 = vadd.f32 %v1974, %v2304
    %v2409 = vadd.f32 %v1977, %v2307
    %v2410 = vadd.f32 %v1979, %v2309
    %v2411 = vadd.f32 %v1982, %v2312
    %v2412 = vadd.f32 %v1984, %v2314
    %v2413 = vadd.f32 %v1987, %v2317
    %v2414 = vadd.f32 %v1989, %v2319
    %v2415 = vadd.f32 %v1992, %v2322
    %v2416 = vadd.f32 %v1994, %v2324
    %v2417 = vadd.f32 %v1997, %v2327
    %v2418 = vadd.f32 %v1999, %v2329
    %v2419 = vadd.f32 %v2002, %v2332
    %v2420 = vadd.f32 %v2004, %v2334
    %v2421 = vadd.f32 %v2007, %v2337
    %v2422 = vadd.f32 %v2009, %v2339
    %v2423 = vadd.f32 %v2012, %v2342
    %v2424 = vadd.f32 %v2014, %v2344
    %v2425 = vadd.f32 %v2017, %v2347
    %v2426 = vadd.f32 %v2019, %v2349
    %v2427 = vadd.f32 %v2022, %v2352
    %v2428 = vadd.f32 %v2024, %v2354
    %v2429 = vadd.f32 %v2027, %v2357
    %v2430 = vadd.f32 %v2029, %v2359
    %v2431 = vadd.f32 %v2032, %v2362
    %v2432 = vadd.f32 %v2034, %v2364
    %v2433 = vadd.f32 %v2037, %v2367
    %v2434 = vadd.f32 %v2039, %v2369
    %v2435 = vld [vmem:[#allocation3] sm:$0xff]
    %v2436 = vld [vmem:[#allocation3 + $0x8] sm:$0xff]
    %v2437 = vld [vmem:[#allocation3 + $0x10] sm:$0xff]
    %v2438 = vld [vmem:[#allocation3 + $0x18] sm:$0xff]
    %v2439 = vld [vmem:[#allocation3 + $0x20] sm:$0xff]
    %v2440 = vld [vmem:[#allocation3 + $0x28] sm:$0xff]
    %v2441 = vld [vmem:[#allocation3 + $0x30] sm:$0xff]
    %v2442 = vld [vmem:[#allocation3 + $0x38] sm:$0xff]
    %v2443 = vld [vmem:[#allocation3 + $0x40] sm:$0xff]
    %v2444 = vld [vmem:[#allocation3 + $0x48] sm:$0xff]
    %v2445 = vld [vmem:[#allocation3 + $0x50] sm:$0xff]
    %v2446 = vld [vmem:[#allocation3 + $0x58] sm:$0xff]
    %v2447 = vld [vmem:[#allocation3 + $0x60] sm:$0xff]
    %v2448 = vld [vmem:[#allocation3 + $0x68] sm:$0xff]
    %v2449 = vld [vmem:[#allocation3 + $0x70] sm:$0xff]
    %v2450 = vld [vmem:[#allocation3 + $0x78] sm:$0xff]
    %v2451 = vld [vmem:[#allocation3 + $0x80] sm:$0xff]
    %v2452 = vld [vmem:[#allocation3 + $0x88] sm:$0xff]
    %v2453 = vld [vmem:[#allocation3 + $0x90] sm:$0xff]
    %v2454 = vld [vmem:[#allocation3 + $0x98] sm:$0xff]
    %v2455 = vld [vmem:[#allocation3 + $0xa0] sm:$0xff]
    %v2456 = vld [vmem:[#allocation3 + $0xa8] sm:$0xff]
    %v2457 = vld [vmem:[#allocation3 + $0xb0] sm:$0xff]
    %v2458 = vld [vmem:[#allocation3 + $0xb8] sm:$0xff]
    %v2459 = vld [vmem:[#allocation3 + $0xc0] sm:$0xff]
    %v2460 = vld [vmem:[#allocation3 + $0xc8] sm:$0xff]
    %v2461 = vld [vmem:[#allocation3 + $0xd0] sm:$0xff]
    %v2462 = vld [vmem:[#allocation3 + $0xd8] sm:$0xff]
    %v2463 = vld [vmem:[#allocation3 + $0xe0] sm:$0xff]
    %v2464 = vld [vmem:[#allocation3 + $0xe8] sm:$0xff]
    %v2465 = vld [vmem:[#allocation3 + $0xf0] sm:$0xff]
    %v2466 = vld [vmem:[#allocation3 + $0xf8] sm:$0xff]
    %v2467 = vld [vmem:[#allocation3 + $0x100] sm:$0xff]
    %v2468 = vld [vmem:[#allocation3 + $0x108] sm:$0xff]
    %v2469 = vld [vmem:[#allocation3 + $0x110] sm:$0xff]
    %v2470 = vld [vmem:[#allocation3 + $0x118] sm:$0xff]
    %v2471 = vld [vmem:[#allocation3 + $0x120] sm:$0xff]
    %v2472 = vld [vmem:[#allocation3 + $0x128] sm:$0xff]
    %v2473 = vld [vmem:[#allocation3 + $0x130] sm:$0xff]
    %v2474 = vld [vmem:[#allocation3 + $0x138] sm:$0xff]
    %v2475 = vld [vmem:[#allocation3 + $0x140] sm:$0xff]
    %v2476 = vld [vmem:[#allocation3 + $0x148] sm:$0xff]
    %v2477 = vld [vmem:[#allocation3 + $0x150] sm:$0xff]
    %v2478 = vld [vmem:[#allocation3 + $0x158] sm:$0xff]
    %v2479 = vld [vmem:[#allocation3 + $0x160] sm:$0xff]
    %v2480 = vld [vmem:[#allocation3 + $0x168] sm:$0xff]
    %v2481 = vld [vmem:[#allocation3 + $0x170] sm:$0xff]
    %v2482 = vld [vmem:[#allocation3 + $0x178] sm:$0xff]
    %v2483 = vld [vmem:[#allocation3 + $0x180] sm:$0xff]
    %v2484 = vld [vmem:[#allocation3 + $0x188] sm:$0xff]
    %v2485 = vld [vmem:[#allocation3 + $0x190] sm:$0xff]
    %v2486 = vld [vmem:[#allocation3 + $0x198] sm:$0xff]
    %v2487 = vld [vmem:[#allocation3 + $0x1a0] sm:$0xff]
    %v2488 = vld [vmem:[#allocation3 + $0x1a8] sm:$0xff]
    %v2489 = vld [vmem:[#allocation3 + $0x1b0] sm:$0xff]
    %v2490 = vld [vmem:[#allocation3 + $0x1b8] sm:$0xff]
    %v2491 = vld [vmem:[#allocation3 + $0x1c0] sm:$0xff]
    %v2492 = vld [vmem:[#allocation3 + $0x1c8] sm:$0xff]
    %v2493 = vld [vmem:[#allocation3 + $0x1d0] sm:$0xff]
    %v2494 = vld [vmem:[#allocation3 + $0x1d8] sm:$0xff]
    %v2495 = vld [vmem:[#allocation3 + $0x1e0] sm:$0xff]
    %v2496 = vld [vmem:[#allocation3 + $0x1e8] sm:$0xff]
    %v2497 = vld [vmem:[#allocation3 + $0x1f0] sm:$0xff]
    %v2498 = vld [vmem:[#allocation3 + $0x1f8] sm:$0xff]
    %v2499 = vadd.f32 %v2435, %v2371
    %v2500 = vadd.f32 %v2436, %v2372
    %v2501 = vadd.f32 %v2437, %v2373
    %v2502 = vadd.f32 %v2438, %v2374
    %v2503 = vadd.f32 %v2439, %v2375
    %v2504 = vadd.f32 %v2440, %v2376
    %v2505 = vadd.f32 %v2441, %v2377
    %v2506 = vadd.f32 %v2442, %v2378
    %v2507 = vadd.f32 %v2443, %v2379
    %v2508 = vadd.f32 %v2444, %v2380
    %v2509 = vadd.f32 %v2445, %v2381
    %v2510 = vadd.f32 %v2446, %v2382
    %v2511 = vadd.f32 %v2447, %v2383
    %v2512 = vadd.f32 %v2448, %v2384
    %v2513 = vadd.f32 %v2449, %v2385
    %v2514 = vadd.f32 %v2450, %v2386
    %v2515 = vadd.f32 %v2451, %v2387
    %v2516 = vadd.f32 %v2452, %v2388
    %v2517 = vadd.f32 %v2453, %v2389
    %v2518 = vadd.f32 %v2454, %v2390
    %v2519 = vadd.f32 %v2455, %v2391
    %v2520 = vadd.f32 %v2456, %v2392
    %v2521 = vadd.f32 %v2457, %v2393
    %v2522 = vadd.f32 %v2458, %v2394
    %v2523 = vadd.f32 %v2459, %v2395
    %v2524 = vadd.f32 %v2460, %v2396
    %v2525 = vadd.f32 %v2461, %v2397
    %v2526 = vadd.f32 %v2462, %v2398
    %v2527 = vadd.f32 %v2463, %v2399
    %v2528 = vadd.f32 %v2464, %v2400
    %v2529 = vadd.f32 %v2465, %v2401
    %v2530 = vadd.f32 %v2466, %v2402
    %v2531 = vadd.f32 %v2467, %v2403
    %v2532 = vadd.f32 %v2468, %v2404
    %v2533 = vadd.f32 %v2469, %v2405
    %v2534 = vadd.f32 %v2470, %v2406
    %v2535 = vadd.f32 %v2471, %v2407
    %v2536 = vadd.f32 %v2472, %v2408
    %v2537 = vadd.f32 %v2473, %v2409
    %v2538 = vadd.f32 %v2474, %v2410
    %v2539 = vadd.f32 %v2475, %v2411
    %v2540 = vadd.f32 %v2476, %v2412
    %v2541 = vadd.f32 %v2477, %v2413
    %v2542 = vadd.f32 %v2478, %v2414
    %v2543 = vadd.f32 %v2479, %v2415
    %v2544 = vadd.f32 %v2480, %v2416
    %v2545 = vadd.f32 %v2481, %v2417
    %v2546 = vadd.f32 %v2482, %v2418
    %v2547 = vadd.f32 %v2483, %v2419
    %v2548 = vadd.f32 %v2484, %v2420
    %v2549 = vadd.f32 %v2485, %v2421
    %v2550 = vadd.f32 %v2486, %v2422
    %v2551 = vadd.f32 %v2487, %v2423
    %v2552 = vadd.f32 %v2488, %v2424
    %v2553 = vadd.f32 %v2489, %v2425
    %v2554 = vadd.f32 %v2490, %v2426
    %v2555 = vadd.f32 %v2491, %v2427
    %v2556 = vadd.f32 %v2492, %v2428
    %v2557 = vadd.f32 %v2493, %v2429
    %v2558 = vadd.f32 %v2494, %v2430
    %v2559 = vadd.f32 %v2495, %v2431
    %v2560 = vadd.f32 %v2496, %v2432
    %v2561 = vadd.f32 %v2497, %v2433
    %v2562 = vadd.f32 %v2498, %v2434
    %2563 = vst [vmem:[#allocation3] sm:$0xff] %v2499
    %2564 = vst [vmem:[#allocation3 + $0x8] sm:$0xff] %v2500
    %2565 = vst [vmem:[#allocation3 + $0x10] sm:$0xff] %v2501
    %2566 = vst [vmem:[#allocation3 + $0x18] sm:$0xff] %v2502
    %2567 = vst [vmem:[#allocation3 + $0x20] sm:$0xff] %v2503
    %2568 = vst [vmem:[#allocation3 + $0x28] sm:$0xff] %v2504
    %2569 = vst [vmem:[#allocation3 + $0x30] sm:$0xff] %v2505
    %2570 = vst [vmem:[#allocation3 + $0x38] sm:$0xff] %v2506
    %2571 = vst [vmem:[#allocation3 + $0x40] sm:$0xff] %v2507
    %2572 = vst [vmem:[#allocation3 + $0x48] sm:$0xff] %v2508
    %2573 = vst [vmem:[#allocation3 + $0x50] sm:$0xff] %v2509
    %2574 = vst [vmem:[#allocation3 + $0x58] sm:$0xff] %v2510
    %2575 = vst [vmem:[#allocation3 + $0x60] sm:$0xff] %v2511
    %2576 = vst [vmem:[#allocation3 + $0x68] sm:$0xff] %v2512
    %2577 = vst [vmem:[#allocation3 + $0x70] sm:$0xff] %v2513
    %2578 = vst [vmem:[#allocation3 + $0x78] sm:$0xff] %v2514
    %2579 = vst [vmem:[#allocation3 + $0x80] sm:$0xff] %v2515
    %2580 = vst [vmem:[#allocation3 + $0x88] sm:$0xff] %v2516
    %2581 = vst [vmem:[#allocation3 + $0x90] sm:$0xff] %v2517
    %2582 = vst [vmem:[#allocation3 + $0x98] sm:$0xff] %v2518
    %2583 = vst [vmem:[#allocation3 + $0xa0] sm:$0xff] %v2519
    %2584 = vst [vmem:[#allocation3 + $0xa8] sm:$0xff] %v2520
    %2585 = vst [vmem:[#allocation3 + $0xb0] sm:$0xff] %v2521
    %2586 = vst [vmem:[#allocation3 + $0xb8] sm:$0xff] %v2522
    %2587 = vst [vmem:[#allocation3 + $0xc0] sm:$0xff] %v2523
    %2588 = vst [vmem:[#allocation3 + $0xc8] sm:$0xff] %v2524
    %2589 = vst [vmem:[#allocation3 + $0xd0] sm:$0xff] %v2525
    %2590 = vst [vmem:[#allocation3 + $0xd8] sm:$0xff] %v2526
    %2591 = vst [vmem:[#allocation3 + $0xe0] sm:$0xff] %v2527
    %2592 = vst [vmem:[#allocation3 + $0xe8] sm:$0xff] %v2528
    %2593 = vst [vmem:[#allocation3 + $0xf0] sm:$0xff] %v2529
    %2594 = vst [vmem:[#allocation3 + $0xf8] sm:$0xff] %v2530
    %2595 = vst [vmem:[#allocation3 + $0x100] sm:$0xff] %v2531
    %2596 = vst [vmem:[#allocation3 + $0x108] sm:$0xff] %v2532
    %2597 = vst [vmem:[#allocation3 + $0x110] sm:$0xff] %v2533
    %2598 = vst [vmem:[#allocation3 + $0x118] sm:$0xff] %v2534
    %2599 = vst [vmem:[#allocation3 + $0x120] sm:$0xff] %v2535
    %2600 = vst [vmem:[#allocation3 + $0x128] sm:$0xff] %v2536
    %2601 = vst [vmem:[#allocation3 + $0x130] sm:$0xff] %v2537
    %2602 = vst [vmem:[#allocation3 + $0x138] sm:$0xff] %v2538
    %2603 = vst [vmem:[#allocation3 + $0x140] sm:$0xff] %v2539
    %2604 = vst [vmem:[#allocation3 + $0x148] sm:$0xff] %v2540
    %2605 = vst [vmem:[#allocation3 + $0x150] sm:$0xff] %v2541
    %2606 = vst [vmem:[#allocation3 + $0x158] sm:$0xff] %v2542
    %2607 = vst [vmem:[#allocation3 + $0x160] sm:$0xff] %v2543
    %2608 = vst [vmem:[#allocation3 + $0x168] sm:$0xff] %v2544
    %2609 = vst [vmem:[#allocation3 + $0x170] sm:$0xff] %v2545
    %2610 = vst [vmem:[#allocation3 + $0x178] sm:$0xff] %v2546
    %2611 = vst [vmem:[#allocation3 + $0x180] sm:$0xff] %v2547
    %2612 = vst [vmem:[#allocation3 + $0x188] sm:$0xff] %v2548
    %2613 = vst [vmem:[#allocation3 + $0x190] sm:$0xff] %v2549
    %2614 = vst [vmem:[#allocation3 + $0x198] sm:$0xff] %v2550
    %2615 = vst [vmem:[#allocation3 + $0x1a0] sm:$0xff] %v2551
    %2616 = vst [vmem:[#allocation3 + $0x1a8] sm:$0xff] %v2552
    %2617 = vst [vmem:[#allocation3 + $0x1b0] sm:$0xff] %v2553
    %2618 = vst [vmem:[#allocation3 + $0x1b8] sm:$0xff] %v2554
    %2619 = vst [vmem:[#allocation3 + $0x1c0] sm:$0xff] %v2555
    %2620 = vst [vmem:[#allocation3 + $0x1c8] sm:$0xff] %v2556
    %2621 = vst [vmem:[#allocation3 + $0x1d0] sm:$0xff] %v2557
    %2622 = vst [vmem:[#allocation3 + $0x1d8] sm:$0xff] %v2558
    %2623 = vst [vmem:[#allocation3 + $0x1e0] sm:$0xff] %v2559
    %2624 = vst [vmem:[#allocation3 + $0x1e8] sm:$0xff] %v2560
    %2625 = vst [vmem:[#allocation3 + $0x1f0] sm:$0xff] %v2561
    %2626 = vst [vmem:[#allocation3 + $0x1f8] sm:$0xff] %v2562
    %s2627 = scalar_lea.vmem [#allocation2], 48
    %v2628 = vld [vmem:[%s2627] sm:$0xff]
    %v2629 = vld [vmem:[%s2627 + $0x8] sm:$0xff]
    %v2630 = vld [vmem:[%s2627 + $0x18] sm:$0xff]
    %v2631 = vld [vmem:[%s2627 + $0x20] sm:$0xff]
    %v2632 = vld [vmem:[%s2627 + $0x30] sm:$0xff]
    %v2633 = vld [vmem:[%s2627 + $0x38] sm:$0xff]
    %v2634 = vld [vmem:[%s2627 + $0x48] sm:$0xff]
    %v2635 = vld [vmem:[%s2627 + $0x50] sm:$0xff]
    %v2636 = vld [vmem:[%s2627 + $0x60] sm:$0xff]
    %v2637 = vld [vmem:[%s2627 + $0x68] sm:$0xff]
    %v2638 = vld [vmem:[%s2627 + $0x78] sm:$0xff]
    %v2639 = vld [vmem:[%s2627 + $0x80] sm:$0xff]
    %v2640 = vld [vmem:[%s2627 + $0x90] sm:$0xff]
    %v2641 = vld [vmem:[%s2627 + $0x98] sm:$0xff]
    %v2642 = vld [vmem:[%s2627 + $0xa8] sm:$0xff]
    %v2643 = vld [vmem:[%s2627 + $0xb0] sm:$0xff]
    %v2644 = vld [vmem:[%s2627 + $0xc0] sm:$0xff]
    %v2645 = vld [vmem:[%s2627 + $0xc8] sm:$0xff]
    %v2646 = vld [vmem:[%s2627 + $0xd8] sm:$0xff]
    %v2647 = vld [vmem:[%s2627 + $0xe0] sm:$0xff]
    %v2648 = vld [vmem:[%s2627 + $0xf0] sm:$0xff]
    %v2649 = vld [vmem:[%s2627 + $0xf8] sm:$0xff]
    %v2650 = vld [vmem:[%s2627 + $0x108] sm:$0xff]
    %v2651 = vld [vmem:[%s2627 + $0x110] sm:$0xff]
    %v2652 = vld [vmem:[%s2627 + $0x120] sm:$0xff]
    %v2653 = vld [vmem:[%s2627 + $0x128] sm:$0xff]
    %v2654 = vld [vmem:[%s2627 + $0x138] sm:$0xff]
    %v2655 = vld [vmem:[%s2627 + $0x140] sm:$0xff]
    %v2656 = vld [vmem:[%s2627 + $0x150] sm:$0xff]
    %v2657 = vld [vmem:[%s2627 + $0x158] sm:$0xff]
    %v2658 = vld [vmem:[%s2627 + $0x168] sm:$0xff]
    %v2659 = vld [vmem:[%s2627 + $0x170] sm:$0xff]
    %v2660 = vld [vmem:[%s2627 + $0x1b0] sm:$0xff]
    %v2661 = vld [vmem:[%s2627 + $0x1b8] sm:$0xff]
    %v2662 = vld [vmem:[%s2627 + $0x1c8] sm:$0xff]
    %v2663 = vld [vmem:[%s2627 + $0x1d0] sm:$0xff]
    %v2664 = vld [vmem:[%s2627 + $0x1e0] sm:$0xff]
    %v2665 = vld [vmem:[%s2627 + $0x1e8] sm:$0xff]
    %v2666 = vld [vmem:[%s2627 + $0x1f8] sm:$0xff]
    %v2667 = vld [vmem:[%s2627 + $0x200] sm:$0xff]
    %v2668 = vld [vmem:[%s2627 + $0x210] sm:$0xff]
    %v2669 = vld [vmem:[%s2627 + $0x218] sm:$0xff]
    %v2670 = vld [vmem:[%s2627 + $0x228] sm:$0xff]
    %v2671 = vld [vmem:[%s2627 + $0x230] sm:$0xff]
    %v2672 = vld [vmem:[%s2627 + $0x240] sm:$0xff]
    %v2673 = vld [vmem:[%s2627 + $0x248] sm:$0xff]
    %v2674 = vld [vmem:[%s2627 + $0x258] sm:$0xff]
    %v2675 = vld [vmem:[%s2627 + $0x260] sm:$0xff]
    %v2676 = vld [vmem:[%s2627 + $0x270] sm:$0xff]
    %v2677 = vld [vmem:[%s2627 + $0x278] sm:$0xff]
    %v2678 = vld [vmem:[%s2627 + $0x288] sm:$0xff]
    %v2679 = vld [vmem:[%s2627 + $0x290] sm:$0xff]
    %v2680 = vld [vmem:[%s2627 + $0x2a0] sm:$0xff]
    %v2681 = vld [vmem:[%s2627 + $0x2a8] sm:$0xff]
    %v2682 = vld [vmem:[%s2627 + $0x2b8] sm:$0xff]
    %v2683 = vld [vmem:[%s2627 + $0x2c0] sm:$0xff]
    %v2684 = vld [vmem:[%s2627 + $0x2d0] sm:$0xff]
    %v2685 = vld [vmem:[%s2627 + $0x2d8] sm:$0xff]
    %v2686 = vld [vmem:[%s2627 + $0x2e8] sm:$0xff]
    %v2687 = vld [vmem:[%s2627 + $0x2f0] sm:$0xff]
    %v2688 = vld [vmem:[%s2627 + $0x300] sm:$0xff]
    %v2689 = vld [vmem:[%s2627 + $0x308] sm:$0xff]
    %v2690 = vld [vmem:[%s2627 + $0x318] sm:$0xff]
    %v2691 = vld [vmem:[%s2627 + $0x320] sm:$0xff]
    %v2692 = vpack.c.bf16 %v2629, %v2628
    %v2693 = vpack.c.bf16 %v2631, %v2630
    %v2694 = vpack.c.bf16 %v2633, %v2632
    %v2695 = vpack.c.bf16 %v2635, %v2634
    %v2696 = vpack.c.bf16 %v2637, %v2636
    %v2697 = vpack.c.bf16 %v2639, %v2638
    %v2698 = vpack.c.bf16 %v2641, %v2640
    %v2699 = vpack.c.bf16 %v2643, %v2642
    %v2700 = vpack.c.bf16 %v2645, %v2644
    %v2701 = vpack.c.bf16 %v2647, %v2646
    %v2702 = vpack.c.bf16 %v2649, %v2648
    %v2703 = vpack.c.bf16 %v2651, %v2650
    %v2704 = vpack.c.bf16 %v2653, %v2652
    %v2705 = vpack.c.bf16 %v2655, %v2654
    %v2706 = vpack.c.bf16 %v2657, %v2656
    %v2707 = vpack.c.bf16 %v2659, %v2658
    %v2708 = vpack.c.bf16 %v2661, %v2660
    %v2709 = vpack.c.bf16 %v2663, %v2662
    %v2710 = vpack.c.bf16 %v2665, %v2664
    %v2711 = vpack.c.bf16 %v2667, %v2666
    %v2712 = vpack.c.bf16 %v2669, %v2668
    %v2713 = vpack.c.bf16 %v2671, %v2670
    %v2714 = vpack.c.bf16 %v2673, %v2672
    %v2715 = vpack.c.bf16 %v2675, %v2674
    %v2716 = vpack.c.bf16 %v2677, %v2676
    %v2717 = vpack.c.bf16 %v2679, %v2678
    %v2718 = vpack.c.bf16 %v2681, %v2680
    %v2719 = vpack.c.bf16 %v2683, %v2682
    %v2720 = vpack.c.bf16 %v2685, %v2684
    %v2721 = vpack.c.bf16 %v2687, %v2686
    %v2722 = vpack.c.bf16 %v2689, %v2688
    %v2723 = vpack.c.bf16 %v2691, %v2690
    %s2724 = scalar_lea.vmem %s1, 384
    %v2725 = vld [vmem:[%s2724] sm:$0xf]
    %v2726 = vld [vmem:[%s2724 + $0x4] sm:$0xf]
    %v2727 = vld [vmem:[%s2724 + $0x8] sm:$0xf]
    %v2728 = vld [vmem:[%s2724 + $0xc] sm:$0xf]
    %v2729 = vld [vmem:[%s2724 + $0x10] sm:$0xf]
    %v2730 = vld [vmem:[%s2724 + $0x14] sm:$0xf]
    %v2731 = vld [vmem:[%s2724 + $0x18] sm:$0xf]
    %v2732 = vld [vmem:[%s2724 + $0x1c] sm:$0xf]
    %v2733 = vld [vmem:[%s2724 + $0x20] sm:$0xf]
    %v2734 = vld [vmem:[%s2724 + $0x24] sm:$0xf]
    %v2735 = vld [vmem:[%s2724 + $0x28] sm:$0xf]
    %v2736 = vld [vmem:[%s2724 + $0x2c] sm:$0xf]
    %v2737 = vld [vmem:[%s2724 + $0x30] sm:$0xf]
    %v2738 = vld [vmem:[%s2724 + $0x34] sm:$0xf]
    %v2739 = vld [vmem:[%s2724 + $0x38] sm:$0xf]
    %v2740 = vld [vmem:[%s2724 + $0x3c] sm:$0xf]
    %v2741 = vld [vmem:[%s2627 + $0x1] sm:$0xff]
    %v2742 = vld [vmem:[%s2627 + $0x9] sm:$0xff]
    %v2743 = vld [vmem:[%s2627 + $0x19] sm:$0xff]
    %v2744 = vld [vmem:[%s2627 + $0x21] sm:$0xff]
    %v2745 = vld [vmem:[%s2627 + $0x31] sm:$0xff]
    %v2746 = vld [vmem:[%s2627 + $0x39] sm:$0xff]
    %v2747 = vld [vmem:[%s2627 + $0x49] sm:$0xff]
    %v2748 = vld [vmem:[%s2627 + $0x51] sm:$0xff]
    %v2749 = vld [vmem:[%s2627 + $0x61] sm:$0xff]
    %v2750 = vld [vmem:[%s2627 + $0x69] sm:$0xff]
    %v2751 = vld [vmem:[%s2627 + $0x79] sm:$0xff]
    %v2752 = vld [vmem:[%s2627 + $0x81] sm:$0xff]
    %v2753 = vld [vmem:[%s2627 + $0x91] sm:$0xff]
    %v2754 = vld [vmem:[%s2627 + $0x99] sm:$0xff]
    %v2755 = vld [vmem:[%s2627 + $0xa9] sm:$0xff]
    %v2756 = vld [vmem:[%s2627 + $0xb1] sm:$0xff]
    %v2757 = vld [vmem:[%s2627 + $0xc1] sm:$0xff]
    %v2758 = vld [vmem:[%s2627 + $0xc9] sm:$0xff]
    %v2759 = vld [vmem:[%s2627 + $0xd9] sm:$0xff]
    %v2760 = vld [vmem:[%s2627 + $0xe1] sm:$0xff]
    %v2761 = vld [vmem:[%s2627 + $0xf1] sm:$0xff]
    %v2762 = vld [vmem:[%s2627 + $0xf9] sm:$0xff]
    %v2763 = vld [vmem:[%s2627 + $0x109] sm:$0xff]
    %v2764 = vld [vmem:[%s2627 + $0x111] sm:$0xff]
    %v2765 = vld [vmem:[%s2627 + $0x121] sm:$0xff]
    %v2766 = vld [vmem:[%s2627 + $0x129] sm:$0xff]
    %v2767 = vld [vmem:[%s2627 + $0x139] sm:$0xff]
    %v2768 = vld [vmem:[%s2627 + $0x141] sm:$0xff]
    %v2769 = vld [vmem:[%s2627 + $0x151] sm:$0xff]
    %v2770 = vld [vmem:[%s2627 + $0x159] sm:$0xff]
    %v2771 = vld [vmem:[%s2627 + $0x169] sm:$0xff]
    %v2772 = vld [vmem:[%s2627 + $0x171] sm:$0xff]
    %v2773 = vld [vmem:[%s2627 + $0x1b1] sm:$0xff]
    %v2774 = vld [vmem:[%s2627 + $0x1b9] sm:$0xff]
    %v2775 = vld [vmem:[%s2627 + $0x1c9] sm:$0xff]
    %v2776 = vld [vmem:[%s2627 + $0x1d1] sm:$0xff]
    %v2777 = vld [vmem:[%s2627 + $0x1e1] sm:$0xff]
    %v2778 = vld [vmem:[%s2627 + $0x1e9] sm:$0xff]
    %v2779 = vld [vmem:[%s2627 + $0x1f9] sm:$0xff]
    %v2780 = vld [vmem:[%s2627 + $0x201] sm:$0xff]
    %v2781 = vld [vmem:[%s2627 + $0x211] sm:$0xff]
    %v2782 = vld [vmem:[%s2627 + $0x219] sm:$0xff]
    %v2783 = vld [vmem:[%s2627 + $0x229] sm:$0xff]
    %v2784 = vld [vmem:[%s2627 + $0x231] sm:$0xff]
    %v2785 = vld [vmem:[%s2627 + $0x241] sm:$0xff]
    %v2786 = vld [vmem:[%s2627 + $0x249] sm:$0xff]
    %v2787 = vld [vmem:[%s2627 + $0x259] sm:$0xff]
    %v2788 = vld [vmem:[%s2627 + $0x261] sm:$0xff]
    %v2789 = vld [vmem:[%s2627 + $0x271] sm:$0xff]
    %v2790 = vld [vmem:[%s2627 + $0x279] sm:$0xff]
    %v2791 = vld [vmem:[%s2627 + $0x289] sm:$0xff]
    %v2792 = vld [vmem:[%s2627 + $0x291] sm:$0xff]
    %v2793 = vld [vmem:[%s2627 + $0x2a1] sm:$0xff]
    %v2794 = vld [vmem:[%s2627 + $0x2a9] sm:$0xff]
    %v2795 = vld [vmem:[%s2627 + $0x2b9] sm:$0xff]
    %v2796 = vld [vmem:[%s2627 + $0x2c1] sm:$0xff]
    %v2797 = vld [vmem:[%s2627 + $0x2d1] sm:$0xff]
    %v2798 = vld [vmem:[%s2627 + $0x2d9] sm:$0xff]
    %v2799 = vld [vmem:[%s2627 + $0x2e9] sm:$0xff]
    %v2800 = vld [vmem:[%s2627 + $0x2f1] sm:$0xff]
    %v2801 = vld [vmem:[%s2627 + $0x301] sm:$0xff]
    %v2802 = vld [vmem:[%s2627 + $0x309] sm:$0xff]
    %v2803 = vld [vmem:[%s2627 + $0x319] sm:$0xff]
    %v2804 = vld [vmem:[%s2627 + $0x321] sm:$0xff]
    %v2805 = vpack.c.bf16 %v2742, %v2741
    %v2806 = vpack.c.bf16 %v2744, %v2743
    %v2807 = vpack.c.bf16 %v2746, %v2745
    %v2808 = vpack.c.bf16 %v2748, %v2747
    %v2809 = vpack.c.bf16 %v2750, %v2749
    %v2810 = vpack.c.bf16 %v2752, %v2751
    %v2811 = vpack.c.bf16 %v2754, %v2753
    %v2812 = vpack.c.bf16 %v2756, %v2755
    %v2813 = vpack.c.bf16 %v2758, %v2757
    %v2814 = vpack.c.bf16 %v2760, %v2759
    %v2815 = vpack.c.bf16 %v2762, %v2761
    %v2816 = vpack.c.bf16 %v2764, %v2763
    %v2817 = vpack.c.bf16 %v2766, %v2765
    %v2818 = vpack.c.bf16 %v2768, %v2767
    %v2819 = vpack.c.bf16 %v2770, %v2769
    %v2820 = vpack.c.bf16 %v2772, %v2771
    %v2821 = vpack.c.bf16 %v2774, %v2773
    %v2822 = vpack.c.bf16 %v2776, %v2775
    %v2823 = vpack.c.bf16 %v2778, %v2777
    %v2824 = vpack.c.bf16 %v2780, %v2779
    %v2825 = vpack.c.bf16 %v2782, %v2781
    %v2826 = vpack.c.bf16 %v2784, %v2783
    %v2827 = vpack.c.bf16 %v2786, %v2785
    %v2828 = vpack.c.bf16 %v2788, %v2787
    %v2829 = vpack.c.bf16 %v2790, %v2789
    %v2830 = vpack.c.bf16 %v2792, %v2791
    %v2831 = vpack.c.bf16 %v2794, %v2793
    %v2832 = vpack.c.bf16 %v2796, %v2795
    %v2833 = vpack.c.bf16 %v2798, %v2797
    %v2834 = vpack.c.bf16 %v2800, %v2799
    %v2835 = vpack.c.bf16 %v2802, %v2801
    %v2836 = vpack.c.bf16 %v2804, %v2803
    %s2837 = scalar_lea.vmem %s1, 448
    %v2838 = vld [vmem:[%s2837] sm:$0xf]
    %v2839 = vld [vmem:[%s2837 + $0x4] sm:$0xf]
    %v2840 = vld [vmem:[%s2837 + $0x8] sm:$0xf]
    %v2841 = vld [vmem:[%s2837 + $0xc] sm:$0xf]
    %v2842 = vld [vmem:[%s2837 + $0x10] sm:$0xf]
    %v2843 = vld [vmem:[%s2837 + $0x14] sm:$0xf]
    %v2844 = vld [vmem:[%s2837 + $0x18] sm:$0xf]
    %v2845 = vld [vmem:[%s2837 + $0x1c] sm:$0xf]
    %v2846 = vld [vmem:[%s2837 + $0x20] sm:$0xf]
    %v2847 = vld [vmem:[%s2837 + $0x24] sm:$0xf]
    %v2848 = vld [vmem:[%s2837 + $0x28] sm:$0xf]
    %v2849 = vld [vmem:[%s2837 + $0x2c] sm:$0xf]
    %v2850 = vld [vmem:[%s2837 + $0x30] sm:$0xf]
    %v2851 = vld [vmem:[%s2837 + $0x34] sm:$0xf]
    %v2852 = vld [vmem:[%s2837 + $0x38] sm:$0xf]
    %v2853 = vld [vmem:[%s2837 + $0x3c] sm:$0xf]
    %v2870 = vunpack.c.l.b16 %v2838
    %v2871 = vunpack.c.l.b16 %v2839
    %v2872 = vunpack.c.l.b16 %v2840
    %v2873 = vunpack.c.l.b16 %v2841
    %v2874 = vunpack.c.l.b16 %v2842
    %v2875 = vunpack.c.l.b16 %v2843
    %v2876 = vunpack.c.l.b16 %v2844
    %v2877 = vunpack.c.l.b16 %v2845
    %v2878 = vunpack.c.l.b16 %v2846
    %v2879 = vunpack.c.l.b16 %v2847
    %v2880 = vunpack.c.l.b16 %v2848
    %v2881 = vunpack.c.l.b16 %v2849
    %v2882 = vunpack.c.l.b16 %v2850
    %v2883 = vunpack.c.l.b16 %v2851
    %v2884 = vunpack.c.l.b16 %v2852
    %v2885 = vunpack.c.l.b16 %v2853
    %v2886 = vpack.c.b16 %v2871, %v2870
    %v2887 = vpack.c.b16 %v2873, %v2872
    %v2888 = vpack.c.b16 %v2875, %v2874
    %v2889 = vpack.c.b16 %v2877, %v2876
    %v2890 = vpack.c.b16 %v2879, %v2878
    %v2891 = vpack.c.b16 %v2881, %v2880
    %v2892 = vpack.c.b16 %v2883, %v2882
    %v2893 = vpack.c.b16 %v2885, %v2884
    %2902 = vmatpush.bf16.msra.mxu0 %v2893
    %2903 = vmatpush.bf16.msra.mxu0 %v2892
    %2904 = vmatpush.bf16.msra.mxu0 %v2891
    %2905 = vmatpush.bf16.msra.mxu0 %v2890
    %2906 = vmatpush.bf16.msra.mxu0 %v2889
    %2907 = vmatpush.bf16.msra.mxu0 %v2888
    %2908 = vmatpush.bf16.msra.mxu0 %v2887
    %2909 = vmatpush.bf16.msra.mxu0 %v2886
    %2910 = vmatmul.bf16.gmra.mxu0 %v2805
    %v2911 = vpop.f32.mrf.mxu0
    %v2912 = vadd.f32 0.0, %v2911
    %v2913 = vpop.f32.mrf.mxu0
    %v2914 = vadd.f32 0.0, %v2913
    %2915 = vmatmul.bf16.gmra.mxu0 %v2806
    %v2916 = vpop.f32.mrf.mxu0
    %v2917 = vadd.f32 0.0, %v2916
    %v2918 = vpop.f32.mrf.mxu0
    %v2919 = vadd.f32 0.0, %v2918
    %2920 = vmatmul.bf16.gmra.mxu0 %v2807
    %v2921 = vpop.f32.mrf.mxu0
    %v2922 = vadd.f32 0.0, %v2921
    %v2923 = vpop.f32.mrf.mxu0
    %v2924 = vadd.f32 0.0, %v2923
    %2925 = vmatmul.bf16.gmra.mxu0 %v2808
    %v2926 = vpop.f32.mrf.mxu0
    %v2927 = vadd.f32 0.0, %v2926
    %v2928 = vpop.f32.mrf.mxu0
    %v2929 = vadd.f32 0.0, %v2928
    %2930 = vmatmul.bf16.gmra.mxu0 %v2809
    %v2931 = vpop.f32.mrf.mxu0
    %v2932 = vadd.f32 0.0, %v2931
    %v2933 = vpop.f32.mrf.mxu0
    %v2934 = vadd.f32 0.0, %v2933
    %2935 = vmatmul.bf16.gmra.mxu0 %v2810
    %v2936 = vpop.f32.mrf.mxu0
    %v2937 = vadd.f32 0.0, %v2936
    %v2938 = vpop.f32.mrf.mxu0
    %v2939 = vadd.f32 0.0, %v2938
    %2940 = vmatmul.bf16.gmra.mxu0 %v2811
    %v2941 = vpop.f32.mrf.mxu0
    %v2942 = vadd.f32 0.0, %v2941
    %v2943 = vpop.f32.mrf.mxu0
    %v2944 = vadd.f32 0.0, %v2943
    %2945 = vmatmul.bf16.gmra.mxu0 %v2812
    %v2946 = vpop.f32.mrf.mxu0
    %v2947 = vadd.f32 0.0, %v2946
    %v2948 = vpop.f32.mrf.mxu0
    %v2949 = vadd.f32 0.0, %v2948
    %2950 = vmatmul.bf16.gmra.mxu0 %v2813
    %v2951 = vpop.f32.mrf.mxu0
    %v2952 = vadd.f32 0.0, %v2951
    %v2953 = vpop.f32.mrf.mxu0
    %v2954 = vadd.f32 0.0, %v2953
    %2955 = vmatmul.bf16.gmra.mxu0 %v2814
    %v2956 = vpop.f32.mrf.mxu0
    %v2957 = vadd.f32 0.0, %v2956
    %v2958 = vpop.f32.mrf.mxu0
    %v2959 = vadd.f32 0.0, %v2958
    %2960 = vmatmul.bf16.gmra.mxu0 %v2815
    %v2961 = vpop.f32.mrf.mxu0
    %v2962 = vadd.f32 0.0, %v2961
    %v2963 = vpop.f32.mrf.mxu0
    %v2964 = vadd.f32 0.0, %v2963
    %2965 = vmatmul.bf16.gmra.mxu0 %v2816
    %v2966 = vpop.f32.mrf.mxu0
    %v2967 = vadd.f32 0.0, %v2966
    %v2968 = vpop.f32.mrf.mxu0
    %v2969 = vadd.f32 0.0, %v2968
    %2970 = vmatmul.bf16.gmra.mxu0 %v2817
    %v2971 = vpop.f32.mrf.mxu0
    %v2972 = vadd.f32 0.0, %v2971
    %v2973 = vpop.f32.mrf.mxu0
    %v2974 = vadd.f32 0.0, %v2973
    %2975 = vmatmul.bf16.gmra.mxu0 %v2818
    %v2976 = vpop.f32.mrf.mxu0
    %v2977 = vadd.f32 0.0, %v2976
    %v2978 = vpop.f32.mrf.mxu0
    %v2979 = vadd.f32 0.0, %v2978
    %2980 = vmatmul.bf16.gmra.mxu0 %v2819
    %v2981 = vpop.f32.mrf.mxu0
    %v2982 = vadd.f32 0.0, %v2981
    %v2983 = vpop.f32.mrf.mxu0
    %v2984 = vadd.f32 0.0, %v2983
    %2985 = vmatmul.bf16.gmra.mxu0 %v2820
    %v2986 = vpop.f32.mrf.mxu0
    %v2987 = vadd.f32 0.0, %v2986
    %v2988 = vpop.f32.mrf.mxu0
    %v2989 = vadd.f32 0.0, %v2988
    %2990 = vmatmul.bf16.gmra.mxu0 %v2821
    %v2991 = vpop.f32.mrf.mxu0
    %v2992 = vadd.f32 0.0, %v2991
    %v2993 = vpop.f32.mrf.mxu0
    %v2994 = vadd.f32 0.0, %v2993
    %2995 = vmatmul.bf16.gmra.mxu0 %v2822
    %v2996 = vpop.f32.mrf.mxu0
    %v2997 = vadd.f32 0.0, %v2996
    %v2998 = vpop.f32.mrf.mxu0
    %v2999 = vadd.f32 0.0, %v2998
    %3000 = vmatmul.bf16.gmra.mxu0 %v2823
    %v3001 = vpop.f32.mrf.mxu0
    %v3002 = vadd.f32 0.0, %v3001
    %v3003 = vpop.f32.mrf.mxu0
    %v3004 = vadd.f32 0.0, %v3003
    %3005 = vmatmul.bf16.gmra.mxu0 %v2824
    %v3006 = vpop.f32.mrf.mxu0
    %v3007 = vadd.f32 0.0, %v3006
    %v3008 = vpop.f32.mrf.mxu0
    %v3009 = vadd.f32 0.0, %v3008
    %3010 = vmatmul.bf16.gmra.mxu0 %v2825
    %v3011 = vpop.f32.mrf.mxu0
    %v3012 = vadd.f32 0.0, %v3011
    %v3013 = vpop.f32.mrf.mxu0
    %v3014 = vadd.f32 0.0, %v3013
    %3015 = vmatmul.bf16.gmra.mxu0 %v2826
    %v3016 = vpop.f32.mrf.mxu0
    %v3017 = vadd.f32 0.0, %v3016
    %v3018 = vpop.f32.mrf.mxu0
    %v3019 = vadd.f32 0.0, %v3018
    %3020 = vmatmul.bf16.gmra.mxu0 %v2827
    %v3021 = vpop.f32.mrf.mxu0
    %v3022 = vadd.f32 0.0, %v3021
    %v3023 = vpop.f32.mrf.mxu0
    %v3024 = vadd.f32 0.0, %v3023
    %3025 = vmatmul.bf16.gmra.mxu0 %v2828
    %v3026 = vpop.f32.mrf.mxu0
    %v3027 = vadd.f32 0.0, %v3026
    %v3028 = vpop.f32.mrf.mxu0
    %v3029 = vadd.f32 0.0, %v3028
    %3030 = vmatmul.bf16.gmra.mxu0 %v2829
    %v3031 = vpop.f32.mrf.mxu0
    %v3032 = vadd.f32 0.0, %v3031
    %v3033 = vpop.f32.mrf.mxu0
    %v3034 = vadd.f32 0.0, %v3033
    %3035 = vmatmul.bf16.gmra.mxu0 %v2830
    %v3036 = vpop.f32.mrf.mxu0
    %v3037 = vadd.f32 0.0, %v3036
    %v3038 = vpop.f32.mrf.mxu0
    %v3039 = vadd.f32 0.0, %v3038
    %3040 = vmatmul.bf16.gmra.mxu0 %v2831
    %v3041 = vpop.f32.mrf.mxu0
    %v3042 = vadd.f32 0.0, %v3041
    %v3043 = vpop.f32.mrf.mxu0
    %v3044 = vadd.f32 0.0, %v3043
    %3045 = vmatmul.bf16.gmra.mxu0 %v2832
    %v3046 = vpop.f32.mrf.mxu0
    %v3047 = vadd.f32 0.0, %v3046
    %v3048 = vpop.f32.mrf.mxu0
    %v3049 = vadd.f32 0.0, %v3048
    %3050 = vmatmul.bf16.gmra.mxu0 %v2833
    %v3051 = vpop.f32.mrf.mxu0
    %v3052 = vadd.f32 0.0, %v3051
    %v3053 = vpop.f32.mrf.mxu0
    %v3054 = vadd.f32 0.0, %v3053
    %3055 = vmatmul.bf16.gmra.mxu0 %v2834
    %v3056 = vpop.f32.mrf.mxu0
    %v3057 = vadd.f32 0.0, %v3056
    %v3058 = vpop.f32.mrf.mxu0
    %v3059 = vadd.f32 0.0, %v3058
    %3060 = vmatmul.bf16.gmra.mxu0 %v2835
    %v3061 = vpop.f32.mrf.mxu0
    %v3062 = vadd.f32 0.0, %v3061
    %v3063 = vpop.f32.mrf.mxu0
    %v3064 = vadd.f32 0.0, %v3063
    %3065 = vmatmul.bf16.gmra.mxu0 %v2836
    %v3066 = vpop.f32.mrf.mxu0
    %v3067 = vadd.f32 0.0, %v3066
    %v3068 = vpop.f32.mrf.mxu0
    %v3069 = vadd.f32 0.0, %v3068
    %3070 = vdwg.mxu0
    %v3087 = vunpack.c.l.b16 %v2725
    %v3088 = vunpack.c.l.b16 %v2726
    %v3089 = vunpack.c.l.b16 %v2727
    %v3090 = vunpack.c.l.b16 %v2728
    %v3091 = vunpack.c.l.b16 %v2729
    %v3092 = vunpack.c.l.b16 %v2730
    %v3093 = vunpack.c.l.b16 %v2731
    %v3094 = vunpack.c.l.b16 %v2732
    %v3095 = vunpack.c.l.b16 %v2733
    %v3096 = vunpack.c.l.b16 %v2734
    %v3097 = vunpack.c.l.b16 %v2735
    %v3098 = vunpack.c.l.b16 %v2736
    %v3099 = vunpack.c.l.b16 %v2737
    %v3100 = vunpack.c.l.b16 %v2738
    %v3101 = vunpack.c.l.b16 %v2739
    %v3102 = vunpack.c.l.b16 %v2740
    %v3103 = vpack.c.b16 %v3088, %v3087
    %v3104 = vpack.c.b16 %v3090, %v3089
    %v3105 = vpack.c.b16 %v3092, %v3091
    %v3106 = vpack.c.b16 %v3094, %v3093
    %v3107 = vpack.c.b16 %v3096, %v3095
    %v3108 = vpack.c.b16 %v3098, %v3097
    %v3109 = vpack.c.b16 %v3100, %v3099
    %v3110 = vpack.c.b16 %v3102, %v3101
    %3119 = vmatpush.bf16.msra.mxu0 %v3110
    %3120 = vmatpush.bf16.msra.mxu0 %v3109
    %3121 = vmatpush.bf16.msra.mxu0 %v3108
    %3122 = vmatpush.bf16.msra.mxu0 %v3107
    %3123 = vmatpush.bf16.msra.mxu0 %v3106
    %3124 = vmatpush.bf16.msra.mxu0 %v3105
    %3125 = vmatpush.bf16.msra.mxu0 %v3104
    %3126 = vmatpush.bf16.msra.mxu0 %v3103
    %3127 = vmatmul.bf16.gmra.mxu0 %v2692
    %v3128 = vpop.f32.mrf.mxu0
    %v3129 = vadd.f32 %v2912, %v3128
    %v3130 = vpop.f32.mrf.mxu0
    %v3131 = vadd.f32 %v2914, %v3130
    %3132 = vmatmul.bf16.gmra.mxu0 %v2693
    %v3133 = vpop.f32.mrf.mxu0
    %v3134 = vadd.f32 %v2917, %v3133
    %v3135 = vpop.f32.mrf.mxu0
    %v3136 = vadd.f32 %v2919, %v3135
    %3137 = vmatmul.bf16.gmra.mxu0 %v2694
    %v3138 = vpop.f32.mrf.mxu0
    %v3139 = vadd.f32 %v2922, %v3138
    %v3140 = vpop.f32.mrf.mxu0
    %v3141 = vadd.f32 %v2924, %v3140
    %3142 = vmatmul.bf16.gmra.mxu0 %v2695
    %v3143 = vpop.f32.mrf.mxu0
    %v3144 = vadd.f32 %v2927, %v3143
    %v3145 = vpop.f32.mrf.mxu0
    %v3146 = vadd.f32 %v2929, %v3145
    %3147 = vmatmul.bf16.gmra.mxu0 %v2696
    %v3148 = vpop.f32.mrf.mxu0
    %v3149 = vadd.f32 %v2932, %v3148
    %v3150 = vpop.f32.mrf.mxu0
    %v3151 = vadd.f32 %v2934, %v3150
    %3152 = vmatmul.bf16.gmra.mxu0 %v2697
    %v3153 = vpop.f32.mrf.mxu0
    %v3154 = vadd.f32 %v2937, %v3153
    %v3155 = vpop.f32.mrf.mxu0
    %v3156 = vadd.f32 %v2939, %v3155
    %3157 = vmatmul.bf16.gmra.mxu0 %v2698
    %v3158 = vpop.f32.mrf.mxu0
    %v3159 = vadd.f32 %v2942, %v3158
    %v3160 = vpop.f32.mrf.mxu0
    %v3161 = vadd.f32 %v2944, %v3160
    %3162 = vmatmul.bf16.gmra.mxu0 %v2699
    %v3163 = vpop.f32.mrf.mxu0
    %v3164 = vadd.f32 %v2947, %v3163
    %v3165 = vpop.f32.mrf.mxu0
    %v3166 = vadd.f32 %v2949, %v3165
    %3167 = vmatmul.bf16.gmra.mxu0 %v2700
    %v3168 = vpop.f32.mrf.mxu0
    %v3169 = vadd.f32 %v2952, %v3168
    %v3170 = vpop.f32.mrf.mxu0
    %v3171 = vadd.f32 %v2954, %v3170
    %3172 = vmatmul.bf16.gmra.mxu0 %v2701
    %v3173 = vpop.f32.mrf.mxu0
    %v3174 = vadd.f32 %v2957, %v3173
    %v3175 = vpop.f32.mrf.mxu0
    %v3176 = vadd.f32 %v2959, %v3175
    %3177 = vmatmul.bf16.gmra.mxu0 %v2702
    %v3178 = vpop.f32.mrf.mxu0
    %v3179 = vadd.f32 %v2962, %v3178
    %v3180 = vpop.f32.mrf.mxu0
    %v3181 = vadd.f32 %v2964, %v3180
    %3182 = vmatmul.bf16.gmra.mxu0 %v2703
    %v3183 = vpop.f32.mrf.mxu0
    %v3184 = vadd.f32 %v2967, %v3183
    %v3185 = vpop.f32.mrf.mxu0
    %v3186 = vadd.f32 %v2969, %v3185
    %3187 = vmatmul.bf16.gmra.mxu0 %v2704
    %v3188 = vpop.f32.mrf.mxu0
    %v3189 = vadd.f32 %v2972, %v3188
    %v3190 = vpop.f32.mrf.mxu0
    %v3191 = vadd.f32 %v2974, %v3190
    %3192 = vmatmul.bf16.gmra.mxu0 %v2705
    %v3193 = vpop.f32.mrf.mxu0
    %v3194 = vadd.f32 %v2977, %v3193
    %v3195 = vpop.f32.mrf.mxu0
    %v3196 = vadd.f32 %v2979, %v3195
    %3197 = vmatmul.bf16.gmra.mxu0 %v2706
    %v3198 = vpop.f32.mrf.mxu0
    %v3199 = vadd.f32 %v2982, %v3198
    %v3200 = vpop.f32.mrf.mxu0
    %v3201 = vadd.f32 %v2984, %v3200
    %3202 = vmatmul.bf16.gmra.mxu0 %v2707
    %v3203 = vpop.f32.mrf.mxu0
    %v3204 = vadd.f32 %v2987, %v3203
    %v3205 = vpop.f32.mrf.mxu0
    %v3206 = vadd.f32 %v2989, %v3205
    %3207 = vmatmul.bf16.gmra.mxu0 %v2708
    %v3208 = vpop.f32.mrf.mxu0
    %v3209 = vadd.f32 %v2992, %v3208
    %v3210 = vpop.f32.mrf.mxu0
    %v3211 = vadd.f32 %v2994, %v3210
    %3212 = vmatmul.bf16.gmra.mxu0 %v2709
    %v3213 = vpop.f32.mrf.mxu0
    %v3214 = vadd.f32 %v2997, %v3213
    %v3215 = vpop.f32.mrf.mxu0
    %v3216 = vadd.f32 %v2999, %v3215
    %3217 = vmatmul.bf16.gmra.mxu0 %v2710
    %v3218 = vpop.f32.mrf.mxu0
    %v3219 = vadd.f32 %v3002, %v3218
    %v3220 = vpop.f32.mrf.mxu0
    %v3221 = vadd.f32 %v3004, %v3220
    %3222 = vmatmul.bf16.gmra.mxu0 %v2711
    %v3223 = vpop.f32.mrf.mxu0
    %v3224 = vadd.f32 %v3007, %v3223
    %v3225 = vpop.f32.mrf.mxu0
    %v3226 = vadd.f32 %v3009, %v3225
    %3227 = vmatmul.bf16.gmra.mxu0 %v2712
    %v3228 = vpop.f32.mrf.mxu0
    %v3229 = vadd.f32 %v3012, %v3228
    %v3230 = vpop.f32.mrf.mxu0
    %v3231 = vadd.f32 %v3014, %v3230
    %3232 = vmatmul.bf16.gmra.mxu0 %v2713
    %v3233 = vpop.f32.mrf.mxu0
    %v3234 = vadd.f32 %v3017, %v3233
    %v3235 = vpop.f32.mrf.mxu0
    %v3236 = vadd.f32 %v3019, %v3235
    %3237 = vmatmul.bf16.gmra.mxu0 %v2714
    %v3238 = vpop.f32.mrf.mxu0
    %v3239 = vadd.f32 %v3022, %v3238
    %v3240 = vpop.f32.mrf.mxu0
    %v3241 = vadd.f32 %v3024, %v3240
    %3242 = vmatmul.bf16.gmra.mxu0 %v2715
    %v3243 = vpop.f32.mrf.mxu0
    %v3244 = vadd.f32 %v3027, %v3243
    %v3245 = vpop.f32.mrf.mxu0
    %v3246 = vadd.f32 %v3029, %v3245
    %3247 = vmatmul.bf16.gmra.mxu0 %v2716
    %v3248 = vpop.f32.mrf.mxu0
    %v3249 = vadd.f32 %v3032, %v3248
    %v3250 = vpop.f32.mrf.mxu0
    %v3251 = vadd.f32 %v3034, %v3250
    %3252 = vmatmul.bf16.gmra.mxu0 %v2717
    %v3253 = vpop.f32.mrf.mxu0
    %v3254 = vadd.f32 %v3037, %v3253
    %v3255 = vpop.f32.mrf.mxu0
    %v3256 = vadd.f32 %v3039, %v3255
    %3257 = vmatmul.bf16.gmra.mxu0 %v2718
    %v3258 = vpop.f32.mrf.mxu0
    %v3259 = vadd.f32 %v3042, %v3258
    %v3260 = vpop.f32.mrf.mxu0
    %v3261 = vadd.f32 %v3044, %v3260
    %3262 = vmatmul.bf16.gmra.mxu0 %v2719
    %v3263 = vpop.f32.mrf.mxu0
    %v3264 = vadd.f32 %v3047, %v3263
    %v3265 = vpop.f32.mrf.mxu0
    %v3266 = vadd.f32 %v3049, %v3265
    %3267 = vmatmul.bf16.gmra.mxu0 %v2720
    %v3268 = vpop.f32.mrf.mxu0
    %v3269 = vadd.f32 %v3052, %v3268
    %v3270 = vpop.f32.mrf.mxu0
    %v3271 = vadd.f32 %v3054, %v3270
    %3272 = vmatmul.bf16.gmra.mxu0 %v2721
    %v3273 = vpop.f32.mrf.mxu0
    %v3274 = vadd.f32 %v3057, %v3273
    %v3275 = vpop.f32.mrf.mxu0
    %v3276 = vadd.f32 %v3059, %v3275
    %3277 = vmatmul.bf16.gmra.mxu0 %v2722
    %v3278 = vpop.f32.mrf.mxu0
    %v3279 = vadd.f32 %v3062, %v3278
    %v3280 = vpop.f32.mrf.mxu0
    %v3281 = vadd.f32 %v3064, %v3280
    %3282 = vmatmul.bf16.gmra.mxu0 %v2723
    %v3283 = vpop.f32.mrf.mxu0
    %v3284 = vadd.f32 %v3067, %v3283
    %v3285 = vpop.f32.mrf.mxu0
    %v3286 = vadd.f32 %v3069, %v3285
    %3287 = vdwg.mxu0
    %v3288 = vld [vmem:[%s2627 + $0x2] sm:$0xff]
    %v3289 = vld [vmem:[%s2627 + $0xa] sm:$0xff]
    %v3290 = vld [vmem:[%s2627 + $0x1a] sm:$0xff]
    %v3291 = vld [vmem:[%s2627 + $0x22] sm:$0xff]
    %v3292 = vld [vmem:[%s2627 + $0x32] sm:$0xff]
    %v3293 = vld [vmem:[%s2627 + $0x3a] sm:$0xff]
    %v3294 = vld [vmem:[%s2627 + $0x4a] sm:$0xff]
    %v3295 = vld [vmem:[%s2627 + $0x52] sm:$0xff]
    %v3296 = vld [vmem:[%s2627 + $0x62] sm:$0xff]
    %v3297 = vld [vmem:[%s2627 + $0x6a] sm:$0xff]
    %v3298 = vld [vmem:[%s2627 + $0x7a] sm:$0xff]
    %v3299 = vld [vmem:[%s2627 + $0x82] sm:$0xff]
    %v3300 = vld [vmem:[%s2627 + $0x92] sm:$0xff]
    %v3301 = vld [vmem:[%s2627 + $0x9a] sm:$0xff]
    %v3302 = vld [vmem:[%s2627 + $0xaa] sm:$0xff]
    %v3303 = vld [vmem:[%s2627 + $0xb2] sm:$0xff]
    %v3304 = vld [vmem:[%s2627 + $0xc2] sm:$0xff]
    %v3305 = vld [vmem:[%s2627 + $0xca] sm:$0xff]
    %v3306 = vld [vmem:[%s2627 + $0xda] sm:$0xff]
    %v3307 = vld [vmem:[%s2627 + $0xe2] sm:$0xff]
    %v3308 = vld [vmem:[%s2627 + $0xf2] sm:$0xff]
    %v3309 = vld [vmem:[%s2627 + $0xfa] sm:$0xff]
    %v3310 = vld [vmem:[%s2627 + $0x10a] sm:$0xff]
    %v3311 = vld [vmem:[%s2627 + $0x112] sm:$0xff]
    %v3312 = vld [vmem:[%s2627 + $0x122] sm:$0xff]
    %v3313 = vld [vmem:[%s2627 + $0x12a] sm:$0xff]
    %v3314 = vld [vmem:[%s2627 + $0x13a] sm:$0xff]
    %v3315 = vld [vmem:[%s2627 + $0x142] sm:$0xff]
    %v3316 = vld [vmem:[%s2627 + $0x152] sm:$0xff]
    %v3317 = vld [vmem:[%s2627 + $0x15a] sm:$0xff]
    %v3318 = vld [vmem:[%s2627 + $0x16a] sm:$0xff]
    %v3319 = vld [vmem:[%s2627 + $0x172] sm:$0xff]
    %v3320 = vld [vmem:[%s2627 + $0x1b2] sm:$0xff]
    %v3321 = vld [vmem:[%s2627 + $0x1ba] sm:$0xff]
    %v3322 = vld [vmem:[%s2627 + $0x1ca] sm:$0xff]
    %v3323 = vld [vmem:[%s2627 + $0x1d2] sm:$0xff]
    %v3324 = vld [vmem:[%s2627 + $0x1e2] sm:$0xff]
    %v3325 = vld [vmem:[%s2627 + $0x1ea] sm:$0xff]
    %v3326 = vld [vmem:[%s2627 + $0x1fa] sm:$0xff]
    %v3327 = vld [vmem:[%s2627 + $0x202] sm:$0xff]
    %v3328 = vld [vmem:[%s2627 + $0x212] sm:$0xff]
    %v3329 = vld [vmem:[%s2627 + $0x21a] sm:$0xff]
    %v3330 = vld [vmem:[%s2627 + $0x22a] sm:$0xff]
    %v3331 = vld [vmem:[%s2627 + $0x232] sm:$0xff]
    %v3332 = vld [vmem:[%s2627 + $0x242] sm:$0xff]
    %v3333 = vld [vmem:[%s2627 + $0x24a] sm:$0xff]
    %v3334 = vld [vmem:[%s2627 + $0x25a] sm:$0xff]
    %v3335 = vld [vmem:[%s2627 + $0x262] sm:$0xff]
    %v3336 = vld [vmem:[%s2627 + $0x272] sm:$0xff]
    %v3337 = vld [vmem:[%s2627 + $0x27a] sm:$0xff]
    %v3338 = vld [vmem:[%s2627 + $0x28a] sm:$0xff]
    %v3339 = vld [vmem:[%s2627 + $0x292] sm:$0xff]
    %v3340 = vld [vmem:[%s2627 + $0x2a2] sm:$0xff]
    %v3341 = vld [vmem:[%s2627 + $0x2aa] sm:$0xff]
    %v3342 = vld [vmem:[%s2627 + $0x2ba] sm:$0xff]
    %v3343 = vld [vmem:[%s2627 + $0x2c2] sm:$0xff]
    %v3344 = vld [vmem:[%s2627 + $0x2d2] sm:$0xff]
    %v3345 = vld [vmem:[%s2627 + $0x2da] sm:$0xff]
    %v3346 = vld [vmem:[%s2627 + $0x2ea] sm:$0xff]
    %v3347 = vld [vmem:[%s2627 + $0x2f2] sm:$0xff]
    %v3348 = vld [vmem:[%s2627 + $0x302] sm:$0xff]
    %v3349 = vld [vmem:[%s2627 + $0x30a] sm:$0xff]
    %v3350 = vld [vmem:[%s2627 + $0x31a] sm:$0xff]
    %v3351 = vld [vmem:[%s2627 + $0x322] sm:$0xff]
    %v3352 = vpack.c.bf16 %v3289, %v3288
    %v3353 = vpack.c.bf16 %v3291, %v3290
    %v3354 = vpack.c.bf16 %v3293, %v3292
    %v3355 = vpack.c.bf16 %v3295, %v3294
    %v3356 = vpack.c.bf16 %v3297, %v3296
    %v3357 = vpack.c.bf16 %v3299, %v3298
    %v3358 = vpack.c.bf16 %v3301, %v3300
    %v3359 = vpack.c.bf16 %v3303, %v3302
    %v3360 = vpack.c.bf16 %v3305, %v3304
    %v3361 = vpack.c.bf16 %v3307, %v3306
    %v3362 = vpack.c.bf16 %v3309, %v3308
    %v3363 = vpack.c.bf16 %v3311, %v3310
    %v3364 = vpack.c.bf16 %v3313, %v3312
    %v3365 = vpack.c.bf16 %v3315, %v3314
    %v3366 = vpack.c.bf16 %v3317, %v3316
    %v3367 = vpack.c.bf16 %v3319, %v3318
    %v3368 = vpack.c.bf16 %v3321, %v3320
    %v3369 = vpack.c.bf16 %v3323, %v3322
    %v3370 = vpack.c.bf16 %v3325, %v3324
    %v3371 = vpack.c.bf16 %v3327, %v3326
    %v3372 = vpack.c.bf16 %v3329, %v3328
    %v3373 = vpack.c.bf16 %v3331, %v3330
    %v3374 = vpack.c.bf16 %v3333, %v3332
    %v3375 = vpack.c.bf16 %v3335, %v3334
    %v3376 = vpack.c.bf16 %v3337, %v3336
    %v3377 = vpack.c.bf16 %v3339, %v3338
    %v3378 = vpack.c.bf16 %v3341, %v3340
    %v3379 = vpack.c.bf16 %v3343, %v3342
    %v3380 = vpack.c.bf16 %v3345, %v3344
    %v3381 = vpack.c.bf16 %v3347, %v3346
    %v3382 = vpack.c.bf16 %v3349, %v3348
    %v3383 = vpack.c.bf16 %v3351, %v3350
    %s3384 = scalar_lea.vmem %s1, 512
    %v3385 = vld [vmem:[%s3384] sm:$0xf]
    %v3386 = vld [vmem:[%s3384 + $0x4] sm:$0xf]
    %v3387 = vld [vmem:[%s3384 + $0x8] sm:$0xf]
    %v3388 = vld [vmem:[%s3384 + $0xc] sm:$0xf]
    %v3389 = vld [vmem:[%s3384 + $0x10] sm:$0xf]
    %v3390 = vld [vmem:[%s3384 + $0x14] sm:$0xf]
    %v3391 = vld [vmem:[%s3384 + $0x18] sm:$0xf]
    %v3392 = vld [vmem:[%s3384 + $0x1c] sm:$0xf]
    %v3393 = vld [vmem:[%s3384 + $0x20] sm:$0xf]
    %v3394 = vld [vmem:[%s3384 + $0x24] sm:$0xf]
    %v3395 = vld [vmem:[%s3384 + $0x28] sm:$0xf]
    %v3396 = vld [vmem:[%s3384 + $0x2c] sm:$0xf]
    %v3397 = vld [vmem:[%s3384 + $0x30] sm:$0xf]
    %v3398 = vld [vmem:[%s3384 + $0x34] sm:$0xf]
    %v3399 = vld [vmem:[%s3384 + $0x38] sm:$0xf]
    %v3400 = vld [vmem:[%s3384 + $0x3c] sm:$0xf]
    %v3417 = vunpack.c.l.b16 %v3385
    %v3418 = vunpack.c.l.b16 %v3386
    %v3419 = vunpack.c.l.b16 %v3387
    %v3420 = vunpack.c.l.b16 %v3388
    %v3421 = vunpack.c.l.b16 %v3389
    %v3422 = vunpack.c.l.b16 %v3390
    %v3423 = vunpack.c.l.b16 %v3391
    %v3424 = vunpack.c.l.b16 %v3392
    %v3425 = vunpack.c.l.b16 %v3393
    %v3426 = vunpack.c.l.b16 %v3394
    %v3427 = vunpack.c.l.b16 %v3395
    %v3428 = vunpack.c.l.b16 %v3396
    %v3429 = vunpack.c.l.b16 %v3397
    %v3430 = vunpack.c.l.b16 %v3398
    %v3431 = vunpack.c.l.b16 %v3399
    %v3432 = vunpack.c.l.b16 %v3400
    %v3433 = vpack.c.b16 %v3418, %v3417
    %v3434 = vpack.c.b16 %v3420, %v3419
    %v3435 = vpack.c.b16 %v3422, %v3421
    %v3436 = vpack.c.b16 %v3424, %v3423
    %v3437 = vpack.c.b16 %v3426, %v3425
    %v3438 = vpack.c.b16 %v3428, %v3427
    %v3439 = vpack.c.b16 %v3430, %v3429
    %v3440 = vpack.c.b16 %v3432, %v3431
    %3449 = vmatpush.bf16.msra.mxu0 %v3440
    %3450 = vmatpush.bf16.msra.mxu0 %v3439
    %3451 = vmatpush.bf16.msra.mxu0 %v3438
    %3452 = vmatpush.bf16.msra.mxu0 %v3437
    %3453 = vmatpush.bf16.msra.mxu0 %v3436
    %3454 = vmatpush.bf16.msra.mxu0 %v3435
    %3455 = vmatpush.bf16.msra.mxu0 %v3434
    %3456 = vmatpush.bf16.msra.mxu0 %v3433
    %3457 = vmatmul.bf16.gmra.mxu0 %v3352
    %v3458 = vpop.f32.mrf.mxu0
    %v3459 = vadd.f32 0.0, %v3458
    %v3460 = vpop.f32.mrf.mxu0
    %v3461 = vadd.f32 0.0, %v3460
    %3462 = vmatmul.bf16.gmra.mxu0 %v3353
    %v3463 = vpop.f32.mrf.mxu0
    %v3464 = vadd.f32 0.0, %v3463
    %v3465 = vpop.f32.mrf.mxu0
    %v3466 = vadd.f32 0.0, %v3465
    %3467 = vmatmul.bf16.gmra.mxu0 %v3354
    %v3468 = vpop.f32.mrf.mxu0
    %v3469 = vadd.f32 0.0, %v3468
    %v3470 = vpop.f32.mrf.mxu0
    %v3471 = vadd.f32 0.0, %v3470
    %3472 = vmatmul.bf16.gmra.mxu0 %v3355
    %v3473 = vpop.f32.mrf.mxu0
    %v3474 = vadd.f32 0.0, %v3473
    %v3475 = vpop.f32.mrf.mxu0
    %v3476 = vadd.f32 0.0, %v3475
    %3477 = vmatmul.bf16.gmra.mxu0 %v3356
    %v3478 = vpop.f32.mrf.mxu0
    %v3479 = vadd.f32 0.0, %v3478
    %v3480 = vpop.f32.mrf.mxu0
    %v3481 = vadd.f32 0.0, %v3480
    %3482 = vmatmul.bf16.gmra.mxu0 %v3357
    %v3483 = vpop.f32.mrf.mxu0
    %v3484 = vadd.f32 0.0, %v3483
    %v3485 = vpop.f32.mrf.mxu0
    %v3486 = vadd.f32 0.0, %v3485
    %3487 = vmatmul.bf16.gmra.mxu0 %v3358
    %v3488 = vpop.f32.mrf.mxu0
    %v3489 = vadd.f32 0.0, %v3488
    %v3490 = vpop.f32.mrf.mxu0
    %v3491 = vadd.f32 0.0, %v3490
    %3492 = vmatmul.bf16.gmra.mxu0 %v3359
    %v3493 = vpop.f32.mrf.mxu0
    %v3494 = vadd.f32 0.0, %v3493
    %v3495 = vpop.f32.mrf.mxu0
    %v3496 = vadd.f32 0.0, %v3495
    %3497 = vmatmul.bf16.gmra.mxu0 %v3360
    %v3498 = vpop.f32.mrf.mxu0
    %v3499 = vadd.f32 0.0, %v3498
    %v3500 = vpop.f32.mrf.mxu0
    %v3501 = vadd.f32 0.0, %v3500
    %3502 = vmatmul.bf16.gmra.mxu0 %v3361
    %v3503 = vpop.f32.mrf.mxu0
    %v3504 = vadd.f32 0.0, %v3503
    %v3505 = vpop.f32.mrf.mxu0
    %v3506 = vadd.f32 0.0, %v3505
    %3507 = vmatmul.bf16.gmra.mxu0 %v3362
    %v3508 = vpop.f32.mrf.mxu0
    %v3509 = vadd.f32 0.0, %v3508
    %v3510 = vpop.f32.mrf.mxu0
    %v3511 = vadd.f32 0.0, %v3510
    %3512 = vmatmul.bf16.gmra.mxu0 %v3363
    %v3513 = vpop.f32.mrf.mxu0
    %v3514 = vadd.f32 0.0, %v3513
    %v3515 = vpop.f32.mrf.mxu0
    %v3516 = vadd.f32 0.0, %v3515
    %3517 = vmatmul.bf16.gmra.mxu0 %v3364
    %v3518 = vpop.f32.mrf.mxu0
    %v3519 = vadd.f32 0.0, %v3518
    %v3520 = vpop.f32.mrf.mxu0
    %v3521 = vadd.f32 0.0, %v3520
    %3522 = vmatmul.bf16.gmra.mxu0 %v3365
    %v3523 = vpop.f32.mrf.mxu0
    %v3524 = vadd.f32 0.0, %v3523
    %v3525 = vpop.f32.mrf.mxu0
    %v3526 = vadd.f32 0.0, %v3525
    %3527 = vmatmul.bf16.gmra.mxu0 %v3366
    %v3528 = vpop.f32.mrf.mxu0
    %v3529 = vadd.f32 0.0, %v3528
    %v3530 = vpop.f32.mrf.mxu0
    %v3531 = vadd.f32 0.0, %v3530
    %3532 = vmatmul.bf16.gmra.mxu0 %v3367
    %v3533 = vpop.f32.mrf.mxu0
    %v3534 = vadd.f32 0.0, %v3533
    %v3535 = vpop.f32.mrf.mxu0
    %v3536 = vadd.f32 0.0, %v3535
    %3537 = vmatmul.bf16.gmra.mxu0 %v3368
    %v3538 = vpop.f32.mrf.mxu0
    %v3539 = vadd.f32 0.0, %v3538
    %v3540 = vpop.f32.mrf.mxu0
    %v3541 = vadd.f32 0.0, %v3540
    %3542 = vmatmul.bf16.gmra.mxu0 %v3369
    %v3543 = vpop.f32.mrf.mxu0
    %v3544 = vadd.f32 0.0, %v3543
    %v3545 = vpop.f32.mrf.mxu0
    %v3546 = vadd.f32 0.0, %v3545
    %3547 = vmatmul.bf16.gmra.mxu0 %v3370
    %v3548 = vpop.f32.mrf.mxu0
    %v3549 = vadd.f32 0.0, %v3548
    %v3550 = vpop.f32.mrf.mxu0
    %v3551 = vadd.f32 0.0, %v3550
    %3552 = vmatmul.bf16.gmra.mxu0 %v3371
    %v3553 = vpop.f32.mrf.mxu0
    %v3554 = vadd.f32 0.0, %v3553
    %v3555 = vpop.f32.mrf.mxu0
    %v3556 = vadd.f32 0.0, %v3555
    %3557 = vmatmul.bf16.gmra.mxu0 %v3372
    %v3558 = vpop.f32.mrf.mxu0
    %v3559 = vadd.f32 0.0, %v3558
    %v3560 = vpop.f32.mrf.mxu0
    %v3561 = vadd.f32 0.0, %v3560
    %3562 = vmatmul.bf16.gmra.mxu0 %v3373
    %v3563 = vpop.f32.mrf.mxu0
    %v3564 = vadd.f32 0.0, %v3563
    %v3565 = vpop.f32.mrf.mxu0
    %v3566 = vadd.f32 0.0, %v3565
    %3567 = vmatmul.bf16.gmra.mxu0 %v3374
    %v3568 = vpop.f32.mrf.mxu0
    %v3569 = vadd.f32 0.0, %v3568
    %v3570 = vpop.f32.mrf.mxu0
    %v3571 = vadd.f32 0.0, %v3570
    %3572 = vmatmul.bf16.gmra.mxu0 %v3375
    %v3573 = vpop.f32.mrf.mxu0
    %v3574 = vadd.f32 0.0, %v3573
    %v3575 = vpop.f32.mrf.mxu0
    %v3576 = vadd.f32 0.0, %v3575
    %3577 = vmatmul.bf16.gmra.mxu0 %v3376
    %v3578 = vpop.f32.mrf.mxu0
    %v3579 = vadd.f32 0.0, %v3578
    %v3580 = vpop.f32.mrf.mxu0
    %v3581 = vadd.f32 0.0, %v3580
    %3582 = vmatmul.bf16.gmra.mxu0 %v3377
    %v3583 = vpop.f32.mrf.mxu0
    %v3584 = vadd.f32 0.0, %v3583
    %v3585 = vpop.f32.mrf.mxu0
    %v3586 = vadd.f32 0.0, %v3585
    %3587 = vmatmul.bf16.gmra.mxu0 %v3378
    %v3588 = vpop.f32.mrf.mxu0
    %v3589 = vadd.f32 0.0, %v3588
    %v3590 = vpop.f32.mrf.mxu0
    %v3591 = vadd.f32 0.0, %v3590
    %3592 = vmatmul.bf16.gmra.mxu0 %v3379
    %v3593 = vpop.f32.mrf.mxu0
    %v3594 = vadd.f32 0.0, %v3593
    %v3595 = vpop.f32.mrf.mxu0
    %v3596 = vadd.f32 0.0, %v3595
    %3597 = vmatmul.bf16.gmra.mxu0 %v3380
    %v3598 = vpop.f32.mrf.mxu0
    %v3599 = vadd.f32 0.0, %v3598
    %v3600 = vpop.f32.mrf.mxu0
    %v3601 = vadd.f32 0.0, %v3600
    %3602 = vmatmul.bf16.gmra.mxu0 %v3381
    %v3603 = vpop.f32.mrf.mxu0
    %v3604 = vadd.f32 0.0, %v3603
    %v3605 = vpop.f32.mrf.mxu0
    %v3606 = vadd.f32 0.0, %v3605
    %3607 = vmatmul.bf16.gmra.mxu0 %v3382
    %v3608 = vpop.f32.mrf.mxu0
    %v3609 = vadd.f32 0.0, %v3608
    %v3610 = vpop.f32.mrf.mxu0
    %v3611 = vadd.f32 0.0, %v3610
    %3612 = vmatmul.bf16.gmra.mxu0 %v3383
    %v3613 = vpop.f32.mrf.mxu0
    %v3614 = vadd.f32 0.0, %v3613
    %v3615 = vpop.f32.mrf.mxu0
    %v3616 = vadd.f32 0.0, %v3615
    %3617 = vdwg.mxu0
    %v3618 = vadd.f32 %v3129, %v3459
    %v3619 = vadd.f32 %v3131, %v3461
    %v3620 = vadd.f32 %v3134, %v3464
    %v3621 = vadd.f32 %v3136, %v3466
    %v3622 = vadd.f32 %v3139, %v3469
    %v3623 = vadd.f32 %v3141, %v3471
    %v3624 = vadd.f32 %v3144, %v3474
    %v3625 = vadd.f32 %v3146, %v3476
    %v3626 = vadd.f32 %v3149, %v3479
    %v3627 = vadd.f32 %v3151, %v3481
    %v3628 = vadd.f32 %v3154, %v3484
    %v3629 = vadd.f32 %v3156, %v3486
    %v3630 = vadd.f32 %v3159, %v3489
    %v3631 = vadd.f32 %v3161, %v3491
    %v3632 = vadd.f32 %v3164, %v3494
    %v3633 = vadd.f32 %v3166, %v3496
    %v3634 = vadd.f32 %v3169, %v3499
    %v3635 = vadd.f32 %v3171, %v3501
    %v3636 = vadd.f32 %v3174, %v3504
    %v3637 = vadd.f32 %v3176, %v3506
    %v3638 = vadd.f32 %v3179, %v3509
    %v3639 = vadd.f32 %v3181, %v3511
    %v3640 = vadd.f32 %v3184, %v3514
    %v3641 = vadd.f32 %v3186, %v3516
    %v3642 = vadd.f32 %v3189, %v3519
    %v3643 = vadd.f32 %v3191, %v3521
    %v3644 = vadd.f32 %v3194, %v3524
    %v3645 = vadd.f32 %v3196, %v3526
    %v3646 = vadd.f32 %v3199, %v3529
    %v3647 = vadd.f32 %v3201, %v3531
    %v3648 = vadd.f32 %v3204, %v3534
    %v3649 = vadd.f32 %v3206, %v3536
    %v3650 = vadd.f32 %v3209, %v3539
    %v3651 = vadd.f32 %v3211, %v3541
    %v3652 = vadd.f32 %v3214, %v3544
    %v3653 = vadd.f32 %v3216, %v3546
    %v3654 = vadd.f32 %v3219, %v3549
    %v3655 = vadd.f32 %v3221, %v3551
    %v3656 = vadd.f32 %v3224, %v3554
    %v3657 = vadd.f32 %v3226, %v3556
    %v3658 = vadd.f32 %v3229, %v3559
    %v3659 = vadd.f32 %v3231, %v3561
    %v3660 = vadd.f32 %v3234, %v3564
    %v3661 = vadd.f32 %v3236, %v3566
    %v3662 = vadd.f32 %v3239, %v3569
    %v3663 = vadd.f32 %v3241, %v3571
    %v3664 = vadd.f32 %v3244, %v3574
    %v3665 = vadd.f32 %v3246, %v3576
    %v3666 = vadd.f32 %v3249, %v3579
    %v3667 = vadd.f32 %v3251, %v3581
    %v3668 = vadd.f32 %v3254, %v3584
    %v3669 = vadd.f32 %v3256, %v3586
    %v3670 = vadd.f32 %v3259, %v3589
    %v3671 = vadd.f32 %v3261, %v3591
    %v3672 = vadd.f32 %v3264, %v3594
    %v3673 = vadd.f32 %v3266, %v3596
    %v3674 = vadd.f32 %v3269, %v3599
    %v3675 = vadd.f32 %v3271, %v3601
    %v3676 = vadd.f32 %v3274, %v3604
    %v3677 = vadd.f32 %v3276, %v3606
    %v3678 = vadd.f32 %v3279, %v3609
    %v3679 = vadd.f32 %v3281, %v3611
    %v3680 = vadd.f32 %v3284, %v3614
    %v3681 = vadd.f32 %v3286, %v3616
    %v3682 = vld [vmem:[#allocation3] sm:$0xff]
    %v3683 = vld [vmem:[#allocation3 + $0x8] sm:$0xff]
    %v3684 = vld [vmem:[#allocation3 + $0x10] sm:$0xff]
    %v3685 = vld [vmem:[#allocation3 + $0x18] sm:$0xff]
    %v3686 = vld [vmem:[#allocation3 + $0x20] sm:$0xff]
    %v3687 = vld [vmem:[#allocation3 + $0x28] sm:$0xff]
    %v3688 = vld [vmem:[#allocation3 + $0x30] sm:$0xff]
    %v3689 = vld [vmem:[#allocation3 + $0x38] sm:$0xff]
    %v3690 = vld [vmem:[#allocation3 + $0x40] sm:$0xff]
    %v3691 = vld [vmem:[#allocation3 + $0x48] sm:$0xff]
    %v3692 = vld [vmem:[#allocation3 + $0x50] sm:$0xff]
    %v3693 = vld [vmem:[#allocation3 + $0x58] sm:$0xff]
    %v3694 = vld [vmem:[#allocation3 + $0x60] sm:$0xff]
    %v3695 = vld [vmem:[#allocation3 + $0x68] sm:$0xff]
    %v3696 = vld [vmem:[#allocation3 + $0x70] sm:$0xff]
    %v3697 = vld [vmem:[#allocation3 + $0x78] sm:$0xff]
    %v3698 = vld [vmem:[#allocation3 + $0x80] sm:$0xff]
    %v3699 = vld [vmem:[#allocation3 + $0x88] sm:$0xff]
    %v3700 = vld [vmem:[#allocation3 + $0x90] sm:$0xff]
    %v3701 = vld [vmem:[#allocation3 + $0x98] sm:$0xff]
    %v3702 = vld [vmem:[#allocation3 + $0xa0] sm:$0xff]
    %v3703 = vld [vmem:[#allocation3 + $0xa8] sm:$0xff]
    %v3704 = vld [vmem:[#allocation3 + $0xb0] sm:$0xff]
    %v3705 = vld [vmem:[#allocation3 + $0xb8] sm:$0xff]
    %v3706 = vld [vmem:[#allocation3 + $0xc0] sm:$0xff]
    %v3707 = vld [vmem:[#allocation3 + $0xc8] sm:$0xff]
    %v3708 = vld [vmem:[#allocation3 + $0xd0] sm:$0xff]
    %v3709 = vld [vmem:[#allocation3 + $0xd8] sm:$0xff]
    %v3710 = vld [vmem:[#allocation3 + $0xe0] sm:$0xff]
    %v3711 = vld [vmem:[#allocation3 + $0xe8] sm:$0xff]
    %v3712 = vld [vmem:[#allocation3 + $0xf0] sm:$0xff]
    %v3713 = vld [vmem:[#allocation3 + $0xf8] sm:$0xff]
    %v3714 = vld [vmem:[#allocation3 + $0x100] sm:$0xff]
    %v3715 = vld [vmem:[#allocation3 + $0x108] sm:$0xff]
    %v3716 = vld [vmem:[#allocation3 + $0x110] sm:$0xff]
    %v3717 = vld [vmem:[#allocation3 + $0x118] sm:$0xff]
    %v3718 = vld [vmem:[#allocation3 + $0x120] sm:$0xff]
    %v3719 = vld [vmem:[#allocation3 + $0x128] sm:$0xff]
    %v3720 = vld [vmem:[#allocation3 + $0x130] sm:$0xff]
    %v3721 = vld [vmem:[#allocation3 + $0x138] sm:$0xff]
    %v3722 = vld [vmem:[#allocation3 + $0x140] sm:$0xff]
    %v3723 = vld [vmem:[#allocation3 + $0x148] sm:$0xff]
    %v3724 = vld [vmem:[#allocation3 + $0x150] sm:$0xff]
    %v3725 = vld [vmem:[#allocation3 + $0x158] sm:$0xff]
    %v3726 = vld [vmem:[#allocation3 + $0x160] sm:$0xff]
    %v3727 = vld [vmem:[#allocation3 + $0x168] sm:$0xff]
    %v3728 = vld [vmem:[#allocation3 + $0x170] sm:$0xff]
    %v3729 = vld [vmem:[#allocation3 + $0x178] sm:$0xff]
    %v3730 = vld [vmem:[#allocation3 + $0x180] sm:$0xff]
    %v3731 = vld [vmem:[#allocation3 + $0x188] sm:$0xff]
    %v3732 = vld [vmem:[#allocation3 + $0x190] sm:$0xff]
    %v3733 = vld [vmem:[#allocation3 + $0x198] sm:$0xff]
    %v3734 = vld [vmem:[#allocation3 + $0x1a0] sm:$0xff]
    %v3735 = vld [vmem:[#allocation3 + $0x1a8] sm:$0xff]
    %v3736 = vld [vmem:[#allocation3 + $0x1b0] sm:$0xff]
    %v3737 = vld [vmem:[#allocation3 + $0x1b8] sm:$0xff]
    %v3738 = vld [vmem:[#allocation3 + $0x1c0] sm:$0xff]
    %v3739 = vld [vmem:[#allocation3 + $0x1c8] sm:$0xff]
    %v3740 = vld [vmem:[#allocation3 + $0x1d0] sm:$0xff]
    %v3741 = vld [vmem:[#allocation3 + $0x1d8] sm:$0xff]
    %v3742 = vld [vmem:[#allocation3 + $0x1e0] sm:$0xff]
    %v3743 = vld [vmem:[#allocation3 + $0x1e8] sm:$0xff]
    %v3744 = vld [vmem:[#allocation3 + $0x1f0] sm:$0xff]
    %v3745 = vld [vmem:[#allocation3 + $0x1f8] sm:$0xff]
    %v3746 = vadd.f32 %v3682, %v3618
    %v3747 = vadd.f32 %v3683, %v3619
    %v3748 = vadd.f32 %v3684, %v3620
    %v3749 = vadd.f32 %v3685, %v3621
    %v3750 = vadd.f32 %v3686, %v3622
    %v3751 = vadd.f32 %v3687, %v3623
    %v3752 = vadd.f32 %v3688, %v3624
    %v3753 = vadd.f32 %v3689, %v3625
    %v3754 = vadd.f32 %v3690, %v3626
    %v3755 = vadd.f32 %v3691, %v3627
    %v3756 = vadd.f32 %v3692, %v3628
    %v3757 = vadd.f32 %v3693, %v3629
    %v3758 = vadd.f32 %v3694, %v3630
    %v3759 = vadd.f32 %v3695, %v3631
    %v3760 = vadd.f32 %v3696, %v3632
    %v3761 = vadd.f32 %v3697, %v3633
    %v3762 = vadd.f32 %v3698, %v3634
    %v3763 = vadd.f32 %v3699, %v3635
    %v3764 = vadd.f32 %v3700, %v3636
    %v3765 = vadd.f32 %v3701, %v3637
    %v3766 = vadd.f32 %v3702, %v3638
    %v3767 = vadd.f32 %v3703, %v3639
    %v3768 = vadd.f32 %v3704, %v3640
    %v3769 = vadd.f32 %v3705, %v3641
    %v3770 = vadd.f32 %v3706, %v3642
    %v3771 = vadd.f32 %v3707, %v3643
    %v3772 = vadd.f32 %v3708, %v3644
    %v3773 = vadd.f32 %v3709, %v3645
    %v3774 = vadd.f32 %v3710, %v3646
    %v3775 = vadd.f32 %v3711, %v3647
    %v3776 = vadd.f32 %v3712, %v3648
    %v3777 = vadd.f32 %v3713, %v3649
    %v3778 = vadd.f32 %v3714, %v3650
    %v3779 = vadd.f32 %v3715, %v3651
    %v3780 = vadd.f32 %v3716, %v3652
    %v3781 = vadd.f32 %v3717, %v3653
    %v3782 = vadd.f32 %v3718, %v3654
    %v3783 = vadd.f32 %v3719, %v3655
    %v3784 = vadd.f32 %v3720, %v3656
    %v3785 = vadd.f32 %v3721, %v3657
    %v3786 = vadd.f32 %v3722, %v3658
    %v3787 = vadd.f32 %v3723, %v3659
    %v3788 = vadd.f32 %v3724, %v3660
    %v3789 = vadd.f32 %v3725, %v3661
    %v3790 = vadd.f32 %v3726, %v3662
    %v3791 = vadd.f32 %v3727, %v3663
    %v3792 = vadd.f32 %v3728, %v3664
    %v3793 = vadd.f32 %v3729, %v3665
    %v3794 = vadd.f32 %v3730, %v3666
    %v3795 = vadd.f32 %v3731, %v3667
    %v3796 = vadd.f32 %v3732, %v3668
    %v3797 = vadd.f32 %v3733, %v3669
    %v3798 = vadd.f32 %v3734, %v3670
    %v3799 = vadd.f32 %v3735, %v3671
    %v3800 = vadd.f32 %v3736, %v3672
    %v3801 = vadd.f32 %v3737, %v3673
    %v3802 = vadd.f32 %v3738, %v3674
    %v3803 = vadd.f32 %v3739, %v3675
    %v3804 = vadd.f32 %v3740, %v3676
    %v3805 = vadd.f32 %v3741, %v3677
    %v3806 = vadd.f32 %v3742, %v3678
    %v3807 = vadd.f32 %v3743, %v3679
    %v3808 = vadd.f32 %v3744, %v3680
    %v3809 = vadd.f32 %v3745, %v3681
    %3810 = vst [vmem:[#allocation3] sm:$0xff] %v3746
    %3811 = vst [vmem:[#allocation3 + $0x8] sm:$0xff] %v3747
    %3812 = vst [vmem:[#allocation3 + $0x10] sm:$0xff] %v3748
    %3813 = vst [vmem:[#allocation3 + $0x18] sm:$0xff] %v3749
    %3814 = vst [vmem:[#allocation3 + $0x20] sm:$0xff] %v3750
    %3815 = vst [vmem:[#allocation3 + $0x28] sm:$0xff] %v3751
    %3816 = vst [vmem:[#allocation3 + $0x30] sm:$0xff] %v3752
    %3817 = vst [vmem:[#allocation3 + $0x38] sm:$0xff] %v3753
    %3818 = vst [vmem:[#allocation3 + $0x40] sm:$0xff] %v3754
    %3819 = vst [vmem:[#allocation3 + $0x48] sm:$0xff] %v3755
    %3820 = vst [vmem:[#allocation3 + $0x50] sm:$0xff] %v3756
    %3821 = vst [vmem:[#allocation3 + $0x58] sm:$0xff] %v3757
    %3822 = vst [vmem:[#allocation3 + $0x60] sm:$0xff] %v3758
    %3823 = vst [vmem:[#allocation3 + $0x68] sm:$0xff] %v3759
    %3824 = vst [vmem:[#allocation3 + $0x70] sm:$0xff] %v3760
    %3825 = vst [vmem:[#allocation3 + $0x78] sm:$0xff] %v3761
    %3826 = vst [vmem:[#allocation3 + $0x80] sm:$0xff] %v3762
    %3827 = vst [vmem:[#allocation3 + $0x88] sm:$0xff] %v3763
    %3828 = vst [vmem:[#allocation3 + $0x90] sm:$0xff] %v3764
    %3829 = vst [vmem:[#allocation3 + $0x98] sm:$0xff] %v3765
    %3830 = vst [vmem:[#allocation3 + $0xa0] sm:$0xff] %v3766
    %3831 = vst [vmem:[#allocation3 + $0xa8] sm:$0xff] %v3767
    %3832 = vst [vmem:[#allocation3 + $0xb0] sm:$0xff] %v3768
    %3833 = vst [vmem:[#allocation3 + $0xb8] sm:$0xff] %v3769
    %3834 = vst [vmem:[#allocation3 + $0xc0] sm:$0xff] %v3770
    %3835 = vst [vmem:[#allocation3 + $0xc8] sm:$0xff] %v3771
    %3836 = vst [vmem:[#allocation3 + $0xd0] sm:$0xff] %v3772
    %3837 = vst [vmem:[#allocation3 + $0xd8] sm:$0xff] %v3773
    %3838 = vst [vmem:[#allocation3 + $0xe0] sm:$0xff] %v3774
    %3839 = vst [vmem:[#allocation3 + $0xe8] sm:$0xff] %v3775
    %3840 = vst [vmem:[#allocation3 + $0xf0] sm:$0xff] %v3776
    %3841 = vst [vmem:[#allocation3 + $0xf8] sm:$0xff] %v3777
    %3842 = vst [vmem:[#allocation3 + $0x100] sm:$0xff] %v3778
    %3843 = vst [vmem:[#allocation3 + $0x108] sm:$0xff] %v3779
    %3844 = vst [vmem:[#allocation3 + $0x110] sm:$0xff] %v3780
    %3845 = vst [vmem:[#allocation3 + $0x118] sm:$0xff] %v3781
    %3846 = vst [vmem:[#allocation3 + $0x120] sm:$0xff] %v3782
    %3847 = vst [vmem:[#allocation3 + $0x128] sm:$0xff] %v3783
    %3848 = vst [vmem:[#allocation3 + $0x130] sm:$0xff] %v3784
    %3849 = vst [vmem:[#allocation3 + $0x138] sm:$0xff] %v3785
    %3850 = vst [vmem:[#allocation3 + $0x140] sm:$0xff] %v3786
    %3851 = vst [vmem:[#allocation3 + $0x148] sm:$0xff] %v3787
    %3852 = vst [vmem:[#allocation3 + $0x150] sm:$0xff] %v3788
    %3853 = vst [vmem:[#allocation3 + $0x158] sm:$0xff] %v3789
    %3854 = vst [vmem:[#allocation3 + $0x160] sm:$0xff] %v3790
    %3855 = vst [vmem:[#allocation3 + $0x168] sm:$0xff] %v3791
    %3856 = vst [vmem:[#allocation3 + $0x170] sm:$0xff] %v3792
    %3857 = vst [vmem:[#allocation3 + $0x178] sm:$0xff] %v3793
    %3858 = vst [vmem:[#allocation3 + $0x180] sm:$0xff] %v3794
    %3859 = vst [vmem:[#allocation3 + $0x188] sm:$0xff] %v3795
    %3860 = vst [vmem:[#allocation3 + $0x190] sm:$0xff] %v3796
    %3861 = vst [vmem:[#allocation3 + $0x198] sm:$0xff] %v3797
    %3862 = vst [vmem:[#allocation3 + $0x1a0] sm:$0xff] %v3798
    %3863 = vst [vmem:[#allocation3 + $0x1a8] sm:$0xff] %v3799
    %3864 = vst [vmem:[#allocation3 + $0x1b0] sm:$0xff] %v3800
    %3865 = vst [vmem:[#allocation3 + $0x1b8] sm:$0xff] %v3801
    %3866 = vst [vmem:[#allocation3 + $0x1c0] sm:$0xff] %v3802
    %3867 = vst [vmem:[#allocation3 + $0x1c8] sm:$0xff] %v3803
    %3868 = vst [vmem:[#allocation3 + $0x1d0] sm:$0xff] %v3804
    %3869 = vst [vmem:[#allocation3 + $0x1d8] sm:$0xff] %v3805
    %3870 = vst [vmem:[#allocation3 + $0x1e0] sm:$0xff] %v3806
    %3871 = vst [vmem:[#allocation3 + $0x1e8] sm:$0xff] %v3807
    %3872 = vst [vmem:[#allocation3 + $0x1f0] sm:$0xff] %v3808
    %3873 = vst [vmem:[#allocation3 + $0x1f8] sm:$0xff] %v3809
    %v3874 = vld [vmem:[#allocation3] sm:$0xff]
    %v3875 = vld [vmem:[#allocation3 + $0x8] sm:$0xff]
    %v3876 = vld [vmem:[#allocation3 + $0x10] sm:$0xff]
    %v3877 = vld [vmem:[#allocation3 + $0x18] sm:$0xff]
    %v3878 = vld [vmem:[#allocation3 + $0x20] sm:$0xff]
    %v3879 = vld [vmem:[#allocation3 + $0x28] sm:$0xff]
    %v3880 = vld [vmem:[#allocation3 + $0x30] sm:$0xff]
    %v3881 = vld [vmem:[#allocation3 + $0x38] sm:$0xff]
    %v3882 = vld [vmem:[#allocation3 + $0x40] sm:$0xff]
    %v3883 = vld [vmem:[#allocation3 + $0x48] sm:$0xff]
    %v3884 = vld [vmem:[#allocation3 + $0x50] sm:$0xff]
    %v3885 = vld [vmem:[#allocation3 + $0x58] sm:$0xff]
    %v3886 = vld [vmem:[#allocation3 + $0x60] sm:$0xff]
    %v3887 = vld [vmem:[#allocation3 + $0x68] sm:$0xff]
    %v3888 = vld [vmem:[#allocation3 + $0x70] sm:$0xff]
    %v3889 = vld [vmem:[#allocation3 + $0x78] sm:$0xff]
    %v3890 = vld [vmem:[#allocation3 + $0x80] sm:$0xff]
    %v3891 = vld [vmem:[#allocation3 + $0x88] sm:$0xff]
    %v3892 = vld [vmem:[#allocation3 + $0x90] sm:$0xff]
    %v3893 = vld [vmem:[#allocation3 + $0x98] sm:$0xff]
    %v3894 = vld [vmem:[#allocation3 + $0xa0] sm:$0xff]
    %v3895 = vld [vmem:[#allocation3 + $0xa8] sm:$0xff]
    %v3896 = vld [vmem:[#allocation3 + $0xb0] sm:$0xff]
    %v3897 = vld [vmem:[#allocation3 + $0xb8] sm:$0xff]
    %v3898 = vld [vmem:[#allocation3 + $0xc0] sm:$0xff]
    %v3899 = vld [vmem:[#allocation3 + $0xc8] sm:$0xff]
    %v3900 = vld [vmem:[#allocation3 + $0xd0] sm:$0xff]
    %v3901 = vld [vmem:[#allocation3 + $0xd8] sm:$0xff]
    %v3902 = vld [vmem:[#allocation3 + $0xe0] sm:$0xff]
    %v3903 = vld [vmem:[#allocation3 + $0xe8] sm:$0xff]
    %v3904 = vld [vmem:[#allocation3 + $0xf0] sm:$0xff]
    %v3905 = vld [vmem:[#allocation3 + $0xf8] sm:$0xff]
    %v3906 = vld [vmem:[#allocation3 + $0x100] sm:$0xff]
    %v3907 = vld [vmem:[#allocation3 + $0x108] sm:$0xff]
    %v3908 = vld [vmem:[#allocation3 + $0x110] sm:$0xff]
    %v3909 = vld [vmem:[#allocation3 + $0x118] sm:$0xff]
    %v3910 = vld [vmem:[#allocation3 + $0x120] sm:$0xff]
    %v3911 = vld [vmem:[#allocation3 + $0x128] sm:$0xff]
    %v3912 = vld [vmem:[#allocation3 + $0x130] sm:$0xff]
    %v3913 = vld [vmem:[#allocation3 + $0x138] sm:$0xff]
    %v3914 = vld [vmem:[#allocation3 + $0x140] sm:$0xff]
    %v3915 = vld [vmem:[#allocation3 + $0x148] sm:$0xff]
    %v3916 = vld [vmem:[#allocation3 + $0x150] sm:$0xff]
    %v3917 = vld [vmem:[#allocation3 + $0x158] sm:$0xff]
    %v3918 = vld [vmem:[#allocation3 + $0x160] sm:$0xff]
    %v3919 = vld [vmem:[#allocation3 + $0x168] sm:$0xff]
    %v3920 = vld [vmem:[#allocation3 + $0x170] sm:$0xff]
    %v3921 = vld [vmem:[#allocation3 + $0x178] sm:$0xff]
    %v3922 = vld [vmem:[#allocation3 + $0x180] sm:$0xff]
    %v3923 = vld [vmem:[#allocation3 + $0x188] sm:$0xff]
    %v3924 = vld [vmem:[#allocation3 + $0x190] sm:$0xff]
    %v3925 = vld [vmem:[#allocation3 + $0x198] sm:$0xff]
    %v3926 = vld [vmem:[#allocation3 + $0x1a0] sm:$0xff]
    %v3927 = vld [vmem:[#allocation3 + $0x1a8] sm:$0xff]
    %v3928 = vld [vmem:[#allocation3 + $0x1b0] sm:$0xff]
    %v3929 = vld [vmem:[#allocation3 + $0x1b8] sm:$0xff]
    %v3930 = vld [vmem:[#allocation3 + $0x1c0] sm:$0xff]
    %v3931 = vld [vmem:[#allocation3 + $0x1c8] sm:$0xff]
    %v3932 = vld [vmem:[#allocation3 + $0x1d0] sm:$0xff]
    %v3933 = vld [vmem:[#allocation3 + $0x1d8] sm:$0xff]
    %v3934 = vld [vmem:[#allocation3 + $0x1e0] sm:$0xff]
    %v3935 = vld [vmem:[#allocation3 + $0x1e8] sm:$0xff]
    %v3936 = vld [vmem:[#allocation3 + $0x1f0] sm:$0xff]
    %v3937 = vld [vmem:[#allocation3 + $0x1f8] sm:$0xff]
    %v3938 = vadd.f32 %v3874, %v3875
    %v3939 = vadd.f32 %v3938, %v3876
    %v3940 = vadd.f32 %v3939, %v3877
    %v3941 = vadd.f32 %v3940, %v3878
    %v3942 = vadd.f32 %v3941, %v3879
    %v3943 = vadd.f32 %v3942, %v3880
    %v3944 = vadd.f32 %v3943, %v3881
    %v3945 = vadd.f32 %v3944, %v3882
    %v3946 = vadd.f32 %v3945, %v3883
    %v3947 = vadd.f32 %v3946, %v3884
    %v3948 = vadd.f32 %v3947, %v3885
    %v3949 = vadd.f32 %v3948, %v3886
    %v3950 = vadd.f32 %v3949, %v3887
    %v3951 = vadd.f32 %v3950, %v3888
    %v3952 = vadd.f32 %v3951, %v3889
    %v3953 = vadd.f32 %v3952, %v3890
    %v3954 = vadd.f32 %v3953, %v3891
    %v3955 = vadd.f32 %v3954, %v3892
    %v3956 = vadd.f32 %v3955, %v3893
    %v3957 = vadd.f32 %v3956, %v3894
    %v3958 = vadd.f32 %v3957, %v3895
    %v3959 = vadd.f32 %v3958, %v3896
    %v3960 = vadd.f32 %v3959, %v3897
    %v3961 = vadd.f32 %v3960, %v3898
    %v3962 = vadd.f32 %v3961, %v3899
    %v3963 = vadd.f32 %v3962, %v3900
    %v3964 = vadd.f32 %v3963, %v3901
    %v3965 = vadd.f32 %v3964, %v3902
    %v3966 = vadd.f32 %v3965, %v3903
    %v3967 = vadd.f32 %v3966, %v3904
    %v3968 = vadd.f32 %v3967, %v3905
    %v3969 = vadd.f32 %v3968, %v3906
    %v3970 = vadd.f32 %v3969, %v3907
    %v3971 = vadd.f32 %v3970, %v3908
    %v3972 = vadd.f32 %v3971, %v3909
    %v3973 = vadd.f32 %v3972, %v3910
    %v3974 = vadd.f32 %v3973, %v3911
    %v3975 = vadd.f32 %v3974, %v3912
    %v3976 = vadd.f32 %v3975, %v3913
    %v3977 = vadd.f32 %v3976, %v3914
    %v3978 = vadd.f32 %v3977, %v3915
    %v3979 = vadd.f32 %v3978, %v3916
    %v3980 = vadd.f32 %v3979, %v3917
    %v3981 = vadd.f32 %v3980, %v3918
    %v3982 = vadd.f32 %v3981, %v3919
    %v3983 = vadd.f32 %v3982, %v3920
    %v3984 = vadd.f32 %v3983, %v3921
    %v3985 = vadd.f32 %v3984, %v3922
    %v3986 = vadd.f32 %v3985, %v3923
    %v3987 = vadd.f32 %v3986, %v3924
    %v3988 = vadd.f32 %v3987, %v3925
    %v3989 = vadd.f32 %v3988, %v3926
    %v3990 = vadd.f32 %v3989, %v3927
    %v3991 = vadd.f32 %v3990, %v3928
    %v3992 = vadd.f32 %v3991, %v3929
    %v3993 = vadd.f32 %v3992, %v3930
    %v3994 = vadd.f32 %v3993, %v3931
    %v3995 = vadd.f32 %v3994, %v3932
    %v3996 = vadd.f32 %v3995, %v3933
    %v3997 = vadd.f32 %v3996, %v3934
    %v3998 = vadd.f32 %v3997, %v3935
    %v3999 = vadd.f32 %v3998, %v3936
    %v4000 = vadd.f32 %v3999, %v3937
    %v4001 = vrot.slane %v4000, 4
    %v4002 = vadd.f32 %v4000, %v4001
    %v4003 = vrot.slane %v4002, 2
    %v4004 = vadd.f32 %v4002, %v4003
    %v4005 = vrot.slane %v4004, 1
    %v4006 = vadd.f32 %v4004, %v4005
    %v4007 = vmul.f32 %v4006, 0.001953125
    %v4008 = vmul.f32 %v3874, %v3874
    %v4009 = vmul.f32 %v3875, %v3875
    %v4010 = vmul.f32 %v3876, %v3876
    %v4011 = vmul.f32 %v3877, %v3877
    %v4012 = vmul.f32 %v3878, %v3878
    %v4013 = vmul.f32 %v3879, %v3879
    %v4014 = vmul.f32 %v3880, %v3880
    %v4015 = vmul.f32 %v3881, %v3881
    %v4016 = vmul.f32 %v3882, %v3882
    %v4017 = vmul.f32 %v3883, %v3883
    %v4018 = vmul.f32 %v3884, %v3884
    %v4019 = vmul.f32 %v3885, %v3885
    %v4020 = vmul.f32 %v3886, %v3886
    %v4021 = vmul.f32 %v3887, %v3887
    %v4022 = vmul.f32 %v3888, %v3888
    %v4023 = vmul.f32 %v3889, %v3889
    %v4024 = vmul.f32 %v3890, %v3890
    %v4025 = vmul.f32 %v3891, %v3891
    %v4026 = vmul.f32 %v3892, %v3892
    %v4027 = vmul.f32 %v3893, %v3893
    %v4028 = vmul.f32 %v3894, %v3894
    %v4029 = vmul.f32 %v3895, %v3895
    %v4030 = vmul.f32 %v3896, %v3896
    %v4031 = vmul.f32 %v3897, %v3897
    %v4032 = vmul.f32 %v3898, %v3898
    %v4033 = vmul.f32 %v3899, %v3899
    %v4034 = vmul.f32 %v3900, %v3900
    %v4035 = vmul.f32 %v3901, %v3901
    %v4036 = vmul.f32 %v3902, %v3902
    %v4037 = vmul.f32 %v3903, %v3903
    %v4038 = vmul.f32 %v3904, %v3904
    %v4039 = vmul.f32 %v3905, %v3905
    %v4040 = vmul.f32 %v3906, %v3906
    %v4041 = vmul.f32 %v3907, %v3907
    %v4042 = vmul.f32 %v3908, %v3908
    %v4043 = vmul.f32 %v3909, %v3909
    %v4044 = vmul.f32 %v3910, %v3910
    %v4045 = vmul.f32 %v3911, %v3911
    %v4046 = vmul.f32 %v3912, %v3912
    %v4047 = vmul.f32 %v3913, %v3913
    %v4048 = vmul.f32 %v3914, %v3914
    %v4049 = vmul.f32 %v3915, %v3915
    %v4050 = vmul.f32 %v3916, %v3916
    %v4051 = vmul.f32 %v3917, %v3917
    %v4052 = vmul.f32 %v3918, %v3918
    %v4053 = vmul.f32 %v3919, %v3919
    %v4054 = vmul.f32 %v3920, %v3920
    %v4055 = vmul.f32 %v3921, %v3921
    %v4056 = vmul.f32 %v3922, %v3922
    %v4057 = vmul.f32 %v3923, %v3923
    %v4058 = vmul.f32 %v3924, %v3924
    %v4059 = vmul.f32 %v3925, %v3925
    %v4060 = vmul.f32 %v3926, %v3926
    %v4061 = vmul.f32 %v3927, %v3927
    %v4062 = vmul.f32 %v3928, %v3928
    %v4063 = vmul.f32 %v3929, %v3929
    %v4064 = vmul.f32 %v3930, %v3930
    %v4065 = vmul.f32 %v3931, %v3931
    %v4066 = vmul.f32 %v3932, %v3932
    %v4067 = vmul.f32 %v3933, %v3933
    %v4068 = vmul.f32 %v3934, %v3934
    %v4069 = vmul.f32 %v3935, %v3935
    %v4070 = vmul.f32 %v3936, %v3936
    %v4071 = vmul.f32 %v3937, %v3937
    %v4072 = vadd.f32 %v4008, %v4009
    %v4073 = vadd.f32 %v4072, %v4010
    %v4074 = vadd.f32 %v4073, %v4011
    %v4075 = vadd.f32 %v4074, %v4012
    %v4076 = vadd.f32 %v4075, %v4013
    %v4077 = vadd.f32 %v4076, %v4014
    %v4078 = vadd.f32 %v4077, %v4015
    %v4079 = vadd.f32 %v4078, %v4016
    %v4080 = vadd.f32 %v4079, %v4017
    %v4081 = vadd.f32 %v4080, %v4018
    %v4082 = vadd.f32 %v4081, %v4019
    %v4083 = vadd.f32 %v4082, %v4020
    %v4084 = vadd.f32 %v4083, %v4021
    %v4085 = vadd.f32 %v4084, %v4022
    %v4086 = vadd.f32 %v4085, %v4023
    %v4087 = vadd.f32 %v4086, %v4024
    %v4088 = vadd.f32 %v4087, %v4025
    %v4089 = vadd.f32 %v4088, %v4026
    %v4090 = vadd.f32 %v4089, %v4027
    %v4091 = vadd.f32 %v4090, %v4028
    %v4092 = vadd.f32 %v4091, %v4029
    %v4093 = vadd.f32 %v4092, %v4030
    %v4094 = vadd.f32 %v4093, %v4031
    %v4095 = vadd.f32 %v4094, %v4032
    %v4096 = vadd.f32 %v4095, %v4033
    %v4097 = vadd.f32 %v4096, %v4034
    %v4098 = vadd.f32 %v4097, %v4035
    %v4099 = vadd.f32 %v4098, %v4036
    %v4100 = vadd.f32 %v4099, %v4037
    %v4101 = vadd.f32 %v4100, %v4038
    %v4102 = vadd.f32 %v4101, %v4039
    %v4103 = vadd.f32 %v4102, %v4040
    %v4104 = vadd.f32 %v4103, %v4041
    %v4105 = vadd.f32 %v4104, %v4042
    %v4106 = vadd.f32 %v4105, %v4043
    %v4107 = vadd.f32 %v4106, %v4044
    %v4108 = vadd.f32 %v4107, %v4045
    %v4109 = vadd.f32 %v4108, %v4046
    %v4110 = vadd.f32 %v4109, %v4047
    %v4111 = vadd.f32 %v4110, %v4048
    %v4112 = vadd.f32 %v4111, %v4049
    %v4113 = vadd.f32 %v4112, %v4050
    %v4114 = vadd.f32 %v4113, %v4051
    %v4115 = vadd.f32 %v4114, %v4052
    %v4116 = vadd.f32 %v4115, %v4053
    %v4117 = vadd.f32 %v4116, %v4054
    %v4118 = vadd.f32 %v4117, %v4055
    %v4119 = vadd.f32 %v4118, %v4056
    %v4120 = vadd.f32 %v4119, %v4057
    %v4121 = vadd.f32 %v4120, %v4058
    %v4122 = vadd.f32 %v4121, %v4059
    %v4123 = vadd.f32 %v4122, %v4060
    %v4124 = vadd.f32 %v4123, %v4061
    %v4125 = vadd.f32 %v4124, %v4062
    %v4126 = vadd.f32 %v4125, %v4063
    %v4127 = vadd.f32 %v4126, %v4064
    %v4128 = vadd.f32 %v4127, %v4065
    %v4129 = vadd.f32 %v4128, %v4066
    %v4130 = vadd.f32 %v4129, %v4067
    %v4131 = vadd.f32 %v4130, %v4068
    %v4132 = vadd.f32 %v4131, %v4069
    %v4133 = vadd.f32 %v4132, %v4070
    %v4134 = vadd.f32 %v4133, %v4071
    %v4135 = vrot.slane %v4134, 4
    %v4136 = vadd.f32 %v4134, %v4135
    %v4137 = vrot.slane %v4136, 2
    %v4138 = vadd.f32 %v4136, %v4137
    %v4139 = vrot.slane %v4138, 1
    %v4140 = vadd.f32 %v4138, %v4139
    %v4141 = vmul.f32 %v4140, 0.001953125
    %v4142 = vmul.f32 %v4007, %v4007
    %v4143 = vsub.f32 %v4141, %v4142
    %v4144 = vld [vmem:[%s3] sm:$0x1]
    %v4145 = vadd.f32 %v4143, 1e-05
    %v4146 = vrsqrt.pop %v4145
    %v4147 = vmul.f32 %v4146, %v4145
    %v4148 = vmul.f32 %v4147, %v4146
    %v4149 = vmul.f32 0.5, %v4148
    %v4150 = vsub.f32 1.5, %v4149
    %v4151 = vmul.f32 %v4146, %v4150
    %vm4152 = vweird.f32 %v4145
    %vm4153 = vweird.f32 %v4146
    %vm4154 = vmor %vm4152, %vm4153
    %v4155 = vsel %vm4154, %v4146, %v4151
    %v4156 = vmul.f32 %v4144, %v4155
    %v4157 = vld [vmem:[%s4] sm:$0x1]
    %v4158 = vmul.f32 %v4007, %v4156
    %v4159 = vsub.f32 %v4157, %v4158
    %v4161 = vperm.slane %v4156, 0
    %v4163 = vmul.f32 %v3874, %v4161
    %v4164 = vmul.f32 %v3875, %v4161
    %v4165 = vmul.f32 %v3876, %v4161
    %v4166 = vmul.f32 %v3877, %v4161
    %v4167 = vmul.f32 %v3878, %v4161
    %v4168 = vmul.f32 %v3879, %v4161
    %v4169 = vmul.f32 %v3880, %v4161
    %v4170 = vmul.f32 %v3881, %v4161
    %v4171 = vmul.f32 %v3882, %v4161
    %v4172 = vmul.f32 %v3883, %v4161
    %v4173 = vmul.f32 %v3884, %v4161
    %v4174 = vmul.f32 %v3885, %v4161
    %v4175 = vmul.f32 %v3886, %v4161
    %v4176 = vmul.f32 %v3887, %v4161
    %v4177 = vmul.f32 %v3888, %v4161
    %v4178 = vmul.f32 %v3889, %v4161
    %v4179 = vmul.f32 %v3890, %v4161
    %v4180 = vmul.f32 %v3891, %v4161
    %v4181 = vmul.f32 %v3892, %v4161
    %v4182 = vmul.f32 %v3893, %v4161
    %v4183 = vmul.f32 %v3894, %v4161
    %v4184 = vmul.f32 %v3895, %v4161
    %v4185 = vmul.f32 %v3896, %v4161
    %v4186 = vmul.f32 %v3897, %v4161
    %v4187 = vmul.f32 %v3898, %v4161
    %v4188 = vmul.f32 %v3899, %v4161
    %v4189 = vmul.f32 %v3900, %v4161
    %v4190 = vmul.f32 %v3901, %v4161
    %v4191 = vmul.f32 %v3902, %v4161
    %v4192 = vmul.f32 %v3903, %v4161
    %v4193 = vmul.f32 %v3904, %v4161
    %v4194 = vmul.f32 %v3905, %v4161
    %v4195 = vmul.f32 %v3906, %v4161
    %v4196 = vmul.f32 %v3907, %v4161
    %v4197 = vmul.f32 %v3908, %v4161
    %v4198 = vmul.f32 %v3909, %v4161
    %v4199 = vmul.f32 %v3910, %v4161
    %v4200 = vmul.f32 %v3911, %v4161
    %v4201 = vmul.f32 %v3912, %v4161
    %v4202 = vmul.f32 %v3913, %v4161
    %v4203 = vmul.f32 %v3914, %v4161
    %v4204 = vmul.f32 %v3915, %v4161
    %v4205 = vmul.f32 %v3916, %v4161
    %v4206 = vmul.f32 %v3917, %v4161
    %v4207 = vmul.f32 %v3918, %v4161
    %v4208 = vmul.f32 %v3919, %v4161
    %v4209 = vmul.f32 %v3920, %v4161
    %v4210 = vmul.f32 %v3921, %v4161
    %v4211 = vmul.f32 %v3922, %v4161
    %v4212 = vmul.f32 %v3923, %v4161
    %v4213 = vmul.f32 %v3924, %v4161
    %v4214 = vmul.f32 %v3925, %v4161
    %v4215 = vmul.f32 %v3926, %v4161
    %v4216 = vmul.f32 %v3927, %v4161
    %v4217 = vmul.f32 %v3928, %v4161
    %v4218 = vmul.f32 %v3929, %v4161
    %v4219 = vmul.f32 %v3930, %v4161
    %v4220 = vmul.f32 %v3931, %v4161
    %v4221 = vmul.f32 %v3932, %v4161
    %v4222 = vmul.f32 %v3933, %v4161
    %v4223 = vmul.f32 %v3934, %v4161
    %v4224 = vmul.f32 %v3935, %v4161
    %v4225 = vmul.f32 %v3936, %v4161
    %v4226 = vmul.f32 %v3937, %v4161
    %v4228 = vperm.slane %v4159, 0
    %v4230 = vadd.f32 %v4163, %v4228
    %v4231 = vadd.f32 %v4164, %v4228
    %v4232 = vadd.f32 %v4165, %v4228
    %v4233 = vadd.f32 %v4166, %v4228
    %v4234 = vadd.f32 %v4167, %v4228
    %v4235 = vadd.f32 %v4168, %v4228
    %v4236 = vadd.f32 %v4169, %v4228
    %v4237 = vadd.f32 %v4170, %v4228
    %v4238 = vadd.f32 %v4171, %v4228
    %v4239 = vadd.f32 %v4172, %v4228
    %v4240 = vadd.f32 %v4173, %v4228
    %v4241 = vadd.f32 %v4174, %v4228
    %v4242 = vadd.f32 %v4175, %v4228
    %v4243 = vadd.f32 %v4176, %v4228
    %v4244 = vadd.f32 %v4177, %v4228
    %v4245 = vadd.f32 %v4178, %v4228
    %v4246 = vadd.f32 %v4179, %v4228
    %v4247 = vadd.f32 %v4180, %v4228
    %v4248 = vadd.f32 %v4181, %v4228
    %v4249 = vadd.f32 %v4182, %v4228
    %v4250 = vadd.f32 %v4183, %v4228
    %v4251 = vadd.f32 %v4184, %v4228
    %v4252 = vadd.f32 %v4185, %v4228
    %v4253 = vadd.f32 %v4186, %v4228
    %v4254 = vadd.f32 %v4187, %v4228
    %v4255 = vadd.f32 %v4188, %v4228
    %v4256 = vadd.f32 %v4189, %v4228
    %v4257 = vadd.f32 %v4190, %v4228
    %v4258 = vadd.f32 %v4191, %v4228
    %v4259 = vadd.f32 %v4192, %v4228
    %v4260 = vadd.f32 %v4193, %v4228
    %v4261 = vadd.f32 %v4194, %v4228
    %v4262 = vadd.f32 %v4195, %v4228
    %v4263 = vadd.f32 %v4196, %v4228
    %v4264 = vadd.f32 %v4197, %v4228
    %v4265 = vadd.f32 %v4198, %v4228
    %v4266 = vadd.f32 %v4199, %v4228
    %v4267 = vadd.f32 %v4200, %v4228
    %v4268 = vadd.f32 %v4201, %v4228
    %v4269 = vadd.f32 %v4202, %v4228
    %v4270 = vadd.f32 %v4203, %v4228
    %v4271 = vadd.f32 %v4204, %v4228
    %v4272 = vadd.f32 %v4205, %v4228
    %v4273 = vadd.f32 %v4206, %v4228
    %v4274 = vadd.f32 %v4207, %v4228
    %v4275 = vadd.f32 %v4208, %v4228
    %v4276 = vadd.f32 %v4209, %v4228
    %v4277 = vadd.f32 %v4210, %v4228
    %v4278 = vadd.f32 %v4211, %v4228
    %v4279 = vadd.f32 %v4212, %v4228
    %v4280 = vadd.f32 %v4213, %v4228
    %v4281 = vadd.f32 %v4214, %v4228
    %v4282 = vadd.f32 %v4215, %v4228
    %v4283 = vadd.f32 %v4216, %v4228
    %v4284 = vadd.f32 %v4217, %v4228
    %v4285 = vadd.f32 %v4218, %v4228
    %v4286 = vadd.f32 %v4219, %v4228
    %v4287 = vadd.f32 %v4220, %v4228
    %v4288 = vadd.f32 %v4221, %v4228
    %v4289 = vadd.f32 %v4222, %v4228
    %v4290 = vadd.f32 %v4223, %v4228
    %v4291 = vadd.f32 %v4224, %v4228
    %v4292 = vadd.f32 %v4225, %v4228
    %v4293 = vadd.f32 %v4226, %v4228
    %v4294 = vmax.f32 %v4230, 0.0
    %v4295 = vmax.f32 %v4231, 0.0
    %v4296 = vmax.f32 %v4232, 0.0
    %v4297 = vmax.f32 %v4233, 0.0
    %v4298 = vmax.f32 %v4234, 0.0
    %v4299 = vmax.f32 %v4235, 0.0
    %v4300 = vmax.f32 %v4236, 0.0
    %v4301 = vmax.f32 %v4237, 0.0
    %v4302 = vmax.f32 %v4238, 0.0
    %v4303 = vmax.f32 %v4239, 0.0
    %v4304 = vmax.f32 %v4240, 0.0
    %v4305 = vmax.f32 %v4241, 0.0
    %v4306 = vmax.f32 %v4242, 0.0
    %v4307 = vmax.f32 %v4243, 0.0
    %v4308 = vmax.f32 %v4244, 0.0
    %v4309 = vmax.f32 %v4245, 0.0
    %v4310 = vmax.f32 %v4246, 0.0
    %v4311 = vmax.f32 %v4247, 0.0
    %v4312 = vmax.f32 %v4248, 0.0
    %v4313 = vmax.f32 %v4249, 0.0
    %v4314 = vmax.f32 %v4250, 0.0
    %v4315 = vmax.f32 %v4251, 0.0
    %v4316 = vmax.f32 %v4252, 0.0
    %v4317 = vmax.f32 %v4253, 0.0
    %v4318 = vmax.f32 %v4254, 0.0
    %v4319 = vmax.f32 %v4255, 0.0
    %v4320 = vmax.f32 %v4256, 0.0
    %v4321 = vmax.f32 %v4257, 0.0
    %v4322 = vmax.f32 %v4258, 0.0
    %v4323 = vmax.f32 %v4259, 0.0
    %v4324 = vmax.f32 %v4260, 0.0
    %v4325 = vmax.f32 %v4261, 0.0
    %v4326 = vmax.f32 %v4262, 0.0
    %v4327 = vmax.f32 %v4263, 0.0
    %v4328 = vmax.f32 %v4264, 0.0
    %v4329 = vmax.f32 %v4265, 0.0
    %v4330 = vmax.f32 %v4266, 0.0
    %v4331 = vmax.f32 %v4267, 0.0
    %v4332 = vmax.f32 %v4268, 0.0
    %v4333 = vmax.f32 %v4269, 0.0
    %v4334 = vmax.f32 %v4270, 0.0
    %v4335 = vmax.f32 %v4271, 0.0
    %v4336 = vmax.f32 %v4272, 0.0
    %v4337 = vmax.f32 %v4273, 0.0
    %v4338 = vmax.f32 %v4274, 0.0
    %v4339 = vmax.f32 %v4275, 0.0
    %v4340 = vmax.f32 %v4276, 0.0
    %v4341 = vmax.f32 %v4277, 0.0
    %v4342 = vmax.f32 %v4278, 0.0
    %v4343 = vmax.f32 %v4279, 0.0
    %v4344 = vmax.f32 %v4280, 0.0
    %v4345 = vmax.f32 %v4281, 0.0
    %v4346 = vmax.f32 %v4282, 0.0
    %v4347 = vmax.f32 %v4283, 0.0
    %v4348 = vmax.f32 %v4284, 0.0
    %v4349 = vmax.f32 %v4285, 0.0
    %v4350 = vmax.f32 %v4286, 0.0
    %v4351 = vmax.f32 %v4287, 0.0
    %v4352 = vmax.f32 %v4288, 0.0
    %v4353 = vmax.f32 %v4289, 0.0
    %v4354 = vmax.f32 %v4290, 0.0
    %v4355 = vmax.f32 %v4291, 0.0
    %v4356 = vmax.f32 %v4292, 0.0
    %v4357 = vmax.f32 %v4293, 0.0
    %4358 = vst [vmem:[%s199 + $0x1] sm:$0xff] %v4294
    %4359 = vst [vmem:[%s199 + $0x9] sm:$0xff] %v4295
    %4360 = vst [vmem:[%s199 + $0x19] sm:$0xff] %v4296
    %4361 = vst [vmem:[%s199 + $0x21] sm:$0xff] %v4297
    %4362 = vst [vmem:[%s199 + $0x31] sm:$0xff] %v4298
    %4363 = vst [vmem:[%s199 + $0x39] sm:$0xff] %v4299
    %4364 = vst [vmem:[%s199 + $0x49] sm:$0xff] %v4300
    %4365 = vst [vmem:[%s199 + $0x51] sm:$0xff] %v4301
    %4366 = vst [vmem:[%s199 + $0x61] sm:$0xff] %v4302
    %4367 = vst [vmem:[%s199 + $0x69] sm:$0xff] %v4303
    %4368 = vst [vmem:[%s199 + $0x79] sm:$0xff] %v4304
    %4369 = vst [vmem:[%s199 + $0x81] sm:$0xff] %v4305
    %4370 = vst [vmem:[%s199 + $0x91] sm:$0xff] %v4306
    %4371 = vst [vmem:[%s199 + $0x99] sm:$0xff] %v4307
    %4372 = vst [vmem:[%s199 + $0xa9] sm:$0xff] %v4308
    %4373 = vst [vmem:[%s199 + $0xb1] sm:$0xff] %v4309
    %4374 = vst [vmem:[%s199 + $0xc1] sm:$0xff] %v4310
    %4375 = vst [vmem:[%s199 + $0xc9] sm:$0xff] %v4311
    %4376 = vst [vmem:[%s199 + $0xd9] sm:$0xff] %v4312
    %4377 = vst [vmem:[%s199 + $0xe1] sm:$0xff] %v4313
    %4378 = vst [vmem:[%s199 + $0xf1] sm:$0xff] %v4314
    %4379 = vst [vmem:[%s199 + $0xf9] sm:$0xff] %v4315
    %4380 = vst [vmem:[%s199 + $0x109] sm:$0xff] %v4316
    %4381 = vst [vmem:[%s199 + $0x111] sm:$0xff] %v4317
    %4382 = vst [vmem:[%s199 + $0x121] sm:$0xff] %v4318
    %4383 = vst [vmem:[%s199 + $0x129] sm:$0xff] %v4319
    %4384 = vst [vmem:[%s199 + $0x139] sm:$0xff] %v4320
    %4385 = vst [vmem:[%s199 + $0x141] sm:$0xff] %v4321
    %4386 = vst [vmem:[%s199 + $0x151] sm:$0xff] %v4322
    %4387 = vst [vmem:[%s199 + $0x159] sm:$0xff] %v4323
    %4388 = vst [vmem:[%s199 + $0x169] sm:$0xff] %v4324
    %4389 = vst [vmem:[%s199 + $0x171] sm:$0xff] %v4325
    %4390 = vst [vmem:[%s199 + $0x1b1] sm:$0xff] %v4326
    %4391 = vst [vmem:[%s199 + $0x1b9] sm:$0xff] %v4327
    %4392 = vst [vmem:[%s199 + $0x1c9] sm:$0xff] %v4328
    %4393 = vst [vmem:[%s199 + $0x1d1] sm:$0xff] %v4329
    %4394 = vst [vmem:[%s199 + $0x1e1] sm:$0xff] %v4330
    %4395 = vst [vmem:[%s199 + $0x1e9] sm:$0xff] %v4331
    %4396 = vst [vmem:[%s199 + $0x1f9] sm:$0xff] %v4332
    %4397 = vst [vmem:[%s199 + $0x201] sm:$0xff] %v4333
    %4398 = vst [vmem:[%s199 + $0x211] sm:$0xff] %v4334
    %4399 = vst [vmem:[%s199 + $0x219] sm:$0xff] %v4335
    %4400 = vst [vmem:[%s199 + $0x229] sm:$0xff] %v4336
    %4401 = vst [vmem:[%s199 + $0x231] sm:$0xff] %v4337
    %4402 = vst [vmem:[%s199 + $0x241] sm:$0xff] %v4338
    %4403 = vst [vmem:[%s199 + $0x249] sm:$0xff] %v4339
    %4404 = vst [vmem:[%s199 + $0x259] sm:$0xff] %v4340
    %4405 = vst [vmem:[%s199 + $0x261] sm:$0xff] %v4341
    %4406 = vst [vmem:[%s199 + $0x271] sm:$0xff] %v4342
    %4407 = vst [vmem:[%s199 + $0x279] sm:$0xff] %v4343
    %4408 = vst [vmem:[%s199 + $0x289] sm:$0xff] %v4344
    %4409 = vst [vmem:[%s199 + $0x291] sm:$0xff] %v4345
    %4410 = vst [vmem:[%s199 + $0x2a1] sm:$0xff] %v4346
    %4411 = vst [vmem:[%s199 + $0x2a9] sm:$0xff] %v4347
    %4412 = vst [vmem:[%s199 + $0x2b9] sm:$0xff] %v4348
    %4413 = vst [vmem:[%s199 + $0x2c1] sm:$0xff] %v4349
    %4414 = vst [vmem:[%s199 + $0x2d1] sm:$0xff] %v4350
    %4415 = vst [vmem:[%s199 + $0x2d9] sm:$0xff] %v4351
    %4416 = vst [vmem:[%s199 + $0x2e9] sm:$0xff] %v4352
    %4417 = vst [vmem:[%s199 + $0x2f1] sm:$0xff] %v4353
    %4418 = vst [vmem:[%s199 + $0x301] sm:$0xff] %v4354
    %4419 = vst [vmem:[%s199 + $0x309] sm:$0xff] %v4355
    %4420 = vst [vmem:[%s199 + $0x319] sm:$0xff] %v4356
    %4421 = vst [vmem:[%s199 + $0x321] sm:$0xff] %v4357
    %v4422 = vld [vmem:[#allocation2] sm:$0xff]
    %v4423 = vld [vmem:[#allocation2 + $0x8] sm:$0xff]
    %v4424 = vld [vmem:[#allocation2 + $0x18] sm:$0xff]
    %v4425 = vld [vmem:[#allocation2 + $0x20] sm:$0xff]
    %v4426 = vld [vmem:[#allocation2 + $0x30] sm:$0xff]
    %v4427 = vld [vmem:[#allocation2 + $0x38] sm:$0xff]
    %v4428 = vld [vmem:[#allocation2 + $0x48] sm:$0xff]
    %v4429 = vld [vmem:[#allocation2 + $0x50] sm:$0xff]
    %v4430 = vld [vmem:[#allocation2 + $0x60] sm:$0xff]
    %v4431 = vld [vmem:[#allocation2 + $0x68] sm:$0xff]
    %v4432 = vld [vmem:[#allocation2 + $0x78] sm:$0xff]
    %v4433 = vld [vmem:[#allocation2 + $0x80] sm:$0xff]
    %v4434 = vld [vmem:[#allocation2 + $0x90] sm:$0xff]
    %v4435 = vld [vmem:[#allocation2 + $0x98] sm:$0xff]
    %v4436 = vld [vmem:[#allocation2 + $0xa8] sm:$0xff]
    %v4437 = vld [vmem:[#allocation2 + $0xb0] sm:$0xff]
    %v4438 = vld [vmem:[#allocation2 + $0xc0] sm:$0xff]
    %v4439 = vld [vmem:[#allocation2 + $0xc8] sm:$0xff]
    %v4440 = vld [vmem:[#allocation2 + $0xd8] sm:$0xff]
    %v4441 = vld [vmem:[#allocation2 + $0xe0] sm:$0xff]
    %v4442 = vld [vmem:[#allocation2 + $0xf0] sm:$0xff]
    %v4443 = vld [vmem:[#allocation2 + $0xf8] sm:$0xff]
    %v4444 = vld [vmem:[#allocation2 + $0x108] sm:$0xff]
    %v4445 = vld [vmem:[#allocation2 + $0x110] sm:$0xff]
    %v4446 = vld [vmem:[#allocation2 + $0x120] sm:$0xff]
    %v4447 = vld [vmem:[#allocation2 + $0x128] sm:$0xff]
    %v4448 = vld [vmem:[#allocation2 + $0x138] sm:$0xff]
    %v4449 = vld [vmem:[#allocation2 + $0x140] sm:$0xff]
    %v4450 = vld [vmem:[#allocation2 + $0x150] sm:$0xff]
    %v4451 = vld [vmem:[#allocation2 + $0x158] sm:$0xff]
    %v4452 = vld [vmem:[#allocation2 + $0x168] sm:$0xff]
    %v4453 = vld [vmem:[#allocation2 + $0x170] sm:$0xff]
    %v4454 = vld [vmem:[#allocation2 + $0x1b0] sm:$0xff]
    %v4455 = vld [vmem:[#allocation2 + $0x1b8] sm:$0xff]
    %v4456 = vld [vmem:[#allocation2 + $0x1c8] sm:$0xff]
    %v4457 = vld [vmem:[#allocation2 + $0x1d0] sm:$0xff]
    %v4458 = vld [vmem:[#allocation2 + $0x1e0] sm:$0xff]
    %v4459 = vld [vmem:[#allocation2 + $0x1e8] sm:$0xff]
    %v4460 = vld [vmem:[#allocation2 + $0x1f8] sm:$0xff]
    %v4461 = vld [vmem:[#allocation2 + $0x200] sm:$0xff]
    %v4462 = vld [vmem:[#allocation2 + $0x210] sm:$0xff]
    %v4463 = vld [vmem:[#allocation2 + $0x218] sm:$0xff]
    %v4464 = vld [vmem:[#allocation2 + $0x228] sm:$0xff]
    %v4465 = vld [vmem:[#allocation2 + $0x230] sm:$0xff]
    %v4466 = vld [vmem:[#allocation2 + $0x240] sm:$0xff]
    %v4467 = vld [vmem:[#allocation2 + $0x248] sm:$0xff]
    %v4468 = vld [vmem:[#allocation2 + $0x258] sm:$0xff]
    %v4469 = vld [vmem:[#allocation2 + $0x260] sm:$0xff]
    %v4470 = vld [vmem:[#allocation2 + $0x270] sm:$0xff]
    %v4471 = vld [vmem:[#allocation2 + $0x278] sm:$0xff]
    %v4472 = vld [vmem:[#allocation2 + $0x288] sm:$0xff]
    %v4473 = vld [vmem:[#allocation2 + $0x290] sm:$0xff]
    %v4474 = vld [vmem:[#allocation2 + $0x2a0] sm:$0xff]
    %v4475 = vld [vmem:[#allocation2 + $0x2a8] sm:$0xff]
    %v4476 = vld [vmem:[#allocation2 + $0x2b8] sm:$0xff]
    %v4477 = vld [vmem:[#allocation2 + $0x2c0] sm:$0xff]
    %v4478 = vld [vmem:[#allocation2 + $0x2d0] sm:$0xff]
    %v4479 = vld [vmem:[#allocation2 + $0x2d8] sm:$0xff]
    %v4480 = vld [vmem:[#allocation2 + $0x2e8] sm:$0xff]
    %v4481 = vld [vmem:[#allocation2 + $0x2f0] sm:$0xff]
    %v4482 = vld [vmem:[#allocation2 + $0x300] sm:$0xff]
    %v4483 = vld [vmem:[#allocation2 + $0x308] sm:$0xff]
    %v4484 = vld [vmem:[#allocation2 + $0x318] sm:$0xff]
    %v4485 = vld [vmem:[#allocation2 + $0x320] sm:$0xff]
    %v4486 = vpack.c.bf16 %v4423, %v4422
    %v4487 = vpack.c.bf16 %v4425, %v4424
    %v4488 = vpack.c.bf16 %v4427, %v4426
    %v4489 = vpack.c.bf16 %v4429, %v4428
    %v4490 = vpack.c.bf16 %v4431, %v4430
    %v4491 = vpack.c.bf16 %v4433, %v4432
    %v4492 = vpack.c.bf16 %v4435, %v4434
    %v4493 = vpack.c.bf16 %v4437, %v4436
    %v4494 = vpack.c.bf16 %v4439, %v4438
    %v4495 = vpack.c.bf16 %v4441, %v4440
    %v4496 = vpack.c.bf16 %v4443, %v4442
    %v4497 = vpack.c.bf16 %v4445, %v4444
    %v4498 = vpack.c.bf16 %v4447, %v4446
    %v4499 = vpack.c.bf16 %v4449, %v4448
    %v4500 = vpack.c.bf16 %v4451, %v4450
    %v4501 = vpack.c.bf16 %v4453, %v4452
    %v4502 = vpack.c.bf16 %v4455, %v4454
    %v4503 = vpack.c.bf16 %v4457, %v4456
    %v4504 = vpack.c.bf16 %v4459, %v4458
    %v4505 = vpack.c.bf16 %v4461, %v4460
    %v4506 = vpack.c.bf16 %v4463, %v4462
    %v4507 = vpack.c.bf16 %v4465, %v4464
    %v4508 = vpack.c.bf16 %v4467, %v4466
    %v4509 = vpack.c.bf16 %v4469, %v4468
    %v4510 = vpack.c.bf16 %v4471, %v4470
    %v4511 = vpack.c.bf16 %v4473, %v4472
    %v4512 = vpack.c.bf16 %v4475, %v4474
    %v4513 = vpack.c.bf16 %v4477, %v4476
    %v4514 = vpack.c.bf16 %v4479, %v4478
    %v4515 = vpack.c.bf16 %v4481, %v4480
    %v4516 = vpack.c.bf16 %v4483, %v4482
    %v4517 = vpack.c.bf16 %v4485, %v4484
    %v4518 = vld [vmem:[%s2] sm:$0xf]
    %v4519 = vld [vmem:[%s2 + $0x4] sm:$0xf]
    %v4520 = vld [vmem:[%s2 + $0x8] sm:$0xf]
    %v4521 = vld [vmem:[%s2 + $0xc] sm:$0xf]
    %v4522 = vld [vmem:[%s2 + $0x10] sm:$0xf]
    %v4523 = vld [vmem:[%s2 + $0x14] sm:$0xf]
    %v4524 = vld [vmem:[%s2 + $0x18] sm:$0xf]
    %v4525 = vld [vmem:[%s2 + $0x1c] sm:$0xf]
    %v4526 = vld [vmem:[%s2 + $0x20] sm:$0xf]
    %v4527 = vld [vmem:[%s2 + $0x24] sm:$0xf]
    %v4528 = vld [vmem:[%s2 + $0x28] sm:$0xf]
    %v4529 = vld [vmem:[%s2 + $0x2c] sm:$0xf]
    %v4530 = vld [vmem:[%s2 + $0x30] sm:$0xf]
    %v4531 = vld [vmem:[%s2 + $0x34] sm:$0xf]
    %v4532 = vld [vmem:[%s2 + $0x38] sm:$0xf]
    %v4533 = vld [vmem:[%s2 + $0x3c] sm:$0xf]
    %v4534 = vld [vmem:[#allocation2 + $0x1] sm:$0xff]
    %v4535 = vld [vmem:[#allocation2 + $0x9] sm:$0xff]
    %v4536 = vld [vmem:[#allocation2 + $0x19] sm:$0xff]
    %v4537 = vld [vmem:[#allocation2 + $0x21] sm:$0xff]
    %v4538 = vld [vmem:[#allocation2 + $0x31] sm:$0xff]
    %v4539 = vld [vmem:[#allocation2 + $0x39] sm:$0xff]
    %v4540 = vld [vmem:[#allocation2 + $0x49] sm:$0xff]
    %v4541 = vld [vmem:[#allocation2 + $0x51] sm:$0xff]
    %v4542 = vld [vmem:[#allocation2 + $0x61] sm:$0xff]
    %v4543 = vld [vmem:[#allocation2 + $0x69] sm:$0xff]
    %v4544 = vld [vmem:[#allocation2 + $0x79] sm:$0xff]
    %v4545 = vld [vmem:[#allocation2 + $0x81] sm:$0xff]
    %v4546 = vld [vmem:[#allocation2 + $0x91] sm:$0xff]
    %v4547 = vld [vmem:[#allocation2 + $0x99] sm:$0xff]
    %v4548 = vld [vmem:[#allocation2 + $0xa9] sm:$0xff]
    %v4549 = vld [vmem:[#allocation2 + $0xb1] sm:$0xff]
    %v4550 = vld [vmem:[#allocation2 + $0xc1] sm:$0xff]
    %v4551 = vld [vmem:[#allocation2 + $0xc9] sm:$0xff]
    %v4552 = vld [vmem:[#allocation2 + $0xd9] sm:$0xff]
    %v4553 = vld [vmem:[#allocation2 + $0xe1] sm:$0xff]
    %v4554 = vld [vmem:[#allocation2 + $0xf1] sm:$0xff]
    %v4555 = vld [vmem:[#allocation2 + $0xf9] sm:$0xff]
    %v4556 = vld [vmem:[#allocation2 + $0x109] sm:$0xff]
    %v4557 = vld [vmem:[#allocation2 + $0x111] sm:$0xff]
    %v4558 = vld [vmem:[#allocation2 + $0x121] sm:$0xff]
    %v4559 = vld [vmem:[#allocation2 + $0x129] sm:$0xff]
    %v4560 = vld [vmem:[#allocation2 + $0x139] sm:$0xff]
    %v4561 = vld [vmem:[#allocation2 + $0x141] sm:$0xff]
    %v4562 = vld [vmem:[#allocation2 + $0x151] sm:$0xff]
    %v4563 = vld [vmem:[#allocation2 + $0x159] sm:$0xff]
    %v4564 = vld [vmem:[#allocation2 + $0x169] sm:$0xff]
    %v4565 = vld [vmem:[#allocation2 + $0x171] sm:$0xff]
    %v4566 = vld [vmem:[#allocation2 + $0x1b1] sm:$0xff]
    %v4567 = vld [vmem:[#allocation2 + $0x1b9] sm:$0xff]
    %v4568 = vld [vmem:[#allocation2 + $0x1c9] sm:$0xff]
    %v4569 = vld [vmem:[#allocation2 + $0x1d1] sm:$0xff]
    %v4570 = vld [vmem:[#allocation2 + $0x1e1] sm:$0xff]
    %v4571 = vld [vmem:[#allocation2 + $0x1e9] sm:$0xff]
    %v4572 = vld [vmem:[#allocation2 + $0x1f9] sm:$0xff]
    %v4573 = vld [vmem:[#allocation2 + $0x201] sm:$0xff]
    %v4574 = vld [vmem:[#allocation2 + $0x211] sm:$0xff]
    %v4575 = vld [vmem:[#allocation2 + $0x219] sm:$0xff]
    %v4576 = vld [vmem:[#allocation2 + $0x229] sm:$0xff]
    %v4577 = vld [vmem:[#allocation2 + $0x231] sm:$0xff]
    %v4578 = vld [vmem:[#allocation2 + $0x241] sm:$0xff]
    %v4579 = vld [vmem:[#allocation2 + $0x249] sm:$0xff]
    %v4580 = vld [vmem:[#allocation2 + $0x259] sm:$0xff]
    %v4581 = vld [vmem:[#allocation2 + $0x261] sm:$0xff]
    %v4582 = vld [vmem:[#allocation2 + $0x271] sm:$0xff]
    %v4583 = vld [vmem:[#allocation2 + $0x279] sm:$0xff]
    %v4584 = vld [vmem:[#allocation2 + $0x289] sm:$0xff]
    %v4585 = vld [vmem:[#allocation2 + $0x291] sm:$0xff]
    %v4586 = vld [vmem:[#allocation2 + $0x2a1] sm:$0xff]
    %v4587 = vld [vmem:[#allocation2 + $0x2a9] sm:$0xff]
    %v4588 = vld [vmem:[#allocation2 + $0x2b9] sm:$0xff]
    %v4589 = vld [vmem:[#allocation2 + $0x2c1] sm:$0xff]
    %v4590 = vld [vmem:[#allocation2 + $0x2d1] sm:$0xff]
    %v4591 = vld [vmem:[#allocation2 + $0x2d9] sm:$0xff]
    %v4592 = vld [vmem:[#allocation2 + $0x2e9] sm:$0xff]
    %v4593 = vld [vmem:[#allocation2 + $0x2f1] sm:$0xff]
    %v4594 = vld [vmem:[#allocation2 + $0x301] sm:$0xff]
    %v4595 = vld [vmem:[#allocation2 + $0x309] sm:$0xff]
    %v4596 = vld [vmem:[#allocation2 + $0x319] sm:$0xff]
    %v4597 = vld [vmem:[#allocation2 + $0x321] sm:$0xff]
    %v4598 = vpack.c.bf16 %v4535, %v4534
    %v4599 = vpack.c.bf16 %v4537, %v4536
    %v4600 = vpack.c.bf16 %v4539, %v4538
    %v4601 = vpack.c.bf16 %v4541, %v4540
    %v4602 = vpack.c.bf16 %v4543, %v4542
    %v4603 = vpack.c.bf16 %v4545, %v4544
    %v4604 = vpack.c.bf16 %v4547, %v4546
    %v4605 = vpack.c.bf16 %v4549, %v4548
    %v4606 = vpack.c.bf16 %v4551, %v4550
    %v4607 = vpack.c.bf16 %v4553, %v4552
    %v4608 = vpack.c.bf16 %v4555, %v4554
    %v4609 = vpack.c.bf16 %v4557, %v4556
    %v4610 = vpack.c.bf16 %v4559, %v4558
    %v4611 = vpack.c.bf16 %v4561, %v4560
    %v4612 = vpack.c.bf16 %v4563, %v4562
    %v4613 = vpack.c.bf16 %v4565, %v4564
    %v4614 = vpack.c.bf16 %v4567, %v4566
    %v4615 = vpack.c.bf16 %v4569, %v4568
    %v4616 = vpack.c.bf16 %v4571, %v4570
    %v4617 = vpack.c.bf16 %v4573, %v4572
    %v4618 = vpack.c.bf16 %v4575, %v4574
    %v4619 = vpack.c.bf16 %v4577, %v4576
    %v4620 = vpack.c.bf16 %v4579, %v4578
    %v4621 = vpack.c.bf16 %v4581, %v4580
    %v4622 = vpack.c.bf16 %v4583, %v4582
    %v4623 = vpack.c.bf16 %v4585, %v4584
    %v4624 = vpack.c.bf16 %v4587, %v4586
    %v4625 = vpack.c.bf16 %v4589, %v4588
    %v4626 = vpack.c.bf16 %v4591, %v4590
    %v4627 = vpack.c.bf16 %v4593, %v4592
    %v4628 = vpack.c.bf16 %v4595, %v4594
    %v4629 = vpack.c.bf16 %v4597, %v4596
    %s4630 = scalar_lea.vmem %s2, 64
    %v4631 = vld [vmem:[%s4630] sm:$0xf]
    %v4632 = vld [vmem:[%s4630 + $0x4] sm:$0xf]
    %v4633 = vld [vmem:[%s4630 + $0x8] sm:$0xf]
    %v4634 = vld [vmem:[%s4630 + $0xc] sm:$0xf]
    %v4635 = vld [vmem:[%s4630 + $0x10] sm:$0xf]
    %v4636 = vld [vmem:[%s4630 + $0x14] sm:$0xf]
    %v4637 = vld [vmem:[%s4630 + $0x18] sm:$0xf]
    %v4638 = vld [vmem:[%s4630 + $0x1c] sm:$0xf]
    %v4639 = vld [vmem:[%s4630 + $0x20] sm:$0xf]
    %v4640 = vld [vmem:[%s4630 + $0x24] sm:$0xf]
    %v4641 = vld [vmem:[%s4630 + $0x28] sm:$0xf]
    %v4642 = vld [vmem:[%s4630 + $0x2c] sm:$0xf]
    %v4643 = vld [vmem:[%s4630 + $0x30] sm:$0xf]
    %v4644 = vld [vmem:[%s4630 + $0x34] sm:$0xf]
    %v4645 = vld [vmem:[%s4630 + $0x38] sm:$0xf]
    %v4646 = vld [vmem:[%s4630 + $0x3c] sm:$0xf]
    %v4663 = vunpack.c.l.b16 %v4631
    %v4664 = vunpack.c.l.b16 %v4632
    %v4665 = vunpack.c.l.b16 %v4633
    %v4666 = vunpack.c.l.b16 %v4634
    %v4667 = vunpack.c.l.b16 %v4635
    %v4668 = vunpack.c.l.b16 %v4636
    %v4669 = vunpack.c.l.b16 %v4637
    %v4670 = vunpack.c.l.b16 %v4638
    %v4671 = vunpack.c.l.b16 %v4639
    %v4672 = vunpack.c.l.b16 %v4640
    %v4673 = vunpack.c.l.b16 %v4641
    %v4674 = vunpack.c.l.b16 %v4642
    %v4675 = vunpack.c.l.b16 %v4643
    %v4676 = vunpack.c.l.b16 %v4644
    %v4677 = vunpack.c.l.b16 %v4645
    %v4678 = vunpack.c.l.b16 %v4646
    %v4679 = vpack.c.b16 %v4664, %v4663
    %v4680 = vpack.c.b16 %v4666, %v4665
    %v4681 = vpack.c.b16 %v4668, %v4667
    %v4682 = vpack.c.b16 %v4670, %v4669
    %v4683 = vpack.c.b16 %v4672, %v4671
    %v4684 = vpack.c.b16 %v4674, %v4673
    %v4685 = vpack.c.b16 %v4676, %v4675
    %v4686 = vpack.c.b16 %v4678, %v4677
    %4695 = vmatpush.bf16.msra.mxu0 %v4686
    %4696 = vmatpush.bf16.msra.mxu0 %v4685
    %4697 = vmatpush.bf16.msra.mxu0 %v4684
    %4698 = vmatpush.bf16.msra.mxu0 %v4683
    %4699 = vmatpush.bf16.msra.mxu0 %v4682
    %4700 = vmatpush.bf16.msra.mxu0 %v4681
    %4701 = vmatpush.bf16.msra.mxu0 %v4680
    %4702 = vmatpush.bf16.msra.mxu0 %v4679
    %4703 = vmatmul.bf16.gmra.mxu0 %v4598
    %v4704 = vpop.f32.mrf.mxu0
    %v4705 = vadd.f32 0.0, %v4704
    %v4706 = vpop.f32.mrf.mxu0
    %v4707 = vadd.f32 0.0, %v4706
    %4708 = vmatmul.bf16.gmra.mxu0 %v4599
    %v4709 = vpop.f32.mrf.mxu0
    %v4710 = vadd.f32 0.0, %v4709
    %v4711 = vpop.f32.mrf.mxu0
    %v4712 = vadd.f32 0.0, %v4711
    %4713 = vmatmul.bf16.gmra.mxu0 %v4600
    %v4714 = vpop.f32.mrf.mxu0
    %v4715 = vadd.f32 0.0, %v4714
    %v4716 = vpop.f32.mrf.mxu0
    %v4717 = vadd.f32 0.0, %v4716
    %4718 = vmatmul.bf16.gmra.mxu0 %v4601
    %v4719 = vpop.f32.mrf.mxu0
    %v4720 = vadd.f32 0.0, %v4719
    %v4721 = vpop.f32.mrf.mxu0
    %v4722 = vadd.f32 0.0, %v4721
    %4723 = vmatmul.bf16.gmra.mxu0 %v4602
    %v4724 = vpop.f32.mrf.mxu0
    %v4725 = vadd.f32 0.0, %v4724
    %v4726 = vpop.f32.mrf.mxu0
    %v4727 = vadd.f32 0.0, %v4726
    %4728 = vmatmul.bf16.gmra.mxu0 %v4603
    %v4729 = vpop.f32.mrf.mxu0
    %v4730 = vadd.f32 0.0, %v4729
    %v4731 = vpop.f32.mrf.mxu0
    %v4732 = vadd.f32 0.0, %v4731
    %4733 = vmatmul.bf16.gmra.mxu0 %v4604
    %v4734 = vpop.f32.mrf.mxu0
    %v4735 = vadd.f32 0.0, %v4734
    %v4736 = vpop.f32.mrf.mxu0
    %v4737 = vadd.f32 0.0, %v4736
    %4738 = vmatmul.bf16.gmra.mxu0 %v4605
    %v4739 = vpop.f32.mrf.mxu0
    %v4740 = vadd.f32 0.0, %v4739
    %v4741 = vpop.f32.mrf.mxu0
    %v4742 = vadd.f32 0.0, %v4741
    %4743 = vmatmul.bf16.gmra.mxu0 %v4606
    %v4744 = vpop.f32.mrf.mxu0
    %v4745 = vadd.f32 0.0, %v4744
    %v4746 = vpop.f32.mrf.mxu0
    %v4747 = vadd.f32 0.0, %v4746
    %4748 = vmatmul.bf16.gmra.mxu0 %v4607
    %v4749 = vpop.f32.mrf.mxu0
    %v4750 = vadd.f32 0.0, %v4749
    %v4751 = vpop.f32.mrf.mxu0
    %v4752 = vadd.f32 0.0, %v4751
    %4753 = vmatmul.bf16.gmra.mxu0 %v4608
    %v4754 = vpop.f32.mrf.mxu0
    %v4755 = vadd.f32 0.0, %v4754
    %v4756 = vpop.f32.mrf.mxu0
    %v4757 = vadd.f32 0.0, %v4756
    %4758 = vmatmul.bf16.gmra.mxu0 %v4609
    %v4759 = vpop.f32.mrf.mxu0
    %v4760 = vadd.f32 0.0, %v4759
    %v4761 = vpop.f32.mrf.mxu0
    %v4762 = vadd.f32 0.0, %v4761
    %4763 = vmatmul.bf16.gmra.mxu0 %v4610
    %v4764 = vpop.f32.mrf.mxu0
    %v4765 = vadd.f32 0.0, %v4764
    %v4766 = vpop.f32.mrf.mxu0
    %v4767 = vadd.f32 0.0, %v4766
    %4768 = vmatmul.bf16.gmra.mxu0 %v4611
    %v4769 = vpop.f32.mrf.mxu0
    %v4770 = vadd.f32 0.0, %v4769
    %v4771 = vpop.f32.mrf.mxu0
    %v4772 = vadd.f32 0.0, %v4771
    %4773 = vmatmul.bf16.gmra.mxu0 %v4612
    %v4774 = vpop.f32.mrf.mxu0
    %v4775 = vadd.f32 0.0, %v4774
    %v4776 = vpop.f32.mrf.mxu0
    %v4777 = vadd.f32 0.0, %v4776
    %4778 = vmatmul.bf16.gmra.mxu0 %v4613
    %v4779 = vpop.f32.mrf.mxu0
    %v4780 = vadd.f32 0.0, %v4779
    %v4781 = vpop.f32.mrf.mxu0
    %v4782 = vadd.f32 0.0, %v4781
    %4783 = vmatmul.bf16.gmra.mxu0 %v4614
    %v4784 = vpop.f32.mrf.mxu0
    %v4785 = vadd.f32 0.0, %v4784
    %v4786 = vpop.f32.mrf.mxu0
    %v4787 = vadd.f32 0.0, %v4786
    %4788 = vmatmul.bf16.gmra.mxu0 %v4615
    %v4789 = vpop.f32.mrf.mxu0
    %v4790 = vadd.f32 0.0, %v4789
    %v4791 = vpop.f32.mrf.mxu0
    %v4792 = vadd.f32 0.0, %v4791
    %4793 = vmatmul.bf16.gmra.mxu0 %v4616
    %v4794 = vpop.f32.mrf.mxu0
    %v4795 = vadd.f32 0.0, %v4794
    %v4796 = vpop.f32.mrf.mxu0
    %v4797 = vadd.f32 0.0, %v4796
    %4798 = vmatmul.bf16.gmra.mxu0 %v4617
    %v4799 = vpop.f32.mrf.mxu0
    %v4800 = vadd.f32 0.0, %v4799
    %v4801 = vpop.f32.mrf.mxu0
    %v4802 = vadd.f32 0.0, %v4801
    %4803 = vmatmul.bf16.gmra.mxu0 %v4618
    %v4804 = vpop.f32.mrf.mxu0
    %v4805 = vadd.f32 0.0, %v4804
    %v4806 = vpop.f32.mrf.mxu0
    %v4807 = vadd.f32 0.0, %v4806
    %4808 = vmatmul.bf16.gmra.mxu0 %v4619
    %v4809 = vpop.f32.mrf.mxu0
    %v4810 = vadd.f32 0.0, %v4809
    %v4811 = vpop.f32.mrf.mxu0
    %v4812 = vadd.f32 0.0, %v4811
    %4813 = vmatmul.bf16.gmra.mxu0 %v4620
    %v4814 = vpop.f32.mrf.mxu0
    %v4815 = vadd.f32 0.0, %v4814
    %v4816 = vpop.f32.mrf.mxu0
    %v4817 = vadd.f32 0.0, %v4816
    %4818 = vmatmul.bf16.gmra.mxu0 %v4621
    %v4819 = vpop.f32.mrf.mxu0
    %v4820 = vadd.f32 0.0, %v4819
    %v4821 = vpop.f32.mrf.mxu0
    %v4822 = vadd.f32 0.0, %v4821
    %4823 = vmatmul.bf16.gmra.mxu0 %v4622
    %v4824 = vpop.f32.mrf.mxu0
    %v4825 = vadd.f32 0.0, %v4824
    %v4826 = vpop.f32.mrf.mxu0
    %v4827 = vadd.f32 0.0, %v4826
    %4828 = vmatmul.bf16.gmra.mxu0 %v4623
    %v4829 = vpop.f32.mrf.mxu0
    %v4830 = vadd.f32 0.0, %v4829
    %v4831 = vpop.f32.mrf.mxu0
    %v4832 = vadd.f32 0.0, %v4831
    %4833 = vmatmul.bf16.gmra.mxu0 %v4624
    %v4834 = vpop.f32.mrf.mxu0
    %v4835 = vadd.f32 0.0, %v4834
    %v4836 = vpop.f32.mrf.mxu0
    %v4837 = vadd.f32 0.0, %v4836
    %4838 = vmatmul.bf16.gmra.mxu0 %v4625
    %v4839 = vpop.f32.mrf.mxu0
    %v4840 = vadd.f32 0.0, %v4839
    %v4841 = vpop.f32.mrf.mxu0
    %v4842 = vadd.f32 0.0, %v4841
    %4843 = vmatmul.bf16.gmra.mxu0 %v4626
    %v4844 = vpop.f32.mrf.mxu0
    %v4845 = vadd.f32 0.0, %v4844
    %v4846 = vpop.f32.mrf.mxu0
    %v4847 = vadd.f32 0.0, %v4846
    %4848 = vmatmul.bf16.gmra.mxu0 %v4627
    %v4849 = vpop.f32.mrf.mxu0
    %v4850 = vadd.f32 0.0, %v4849
    %v4851 = vpop.f32.mrf.mxu0
    %v4852 = vadd.f32 0.0, %v4851
    %4853 = vmatmul.bf16.gmra.mxu0 %v4628
    %v4854 = vpop.f32.mrf.mxu0
    %v4855 = vadd.f32 0.0, %v4854
    %v4856 = vpop.f32.mrf.mxu0
    %v4857 = vadd.f32 0.0, %v4856
    %4858 = vmatmul.bf16.gmra.mxu0 %v4629
    %v4859 = vpop.f32.mrf.mxu0
    %v4860 = vadd.f32 0.0, %v4859
    %v4861 = vpop.f32.mrf.mxu0
    %v4862 = vadd.f32 0.0, %v4861
    %4863 = vdwg.mxu0
    %v4880 = vunpack.c.l.b16 %v4518
    %v4881 = vunpack.c.l.b16 %v4519
    %v4882 = vunpack.c.l.b16 %v4520
    %v4883 = vunpack.c.l.b16 %v4521
    %v4884 = vunpack.c.l.b16 %v4522
    %v4885 = vunpack.c.l.b16 %v4523
    %v4886 = vunpack.c.l.b16 %v4524
    %v4887 = vunpack.c.l.b16 %v4525
    %v4888 = vunpack.c.l.b16 %v4526
    %v4889 = vunpack.c.l.b16 %v4527
    %v4890 = vunpack.c.l.b16 %v4528
    %v4891 = vunpack.c.l.b16 %v4529
    %v4892 = vunpack.c.l.b16 %v4530
    %v4893 = vunpack.c.l.b16 %v4531
    %v4894 = vunpack.c.l.b16 %v4532
    %v4895 = vunpack.c.l.b16 %v4533
    %v4896 = vpack.c.b16 %v4881, %v4880
    %v4897 = vpack.c.b16 %v4883, %v4882
    %v4898 = vpack.c.b16 %v4885, %v4884
    %v4899 = vpack.c.b16 %v4887, %v4886
    %v4900 = vpack.c.b16 %v4889, %v4888
    %v4901 = vpack.c.b16 %v4891, %v4890
    %v4902 = vpack.c.b16 %v4893, %v4892
    %v4903 = vpack.c.b16 %v4895, %v4894
    %4912 = vmatpush.bf16.msra.mxu0 %v4903
    %4913 = vmatpush.bf16.msra.mxu0 %v4902
    %4914 = vmatpush.bf16.msra.mxu0 %v4901
    %4915 = vmatpush.bf16.msra.mxu0 %v4900
    %4916 = vmatpush.bf16.msra.mxu0 %v4899
    %4917 = vmatpush.bf16.msra.mxu0 %v4898
    %4918 = vmatpush.bf16.msra.mxu0 %v4897
    %4919 = vmatpush.bf16.msra.mxu0 %v4896
    %4920 = vmatmul.bf16.gmra.mxu0 %v4486
    %v4921 = vpop.f32.mrf.mxu0
    %v4922 = vadd.f32 %v4705, %v4921
    %v4923 = vpop.f32.mrf.mxu0
    %v4924 = vadd.f32 %v4707, %v4923
    %4925 = vmatmul.bf16.gmra.mxu0 %v4487
    %v4926 = vpop.f32.mrf.mxu0
    %v4927 = vadd.f32 %v4710, %v4926
    %v4928 = vpop.f32.mrf.mxu0
    %v4929 = vadd.f32 %v4712, %v4928
    %4930 = vmatmul.bf16.gmra.mxu0 %v4488
    %v4931 = vpop.f32.mrf.mxu0
    %v4932 = vadd.f32 %v4715, %v4931
    %v4933 = vpop.f32.mrf.mxu0
    %v4934 = vadd.f32 %v4717, %v4933
    %4935 = vmatmul.bf16.gmra.mxu0 %v4489
    %v4936 = vpop.f32.mrf.mxu0
    %v4937 = vadd.f32 %v4720, %v4936
    %v4938 = vpop.f32.mrf.mxu0
    %v4939 = vadd.f32 %v4722, %v4938
    %4940 = vmatmul.bf16.gmra.mxu0 %v4490
    %v4941 = vpop.f32.mrf.mxu0
    %v4942 = vadd.f32 %v4725, %v4941
    %v4943 = vpop.f32.mrf.mxu0
    %v4944 = vadd.f32 %v4727, %v4943
    %4945 = vmatmul.bf16.gmra.mxu0 %v4491
    %v4946 = vpop.f32.mrf.mxu0
    %v4947 = vadd.f32 %v4730, %v4946
    %v4948 = vpop.f32.mrf.mxu0
    %v4949 = vadd.f32 %v4732, %v4948
    %4950 = vmatmul.bf16.gmra.mxu0 %v4492
    %v4951 = vpop.f32.mrf.mxu0
    %v4952 = vadd.f32 %v4735, %v4951
    %v4953 = vpop.f32.mrf.mxu0
    %v4954 = vadd.f32 %v4737, %v4953
    %4955 = vmatmul.bf16.gmra.mxu0 %v4493
    %v4956 = vpop.f32.mrf.mxu0
    %v4957 = vadd.f32 %v4740, %v4956
    %v4958 = vpop.f32.mrf.mxu0
    %v4959 = vadd.f32 %v4742, %v4958
    %4960 = vmatmul.bf16.gmra.mxu0 %v4494
    %v4961 = vpop.f32.mrf.mxu0
    %v4962 = vadd.f32 %v4745, %v4961
    %v4963 = vpop.f32.mrf.mxu0
    %v4964 = vadd.f32 %v4747, %v4963
    %4965 = vmatmul.bf16.gmra.mxu0 %v4495
    %v4966 = vpop.f32.mrf.mxu0
    %v4967 = vadd.f32 %v4750, %v4966
    %v4968 = vpop.f32.mrf.mxu0
    %v4969 = vadd.f32 %v4752, %v4968
    %4970 = vmatmul.bf16.gmra.mxu0 %v4496
    %v4971 = vpop.f32.mrf.mxu0
    %v4972 = vadd.f32 %v4755, %v4971
    %v4973 = vpop.f32.mrf.mxu0
    %v4974 = vadd.f32 %v4757, %v4973
    %4975 = vmatmul.bf16.gmra.mxu0 %v4497
    %v4976 = vpop.f32.mrf.mxu0
    %v4977 = vadd.f32 %v4760, %v4976
    %v4978 = vpop.f32.mrf.mxu0
    %v4979 = vadd.f32 %v4762, %v4978
    %4980 = vmatmul.bf16.gmra.mxu0 %v4498
    %v4981 = vpop.f32.mrf.mxu0
    %v4982 = vadd.f32 %v4765, %v4981
    %v4983 = vpop.f32.mrf.mxu0
    %v4984 = vadd.f32 %v4767, %v4983
    %4985 = vmatmul.bf16.gmra.mxu0 %v4499
    %v4986 = vpop.f32.mrf.mxu0
    %v4987 = vadd.f32 %v4770, %v4986
    %v4988 = vpop.f32.mrf.mxu0
    %v4989 = vadd.f32 %v4772, %v4988
    %4990 = vmatmul.bf16.gmra.mxu0 %v4500
    %v4991 = vpop.f32.mrf.mxu0
    %v4992 = vadd.f32 %v4775, %v4991
    %v4993 = vpop.f32.mrf.mxu0
    %v4994 = vadd.f32 %v4777, %v4993
    %4995 = vmatmul.bf16.gmra.mxu0 %v4501
    %v4996 = vpop.f32.mrf.mxu0
    %v4997 = vadd.f32 %v4780, %v4996
    %v4998 = vpop.f32.mrf.mxu0
    %v4999 = vadd.f32 %v4782, %v4998
    %5000 = vmatmul.bf16.gmra.mxu0 %v4502
    %v5001 = vpop.f32.mrf.mxu0
    %v5002 = vadd.f32 %v4785, %v5001
    %v5003 = vpop.f32.mrf.mxu0
    %v5004 = vadd.f32 %v4787, %v5003
    %5005 = vmatmul.bf16.gmra.mxu0 %v4503
    %v5006 = vpop.f32.mrf.mxu0
    %v5007 = vadd.f32 %v4790, %v5006
    %v5008 = vpop.f32.mrf.mxu0
    %v5009 = vadd.f32 %v4792, %v5008
    %5010 = vmatmul.bf16.gmra.mxu0 %v4504
    %v5011 = vpop.f32.mrf.mxu0
    %v5012 = vadd.f32 %v4795, %v5011
    %v5013 = vpop.f32.mrf.mxu0
    %v5014 = vadd.f32 %v4797, %v5013
    %5015 = vmatmul.bf16.gmra.mxu0 %v4505
    %v5016 = vpop.f32.mrf.mxu0
    %v5017 = vadd.f32 %v4800, %v5016
    %v5018 = vpop.f32.mrf.mxu0
    %v5019 = vadd.f32 %v4802, %v5018
    %5020 = vmatmul.bf16.gmra.mxu0 %v4506
    %v5021 = vpop.f32.mrf.mxu0
    %v5022 = vadd.f32 %v4805, %v5021
    %v5023 = vpop.f32.mrf.mxu0
    %v5024 = vadd.f32 %v4807, %v5023
    %5025 = vmatmul.bf16.gmra.mxu0 %v4507
    %v5026 = vpop.f32.mrf.mxu0
    %v5027 = vadd.f32 %v4810, %v5026
    %v5028 = vpop.f32.mrf.mxu0
    %v5029 = vadd.f32 %v4812, %v5028
    %5030 = vmatmul.bf16.gmra.mxu0 %v4508
    %v5031 = vpop.f32.mrf.mxu0
    %v5032 = vadd.f32 %v4815, %v5031
    %v5033 = vpop.f32.mrf.mxu0
    %v5034 = vadd.f32 %v4817, %v5033
    %5035 = vmatmul.bf16.gmra.mxu0 %v4509
    %v5036 = vpop.f32.mrf.mxu0
    %v5037 = vadd.f32 %v4820, %v5036
    %v5038 = vpop.f32.mrf.mxu0
    %v5039 = vadd.f32 %v4822, %v5038
    %5040 = vmatmul.bf16.gmra.mxu0 %v4510
    %v5041 = vpop.f32.mrf.mxu0
    %v5042 = vadd.f32 %v4825, %v5041
    %v5043 = vpop.f32.mrf.mxu0
    %v5044 = vadd.f32 %v4827, %v5043
    %5045 = vmatmul.bf16.gmra.mxu0 %v4511
    %v5046 = vpop.f32.mrf.mxu0
    %v5047 = vadd.f32 %v4830, %v5046
    %v5048 = vpop.f32.mrf.mxu0
    %v5049 = vadd.f32 %v4832, %v5048
    %5050 = vmatmul.bf16.gmra.mxu0 %v4512
    %v5051 = vpop.f32.mrf.mxu0
    %v5052 = vadd.f32 %v4835, %v5051
    %v5053 = vpop.f32.mrf.mxu0
    %v5054 = vadd.f32 %v4837, %v5053
    %5055 = vmatmul.bf16.gmra.mxu0 %v4513
    %v5056 = vpop.f32.mrf.mxu0
    %v5057 = vadd.f32 %v4840, %v5056
    %v5058 = vpop.f32.mrf.mxu0
    %v5059 = vadd.f32 %v4842, %v5058
    %5060 = vmatmul.bf16.gmra.mxu0 %v4514
    %v5061 = vpop.f32.mrf.mxu0
    %v5062 = vadd.f32 %v4845, %v5061
    %v5063 = vpop.f32.mrf.mxu0
    %v5064 = vadd.f32 %v4847, %v5063
    %5065 = vmatmul.bf16.gmra.mxu0 %v4515
    %v5066 = vpop.f32.mrf.mxu0
    %v5067 = vadd.f32 %v4850, %v5066
    %v5068 = vpop.f32.mrf.mxu0
    %v5069 = vadd.f32 %v4852, %v5068
    %5070 = vmatmul.bf16.gmra.mxu0 %v4516
    %v5071 = vpop.f32.mrf.mxu0
    %v5072 = vadd.f32 %v4855, %v5071
    %v5073 = vpop.f32.mrf.mxu0
    %v5074 = vadd.f32 %v4857, %v5073
    %5075 = vmatmul.bf16.gmra.mxu0 %v4517
    %v5076 = vpop.f32.mrf.mxu0
    %v5077 = vadd.f32 %v4860, %v5076
    %v5078 = vpop.f32.mrf.mxu0
    %v5079 = vadd.f32 %v4862, %v5078
    %5080 = vdwg.mxu0
    %v5081 = vld [vmem:[#allocation2 + $0x2] sm:$0xff]
    %v5082 = vld [vmem:[#allocation2 + $0xa] sm:$0xff]
    %v5083 = vld [vmem:[#allocation2 + $0x1a] sm:$0xff]
    %v5084 = vld [vmem:[#allocation2 + $0x22] sm:$0xff]
    %v5085 = vld [vmem:[#allocation2 + $0x32] sm:$0xff]
    %v5086 = vld [vmem:[#allocation2 + $0x3a] sm:$0xff]
    %v5087 = vld [vmem:[#allocation2 + $0x4a] sm:$0xff]
    %v5088 = vld [vmem:[#allocation2 + $0x52] sm:$0xff]
    %v5089 = vld [vmem:[#allocation2 + $0x62] sm:$0xff]
    %v5090 = vld [vmem:[#allocation2 + $0x6a] sm:$0xff]
    %v5091 = vld [vmem:[#allocation2 + $0x7a] sm:$0xff]
    %v5092 = vld [vmem:[#allocation2 + $0x82] sm:$0xff]
    %v5093 = vld [vmem:[#allocation2 + $0x92] sm:$0xff]
    %v5094 = vld [vmem:[#allocation2 + $0x9a] sm:$0xff]
    %v5095 = vld [vmem:[#allocation2 + $0xaa] sm:$0xff]
    %v5096 = vld [vmem:[#allocation2 + $0xb2] sm:$0xff]
    %v5097 = vld [vmem:[#allocation2 + $0xc2] sm:$0xff]
    %v5098 = vld [vmem:[#allocation2 + $0xca] sm:$0xff]
    %v5099 = vld [vmem:[#allocation2 + $0xda] sm:$0xff]
    %v5100 = vld [vmem:[#allocation2 + $0xe2] sm:$0xff]
    %v5101 = vld [vmem:[#allocation2 + $0xf2] sm:$0xff]
    %v5102 = vld [vmem:[#allocation2 + $0xfa] sm:$0xff]
    %v5103 = vld [vmem:[#allocation2 + $0x10a] sm:$0xff]
    %v5104 = vld [vmem:[#allocation2 + $0x112] sm:$0xff]
    %v5105 = vld [vmem:[#allocation2 + $0x122] sm:$0xff]
    %v5106 = vld [vmem:[#allocation2 + $0x12a] sm:$0xff]
    %v5107 = vld [vmem:[#allocation2 + $0x13a] sm:$0xff]
    %v5108 = vld [vmem:[#allocation2 + $0x142] sm:$0xff]
    %v5109 = vld [vmem:[#allocation2 + $0x152] sm:$0xff]
    %v5110 = vld [vmem:[#allocation2 + $0x15a] sm:$0xff]
    %v5111 = vld [vmem:[#allocation2 + $0x16a] sm:$0xff]
    %v5112 = vld [vmem:[#allocation2 + $0x172] sm:$0xff]
    %v5113 = vld [vmem:[#allocation2 + $0x1b2] sm:$0xff]
    %v5114 = vld [vmem:[#allocation2 + $0x1ba] sm:$0xff]
    %v5115 = vld [vmem:[#allocation2 + $0x1ca] sm:$0xff]
    %v5116 = vld [vmem:[#allocation2 + $0x1d2] sm:$0xff]
    %v5117 = vld [vmem:[#allocation2 + $0x1e2] sm:$0xff]
    %v5118 = vld [vmem:[#allocation2 + $0x1ea] sm:$0xff]
    %v5119 = vld [vmem:[#allocation2 + $0x1fa] sm:$0xff]
    %v5120 = vld [vmem:[#allocation2 + $0x202] sm:$0xff]
    %v5121 = vld [vmem:[#allocation2 + $0x212] sm:$0xff]
    %v5122 = vld [vmem:[#allocation2 + $0x21a] sm:$0xff]
    %v5123 = vld [vmem:[#allocation2 + $0x22a] sm:$0xff]
    %v5124 = vld [vmem:[#allocation2 + $0x232] sm:$0xff]
    %v5125 = vld [vmem:[#allocation2 + $0x242] sm:$0xff]
    %v5126 = vld [vmem:[#allocation2 + $0x24a] sm:$0xff]
    %v5127 = vld [vmem:[#allocation2 + $0x25a] sm:$0xff]
    %v5128 = vld [vmem:[#allocation2 + $0x262] sm:$0xff]
    %v5129 = vld [vmem:[#allocation2 + $0x272] sm:$0xff]
    %v5130 = vld [vmem:[#allocation2 + $0x27a] sm:$0xff]
    %v5131 = vld [vmem:[#allocation2 + $0x28a] sm:$0xff]
    %v5132 = vld [vmem:[#allocation2 + $0x292] sm:$0xff]
    %v5133 = vld [vmem:[#allocation2 + $0x2a2] sm:$0xff]
    %v5134 = vld [vmem:[#allocation2 + $0x2aa] sm:$0xff]
    %v5135 = vld [vmem:[#allocation2 + $0x2ba] sm:$0xff]
    %v5136 = vld [vmem:[#allocation2 + $0x2c2] sm:$0xff]
    %v5137 = vld [vmem:[#allocation2 + $0x2d2] sm:$0xff]
    %v5138 = vld [vmem:[#allocation2 + $0x2da] sm:$0xff]
    %v5139 = vld [vmem:[#allocation2 + $0x2ea] sm:$0xff]
    %v5140 = vld [vmem:[#allocation2 + $0x2f2] sm:$0xff]
    %v5141 = vld [vmem:[#allocation2 + $0x302] sm:$0xff]
    %v5142 = vld [vmem:[#allocation2 + $0x30a] sm:$0xff]
    %v5143 = vld [vmem:[#allocation2 + $0x31a] sm:$0xff]
    %v5144 = vld [vmem:[#allocation2 + $0x322] sm:$0xff]
    %v5145 = vpack.c.bf16 %v5082, %v5081
    %v5146 = vpack.c.bf16 %v5084, %v5083
    %v5147 = vpack.c.bf16 %v5086, %v5085
    %v5148 = vpack.c.bf16 %v5088, %v5087
    %v5149 = vpack.c.bf16 %v5090, %v5089
    %v5150 = vpack.c.bf16 %v5092, %v5091
    %v5151 = vpack.c.bf16 %v5094, %v5093
    %v5152 = vpack.c.bf16 %v5096, %v5095
    %v5153 = vpack.c.bf16 %v5098, %v5097
    %v5154 = vpack.c.bf16 %v5100, %v5099
    %v5155 = vpack.c.bf16 %v5102, %v5101
    %v5156 = vpack.c.bf16 %v5104, %v5103
    %v5157 = vpack.c.bf16 %v5106, %v5105
    %v5158 = vpack.c.bf16 %v5108, %v5107
    %v5159 = vpack.c.bf16 %v5110, %v5109
    %v5160 = vpack.c.bf16 %v5112, %v5111
    %v5161 = vpack.c.bf16 %v5114, %v5113
    %v5162 = vpack.c.bf16 %v5116, %v5115
    %v5163 = vpack.c.bf16 %v5118, %v5117
    %v5164 = vpack.c.bf16 %v5120, %v5119
    %v5165 = vpack.c.bf16 %v5122, %v5121
    %v5166 = vpack.c.bf16 %v5124, %v5123
    %v5167 = vpack.c.bf16 %v5126, %v5125
    %v5168 = vpack.c.bf16 %v5128, %v5127
    %v5169 = vpack.c.bf16 %v5130, %v5129
    %v5170 = vpack.c.bf16 %v5132, %v5131
    %v5171 = vpack.c.bf16 %v5134, %v5133
    %v5172 = vpack.c.bf16 %v5136, %v5135
    %v5173 = vpack.c.bf16 %v5138, %v5137
    %v5174 = vpack.c.bf16 %v5140, %v5139
    %v5175 = vpack.c.bf16 %v5142, %v5141
    %v5176 = vpack.c.bf16 %v5144, %v5143
    %s5177 = scalar_lea.vmem %s2, 128
    %v5178 = vld [vmem:[%s5177] sm:$0xf]
    %v5179 = vld [vmem:[%s5177 + $0x4] sm:$0xf]
    %v5180 = vld [vmem:[%s5177 + $0x8] sm:$0xf]
    %v5181 = vld [vmem:[%s5177 + $0xc] sm:$0xf]
    %v5182 = vld [vmem:[%s5177 + $0x10] sm:$0xf]
    %v5183 = vld [vmem:[%s5177 + $0x14] sm:$0xf]
    %v5184 = vld [vmem:[%s5177 + $0x18] sm:$0xf]
    %v5185 = vld [vmem:[%s5177 + $0x1c] sm:$0xf]
    %v5186 = vld [vmem:[%s5177 + $0x20] sm:$0xf]
    %v5187 = vld [vmem:[%s5177 + $0x24] sm:$0xf]
    %v5188 = vld [vmem:[%s5177 + $0x28] sm:$0xf]
    %v5189 = vld [vmem:[%s5177 + $0x2c] sm:$0xf]
    %v5190 = vld [vmem:[%s5177 + $0x30] sm:$0xf]
    %v5191 = vld [vmem:[%s5177 + $0x34] sm:$0xf]
    %v5192 = vld [vmem:[%s5177 + $0x38] sm:$0xf]
    %v5193 = vld [vmem:[%s5177 + $0x3c] sm:$0xf]
    %v5210 = vunpack.c.l.b16 %v5178
    %v5211 = vunpack.c.l.b16 %v5179
    %v5212 = vunpack.c.l.b16 %v5180
    %v5213 = vunpack.c.l.b16 %v5181
    %v5214 = vunpack.c.l.b16 %v5182
    %v5215 = vunpack.c.l.b16 %v5183
    %v5216 = vunpack.c.l.b16 %v5184
    %v5217 = vunpack.c.l.b16 %v5185
    %v5218 = vunpack.c.l.b16 %v5186
    %v5219 = vunpack.c.l.b16 %v5187
    %v5220 = vunpack.c.l.b16 %v5188
    %v5221 = vunpack.c.l.b16 %v5189
    %v5222 = vunpack.c.l.b16 %v5190
    %v5223 = vunpack.c.l.b16 %v5191
    %v5224 = vunpack.c.l.b16 %v5192
    %v5225 = vunpack.c.l.b16 %v5193
    %v5226 = vpack.c.b16 %v5211, %v5210
    %v5227 = vpack.c.b16 %v5213, %v5212
    %v5228 = vpack.c.b16 %v5215, %v5214
    %v5229 = vpack.c.b16 %v5217, %v5216
    %v5230 = vpack.c.b16 %v5219, %v5218
    %v5231 = vpack.c.b16 %v5221, %v5220
    %v5232 = vpack.c.b16 %v5223, %v5222
    %v5233 = vpack.c.b16 %v5225, %v5224
    %5242 = vmatpush.bf16.msra.mxu0 %v5233
    %5243 = vmatpush.bf16.msra.mxu0 %v5232
    %5244 = vmatpush.bf16.msra.mxu0 %v5231
    %5245 = vmatpush.bf16.msra.mxu0 %v5230
    %5246 = vmatpush.bf16.msra.mxu0 %v5229
    %5247 = vmatpush.bf16.msra.mxu0 %v5228
    %5248 = vmatpush.bf16.msra.mxu0 %v5227
    %5249 = vmatpush.bf16.msra.mxu0 %v5226
    %5250 = vmatmul.bf16.gmra.mxu0 %v5145
    %v5251 = vpop.f32.mrf.mxu0
    %v5252 = vadd.f32 0.0, %v5251
    %v5253 = vpop.f32.mrf.mxu0
    %v5254 = vadd.f32 0.0, %v5253
    %5255 = vmatmul.bf16.gmra.mxu0 %v5146
    %v5256 = vpop.f32.mrf.mxu0
    %v5257 = vadd.f32 0.0, %v5256
    %v5258 = vpop.f32.mrf.mxu0
    %v5259 = vadd.f32 0.0, %v5258
    %5260 = vmatmul.bf16.gmra.mxu0 %v5147
    %v5261 = vpop.f32.mrf.mxu0
    %v5262 = vadd.f32 0.0, %v5261
    %v5263 = vpop.f32.mrf.mxu0
    %v5264 = vadd.f32 0.0, %v5263
    %5265 = vmatmul.bf16.gmra.mxu0 %v5148
    %v5266 = vpop.f32.mrf.mxu0
    %v5267 = vadd.f32 0.0, %v5266
    %v5268 = vpop.f32.mrf.mxu0
    %v5269 = vadd.f32 0.0, %v5268
    %5270 = vmatmul.bf16.gmra.mxu0 %v5149
    %v5271 = vpop.f32.mrf.mxu0
    %v5272 = vadd.f32 0.0, %v5271
    %v5273 = vpop.f32.mrf.mxu0
    %v5274 = vadd.f32 0.0, %v5273
    %5275 = vmatmul.bf16.gmra.mxu0 %v5150
    %v5276 = vpop.f32.mrf.mxu0
    %v5277 = vadd.f32 0.0, %v5276
    %v5278 = vpop.f32.mrf.mxu0
    %v5279 = vadd.f32 0.0, %v5278
    %5280 = vmatmul.bf16.gmra.mxu0 %v5151
    %v5281 = vpop.f32.mrf.mxu0
    %v5282 = vadd.f32 0.0, %v5281
    %v5283 = vpop.f32.mrf.mxu0
    %v5284 = vadd.f32 0.0, %v5283
    %5285 = vmatmul.bf16.gmra.mxu0 %v5152
    %v5286 = vpop.f32.mrf.mxu0
    %v5287 = vadd.f32 0.0, %v5286
    %v5288 = vpop.f32.mrf.mxu0
    %v5289 = vadd.f32 0.0, %v5288
    %5290 = vmatmul.bf16.gmra.mxu0 %v5153
    %v5291 = vpop.f32.mrf.mxu0
    %v5292 = vadd.f32 0.0, %v5291
    %v5293 = vpop.f32.mrf.mxu0
    %v5294 = vadd.f32 0.0, %v5293
    %5295 = vmatmul.bf16.gmra.mxu0 %v5154
    %v5296 = vpop.f32.mrf.mxu0
    %v5297 = vadd.f32 0.0, %v5296
    %v5298 = vpop.f32.mrf.mxu0
    %v5299 = vadd.f32 0.0, %v5298
    %5300 = vmatmul.bf16.gmra.mxu0 %v5155
    %v5301 = vpop.f32.mrf.mxu0
    %v5302 = vadd.f32 0.0, %v5301
    %v5303 = vpop.f32.mrf.mxu0
    %v5304 = vadd.f32 0.0, %v5303
    %5305 = vmatmul.bf16.gmra.mxu0 %v5156
    %v5306 = vpop.f32.mrf.mxu0
    %v5307 = vadd.f32 0.0, %v5306
    %v5308 = vpop.f32.mrf.mxu0
    %v5309 = vadd.f32 0.0, %v5308
    %5310 = vmatmul.bf16.gmra.mxu0 %v5157
    %v5311 = vpop.f32.mrf.mxu0
    %v5312 = vadd.f32 0.0, %v5311
    %v5313 = vpop.f32.mrf.mxu0
    %v5314 = vadd.f32 0.0, %v5313
    %5315 = vmatmul.bf16.gmra.mxu0 %v5158
    %v5316 = vpop.f32.mrf.mxu0
    %v5317 = vadd.f32 0.0, %v5316
    %v5318 = vpop.f32.mrf.mxu0
    %v5319 = vadd.f32 0.0, %v5318
    %5320 = vmatmul.bf16.gmra.mxu0 %v5159
    %v5321 = vpop.f32.mrf.mxu0
    %v5322 = vadd.f32 0.0, %v5321
    %v5323 = vpop.f32.mrf.mxu0
    %v5324 = vadd.f32 0.0, %v5323
    %5325 = vmatmul.bf16.gmra.mxu0 %v5160
    %v5326 = vpop.f32.mrf.mxu0
    %v5327 = vadd.f32 0.0, %v5326
    %v5328 = vpop.f32.mrf.mxu0
    %v5329 = vadd.f32 0.0, %v5328
    %5330 = vmatmul.bf16.gmra.mxu0 %v5161
    %v5331 = vpop.f32.mrf.mxu0
    %v5332 = vadd.f32 0.0, %v5331
    %v5333 = vpop.f32.mrf.mxu0
    %v5334 = vadd.f32 0.0, %v5333
    %5335 = vmatmul.bf16.gmra.mxu0 %v5162
    %v5336 = vpop.f32.mrf.mxu0
    %v5337 = vadd.f32 0.0, %v5336
    %v5338 = vpop.f32.mrf.mxu0
    %v5339 = vadd.f32 0.0, %v5338
    %5340 = vmatmul.bf16.gmra.mxu0 %v5163
    %v5341 = vpop.f32.mrf.mxu0
    %v5342 = vadd.f32 0.0, %v5341
    %v5343 = vpop.f32.mrf.mxu0
    %v5344 = vadd.f32 0.0, %v5343
    %5345 = vmatmul.bf16.gmra.mxu0 %v5164
    %v5346 = vpop.f32.mrf.mxu0
    %v5347 = vadd.f32 0.0, %v5346
    %v5348 = vpop.f32.mrf.mxu0
    %v5349 = vadd.f32 0.0, %v5348
    %5350 = vmatmul.bf16.gmra.mxu0 %v5165
    %v5351 = vpop.f32.mrf.mxu0
    %v5352 = vadd.f32 0.0, %v5351
    %v5353 = vpop.f32.mrf.mxu0
    %v5354 = vadd.f32 0.0, %v5353
    %5355 = vmatmul.bf16.gmra.mxu0 %v5166
    %v5356 = vpop.f32.mrf.mxu0
    %v5357 = vadd.f32 0.0, %v5356
    %v5358 = vpop.f32.mrf.mxu0
    %v5359 = vadd.f32 0.0, %v5358
    %5360 = vmatmul.bf16.gmra.mxu0 %v5167
    %v5361 = vpop.f32.mrf.mxu0
    %v5362 = vadd.f32 0.0, %v5361
    %v5363 = vpop.f32.mrf.mxu0
    %v5364 = vadd.f32 0.0, %v5363
    %5365 = vmatmul.bf16.gmra.mxu0 %v5168
    %v5366 = vpop.f32.mrf.mxu0
    %v5367 = vadd.f32 0.0, %v5366
    %v5368 = vpop.f32.mrf.mxu0
    %v5369 = vadd.f32 0.0, %v5368
    %5370 = vmatmul.bf16.gmra.mxu0 %v5169
    %v5371 = vpop.f32.mrf.mxu0
    %v5372 = vadd.f32 0.0, %v5371
    %v5373 = vpop.f32.mrf.mxu0
    %v5374 = vadd.f32 0.0, %v5373
    %5375 = vmatmul.bf16.gmra.mxu0 %v5170
    %v5376 = vpop.f32.mrf.mxu0
    %v5377 = vadd.f32 0.0, %v5376
    %v5378 = vpop.f32.mrf.mxu0
    %v5379 = vadd.f32 0.0, %v5378
    %5380 = vmatmul.bf16.gmra.mxu0 %v5171
    %v5381 = vpop.f32.mrf.mxu0
    %v5382 = vadd.f32 0.0, %v5381
    %v5383 = vpop.f32.mrf.mxu0
    %v5384 = vadd.f32 0.0, %v5383
    %5385 = vmatmul.bf16.gmra.mxu0 %v5172
    %v5386 = vpop.f32.mrf.mxu0
    %v5387 = vadd.f32 0.0, %v5386
    %v5388 = vpop.f32.mrf.mxu0
    %v5389 = vadd.f32 0.0, %v5388
    %5390 = vmatmul.bf16.gmra.mxu0 %v5173
    %v5391 = vpop.f32.mrf.mxu0
    %v5392 = vadd.f32 0.0, %v5391
    %v5393 = vpop.f32.mrf.mxu0
    %v5394 = vadd.f32 0.0, %v5393
    %5395 = vmatmul.bf16.gmra.mxu0 %v5174
    %v5396 = vpop.f32.mrf.mxu0
    %v5397 = vadd.f32 0.0, %v5396
    %v5398 = vpop.f32.mrf.mxu0
    %v5399 = vadd.f32 0.0, %v5398
    %5400 = vmatmul.bf16.gmra.mxu0 %v5175
    %v5401 = vpop.f32.mrf.mxu0
    %v5402 = vadd.f32 0.0, %v5401
    %v5403 = vpop.f32.mrf.mxu0
    %v5404 = vadd.f32 0.0, %v5403
    %5405 = vmatmul.bf16.gmra.mxu0 %v5176
    %v5406 = vpop.f32.mrf.mxu0
    %v5407 = vadd.f32 0.0, %v5406
    %v5408 = vpop.f32.mrf.mxu0
    %v5409 = vadd.f32 0.0, %v5408
    %5410 = vdwg.mxu0
    %v5411 = vadd.f32 %v4922, %v5252
    %v5412 = vadd.f32 %v4924, %v5254
    %v5413 = vadd.f32 %v4927, %v5257
    %v5414 = vadd.f32 %v4929, %v5259
    %v5415 = vadd.f32 %v4932, %v5262
    %v5416 = vadd.f32 %v4934, %v5264
    %v5417 = vadd.f32 %v4937, %v5267
    %v5418 = vadd.f32 %v4939, %v5269
    %v5419 = vadd.f32 %v4942, %v5272
    %v5420 = vadd.f32 %v4944, %v5274
    %v5421 = vadd.f32 %v4947, %v5277
    %v5422 = vadd.f32 %v4949, %v5279
    %v5423 = vadd.f32 %v4952, %v5282
    %v5424 = vadd.f32 %v4954, %v5284
    %v5425 = vadd.f32 %v4957, %v5287
    %v5426 = vadd.f32 %v4959, %v5289
    %v5427 = vadd.f32 %v4962, %v5292
    %v5428 = vadd.f32 %v4964, %v5294
    %v5429 = vadd.f32 %v4967, %v5297
    %v5430 = vadd.f32 %v4969, %v5299
    %v5431 = vadd.f32 %v4972, %v5302
    %v5432 = vadd.f32 %v4974, %v5304
    %v5433 = vadd.f32 %v4977, %v5307
    %v5434 = vadd.f32 %v4979, %v5309
    %v5435 = vadd.f32 %v4982, %v5312
    %v5436 = vadd.f32 %v4984, %v5314
    %v5437 = vadd.f32 %v4987, %v5317
    %v5438 = vadd.f32 %v4989, %v5319
    %v5439 = vadd.f32 %v4992, %v5322
    %v5440 = vadd.f32 %v4994, %v5324
    %v5441 = vadd.f32 %v4997, %v5327
    %v5442 = vadd.f32 %v4999, %v5329
    %v5443 = vadd.f32 %v5002, %v5332
    %v5444 = vadd.f32 %v5004, %v5334
    %v5445 = vadd.f32 %v5007, %v5337
    %v5446 = vadd.f32 %v5009, %v5339
    %v5447 = vadd.f32 %v5012, %v5342
    %v5448 = vadd.f32 %v5014, %v5344
    %v5449 = vadd.f32 %v5017, %v5347
    %v5450 = vadd.f32 %v5019, %v5349
    %v5451 = vadd.f32 %v5022, %v5352
    %v5452 = vadd.f32 %v5024, %v5354
    %v5453 = vadd.f32 %v5027, %v5357
    %v5454 = vadd.f32 %v5029, %v5359
    %v5455 = vadd.f32 %v5032, %v5362
    %v5456 = vadd.f32 %v5034, %v5364
    %v5457 = vadd.f32 %v5037, %v5367
    %v5458 = vadd.f32 %v5039, %v5369
    %v5459 = vadd.f32 %v5042, %v5372
    %v5460 = vadd.f32 %v5044, %v5374
    %v5461 = vadd.f32 %v5047, %v5377
    %v5462 = vadd.f32 %v5049, %v5379
    %v5463 = vadd.f32 %v5052, %v5382
    %v5464 = vadd.f32 %v5054, %v5384
    %v5465 = vadd.f32 %v5057, %v5387
    %v5466 = vadd.f32 %v5059, %v5389
    %v5467 = vadd.f32 %v5062, %v5392
    %v5468 = vadd.f32 %v5064, %v5394
    %v5469 = vadd.f32 %v5067, %v5397
    %v5470 = vadd.f32 %v5069, %v5399
    %v5471 = vadd.f32 %v5072, %v5402
    %v5472 = vadd.f32 %v5074, %v5404
    %v5473 = vadd.f32 %v5077, %v5407
    %v5474 = vadd.f32 %v5079, %v5409
    %5475 = vst [vmem:[#allocation3] sm:$0xff] %v5411
    %5476 = vst [vmem:[#allocation3 + $0x8] sm:$0xff] %v5412
    %5477 = vst [vmem:[#allocation3 + $0x10] sm:$0xff] %v5413
    %5478 = vst [vmem:[#allocation3 + $0x18] sm:$0xff] %v5414
    %5479 = vst [vmem:[#allocation3 + $0x20] sm:$0xff] %v5415
    %5480 = vst [vmem:[#allocation3 + $0x28] sm:$0xff] %v5416
    %5481 = vst [vmem:[#allocation3 + $0x30] sm:$0xff] %v5417
    %5482 = vst [vmem:[#allocation3 + $0x38] sm:$0xff] %v5418
    %5483 = vst [vmem:[#allocation3 + $0x40] sm:$0xff] %v5419
    %5484 = vst [vmem:[#allocation3 + $0x48] sm:$0xff] %v5420
    %5485 = vst [vmem:[#allocation3 + $0x50] sm:$0xff] %v5421
    %5486 = vst [vmem:[#allocation3 + $0x58] sm:$0xff] %v5422
    %5487 = vst [vmem:[#allocation3 + $0x60] sm:$0xff] %v5423
    %5488 = vst [vmem:[#allocation3 + $0x68] sm:$0xff] %v5424
    %5489 = vst [vmem:[#allocation3 + $0x70] sm:$0xff] %v5425
    %5490 = vst [vmem:[#allocation3 + $0x78] sm:$0xff] %v5426
    %5491 = vst [vmem:[#allocation3 + $0x80] sm:$0xff] %v5427
    %5492 = vst [vmem:[#allocation3 + $0x88] sm:$0xff] %v5428
    %5493 = vst [vmem:[#allocation3 + $0x90] sm:$0xff] %v5429
    %5494 = vst [vmem:[#allocation3 + $0x98] sm:$0xff] %v5430
    %5495 = vst [vmem:[#allocation3 + $0xa0] sm:$0xff] %v5431
    %5496 = vst [vmem:[#allocation3 + $0xa8] sm:$0xff] %v5432
    %5497 = vst [vmem:[#allocation3 + $0xb0] sm:$0xff] %v5433
    %5498 = vst [vmem:[#allocation3 + $0xb8] sm:$0xff] %v5434
    %5499 = vst [vmem:[#allocation3 + $0xc0] sm:$0xff] %v5435
    %5500 = vst [vmem:[#allocation3 + $0xc8] sm:$0xff] %v5436
    %5501 = vst [vmem:[#allocation3 + $0xd0] sm:$0xff] %v5437
    %5502 = vst [vmem:[#allocation3 + $0xd8] sm:$0xff] %v5438
    %5503 = vst [vmem:[#allocation3 + $0xe0] sm:$0xff] %v5439
    %5504 = vst [vmem:[#allocation3 + $0xe8] sm:$0xff] %v5440
    %5505 = vst [vmem:[#allocation3 + $0xf0] sm:$0xff] %v5441
    %5506 = vst [vmem:[#allocation3 + $0xf8] sm:$0xff] %v5442
    %5507 = vst [vmem:[#allocation3 + $0x100] sm:$0xff] %v5443
    %5508 = vst [vmem:[#allocation3 + $0x108] sm:$0xff] %v5444
    %5509 = vst [vmem:[#allocation3 + $0x110] sm:$0xff] %v5445
    %5510 = vst [vmem:[#allocation3 + $0x118] sm:$0xff] %v5446
    %5511 = vst [vmem:[#allocation3 + $0x120] sm:$0xff] %v5447
    %5512 = vst [vmem:[#allocation3 + $0x128] sm:$0xff] %v5448
    %5513 = vst [vmem:[#allocation3 + $0x130] sm:$0xff] %v5449
    %5514 = vst [vmem:[#allocation3 + $0x138] sm:$0xff] %v5450
    %5515 = vst [vmem:[#allocation3 + $0x140] sm:$0xff] %v5451
    %5516 = vst [vmem:[#allocation3 + $0x148] sm:$0xff] %v5452
    %5517 = vst [vmem:[#allocation3 + $0x150] sm:$0xff] %v5453
    %5518 = vst [vmem:[#allocation3 + $0x158] sm:$0xff] %v5454
    %5519 = vst [vmem:[#allocation3 + $0x160] sm:$0xff] %v5455
    %5520 = vst [vmem:[#allocation3 + $0x168] sm:$0xff] %v5456
    %5521 = vst [vmem:[#allocation3 + $0x170] sm:$0xff] %v5457
    %5522 = vst [vmem:[#allocation3 + $0x178] sm:$0xff] %v5458
    %5523 = vst [vmem:[#allocation3 + $0x180] sm:$0xff] %v5459
    %5524 = vst [vmem:[#allocation3 + $0x188] sm:$0xff] %v5460
    %5525 = vst [vmem:[#allocation3 + $0x190] sm:$0xff] %v5461
    %5526 = vst [vmem:[#allocation3 + $0x198] sm:$0xff] %v5462
    %5527 = vst [vmem:[#allocation3 + $0x1a0] sm:$0xff] %v5463
    %5528 = vst [vmem:[#allocation3 + $0x1a8] sm:$0xff] %v5464
    %5529 = vst [vmem:[#allocation3 + $0x1b0] sm:$0xff] %v5465
    %5530 = vst [vmem:[#allocation3 + $0x1b8] sm:$0xff] %v5466
    %5531 = vst [vmem:[#allocation3 + $0x1c0] sm:$0xff] %v5467
    %5532 = vst [vmem:[#allocation3 + $0x1c8] sm:$0xff] %v5468
    %5533 = vst [vmem:[#allocation3 + $0x1d0] sm:$0xff] %v5469
    %5534 = vst [vmem:[#allocation3 + $0x1d8] sm:$0xff] %v5470
    %5535 = vst [vmem:[#allocation3 + $0x1e0] sm:$0xff] %v5471
    %5536 = vst [vmem:[#allocation3 + $0x1e8] sm:$0xff] %v5472
    %5537 = vst [vmem:[#allocation3 + $0x1f0] sm:$0xff] %v5473
    %5538 = vst [vmem:[#allocation3 + $0x1f8] sm:$0xff] %v5474
    %v5539 = vld [vmem:[%s199] sm:$0xff]
    %v5540 = vld [vmem:[%s199 + $0x8] sm:$0xff]
    %v5541 = vld [vmem:[%s199 + $0x18] sm:$0xff]
    %v5542 = vld [vmem:[%s199 + $0x20] sm:$0xff]
    %v5543 = vld [vmem:[%s199 + $0x30] sm:$0xff]
    %v5544 = vld [vmem:[%s199 + $0x38] sm:$0xff]
    %v5545 = vld [vmem:[%s199 + $0x48] sm:$0xff]
    %v5546 = vld [vmem:[%s199 + $0x50] sm:$0xff]
    %v5547 = vld [vmem:[%s199 + $0x60] sm:$0xff]
    %v5548 = vld [vmem:[%s199 + $0x68] sm:$0xff]
    %v5549 = vld [vmem:[%s199 + $0x78] sm:$0xff]
    %v5550 = vld [vmem:[%s199 + $0x80] sm:$0xff]
    %v5551 = vld [vmem:[%s199 + $0x90] sm:$0xff]
    %v5552 = vld [vmem:[%s199 + $0x98] sm:$0xff]
    %v5553 = vld [vmem:[%s199 + $0xa8] sm:$0xff]
    %v5554 = vld [vmem:[%s199 + $0xb0] sm:$0xff]
    %v5555 = vld [vmem:[%s199 + $0xc0] sm:$0xff]
    %v5556 = vld [vmem:[%s199 + $0xc8] sm:$0xff]
    %v5557 = vld [vmem:[%s199 + $0xd8] sm:$0xff]
    %v5558 = vld [vmem:[%s199 + $0xe0] sm:$0xff]
    %v5559 = vld [vmem:[%s199 + $0xf0] sm:$0xff]
    %v5560 = vld [vmem:[%s199 + $0xf8] sm:$0xff]
    %v5561 = vld [vmem:[%s199 + $0x108] sm:$0xff]
    %v5562 = vld [vmem:[%s199 + $0x110] sm:$0xff]
    %v5563 = vld [vmem:[%s199 + $0x120] sm:$0xff]
    %v5564 = vld [vmem:[%s199 + $0x128] sm:$0xff]
    %v5565 = vld [vmem:[%s199 + $0x138] sm:$0xff]
    %v5566 = vld [vmem:[%s199 + $0x140] sm:$0xff]
    %v5567 = vld [vmem:[%s199 + $0x150] sm:$0xff]
    %v5568 = vld [vmem:[%s199 + $0x158] sm:$0xff]
    %v5569 = vld [vmem:[%s199 + $0x168] sm:$0xff]
    %v5570 = vld [vmem:[%s199 + $0x170] sm:$0xff]
    %v5571 = vld [vmem:[%s199 + $0x1b0] sm:$0xff]
    %v5572 = vld [vmem:[%s199 + $0x1b8] sm:$0xff]
    %v5573 = vld [vmem:[%s199 + $0x1c8] sm:$0xff]
    %v5574 = vld [vmem:[%s199 + $0x1d0] sm:$0xff]
    %v5575 = vld [vmem:[%s199 + $0x1e0] sm:$0xff]
    %v5576 = vld [vmem:[%s199 + $0x1e8] sm:$0xff]
    %v5577 = vld [vmem:[%s199 + $0x1f8] sm:$0xff]
    %v5578 = vld [vmem:[%s199 + $0x200] sm:$0xff]
    %v5579 = vld [vmem:[%s199 + $0x210] sm:$0xff]
    %v5580 = vld [vmem:[%s199 + $0x218] sm:$0xff]
    %v5581 = vld [vmem:[%s199 + $0x228] sm:$0xff]
    %v5582 = vld [vmem:[%s199 + $0x230] sm:$0xff]
    %v5583 = vld [vmem:[%s199 + $0x240] sm:$0xff]
    %v5584 = vld [vmem:[%s199 + $0x248] sm:$0xff]
    %v5585 = vld [vmem:[%s199 + $0x258] sm:$0xff]
    %v5586 = vld [vmem:[%s199 + $0x260] sm:$0xff]
    %v5587 = vld [vmem:[%s199 + $0x270] sm:$0xff]
    %v5588 = vld [vmem:[%s199 + $0x278] sm:$0xff]
    %v5589 = vld [vmem:[%s199 + $0x288] sm:$0xff]
    %v5590 = vld [vmem:[%s199 + $0x290] sm:$0xff]
    %v5591 = vld [vmem:[%s199 + $0x2a0] sm:$0xff]
    %v5592 = vld [vmem:[%s199 + $0x2a8] sm:$0xff]
    %v5593 = vld [vmem:[%s199 + $0x2b8] sm:$0xff]
    %v5594 = vld [vmem:[%s199 + $0x2c0] sm:$0xff]
    %v5595 = vld [vmem:[%s199 + $0x2d0] sm:$0xff]
    %v5596 = vld [vmem:[%s199 + $0x2d8] sm:$0xff]
    %v5597 = vld [vmem:[%s199 + $0x2e8] sm:$0xff]
    %v5598 = vld [vmem:[%s199 + $0x2f0] sm:$0xff]
    %v5599 = vld [vmem:[%s199 + $0x300] sm:$0xff]
    %v5600 = vld [vmem:[%s199 + $0x308] sm:$0xff]
    %v5601 = vld [vmem:[%s199 + $0x318] sm:$0xff]
    %v5602 = vld [vmem:[%s199 + $0x320] sm:$0xff]
    %v5603 = vpack.c.bf16 %v5540, %v5539
    %v5604 = vpack.c.bf16 %v5542, %v5541
    %v5605 = vpack.c.bf16 %v5544, %v5543
    %v5606 = vpack.c.bf16 %v5546, %v5545
    %v5607 = vpack.c.bf16 %v5548, %v5547
    %v5608 = vpack.c.bf16 %v5550, %v5549
    %v5609 = vpack.c.bf16 %v5552, %v5551
    %v5610 = vpack.c.bf16 %v5554, %v5553
    %v5611 = vpack.c.bf16 %v5556, %v5555
    %v5612 = vpack.c.bf16 %v5558, %v5557
    %v5613 = vpack.c.bf16 %v5560, %v5559
    %v5614 = vpack.c.bf16 %v5562, %v5561
    %v5615 = vpack.c.bf16 %v5564, %v5563
    %v5616 = vpack.c.bf16 %v5566, %v5565
    %v5617 = vpack.c.bf16 %v5568, %v5567
    %v5618 = vpack.c.bf16 %v5570, %v5569
    %v5619 = vpack.c.bf16 %v5572, %v5571
    %v5620 = vpack.c.bf16 %v5574, %v5573
    %v5621 = vpack.c.bf16 %v5576, %v5575
    %v5622 = vpack.c.bf16 %v5578, %v5577
    %v5623 = vpack.c.bf16 %v5580, %v5579
    %v5624 = vpack.c.bf16 %v5582, %v5581
    %v5625 = vpack.c.bf16 %v5584, %v5583
    %v5626 = vpack.c.bf16 %v5586, %v5585
    %v5627 = vpack.c.bf16 %v5588, %v5587
    %v5628 = vpack.c.bf16 %v5590, %v5589
    %v5629 = vpack.c.bf16 %v5592, %v5591
    %v5630 = vpack.c.bf16 %v5594, %v5593
    %v5631 = vpack.c.bf16 %v5596, %v5595
    %v5632 = vpack.c.bf16 %v5598, %v5597
    %v5633 = vpack.c.bf16 %v5600, %v5599
    %v5634 = vpack.c.bf16 %v5602, %v5601
    %s5635 = scalar_lea.vmem %s2, 192
    %v5636 = vld [vmem:[%s5635] sm:$0xf]
    %v5637 = vld [vmem:[%s5635 + $0x4] sm:$0xf]
    %v5638 = vld [vmem:[%s5635 + $0x8] sm:$0xf]
    %v5639 = vld [vmem:[%s5635 + $0xc] sm:$0xf]
    %v5640 = vld [vmem:[%s5635 + $0x10] sm:$0xf]
    %v5641 = vld [vmem:[%s5635 + $0x14] sm:$0xf]
    %v5642 = vld [vmem:[%s5635 + $0x18] sm:$0xf]
    %v5643 = vld [vmem:[%s5635 + $0x1c] sm:$0xf]
    %v5644 = vld [vmem:[%s5635 + $0x20] sm:$0xf]
    %v5645 = vld [vmem:[%s5635 + $0x24] sm:$0xf]
    %v5646 = vld [vmem:[%s5635 + $0x28] sm:$0xf]
    %v5647 = vld [vmem:[%s5635 + $0x2c] sm:$0xf]
    %v5648 = vld [vmem:[%s5635 + $0x30] sm:$0xf]
    %v5649 = vld [vmem:[%s5635 + $0x34] sm:$0xf]
    %v5650 = vld [vmem:[%s5635 + $0x38] sm:$0xf]
    %v5651 = vld [vmem:[%s5635 + $0x3c] sm:$0xf]
    %v5652 = vld [vmem:[%s199 + $0x1] sm:$0xff]
    %v5653 = vld [vmem:[%s199 + $0x9] sm:$0xff]
    %v5654 = vld [vmem:[%s199 + $0x19] sm:$0xff]
    %v5655 = vld [vmem:[%s199 + $0x21] sm:$0xff]
    %v5656 = vld [vmem:[%s199 + $0x31] sm:$0xff]
    %v5657 = vld [vmem:[%s199 + $0x39] sm:$0xff]
    %v5658 = vld [vmem:[%s199 + $0x49] sm:$0xff]
    %v5659 = vld [vmem:[%s199 + $0x51] sm:$0xff]
    %v5660 = vld [vmem:[%s199 + $0x61] sm:$0xff]
    %v5661 = vld [vmem:[%s199 + $0x69] sm:$0xff]
    %v5662 = vld [vmem:[%s199 + $0x79] sm:$0xff]
    %v5663 = vld [vmem:[%s199 + $0x81] sm:$0xff]
    %v5664 = vld [vmem:[%s199 + $0x91] sm:$0xff]
    %v5665 = vld [vmem:[%s199 + $0x99] sm:$0xff]
    %v5666 = vld [vmem:[%s199 + $0xa9] sm:$0xff]
    %v5667 = vld [vmem:[%s199 + $0xb1] sm:$0xff]
    %v5668 = vld [vmem:[%s199 + $0xc1] sm:$0xff]
    %v5669 = vld [vmem:[%s199 + $0xc9] sm:$0xff]
    %v5670 = vld [vmem:[%s199 + $0xd9] sm:$0xff]
    %v5671 = vld [vmem:[%s199 + $0xe1] sm:$0xff]
    %v5672 = vld [vmem:[%s199 + $0xf1] sm:$0xff]
    %v5673 = vld [vmem:[%s199 + $0xf9] sm:$0xff]
    %v5674 = vld [vmem:[%s199 + $0x109] sm:$0xff]
    %v5675 = vld [vmem:[%s199 + $0x111] sm:$0xff]
    %v5676 = vld [vmem:[%s199 + $0x121] sm:$0xff]
    %v5677 = vld [vmem:[%s199 + $0x129] sm:$0xff]
    %v5678 = vld [vmem:[%s199 + $0x139] sm:$0xff]
    %v5679 = vld [vmem:[%s199 + $0x141] sm:$0xff]
    %v5680 = vld [vmem:[%s199 + $0x151] sm:$0xff]
    %v5681 = vld [vmem:[%s199 + $0x159] sm:$0xff]
    %v5682 = vld [vmem:[%s199 + $0x169] sm:$0xff]
    %v5683 = vld [vmem:[%s199 + $0x171] sm:$0xff]
    %v5684 = vld [vmem:[%s199 + $0x1b1] sm:$0xff]
    %v5685 = vld [vmem:[%s199 + $0x1b9] sm:$0xff]
    %v5686 = vld [vmem:[%s199 + $0x1c9] sm:$0xff]
    %v5687 = vld [vmem:[%s199 + $0x1d1] sm:$0xff]
    %v5688 = vld [vmem:[%s199 + $0x1e1] sm:$0xff]
    %v5689 = vld [vmem:[%s199 + $0x1e9] sm:$0xff]
    %v5690 = vld [vmem:[%s199 + $0x1f9] sm:$0xff]
    %v5691 = vld [vmem:[%s199 + $0x201] sm:$0xff]
    %v5692 = vld [vmem:[%s199 + $0x211] sm:$0xff]
    %v5693 = vld [vmem:[%s199 + $0x219] sm:$0xff]
    %v5694 = vld [vmem:[%s199 + $0x229] sm:$0xff]
    %v5695 = vld [vmem:[%s199 + $0x231] sm:$0xff]
    %v5696 = vld [vmem:[%s199 + $0x241] sm:$0xff]
    %v5697 = vld [vmem:[%s199 + $0x249] sm:$0xff]
    %v5698 = vld [vmem:[%s199 + $0x259] sm:$0xff]
    %v5699 = vld [vmem:[%s199 + $0x261] sm:$0xff]
    %v5700 = vld [vmem:[%s199 + $0x271] sm:$0xff]
    %v5701 = vld [vmem:[%s199 + $0x279] sm:$0xff]
    %v5702 = vld [vmem:[%s199 + $0x289] sm:$0xff]
    %v5703 = vld [vmem:[%s199 + $0x291] sm:$0xff]
    %v5704 = vld [vmem:[%s199 + $0x2a1] sm:$0xff]
    %v5705 = vld [vmem:[%s199 + $0x2a9] sm:$0xff]
    %v5706 = vld [vmem:[%s199 + $0x2b9] sm:$0xff]
    %v5707 = vld [vmem:[%s199 + $0x2c1] sm:$0xff]
    %v5708 = vld [vmem:[%s199 + $0x2d1] sm:$0xff]
    %v5709 = vld [vmem:[%s199 + $0x2d9] sm:$0xff]
    %v5710 = vld [vmem:[%s199 + $0x2e9] sm:$0xff]
    %v5711 = vld [vmem:[%s199 + $0x2f1] sm:$0xff]
    %v5712 = vld [vmem:[%s199 + $0x301] sm:$0xff]
    %v5713 = vld [vmem:[%s199 + $0x309] sm:$0xff]
    %v5714 = vld [vmem:[%s199 + $0x319] sm:$0xff]
    %v5715 = vld [vmem:[%s199 + $0x321] sm:$0xff]
    %v5716 = vpack.c.bf16 %v5653, %v5652
    %v5717 = vpack.c.bf16 %v5655, %v5654
    %v5718 = vpack.c.bf16 %v5657, %v5656
    %v5719 = vpack.c.bf16 %v5659, %v5658
    %v5720 = vpack.c.bf16 %v5661, %v5660
    %v5721 = vpack.c.bf16 %v5663, %v5662
    %v5722 = vpack.c.bf16 %v5665, %v5664
    %v5723 = vpack.c.bf16 %v5667, %v5666
    %v5724 = vpack.c.bf16 %v5669, %v5668
    %v5725 = vpack.c.bf16 %v5671, %v5670
    %v5726 = vpack.c.bf16 %v5673, %v5672
    %v5727 = vpack.c.bf16 %v5675, %v5674
    %v5728 = vpack.c.bf16 %v5677, %v5676
    %v5729 = vpack.c.bf16 %v5679, %v5678
    %v5730 = vpack.c.bf16 %v5681, %v5680
    %v5731 = vpack.c.bf16 %v5683, %v5682
    %v5732 = vpack.c.bf16 %v5685, %v5684
    %v5733 = vpack.c.bf16 %v5687, %v5686
    %v5734 = vpack.c.bf16 %v5689, %v5688
    %v5735 = vpack.c.bf16 %v5691, %v5690
    %v5736 = vpack.c.bf16 %v5693, %v5692
    %v5737 = vpack.c.bf16 %v5695, %v5694
    %v5738 = vpack.c.bf16 %v5697, %v5696
    %v5739 = vpack.c.bf16 %v5699, %v5698
    %v5740 = vpack.c.bf16 %v5701, %v5700
    %v5741 = vpack.c.bf16 %v5703, %v5702
    %v5742 = vpack.c.bf16 %v5705, %v5704
    %v5743 = vpack.c.bf16 %v5707, %v5706
    %v5744 = vpack.c.bf16 %v5709, %v5708
    %v5745 = vpack.c.bf16 %v5711, %v5710
    %v5746 = vpack.c.bf16 %v5713, %v5712
    %v5747 = vpack.c.bf16 %v5715, %v5714
    %s5748 = scalar_lea.vmem %s2, 256
    %v5749 = vld [vmem:[%s5748] sm:$0xf]
    %v5750 = vld [vmem:[%s5748 + $0x4] sm:$0xf]
    %v5751 = vld [vmem:[%s5748 + $0x8] sm:$0xf]
    %v5752 = vld [vmem:[%s5748 + $0xc] sm:$0xf]
    %v5753 = vld [vmem:[%s5748 + $0x10] sm:$0xf]
    %v5754 = vld [vmem:[%s5748 + $0x14] sm:$0xf]
    %v5755 = vld [vmem:[%s5748 + $0x18] sm:$0xf]
    %v5756 = vld [vmem:[%s5748 + $0x1c] sm:$0xf]
    %v5757 = vld [vmem:[%s5748 + $0x20] sm:$0xf]
    %v5758 = vld [vmem:[%s5748 + $0x24] sm:$0xf]
    %v5759 = vld [vmem:[%s5748 + $0x28] sm:$0xf]
    %v5760 = vld [vmem:[%s5748 + $0x2c] sm:$0xf]
    %v5761 = vld [vmem:[%s5748 + $0x30] sm:$0xf]
    %v5762 = vld [vmem:[%s5748 + $0x34] sm:$0xf]
    %v5763 = vld [vmem:[%s5748 + $0x38] sm:$0xf]
    %v5764 = vld [vmem:[%s5748 + $0x3c] sm:$0xf]
    %v5781 = vunpack.c.l.b16 %v5749
    %v5782 = vunpack.c.l.b16 %v5750
    %v5783 = vunpack.c.l.b16 %v5751
    %v5784 = vunpack.c.l.b16 %v5752
    %v5785 = vunpack.c.l.b16 %v5753
    %v5786 = vunpack.c.l.b16 %v5754
    %v5787 = vunpack.c.l.b16 %v5755
    %v5788 = vunpack.c.l.b16 %v5756
    %v5789 = vunpack.c.l.b16 %v5757
    %v5790 = vunpack.c.l.b16 %v5758
    %v5791 = vunpack.c.l.b16 %v5759
    %v5792 = vunpack.c.l.b16 %v5760
    %v5793 = vunpack.c.l.b16 %v5761
    %v5794 = vunpack.c.l.b16 %v5762
    %v5795 = vunpack.c.l.b16 %v5763
    %v5796 = vunpack.c.l.b16 %v5764
    %v5797 = vpack.c.b16 %v5782, %v5781
    %v5798 = vpack.c.b16 %v5784, %v5783
    %v5799 = vpack.c.b16 %v5786, %v5785
    %v5800 = vpack.c.b16 %v5788, %v5787
    %v5801 = vpack.c.b16 %v5790, %v5789
    %v5802 = vpack.c.b16 %v5792, %v5791
    %v5803 = vpack.c.b16 %v5794, %v5793
    %v5804 = vpack.c.b16 %v5796, %v5795
    %5813 = vmatpush.bf16.msra.mxu0 %v5804
    %5814 = vmatpush.bf16.msra.mxu0 %v5803
    %5815 = vmatpush.bf16.msra.mxu0 %v5802
    %5816 = vmatpush.bf16.msra.mxu0 %v5801
    %5817 = vmatpush.bf16.msra.mxu0 %v5800
    %5818 = vmatpush.bf16.msra.mxu0 %v5799
    %5819 = vmatpush.bf16.msra.mxu0 %v5798
    %5820 = vmatpush.bf16.msra.mxu0 %v5797
    %5821 = vmatmul.bf16.gmra.mxu0 %v5716
    %v5822 = vpop.f32.mrf.mxu0
    %v5823 = vadd.f32 0.0, %v5822
    %v5824 = vpop.f32.mrf.mxu0
    %v5825 = vadd.f32 0.0, %v5824
    %5826 = vmatmul.bf16.gmra.mxu0 %v5717
    %v5827 = vpop.f32.mrf.mxu0
    %v5828 = vadd.f32 0.0, %v5827
    %v5829 = vpop.f32.mrf.mxu0
    %v5830 = vadd.f32 0.0, %v5829
    %5831 = vmatmul.bf16.gmra.mxu0 %v5718
    %v5832 = vpop.f32.mrf.mxu0
    %v5833 = vadd.f32 0.0, %v5832
    %v5834 = vpop.f32.mrf.mxu0
    %v5835 = vadd.f32 0.0, %v5834
    %5836 = vmatmul.bf16.gmra.mxu0 %v5719
    %v5837 = vpop.f32.mrf.mxu0
    %v5838 = vadd.f32 0.0, %v5837
    %v5839 = vpop.f32.mrf.mxu0
    %v5840 = vadd.f32 0.0, %v5839
    %5841 = vmatmul.bf16.gmra.mxu0 %v5720
    %v5842 = vpop.f32.mrf.mxu0
    %v5843 = vadd.f32 0.0, %v5842
    %v5844 = vpop.f32.mrf.mxu0
    %v5845 = vadd.f32 0.0, %v5844
    %5846 = vmatmul.bf16.gmra.mxu0 %v5721
    %v5847 = vpop.f32.mrf.mxu0
    %v5848 = vadd.f32 0.0, %v5847
    %v5849 = vpop.f32.mrf.mxu0
    %v5850 = vadd.f32 0.0, %v5849
    %5851 = vmatmul.bf16.gmra.mxu0 %v5722
    %v5852 = vpop.f32.mrf.mxu0
    %v5853 = vadd.f32 0.0, %v5852
    %v5854 = vpop.f32.mrf.mxu0
    %v5855 = vadd.f32 0.0, %v5854
    %5856 = vmatmul.bf16.gmra.mxu0 %v5723
    %v5857 = vpop.f32.mrf.mxu0
    %v5858 = vadd.f32 0.0, %v5857
    %v5859 = vpop.f32.mrf.mxu0
    %v5860 = vadd.f32 0.0, %v5859
    %5861 = vmatmul.bf16.gmra.mxu0 %v5724
    %v5862 = vpop.f32.mrf.mxu0
    %v5863 = vadd.f32 0.0, %v5862
    %v5864 = vpop.f32.mrf.mxu0
    %v5865 = vadd.f32 0.0, %v5864
    %5866 = vmatmul.bf16.gmra.mxu0 %v5725
    %v5867 = vpop.f32.mrf.mxu0
    %v5868 = vadd.f32 0.0, %v5867
    %v5869 = vpop.f32.mrf.mxu0
    %v5870 = vadd.f32 0.0, %v5869
    %5871 = vmatmul.bf16.gmra.mxu0 %v5726
    %v5872 = vpop.f32.mrf.mxu0
    %v5873 = vadd.f32 0.0, %v5872
    %v5874 = vpop.f32.mrf.mxu0
    %v5875 = vadd.f32 0.0, %v5874
    %5876 = vmatmul.bf16.gmra.mxu0 %v5727
    %v5877 = vpop.f32.mrf.mxu0
    %v5878 = vadd.f32 0.0, %v5877
    %v5879 = vpop.f32.mrf.mxu0
    %v5880 = vadd.f32 0.0, %v5879
    %5881 = vmatmul.bf16.gmra.mxu0 %v5728
    %v5882 = vpop.f32.mrf.mxu0
    %v5883 = vadd.f32 0.0, %v5882
    %v5884 = vpop.f32.mrf.mxu0
    %v5885 = vadd.f32 0.0, %v5884
    %5886 = vmatmul.bf16.gmra.mxu0 %v5729
    %v5887 = vpop.f32.mrf.mxu0
    %v5888 = vadd.f32 0.0, %v5887
    %v5889 = vpop.f32.mrf.mxu0
    %v5890 = vadd.f32 0.0, %v5889
    %5891 = vmatmul.bf16.gmra.mxu0 %v5730
    %v5892 = vpop.f32.mrf.mxu0
    %v5893 = vadd.f32 0.0, %v5892
    %v5894 = vpop.f32.mrf.mxu0
    %v5895 = vadd.f32 0.0, %v5894
    %5896 = vmatmul.bf16.gmra.mxu0 %v5731
    %v5897 = vpop.f32.mrf.mxu0
    %v5898 = vadd.f32 0.0, %v5897
    %v5899 = vpop.f32.mrf.mxu0
    %v5900 = vadd.f32 0.0, %v5899
    %5901 = vmatmul.bf16.gmra.mxu0 %v5732
    %v5902 = vpop.f32.mrf.mxu0
    %v5903 = vadd.f32 0.0, %v5902
    %v5904 = vpop.f32.mrf.mxu0
    %v5905 = vadd.f32 0.0, %v5904
    %5906 = vmatmul.bf16.gmra.mxu0 %v5733
    %v5907 = vpop.f32.mrf.mxu0
    %v5908 = vadd.f32 0.0, %v5907
    %v5909 = vpop.f32.mrf.mxu0
    %v5910 = vadd.f32 0.0, %v5909
    %5911 = vmatmul.bf16.gmra.mxu0 %v5734
    %v5912 = vpop.f32.mrf.mxu0
    %v5913 = vadd.f32 0.0, %v5912
    %v5914 = vpop.f32.mrf.mxu0
    %v5915 = vadd.f32 0.0, %v5914
    %5916 = vmatmul.bf16.gmra.mxu0 %v5735
    %v5917 = vpop.f32.mrf.mxu0
    %v5918 = vadd.f32 0.0, %v5917
    %v5919 = vpop.f32.mrf.mxu0
    %v5920 = vadd.f32 0.0, %v5919
    %5921 = vmatmul.bf16.gmra.mxu0 %v5736
    %v5922 = vpop.f32.mrf.mxu0
    %v5923 = vadd.f32 0.0, %v5922
    %v5924 = vpop.f32.mrf.mxu0
    %v5925 = vadd.f32 0.0, %v5924
    %5926 = vmatmul.bf16.gmra.mxu0 %v5737
    %v5927 = vpop.f32.mrf.mxu0
    %v5928 = vadd.f32 0.0, %v5927
    %v5929 = vpop.f32.mrf.mxu0
    %v5930 = vadd.f32 0.0, %v5929
    %5931 = vmatmul.bf16.gmra.mxu0 %v5738
    %v5932 = vpop.f32.mrf.mxu0
    %v5933 = vadd.f32 0.0, %v5932
    %v5934 = vpop.f32.mrf.mxu0
    %v5935 = vadd.f32 0.0, %v5934
    %5936 = vmatmul.bf16.gmra.mxu0 %v5739
    %v5937 = vpop.f32.mrf.mxu0
    %v5938 = vadd.f32 0.0, %v5937
    %v5939 = vpop.f32.mrf.mxu0
    %v5940 = vadd.f32 0.0, %v5939
    %5941 = vmatmul.bf16.gmra.mxu0 %v5740
    %v5942 = vpop.f32.mrf.mxu0
    %v5943 = vadd.f32 0.0, %v5942
    %v5944 = vpop.f32.mrf.mxu0
    %v5945 = vadd.f32 0.0, %v5944
    %5946 = vmatmul.bf16.gmra.mxu0 %v5741
    %v5947 = vpop.f32.mrf.mxu0
    %v5948 = vadd.f32 0.0, %v5947
    %v5949 = vpop.f32.mrf.mxu0
    %v5950 = vadd.f32 0.0, %v5949
    %5951 = vmatmul.bf16.gmra.mxu0 %v5742
    %v5952 = vpop.f32.mrf.mxu0
    %v5953 = vadd.f32 0.0, %v5952
    %v5954 = vpop.f32.mrf.mxu0
    %v5955 = vadd.f32 0.0, %v5954
    %5956 = vmatmul.bf16.gmra.mxu0 %v5743
    %v5957 = vpop.f32.mrf.mxu0
    %v5958 = vadd.f32 0.0, %v5957
    %v5959 = vpop.f32.mrf.mxu0
    %v5960 = vadd.f32 0.0, %v5959
    %5961 = vmatmul.bf16.gmra.mxu0 %v5744
    %v5962 = vpop.f32.mrf.mxu0
    %v5963 = vadd.f32 0.0, %v5962
    %v5964 = vpop.f32.mrf.mxu0
    %v5965 = vadd.f32 0.0, %v5964
    %5966 = vmatmul.bf16.gmra.mxu0 %v5745
    %v5967 = vpop.f32.mrf.mxu0
    %v5968 = vadd.f32 0.0, %v5967
    %v5969 = vpop.f32.mrf.mxu0
    %v5970 = vadd.f32 0.0, %v5969
    %5971 = vmatmul.bf16.gmra.mxu0 %v5746
    %v5972 = vpop.f32.mrf.mxu0
    %v5973 = vadd.f32 0.0, %v5972
    %v5974 = vpop.f32.mrf.mxu0
    %v5975 = vadd.f32 0.0, %v5974
    %5976 = vmatmul.bf16.gmra.mxu0 %v5747
    %v5977 = vpop.f32.mrf.mxu0
    %v5978 = vadd.f32 0.0, %v5977
    %v5979 = vpop.f32.mrf.mxu0
    %v5980 = vadd.f32 0.0, %v5979
    %5981 = vdwg.mxu0
    %v5998 = vunpack.c.l.b16 %v5636
    %v5999 = vunpack.c.l.b16 %v5637
    %v6000 = vunpack.c.l.b16 %v5638
    %v6001 = vunpack.c.l.b16 %v5639
    %v6002 = vunpack.c.l.b16 %v5640
    %v6003 = vunpack.c.l.b16 %v5641
    %v6004 = vunpack.c.l.b16 %v5642
    %v6005 = vunpack.c.l.b16 %v5643
    %v6006 = vunpack.c.l.b16 %v5644
    %v6007 = vunpack.c.l.b16 %v5645
    %v6008 = vunpack.c.l.b16 %v5646
    %v6009 = vunpack.c.l.b16 %v5647
    %v6010 = vunpack.c.l.b16 %v5648
    %v6011 = vunpack.c.l.b16 %v5649
    %v6012 = vunpack.c.l.b16 %v5650
    %v6013 = vunpack.c.l.b16 %v5651
    %v6014 = vpack.c.b16 %v5999, %v5998
    %v6015 = vpack.c.b16 %v6001, %v6000
    %v6016 = vpack.c.b16 %v6003, %v6002
    %v6017 = vpack.c.b16 %v6005, %v6004
    %v6018 = vpack.c.b16 %v6007, %v6006
    %v6019 = vpack.c.b16 %v6009, %v6008
    %v6020 = vpack.c.b16 %v6011, %v6010
    %v6021 = vpack.c.b16 %v6013, %v6012
    %6030 = vmatpush.bf16.msra.mxu0 %v6021
    %6031 = vmatpush.bf16.msra.mxu0 %v6020
    %6032 = vmatpush.bf16.msra.mxu0 %v6019
    %6033 = vmatpush.bf16.msra.mxu0 %v6018
    %6034 = vmatpush.bf16.msra.mxu0 %v6017
    %6035 = vmatpush.bf16.msra.mxu0 %v6016
    %6036 = vmatpush.bf16.msra.mxu0 %v6015
    %6037 = vmatpush.bf16.msra.mxu0 %v6014
    %6038 = vmatmul.bf16.gmra.mxu0 %v5603
    %v6039 = vpop.f32.mrf.mxu0
    %v6040 = vadd.f32 %v5823, %v6039
    %v6041 = vpop.f32.mrf.mxu0
    %v6042 = vadd.f32 %v5825, %v6041
    %6043 = vmatmul.bf16.gmra.mxu0 %v5604
    %v6044 = vpop.f32.mrf.mxu0
    %v6045 = vadd.f32 %v5828, %v6044
    %v6046 = vpop.f32.mrf.mxu0
    %v6047 = vadd.f32 %v5830, %v6046
    %6048 = vmatmul.bf16.gmra.mxu0 %v5605
    %v6049 = vpop.f32.mrf.mxu0
    %v6050 = vadd.f32 %v5833, %v6049
    %v6051 = vpop.f32.mrf.mxu0
    %v6052 = vadd.f32 %v5835, %v6051
    %6053 = vmatmul.bf16.gmra.mxu0 %v5606
    %v6054 = vpop.f32.mrf.mxu0
    %v6055 = vadd.f32 %v5838, %v6054
    %v6056 = vpop.f32.mrf.mxu0
    %v6057 = vadd.f32 %v5840, %v6056
    %6058 = vmatmul.bf16.gmra.mxu0 %v5607
    %v6059 = vpop.f32.mrf.mxu0
    %v6060 = vadd.f32 %v5843, %v6059
    %v6061 = vpop.f32.mrf.mxu0
    %v6062 = vadd.f32 %v5845, %v6061
    %6063 = vmatmul.bf16.gmra.mxu0 %v5608
    %v6064 = vpop.f32.mrf.mxu0
    %v6065 = vadd.f32 %v5848, %v6064
    %v6066 = vpop.f32.mrf.mxu0
    %v6067 = vadd.f32 %v5850, %v6066
    %6068 = vmatmul.bf16.gmra.mxu0 %v5609
    %v6069 = vpop.f32.mrf.mxu0
    %v6070 = vadd.f32 %v5853, %v6069
    %v6071 = vpop.f32.mrf.mxu0
    %v6072 = vadd.f32 %v5855, %v6071
    %6073 = vmatmul.bf16.gmra.mxu0 %v5610
    %v6074 = vpop.f32.mrf.mxu0
    %v6075 = vadd.f32 %v5858, %v6074
    %v6076 = vpop.f32.mrf.mxu0
    %v6077 = vadd.f32 %v5860, %v6076
    %6078 = vmatmul.bf16.gmra.mxu0 %v5611
    %v6079 = vpop.f32.mrf.mxu0
    %v6080 = vadd.f32 %v5863, %v6079
    %v6081 = vpop.f32.mrf.mxu0
    %v6082 = vadd.f32 %v5865, %v6081
    %6083 = vmatmul.bf16.gmra.mxu0 %v5612
    %v6084 = vpop.f32.mrf.mxu0
    %v6085 = vadd.f32 %v5868, %v6084
    %v6086 = vpop.f32.mrf.mxu0
    %v6087 = vadd.f32 %v5870, %v6086
    %6088 = vmatmul.bf16.gmra.mxu0 %v5613
    %v6089 = vpop.f32.mrf.mxu0
    %v6090 = vadd.f32 %v5873, %v6089
    %v6091 = vpop.f32.mrf.mxu0
    %v6092 = vadd.f32 %v5875, %v6091
    %6093 = vmatmul.bf16.gmra.mxu0 %v5614
    %v6094 = vpop.f32.mrf.mxu0
    %v6095 = vadd.f32 %v5878, %v6094
    %v6096 = vpop.f32.mrf.mxu0
    %v6097 = vadd.f32 %v5880, %v6096
    %6098 = vmatmul.bf16.gmra.mxu0 %v5615
    %v6099 = vpop.f32.mrf.mxu0
    %v6100 = vadd.f32 %v5883, %v6099
    %v6101 = vpop.f32.mrf.mxu0
    %v6102 = vadd.f32 %v5885, %v6101
    %6103 = vmatmul.bf16.gmra.mxu0 %v5616
    %v6104 = vpop.f32.mrf.mxu0
    %v6105 = vadd.f32 %v5888, %v6104
    %v6106 = vpop.f32.mrf.mxu0
    %v6107 = vadd.f32 %v5890, %v6106
    %6108 = vmatmul.bf16.gmra.mxu0 %v5617
    %v6109 = vpop.f32.mrf.mxu0
    %v6110 = vadd.f32 %v5893, %v6109
    %v6111 = vpop.f32.mrf.mxu0
    %v6112 = vadd.f32 %v5895, %v6111
    %6113 = vmatmul.bf16.gmra.mxu0 %v5618
    %v6114 = vpop.f32.mrf.mxu0
    %v6115 = vadd.f32 %v5898, %v6114
    %v6116 = vpop.f32.mrf.mxu0
    %v6117 = vadd.f32 %v5900, %v6116
    %6118 = vmatmul.bf16.gmra.mxu0 %v5619
    %v6119 = vpop.f32.mrf.mxu0
    %v6120 = vadd.f32 %v5903, %v6119
    %v6121 = vpop.f32.mrf.mxu0
    %v6122 = vadd.f32 %v5905, %v6121
    %6123 = vmatmul.bf16.gmra.mxu0 %v5620
    %v6124 = vpop.f32.mrf.mxu0
    %v6125 = vadd.f32 %v5908, %v6124
    %v6126 = vpop.f32.mrf.mxu0
    %v6127 = vadd.f32 %v5910, %v6126
    %6128 = vmatmul.bf16.gmra.mxu0 %v5621
    %v6129 = vpop.f32.mrf.mxu0
    %v6130 = vadd.f32 %v5913, %v6129
    %v6131 = vpop.f32.mrf.mxu0
    %v6132 = vadd.f32 %v5915, %v6131
    %6133 = vmatmul.bf16.gmra.mxu0 %v5622
    %v6134 = vpop.f32.mrf.mxu0
    %v6135 = vadd.f32 %v5918, %v6134
    %v6136 = vpop.f32.mrf.mxu0
    %v6137 = vadd.f32 %v5920, %v6136
    %6138 = vmatmul.bf16.gmra.mxu0 %v5623
    %v6139 = vpop.f32.mrf.mxu0
    %v6140 = vadd.f32 %v5923, %v6139
    %v6141 = vpop.f32.mrf.mxu0
    %v6142 = vadd.f32 %v5925, %v6141
    %6143 = vmatmul.bf16.gmra.mxu0 %v5624
    %v6144 = vpop.f32.mrf.mxu0
    %v6145 = vadd.f32 %v5928, %v6144
    %v6146 = vpop.f32.mrf.mxu0
    %v6147 = vadd.f32 %v5930, %v6146
    %6148 = vmatmul.bf16.gmra.mxu0 %v5625
    %v6149 = vpop.f32.mrf.mxu0
    %v6150 = vadd.f32 %v5933, %v6149
    %v6151 = vpop.f32.mrf.mxu0
    %v6152 = vadd.f32 %v5935, %v6151
    %6153 = vmatmul.bf16.gmra.mxu0 %v5626
    %v6154 = vpop.f32.mrf.mxu0
    %v6155 = vadd.f32 %v5938, %v6154
    %v6156 = vpop.f32.mrf.mxu0
    %v6157 = vadd.f32 %v5940, %v6156
    %6158 = vmatmul.bf16.gmra.mxu0 %v5627
    %v6159 = vpop.f32.mrf.mxu0
    %v6160 = vadd.f32 %v5943, %v6159
    %v6161 = vpop.f32.mrf.mxu0
    %v6162 = vadd.f32 %v5945, %v6161
    %6163 = vmatmul.bf16.gmra.mxu0 %v5628
    %v6164 = vpop.f32.mrf.mxu0
    %v6165 = vadd.f32 %v5948, %v6164
    %v6166 = vpop.f32.mrf.mxu0
    %v6167 = vadd.f32 %v5950, %v6166
    %6168 = vmatmul.bf16.gmra.mxu0 %v5629
    %v6169 = vpop.f32.mrf.mxu0
    %v6170 = vadd.f32 %v5953, %v6169
    %v6171 = vpop.f32.mrf.mxu0
    %v6172 = vadd.f32 %v5955, %v6171
    %6173 = vmatmul.bf16.gmra.mxu0 %v5630
    %v6174 = vpop.f32.mrf.mxu0
    %v6175 = vadd.f32 %v5958, %v6174
    %v6176 = vpop.f32.mrf.mxu0
    %v6177 = vadd.f32 %v5960, %v6176
    %6178 = vmatmul.bf16.gmra.mxu0 %v5631
    %v6179 = vpop.f32.mrf.mxu0
    %v6180 = vadd.f32 %v5963, %v6179
    %v6181 = vpop.f32.mrf.mxu0
    %v6182 = vadd.f32 %v5965, %v6181
    %6183 = vmatmul.bf16.gmra.mxu0 %v5632
    %v6184 = vpop.f32.mrf.mxu0
    %v6185 = vadd.f32 %v5968, %v6184
    %v6186 = vpop.f32.mrf.mxu0
    %v6187 = vadd.f32 %v5970, %v6186
    %6188 = vmatmul.bf16.gmra.mxu0 %v5633
    %v6189 = vpop.f32.mrf.mxu0
    %v6190 = vadd.f32 %v5973, %v6189
    %v6191 = vpop.f32.mrf.mxu0
    %v6192 = vadd.f32 %v5975, %v6191
    %6193 = vmatmul.bf16.gmra.mxu0 %v5634
    %v6194 = vpop.f32.mrf.mxu0
    %v6195 = vadd.f32 %v5978, %v6194
    %v6196 = vpop.f32.mrf.mxu0
    %v6197 = vadd.f32 %v5980, %v6196
    %6198 = vdwg.mxu0
    %v6199 = vld [vmem:[%s199 + $0x2] sm:$0xff]
    %v6200 = vld [vmem:[%s199 + $0xa] sm:$0xff]
    %v6201 = vld [vmem:[%s199 + $0x1a] sm:$0xff]
    %v6202 = vld [vmem:[%s199 + $0x22] sm:$0xff]
    %v6203 = vld [vmem:[%s199 + $0x32] sm:$0xff]
    %v6204 = vld [vmem:[%s199 + $0x3a] sm:$0xff]
    %v6205 = vld [vmem:[%s199 + $0x4a] sm:$0xff]
    %v6206 = vld [vmem:[%s199 + $0x52] sm:$0xff]
    %v6207 = vld [vmem:[%s199 + $0x62] sm:$0xff]
    %v6208 = vld [vmem:[%s199 + $0x6a] sm:$0xff]
    %v6209 = vld [vmem:[%s199 + $0x7a] sm:$0xff]
    %v6210 = vld [vmem:[%s199 + $0x82] sm:$0xff]
    %v6211 = vld [vmem:[%s199 + $0x92] sm:$0xff]
    %v6212 = vld [vmem:[%s199 + $0x9a] sm:$0xff]
    %v6213 = vld [vmem:[%s199 + $0xaa] sm:$0xff]
    %v6214 = vld [vmem:[%s199 + $0xb2] sm:$0xff]
    %v6215 = vld [vmem:[%s199 + $0xc2] sm:$0xff]
    %v6216 = vld [vmem:[%s199 + $0xca] sm:$0xff]
    %v6217 = vld [vmem:[%s199 + $0xda] sm:$0xff]
    %v6218 = vld [vmem:[%s199 + $0xe2] sm:$0xff]
    %v6219 = vld [vmem:[%s199 + $0xf2] sm:$0xff]
    %v6220 = vld [vmem:[%s199 + $0xfa] sm:$0xff]
    %v6221 = vld [vmem:[%s199 + $0x10a] sm:$0xff]
    %v6222 = vld [vmem:[%s199 + $0x112] sm:$0xff]
    %v6223 = vld [vmem:[%s199 + $0x122] sm:$0xff]
    %v6224 = vld [vmem:[%s199 + $0x12a] sm:$0xff]
    %v6225 = vld [vmem:[%s199 + $0x13a] sm:$0xff]
    %v6226 = vld [vmem:[%s199 + $0x142] sm:$0xff]
    %v6227 = vld [vmem:[%s199 + $0x152] sm:$0xff]
    %v6228 = vld [vmem:[%s199 + $0x15a] sm:$0xff]
    %v6229 = vld [vmem:[%s199 + $0x16a] sm:$0xff]
    %v6230 = vld [vmem:[%s199 + $0x172] sm:$0xff]
    %v6231 = vld [vmem:[%s199 + $0x1b2] sm:$0xff]
    %v6232 = vld [vmem:[%s199 + $0x1ba] sm:$0xff]
    %v6233 = vld [vmem:[%s199 + $0x1ca] sm:$0xff]
    %v6234 = vld [vmem:[%s199 + $0x1d2] sm:$0xff]
    %v6235 = vld [vmem:[%s199 + $0x1e2] sm:$0xff]
    %v6236 = vld [vmem:[%s199 + $0x1ea] sm:$0xff]
    %v6237 = vld [vmem:[%s199 + $0x1fa] sm:$0xff]
    %v6238 = vld [vmem:[%s199 + $0x202] sm:$0xff]
    %v6239 = vld [vmem:[%s199 + $0x212] sm:$0xff]
    %v6240 = vld [vmem:[%s199 + $0x21a] sm:$0xff]
    %v6241 = vld [vmem:[%s199 + $0x22a] sm:$0xff]
    %v6242 = vld [vmem:[%s199 + $0x232] sm:$0xff]
    %v6243 = vld [vmem:[%s199 + $0x242] sm:$0xff]
    %v6244 = vld [vmem:[%s199 + $0x24a] sm:$0xff]
    %v6245 = vld [vmem:[%s199 + $0x25a] sm:$0xff]
    %v6246 = vld [vmem:[%s199 + $0x262] sm:$0xff]
    %v6247 = vld [vmem:[%s199 + $0x272] sm:$0xff]
    %v6248 = vld [vmem:[%s199 + $0x27a] sm:$0xff]
    %v6249 = vld [vmem:[%s199 + $0x28a] sm:$0xff]
    %v6250 = vld [vmem:[%s199 + $0x292] sm:$0xff]
    %v6251 = vld [vmem:[%s199 + $0x2a2] sm:$0xff]
    %v6252 = vld [vmem:[%s199 + $0x2aa] sm:$0xff]
    %v6253 = vld [vmem:[%s199 + $0x2ba] sm:$0xff]
    %v6254 = vld [vmem:[%s199 + $0x2c2] sm:$0xff]
    %v6255 = vld [vmem:[%s199 + $0x2d2] sm:$0xff]
    %v6256 = vld [vmem:[%s199 + $0x2da] sm:$0xff]
    %v6257 = vld [vmem:[%s199 + $0x2ea] sm:$0xff]
    %v6258 = vld [vmem:[%s199 + $0x2f2] sm:$0xff]
    %v6259 = vld [vmem:[%s199 + $0x302] sm:$0xff]
    %v6260 = vld [vmem:[%s199 + $0x30a] sm:$0xff]
    %v6261 = vld [vmem:[%s199 + $0x31a] sm:$0xff]
    %v6262 = vld [vmem:[%s199 + $0x322] sm:$0xff]
    %v6263 = vpack.c.bf16 %v6200, %v6199
    %v6264 = vpack.c.bf16 %v6202, %v6201
    %v6265 = vpack.c.bf16 %v6204, %v6203
    %v6266 = vpack.c.bf16 %v6206, %v6205
    %v6267 = vpack.c.bf16 %v6208, %v6207
    %v6268 = vpack.c.bf16 %v6210, %v6209
    %v6269 = vpack.c.bf16 %v6212, %v6211
    %v6270 = vpack.c.bf16 %v6214, %v6213
    %v6271 = vpack.c.bf16 %v6216, %v6215
    %v6272 = vpack.c.bf16 %v6218, %v6217
    %v6273 = vpack.c.bf16 %v6220, %v6219
    %v6274 = vpack.c.bf16 %v6222, %v6221
    %v6275 = vpack.c.bf16 %v6224, %v6223
    %v6276 = vpack.c.bf16 %v6226, %v6225
    %v6277 = vpack.c.bf16 %v6228, %v6227
    %v6278 = vpack.c.bf16 %v6230, %v6229
    %v6279 = vpack.c.bf16 %v6232, %v6231
    %v6280 = vpack.c.bf16 %v6234, %v6233
    %v6281 = vpack.c.bf16 %v6236, %v6235
    %v6282 = vpack.c.bf16 %v6238, %v6237
    %v6283 = vpack.c.bf16 %v6240, %v6239
    %v6284 = vpack.c.bf16 %v6242, %v6241
    %v6285 = vpack.c.bf16 %v6244, %v6243
    %v6286 = vpack.c.bf16 %v6246, %v6245
    %v6287 = vpack.c.bf16 %v6248, %v6247
    %v6288 = vpack.c.bf16 %v6250, %v6249
    %v6289 = vpack.c.bf16 %v6252, %v6251
    %v6290 = vpack.c.bf16 %v6254, %v6253
    %v6291 = vpack.c.bf16 %v6256, %v6255
    %v6292 = vpack.c.bf16 %v6258, %v6257
    %v6293 = vpack.c.bf16 %v6260, %v6259
    %v6294 = vpack.c.bf16 %v6262, %v6261
    %s6295 = scalar_lea.vmem %s2, 320
    %v6296 = vld [vmem:[%s6295] sm:$0xf]
    %v6297 = vld [vmem:[%s6295 + $0x4] sm:$0xf]
    %v6298 = vld [vmem:[%s6295 + $0x8] sm:$0xf]
    %v6299 = vld [vmem:[%s6295 + $0xc] sm:$0xf]
    %v6300 = vld [vmem:[%s6295 + $0x10] sm:$0xf]
    %v6301 = vld [vmem:[%s6295 + $0x14] sm:$0xf]
    %v6302 = vld [vmem:[%s6295 + $0x18] sm:$0xf]
    %v6303 = vld [vmem:[%s6295 + $0x1c] sm:$0xf]
    %v6304 = vld [vmem:[%s6295 + $0x20] sm:$0xf]
    %v6305 = vld [vmem:[%s6295 + $0x24] sm:$0xf]
    %v6306 = vld [vmem:[%s6295 + $0x28] sm:$0xf]
    %v6307 = vld [vmem:[%s6295 + $0x2c] sm:$0xf]
    %v6308 = vld [vmem:[%s6295 + $0x30] sm:$0xf]
    %v6309 = vld [vmem:[%s6295 + $0x34] sm:$0xf]
    %v6310 = vld [vmem:[%s6295 + $0x38] sm:$0xf]
    %v6311 = vld [vmem:[%s6295 + $0x3c] sm:$0xf]
    %v6328 = vunpack.c.l.b16 %v6296
    %v6329 = vunpack.c.l.b16 %v6297
    %v6330 = vunpack.c.l.b16 %v6298
    %v6331 = vunpack.c.l.b16 %v6299
    %v6332 = vunpack.c.l.b16 %v6300
    %v6333 = vunpack.c.l.b16 %v6301
    %v6334 = vunpack.c.l.b16 %v6302
    %v6335 = vunpack.c.l.b16 %v6303
    %v6336 = vunpack.c.l.b16 %v6304
    %v6337 = vunpack.c.l.b16 %v6305
    %v6338 = vunpack.c.l.b16 %v6306
    %v6339 = vunpack.c.l.b16 %v6307
    %v6340 = vunpack.c.l.b16 %v6308
    %v6341 = vunpack.c.l.b16 %v6309
    %v6342 = vunpack.c.l.b16 %v6310
    %v6343 = vunpack.c.l.b16 %v6311
    %v6344 = vpack.c.b16 %v6329, %v6328
    %v6345 = vpack.c.b16 %v6331, %v6330
    %v6346 = vpack.c.b16 %v6333, %v6332
    %v6347 = vpack.c.b16 %v6335, %v6334
    %v6348 = vpack.c.b16 %v6337, %v6336
    %v6349 = vpack.c.b16 %v6339, %v6338
    %v6350 = vpack.c.b16 %v6341, %v6340
    %v6351 = vpack.c.b16 %v6343, %v6342
    %6360 = vmatpush.bf16.msra.mxu0 %v6351
    %6361 = vmatpush.bf16.msra.mxu0 %v6350
    %6362 = vmatpush.bf16.msra.mxu0 %v6349
    %6363 = vmatpush.bf16.msra.mxu0 %v6348
    %6364 = vmatpush.bf16.msra.mxu0 %v6347
    %6365 = vmatpush.bf16.msra.mxu0 %v6346
    %6366 = vmatpush.bf16.msra.mxu0 %v6345
    %6367 = vmatpush.bf16.msra.mxu0 %v6344
    %6368 = vmatmul.bf16.gmra.mxu0 %v6263
    %v6369 = vpop.f32.mrf.mxu0
    %v6370 = vadd.f32 0.0, %v6369
    %v6371 = vpop.f32.mrf.mxu0
    %v6372 = vadd.f32 0.0, %v6371
    %6373 = vmatmul.bf16.gmra.mxu0 %v6264
    %v6374 = vpop.f32.mrf.mxu0
    %v6375 = vadd.f32 0.0, %v6374
    %v6376 = vpop.f32.mrf.mxu0
    %v6377 = vadd.f32 0.0, %v6376
    %6378 = vmatmul.bf16.gmra.mxu0 %v6265
    %v6379 = vpop.f32.mrf.mxu0
    %v6380 = vadd.f32 0.0, %v6379
    %v6381 = vpop.f32.mrf.mxu0
    %v6382 = vadd.f32 0.0, %v6381
    %6383 = vmatmul.bf16.gmra.mxu0 %v6266
    %v6384 = vpop.f32.mrf.mxu0
    %v6385 = vadd.f32 0.0, %v6384
    %v6386 = vpop.f32.mrf.mxu0
    %v6387 = vadd.f32 0.0, %v6386
    %6388 = vmatmul.bf16.gmra.mxu0 %v6267
    %v6389 = vpop.f32.mrf.mxu0
    %v6390 = vadd.f32 0.0, %v6389
    %v6391 = vpop.f32.mrf.mxu0
    %v6392 = vadd.f32 0.0, %v6391
    %6393 = vmatmul.bf16.gmra.mxu0 %v6268
    %v6394 = vpop.f32.mrf.mxu0
    %v6395 = vadd.f32 0.0, %v6394
    %v6396 = vpop.f32.mrf.mxu0
    %v6397 = vadd.f32 0.0, %v6396
    %6398 = vmatmul.bf16.gmra.mxu0 %v6269
    %v6399 = vpop.f32.mrf.mxu0
    %v6400 = vadd.f32 0.0, %v6399
    %v6401 = vpop.f32.mrf.mxu0
    %v6402 = vadd.f32 0.0, %v6401
    %6403 = vmatmul.bf16.gmra.mxu0 %v6270
    %v6404 = vpop.f32.mrf.mxu0
    %v6405 = vadd.f32 0.0, %v6404
    %v6406 = vpop.f32.mrf.mxu0
    %v6407 = vadd.f32 0.0, %v6406
    %6408 = vmatmul.bf16.gmra.mxu0 %v6271
    %v6409 = vpop.f32.mrf.mxu0
    %v6410 = vadd.f32 0.0, %v6409
    %v6411 = vpop.f32.mrf.mxu0
    %v6412 = vadd.f32 0.0, %v6411
    %6413 = vmatmul.bf16.gmra.mxu0 %v6272
    %v6414 = vpop.f32.mrf.mxu0
    %v6415 = vadd.f32 0.0, %v6414
    %v6416 = vpop.f32.mrf.mxu0
    %v6417 = vadd.f32 0.0, %v6416
    %6418 = vmatmul.bf16.gmra.mxu0 %v6273
    %v6419 = vpop.f32.mrf.mxu0
    %v6420 = vadd.f32 0.0, %v6419
    %v6421 = vpop.f32.mrf.mxu0
    %v6422 = vadd.f32 0.0, %v6421
    %6423 = vmatmul.bf16.gmra.mxu0 %v6274
    %v6424 = vpop.f32.mrf.mxu0
    %v6425 = vadd.f32 0.0, %v6424
    %v6426 = vpop.f32.mrf.mxu0
    %v6427 = vadd.f32 0.0, %v6426
    %6428 = vmatmul.bf16.gmra.mxu0 %v6275
    %v6429 = vpop.f32.mrf.mxu0
    %v6430 = vadd.f32 0.0, %v6429
    %v6431 = vpop.f32.mrf.mxu0
    %v6432 = vadd.f32 0.0, %v6431
    %6433 = vmatmul.bf16.gmra.mxu0 %v6276
    %v6434 = vpop.f32.mrf.mxu0
    %v6435 = vadd.f32 0.0, %v6434
    %v6436 = vpop.f32.mrf.mxu0
    %v6437 = vadd.f32 0.0, %v6436
    %6438 = vmatmul.bf16.gmra.mxu0 %v6277
    %v6439 = vpop.f32.mrf.mxu0
    %v6440 = vadd.f32 0.0, %v6439
    %v6441 = vpop.f32.mrf.mxu0
    %v6442 = vadd.f32 0.0, %v6441
    %6443 = vmatmul.bf16.gmra.mxu0 %v6278
    %v6444 = vpop.f32.mrf.mxu0
    %v6445 = vadd.f32 0.0, %v6444
    %v6446 = vpop.f32.mrf.mxu0
    %v6447 = vadd.f32 0.0, %v6446
    %6448 = vmatmul.bf16.gmra.mxu0 %v6279
    %v6449 = vpop.f32.mrf.mxu0
    %v6450 = vadd.f32 0.0, %v6449
    %v6451 = vpop.f32.mrf.mxu0
    %v6452 = vadd.f32 0.0, %v6451
    %6453 = vmatmul.bf16.gmra.mxu0 %v6280
    %v6454 = vpop.f32.mrf.mxu0
    %v6455 = vadd.f32 0.0, %v6454
    %v6456 = vpop.f32.mrf.mxu0
    %v6457 = vadd.f32 0.0, %v6456
    %6458 = vmatmul.bf16.gmra.mxu0 %v6281
    %v6459 = vpop.f32.mrf.mxu0
    %v6460 = vadd.f32 0.0, %v6459
    %v6461 = vpop.f32.mrf.mxu0
    %v6462 = vadd.f32 0.0, %v6461
    %6463 = vmatmul.bf16.gmra.mxu0 %v6282
    %v6464 = vpop.f32.mrf.mxu0
    %v6465 = vadd.f32 0.0, %v6464
    %v6466 = vpop.f32.mrf.mxu0
    %v6467 = vadd.f32 0.0, %v6466
    %6468 = vmatmul.bf16.gmra.mxu0 %v6283
    %v6469 = vpop.f32.mrf.mxu0
    %v6470 = vadd.f32 0.0, %v6469
    %v6471 = vpop.f32.mrf.mxu0
    %v6472 = vadd.f32 0.0, %v6471
    %6473 = vmatmul.bf16.gmra.mxu0 %v6284
    %v6474 = vpop.f32.mrf.mxu0
    %v6475 = vadd.f32 0.0, %v6474
    %v6476 = vpop.f32.mrf.mxu0
    %v6477 = vadd.f32 0.0, %v6476
    %6478 = vmatmul.bf16.gmra.mxu0 %v6285
    %v6479 = vpop.f32.mrf.mxu0
    %v6480 = vadd.f32 0.0, %v6479
    %v6481 = vpop.f32.mrf.mxu0
    %v6482 = vadd.f32 0.0, %v6481
    %6483 = vmatmul.bf16.gmra.mxu0 %v6286
    %v6484 = vpop.f32.mrf.mxu0
    %v6485 = vadd.f32 0.0, %v6484
    %v6486 = vpop.f32.mrf.mxu0
    %v6487 = vadd.f32 0.0, %v6486
    %6488 = vmatmul.bf16.gmra.mxu0 %v6287
    %v6489 = vpop.f32.mrf.mxu0
    %v6490 = vadd.f32 0.0, %v6489
    %v6491 = vpop.f32.mrf.mxu0
    %v6492 = vadd.f32 0.0, %v6491
    %6493 = vmatmul.bf16.gmra.mxu0 %v6288
    %v6494 = vpop.f32.mrf.mxu0
    %v6495 = vadd.f32 0.0, %v6494
    %v6496 = vpop.f32.mrf.mxu0
    %v6497 = vadd.f32 0.0, %v6496
    %6498 = vmatmul.bf16.gmra.mxu0 %v6289
    %v6499 = vpop.f32.mrf.mxu0
    %v6500 = vadd.f32 0.0, %v6499
    %v6501 = vpop.f32.mrf.mxu0
    %v6502 = vadd.f32 0.0, %v6501
    %6503 = vmatmul.bf16.gmra.mxu0 %v6290
    %v6504 = vpop.f32.mrf.mxu0
    %v6505 = vadd.f32 0.0, %v6504
    %v6506 = vpop.f32.mrf.mxu0
    %v6507 = vadd.f32 0.0, %v6506
    %6508 = vmatmul.bf16.gmra.mxu0 %v6291
    %v6509 = vpop.f32.mrf.mxu0
    %v6510 = vadd.f32 0.0, %v6509
    %v6511 = vpop.f32.mrf.mxu0
    %v6512 = vadd.f32 0.0, %v6511
    %6513 = vmatmul.bf16.gmra.mxu0 %v6292
    %v6514 = vpop.f32.mrf.mxu0
    %v6515 = vadd.f32 0.0, %v6514
    %v6516 = vpop.f32.mrf.mxu0
    %v6517 = vadd.f32 0.0, %v6516
    %6518 = vmatmul.bf16.gmra.mxu0 %v6293
    %v6519 = vpop.f32.mrf.mxu0
    %v6520 = vadd.f32 0.0, %v6519
    %v6521 = vpop.f32.mrf.mxu0
    %v6522 = vadd.f32 0.0, %v6521
    %6523 = vmatmul.bf16.gmra.mxu0 %v6294
    %v6524 = vpop.f32.mrf.mxu0
    %v6525 = vadd.f32 0.0, %v6524
    %v6526 = vpop.f32.mrf.mxu0
    %v6527 = vadd.f32 0.0, %v6526
    %6528 = vdwg.mxu0
    %v6529 = vadd.f32 %v6040, %v6370
    %v6530 = vadd.f32 %v6042, %v6372
    %v6531 = vadd.f32 %v6045, %v6375
    %v6532 = vadd.f32 %v6047, %v6377
    %v6533 = vadd.f32 %v6050, %v6380
    %v6534 = vadd.f32 %v6052, %v6382
    %v6535 = vadd.f32 %v6055, %v6385
    %v6536 = vadd.f32 %v6057, %v6387
    %v6537 = vadd.f32 %v6060, %v6390
    %v6538 = vadd.f32 %v6062, %v6392
    %v6539 = vadd.f32 %v6065, %v6395
    %v6540 = vadd.f32 %v6067, %v6397
    %v6541 = vadd.f32 %v6070, %v6400
    %v6542 = vadd.f32 %v6072, %v6402
    %v6543 = vadd.f32 %v6075, %v6405
    %v6544 = vadd.f32 %v6077, %v6407
    %v6545 = vadd.f32 %v6080, %v6410
    %v6546 = vadd.f32 %v6082, %v6412
    %v6547 = vadd.f32 %v6085, %v6415
    %v6548 = vadd.f32 %v6087, %v6417
    %v6549 = vadd.f32 %v6090, %v6420
    %v6550 = vadd.f32 %v6092, %v6422
    %v6551 = vadd.f32 %v6095, %v6425
    %v6552 = vadd.f32 %v6097, %v6427
    %v6553 = vadd.f32 %v6100, %v6430
    %v6554 = vadd.f32 %v6102, %v6432
    %v6555 = vadd.f32 %v6105, %v6435
    %v6556 = vadd.f32 %v6107, %v6437
    %v6557 = vadd.f32 %v6110, %v6440
    %v6558 = vadd.f32 %v6112, %v6442
    %v6559 = vadd.f32 %v6115, %v6445
    %v6560 = vadd.f32 %v6117, %v6447
    %v6561 = vadd.f32 %v6120, %v6450
    %v6562 = vadd.f32 %v6122, %v6452
    %v6563 = vadd.f32 %v6125, %v6455
    %v6564 = vadd.f32 %v6127, %v6457
    %v6565 = vadd.f32 %v6130, %v6460
    %v6566 = vadd.f32 %v6132, %v6462
    %v6567 = vadd.f32 %v6135, %v6465
    %v6568 = vadd.f32 %v6137, %v6467
    %v6569 = vadd.f32 %v6140, %v6470
    %v6570 = vadd.f32 %v6142, %v6472
    %v6571 = vadd.f32 %v6145, %v6475
    %v6572 = vadd.f32 %v6147, %v6477
    %v6573 = vadd.f32 %v6150, %v6480
    %v6574 = vadd.f32 %v6152, %v6482
    %v6575 = vadd.f32 %v6155, %v6485
    %v6576 = vadd.f32 %v6157, %v6487
    %v6577 = vadd.f32 %v6160, %v6490
    %v6578 = vadd.f32 %v6162, %v6492
    %v6579 = vadd.f32 %v6165, %v6495
    %v6580 = vadd.f32 %v6167, %v6497
    %v6581 = vadd.f32 %v6170, %v6500
    %v6582 = vadd.f32 %v6172, %v6502
    %v6583 = vadd.f32 %v6175, %v6505
    %v6584 = vadd.f32 %v6177, %v6507
    %v6585 = vadd.f32 %v6180, %v6510
    %v6586 = vadd.f32 %v6182, %v6512
    %v6587 = vadd.f32 %v6185, %v6515
    %v6588 = vadd.f32 %v6187, %v6517
    %v6589 = vadd.f32 %v6190, %v6520
    %v6590 = vadd.f32 %v6192, %v6522
    %v6591 = vadd.f32 %v6195, %v6525
    %v6592 = vadd.f32 %v6197, %v6527
    %v6593 = vld [vmem:[#allocation3] sm:$0xff]
    %v6594 = vld [vmem:[#allocation3 + $0x8] sm:$0xff]
    %v6595 = vld [vmem:[#allocation3 + $0x10] sm:$0xff]
    %v6596 = vld [vmem:[#allocation3 + $0x18] sm:$0xff]
    %v6597 = vld [vmem:[#allocation3 + $0x20] sm:$0xff]
    %v6598 = vld [vmem:[#allocation3 + $0x28] sm:$0xff]
    %v6599 = vld [vmem:[#allocation3 + $0x30] sm:$0xff]
    %v6600 = vld [vmem:[#allocation3 + $0x38] sm:$0xff]
    %v6601 = vld [vmem:[#allocation3 + $0x40] sm:$0xff]
    %v6602 = vld [vmem:[#allocation3 + $0x48] sm:$0xff]
    %v6603 = vld [vmem:[#allocation3 + $0x50] sm:$0xff]
    %v6604 = vld [vmem:[#allocation3 + $0x58] sm:$0xff]
    %v6605 = vld [vmem:[#allocation3 + $0x60] sm:$0xff]
    %v6606 = vld [vmem:[#allocation3 + $0x68] sm:$0xff]
    %v6607 = vld [vmem:[#allocation3 + $0x70] sm:$0xff]
    %v6608 = vld [vmem:[#allocation3 + $0x78] sm:$0xff]
    %v6609 = vld [vmem:[#allocation3 + $0x80] sm:$0xff]
    %v6610 = vld [vmem:[#allocation3 + $0x88] sm:$0xff]
    %v6611 = vld [vmem:[#allocation3 + $0x90] sm:$0xff]
    %v6612 = vld [vmem:[#allocation3 + $0x98] sm:$0xff]
    %v6613 = vld [vmem:[#allocation3 + $0xa0] sm:$0xff]
    %v6614 = vld [vmem:[#allocation3 + $0xa8] sm:$0xff]
    %v6615 = vld [vmem:[#allocation3 + $0xb0] sm:$0xff]
    %v6616 = vld [vmem:[#allocation3 + $0xb8] sm:$0xff]
    %v6617 = vld [vmem:[#allocation3 + $0xc0] sm:$0xff]
    %v6618 = vld [vmem:[#allocation3 + $0xc8] sm:$0xff]
    %v6619 = vld [vmem:[#allocation3 + $0xd0] sm:$0xff]
    %v6620 = vld [vmem:[#allocation3 + $0xd8] sm:$0xff]
    %v6621 = vld [vmem:[#allocation3 + $0xe0] sm:$0xff]
    %v6622 = vld [vmem:[#allocation3 + $0xe8] sm:$0xff]
    %v6623 = vld [vmem:[#allocation3 + $0xf0] sm:$0xff]
    %v6624 = vld [vmem:[#allocation3 + $0xf8] sm:$0xff]
    %v6625 = vld [vmem:[#allocation3 + $0x100] sm:$0xff]
    %v6626 = vld [vmem:[#allocation3 + $0x108] sm:$0xff]
    %v6627 = vld [vmem:[#allocation3 + $0x110] sm:$0xff]
    %v6628 = vld [vmem:[#allocation3 + $0x118] sm:$0xff]
    %v6629 = vld [vmem:[#allocation3 + $0x120] sm:$0xff]
    %v6630 = vld [vmem:[#allocation3 + $0x128] sm:$0xff]
    %v6631 = vld [vmem:[#allocation3 + $0x130] sm:$0xff]
    %v6632 = vld [vmem:[#allocation3 + $0x138] sm:$0xff]
    %v6633 = vld [vmem:[#allocation3 + $0x140] sm:$0xff]
    %v6634 = vld [vmem:[#allocation3 + $0x148] sm:$0xff]
    %v6635 = vld [vmem:[#allocation3 + $0x150] sm:$0xff]
    %v6636 = vld [vmem:[#allocation3 + $0x158] sm:$0xff]
    %v6637 = vld [vmem:[#allocation3 + $0x160] sm:$0xff]
    %v6638 = vld [vmem:[#allocation3 + $0x168] sm:$0xff]
    %v6639 = vld [vmem:[#allocation3 + $0x170] sm:$0xff]
    %v6640 = vld [vmem:[#allocation3 + $0x178] sm:$0xff]
    %v6641 = vld [vmem:[#allocation3 + $0x180] sm:$0xff]
    %v6642 = vld [vmem:[#allocation3 + $0x188] sm:$0xff]
    %v6643 = vld [vmem:[#allocation3 + $0x190] sm:$0xff]
    %v6644 = vld [vmem:[#allocation3 + $0x198] sm:$0xff]
    %v6645 = vld [vmem:[#allocation3 + $0x1a0] sm:$0xff]
    %v6646 = vld [vmem:[#allocation3 + $0x1a8] sm:$0xff]
    %v6647 = vld [vmem:[#allocation3 + $0x1b0] sm:$0xff]
    %v6648 = vld [vmem:[#allocation3 + $0x1b8] sm:$0xff]
    %v6649 = vld [vmem:[#allocation3 + $0x1c0] sm:$0xff]
    %v6650 = vld [vmem:[#allocation3 + $0x1c8] sm:$0xff]
    %v6651 = vld [vmem:[#allocation3 + $0x1d0] sm:$0xff]
    %v6652 = vld [vmem:[#allocation3 + $0x1d8] sm:$0xff]
    %v6653 = vld [vmem:[#allocation3 + $0x1e0] sm:$0xff]
    %v6654 = vld [vmem:[#allocation3 + $0x1e8] sm:$0xff]
    %v6655 = vld [vmem:[#allocation3 + $0x1f0] sm:$0xff]
    %v6656 = vld [vmem:[#allocation3 + $0x1f8] sm:$0xff]
    %v6657 = vadd.f32 %v6593, %v6529
    %v6658 = vadd.f32 %v6594, %v6530
    %v6659 = vadd.f32 %v6595, %v6531
    %v6660 = vadd.f32 %v6596, %v6532
    %v6661 = vadd.f32 %v6597, %v6533
    %v6662 = vadd.f32 %v6598, %v6534
    %v6663 = vadd.f32 %v6599, %v6535
    %v6664 = vadd.f32 %v6600, %v6536
    %v6665 = vadd.f32 %v6601, %v6537
    %v6666 = vadd.f32 %v6602, %v6538
    %v6667 = vadd.f32 %v6603, %v6539
    %v6668 = vadd.f32 %v6604, %v6540
    %v6669 = vadd.f32 %v6605, %v6541
    %v6670 = vadd.f32 %v6606, %v6542
    %v6671 = vadd.f32 %v6607, %v6543
    %v6672 = vadd.f32 %v6608, %v6544
    %v6673 = vadd.f32 %v6609, %v6545
    %v6674 = vadd.f32 %v6610, %v6546
    %v6675 = vadd.f32 %v6611, %v6547
    %v6676 = vadd.f32 %v6612, %v6548
    %v6677 = vadd.f32 %v6613, %v6549
    %v6678 = vadd.f32 %v6614, %v6550
    %v6679 = vadd.f32 %v6615, %v6551
    %v6680 = vadd.f32 %v6616, %v6552
    %v6681 = vadd.f32 %v6617, %v6553
    %v6682 = vadd.f32 %v6618, %v6554
    %v6683 = vadd.f32 %v6619, %v6555
    %v6684 = vadd.f32 %v6620, %v6556
    %v6685 = vadd.f32 %v6621, %v6557
    %v6686 = vadd.f32 %v6622, %v6558
    %v6687 = vadd.f32 %v6623, %v6559
    %v6688 = vadd.f32 %v6624, %v6560
    %v6689 = vadd.f32 %v6625, %v6561
    %v6690 = vadd.f32 %v6626, %v6562
    %v6691 = vadd.f32 %v6627, %v6563
    %v6692 = vadd.f32 %v6628, %v6564
    %v6693 = vadd.f32 %v6629, %v6565
    %v6694 = vadd.f32 %v6630, %v6566
    %v6695 = vadd.f32 %v6631, %v6567
    %v6696 = vadd.f32 %v6632, %v6568
    %v6697 = vadd.f32 %v6633, %v6569
    %v6698 = vadd.f32 %v6634, %v6570
    %v6699 = vadd.f32 %v6635, %v6571
    %v6700 = vadd.f32 %v6636, %v6572
    %v6701 = vadd.f32 %v6637, %v6573
    %v6702 = vadd.f32 %v6638, %v6574
    %v6703 = vadd.f32 %v6639, %v6575
    %v6704 = vadd.f32 %v6640, %v6576
    %v6705 = vadd.f32 %v6641, %v6577
    %v6706 = vadd.f32 %v6642, %v6578
    %v6707 = vadd.f32 %v6643, %v6579
    %v6708 = vadd.f32 %v6644, %v6580
    %v6709 = vadd.f32 %v6645, %v6581
    %v6710 = vadd.f32 %v6646, %v6582
    %v6711 = vadd.f32 %v6647, %v6583
    %v6712 = vadd.f32 %v6648, %v6584
    %v6713 = vadd.f32 %v6649, %v6585
    %v6714 = vadd.f32 %v6650, %v6586
    %v6715 = vadd.f32 %v6651, %v6587
    %v6716 = vadd.f32 %v6652, %v6588
    %v6717 = vadd.f32 %v6653, %v6589
    %v6718 = vadd.f32 %v6654, %v6590
    %v6719 = vadd.f32 %v6655, %v6591
    %v6720 = vadd.f32 %v6656, %v6592
    %6721 = vst [vmem:[#allocation3] sm:$0xff] %v6657
    %6722 = vst [vmem:[#allocation3 + $0x8] sm:$0xff] %v6658
    %6723 = vst [vmem:[#allocation3 + $0x10] sm:$0xff] %v6659
    %6724 = vst [vmem:[#allocation3 + $0x18] sm:$0xff] %v6660
    %6725 = vst [vmem:[#allocation3 + $0x20] sm:$0xff] %v6661
    %6726 = vst [vmem:[#allocation3 + $0x28] sm:$0xff] %v6662
    %6727 = vst [vmem:[#allocation3 + $0x30] sm:$0xff] %v6663
    %6728 = vst [vmem:[#allocation3 + $0x38] sm:$0xff] %v6664
    %6729 = vst [vmem:[#allocation3 + $0x40] sm:$0xff] %v6665
    %6730 = vst [vmem:[#allocation3 + $0x48] sm:$0xff] %v6666
    %6731 = vst [vmem:[#allocation3 + $0x50] sm:$0xff] %v6667
    %6732 = vst [vmem:[#allocation3 + $0x58] sm:$0xff] %v6668
    %6733 = vst [vmem:[#allocation3 + $0x60] sm:$0xff] %v6669
    %6734 = vst [vmem:[#allocation3 + $0x68] sm:$0xff] %v6670
    %6735 = vst [vmem:[#allocation3 + $0x70] sm:$0xff] %v6671
    %6736 = vst [vmem:[#allocation3 + $0x78] sm:$0xff] %v6672
    %6737 = vst [vmem:[#allocation3 + $0x80] sm:$0xff] %v6673
    %6738 = vst [vmem:[#allocation3 + $0x88] sm:$0xff] %v6674
    %6739 = vst [vmem:[#allocation3 + $0x90] sm:$0xff] %v6675
    %6740 = vst [vmem:[#allocation3 + $0x98] sm:$0xff] %v6676
    %6741 = vst [vmem:[#allocation3 + $0xa0] sm:$0xff] %v6677
    %6742 = vst [vmem:[#allocation3 + $0xa8] sm:$0xff] %v6678
    %6743 = vst [vmem:[#allocation3 + $0xb0] sm:$0xff] %v6679
    %6744 = vst [vmem:[#allocation3 + $0xb8] sm:$0xff] %v6680
    %6745 = vst [vmem:[#allocation3 + $0xc0] sm:$0xff] %v6681
    %6746 = vst [vmem:[#allocation3 + $0xc8] sm:$0xff] %v6682
    %6747 = vst [vmem:[#allocation3 + $0xd0] sm:$0xff] %v6683
    %6748 = vst [vmem:[#allocation3 + $0xd8] sm:$0xff] %v6684
    %6749 = vst [vmem:[#allocation3 + $0xe0] sm:$0xff] %v6685
    %6750 = vst [vmem:[#allocation3 + $0xe8] sm:$0xff] %v6686
    %6751 = vst [vmem:[#allocation3 + $0xf0] sm:$0xff] %v6687
    %6752 = vst [vmem:[#allocation3 + $0xf8] sm:$0xff] %v6688
    %6753 = vst [vmem:[#allocation3 + $0x100] sm:$0xff] %v6689
    %6754 = vst [vmem:[#allocation3 + $0x108] sm:$0xff] %v6690
    %6755 = vst [vmem:[#allocation3 + $0x110] sm:$0xff] %v6691
    %6756 = vst [vmem:[#allocation3 + $0x118] sm:$0xff] %v6692
    %6757 = vst [vmem:[#allocation3 + $0x120] sm:$0xff] %v6693
    %6758 = vst [vmem:[#allocation3 + $0x128] sm:$0xff] %v6694
    %6759 = vst [vmem:[#allocation3 + $0x130] sm:$0xff] %v6695
    %6760 = vst [vmem:[#allocation3 + $0x138] sm:$0xff] %v6696
    %6761 = vst [vmem:[#allocation3 + $0x140] sm:$0xff] %v6697
    %6762 = vst [vmem:[#allocation3 + $0x148] sm:$0xff] %v6698
    %6763 = vst [vmem:[#allocation3 + $0x150] sm:$0xff] %v6699
    %6764 = vst [vmem:[#allocation3 + $0x158] sm:$0xff] %v6700
    %6765 = vst [vmem:[#allocation3 + $0x160] sm:$0xff] %v6701
    %6766 = vst [vmem:[#allocation3 + $0x168] sm:$0xff] %v6702
    %6767 = vst [vmem:[#allocation3 + $0x170] sm:$0xff] %v6703
    %6768 = vst [vmem:[#allocation3 + $0x178] sm:$0xff] %v6704
    %6769 = vst [vmem:[#allocation3 + $0x180] sm:$0xff] %v6705
    %6770 = vst [vmem:[#allocation3 + $0x188] sm:$0xff] %v6706
    %6771 = vst [vmem:[#allocation3 + $0x190] sm:$0xff] %v6707
    %6772 = vst [vmem:[#allocation3 + $0x198] sm:$0xff] %v6708
    %6773 = vst [vmem:[#allocation3 + $0x1a0] sm:$0xff] %v6709
    %6774 = vst [vmem:[#allocation3 + $0x1a8] sm:$0xff] %v6710
    %6775 = vst [vmem:[#allocation3 + $0x1b0] sm:$0xff] %v6711
    %6776 = vst [vmem:[#allocation3 + $0x1b8] sm:$0xff] %v6712
    %6777 = vst [vmem:[#allocation3 + $0x1c0] sm:$0xff] %v6713
    %6778 = vst [vmem:[#allocation3 + $0x1c8] sm:$0xff] %v6714
    %6779 = vst [vmem:[#allocation3 + $0x1d0] sm:$0xff] %v6715
    %6780 = vst [vmem:[#allocation3 + $0x1d8] sm:$0xff] %v6716
    %6781 = vst [vmem:[#allocation3 + $0x1e0] sm:$0xff] %v6717
    %6782 = vst [vmem:[#allocation3 + $0x1e8] sm:$0xff] %v6718
    %6783 = vst [vmem:[#allocation3 + $0x1f0] sm:$0xff] %v6719
    %6784 = vst [vmem:[#allocation3 + $0x1f8] sm:$0xff] %v6720
    %v6785 = vld [vmem:[%s2627] sm:$0xff]
    %v6786 = vld [vmem:[%s2627 + $0x8] sm:$0xff]
    %v6787 = vld [vmem:[%s2627 + $0x18] sm:$0xff]
    %v6788 = vld [vmem:[%s2627 + $0x20] sm:$0xff]
    %v6789 = vld [vmem:[%s2627 + $0x30] sm:$0xff]
    %v6790 = vld [vmem:[%s2627 + $0x38] sm:$0xff]
    %v6791 = vld [vmem:[%s2627 + $0x48] sm:$0xff]
    %v6792 = vld [vmem:[%s2627 + $0x50] sm:$0xff]
    %v6793 = vld [vmem:[%s2627 + $0x60] sm:$0xff]
    %v6794 = vld [vmem:[%s2627 + $0x68] sm:$0xff]
    %v6795 = vld [vmem:[%s2627 + $0x78] sm:$0xff]
    %v6796 = vld [vmem:[%s2627 + $0x80] sm:$0xff]
    %v6797 = vld [vmem:[%s2627 + $0x90] sm:$0xff]
    %v6798 = vld [vmem:[%s2627 + $0x98] sm:$0xff]
    %v6799 = vld [vmem:[%s2627 + $0xa8] sm:$0xff]
    %v6800 = vld [vmem:[%s2627 + $0xb0] sm:$0xff]
    %v6801 = vld [vmem:[%s2627 + $0xc0] sm:$0xff]
    %v6802 = vld [vmem:[%s2627 + $0xc8] sm:$0xff]
    %v6803 = vld [vmem:[%s2627 + $0xd8] sm:$0xff]
    %v6804 = vld [vmem:[%s2627 + $0xe0] sm:$0xff]
    %v6805 = vld [vmem:[%s2627 + $0xf0] sm:$0xff]
    %v6806 = vld [vmem:[%s2627 + $0xf8] sm:$0xff]
    %v6807 = vld [vmem:[%s2627 + $0x108] sm:$0xff]
    %v6808 = vld [vmem:[%s2627 + $0x110] sm:$0xff]
    %v6809 = vld [vmem:[%s2627 + $0x120] sm:$0xff]
    %v6810 = vld [vmem:[%s2627 + $0x128] sm:$0xff]
    %v6811 = vld [vmem:[%s2627 + $0x138] sm:$0xff]
    %v6812 = vld [vmem:[%s2627 + $0x140] sm:$0xff]
    %v6813 = vld [vmem:[%s2627 + $0x150] sm:$0xff]
    %v6814 = vld [vmem:[%s2627 + $0x158] sm:$0xff]
    %v6815 = vld [vmem:[%s2627 + $0x168] sm:$0xff]
    %v6816 = vld [vmem:[%s2627 + $0x170] sm:$0xff]
    %v6817 = vld [vmem:[%s2627 + $0x1b0] sm:$0xff]
    %v6818 = vld [vmem:[%s2627 + $0x1b8] sm:$0xff]
    %v6819 = vld [vmem:[%s2627 + $0x1c8] sm:$0xff]
    %v6820 = vld [vmem:[%s2627 + $0x1d0] sm:$0xff]
    %v6821 = vld [vmem:[%s2627 + $0x1e0] sm:$0xff]
    %v6822 = vld [vmem:[%s2627 + $0x1e8] sm:$0xff]
    %v6823 = vld [vmem:[%s2627 + $0x1f8] sm:$0xff]
    %v6824 = vld [vmem:[%s2627 + $0x200] sm:$0xff]
    %v6825 = vld [vmem:[%s2627 + $0x210] sm:$0xff]
    %v6826 = vld [vmem:[%s2627 + $0x218] sm:$0xff]
    %v6827 = vld [vmem:[%s2627 + $0x228] sm:$0xff]
    %v6828 = vld [vmem:[%s2627 + $0x230] sm:$0xff]
    %v6829 = vld [vmem:[%s2627 + $0x240] sm:$0xff]
    %v6830 = vld [vmem:[%s2627 + $0x248] sm:$0xff]
    %v6831 = vld [vmem:[%s2627 + $0x258] sm:$0xff]
    %v6832 = vld [vmem:[%s2627 + $0x260] sm:$0xff]
    %v6833 = vld [vmem:[%s2627 + $0x270] sm:$0xff]
    %v6834 = vld [vmem:[%s2627 + $0x278] sm:$0xff]
    %v6835 = vld [vmem:[%s2627 + $0x288] sm:$0xff]
    %v6836 = vld [vmem:[%s2627 + $0x290] sm:$0xff]
    %v6837 = vld [vmem:[%s2627 + $0x2a0] sm:$0xff]
    %v6838 = vld [vmem:[%s2627 + $0x2a8] sm:$0xff]
    %v6839 = vld [vmem:[%s2627 + $0x2b8] sm:$0xff]
    %v6840 = vld [vmem:[%s2627 + $0x2c0] sm:$0xff]
    %v6841 = vld [vmem:[%s2627 + $0x2d0] sm:$0xff]
    %v6842 = vld [vmem:[%s2627 + $0x2d8] sm:$0xff]
    %v6843 = vld [vmem:[%s2627 + $0x2e8] sm:$0xff]
    %v6844 = vld [vmem:[%s2627 + $0x2f0] sm:$0xff]
    %v6845 = vld [vmem:[%s2627 + $0x300] sm:$0xff]
    %v6846 = vld [vmem:[%s2627 + $0x308] sm:$0xff]
    %v6847 = vld [vmem:[%s2627 + $0x318] sm:$0xff]
    %v6848 = vld [vmem:[%s2627 + $0x320] sm:$0xff]
    %v6849 = vpack.c.bf16 %v6786, %v6785
    %v6850 = vpack.c.bf16 %v6788, %v6787
    %v6851 = vpack.c.bf16 %v6790, %v6789
    %v6852 = vpack.c.bf16 %v6792, %v6791
    %v6853 = vpack.c.bf16 %v6794, %v6793
    %v6854 = vpack.c.bf16 %v6796, %v6795
    %v6855 = vpack.c.bf16 %v6798, %v6797
    %v6856 = vpack.c.bf16 %v6800, %v6799
    %v6857 = vpack.c.bf16 %v6802, %v6801
    %v6858 = vpack.c.bf16 %v6804, %v6803
    %v6859 = vpack.c.bf16 %v6806, %v6805
    %v6860 = vpack.c.bf16 %v6808, %v6807
    %v6861 = vpack.c.bf16 %v6810, %v6809
    %v6862 = vpack.c.bf16 %v6812, %v6811
    %v6863 = vpack.c.bf16 %v6814, %v6813
    %v6864 = vpack.c.bf16 %v6816, %v6815
    %v6865 = vpack.c.bf16 %v6818, %v6817
    %v6866 = vpack.c.bf16 %v6820, %v6819
    %v6867 = vpack.c.bf16 %v6822, %v6821
    %v6868 = vpack.c.bf16 %v6824, %v6823
    %v6869 = vpack.c.bf16 %v6826, %v6825
    %v6870 = vpack.c.bf16 %v6828, %v6827
    %v6871 = vpack.c.bf16 %v6830, %v6829
    %v6872 = vpack.c.bf16 %v6832, %v6831
    %v6873 = vpack.c.bf16 %v6834, %v6833
    %v6874 = vpack.c.bf16 %v6836, %v6835
    %v6875 = vpack.c.bf16 %v6838, %v6837
    %v6876 = vpack.c.bf16 %v6840, %v6839
    %v6877 = vpack.c.bf16 %v6842, %v6841
    %v6878 = vpack.c.bf16 %v6844, %v6843
    %v6879 = vpack.c.bf16 %v6846, %v6845
    %v6880 = vpack.c.bf16 %v6848, %v6847
    %s6881 = scalar_lea.vmem %s2, 384
    %v6882 = vld [vmem:[%s6881] sm:$0xf]
    %v6883 = vld [vmem:[%s6881 + $0x4] sm:$0xf]
    %v6884 = vld [vmem:[%s6881 + $0x8] sm:$0xf]
    %v6885 = vld [vmem:[%s6881 + $0xc] sm:$0xf]
    %v6886 = vld [vmem:[%s6881 + $0x10] sm:$0xf]
    %v6887 = vld [vmem:[%s6881 + $0x14] sm:$0xf]
    %v6888 = vld [vmem:[%s6881 + $0x18] sm:$0xf]
    %v6889 = vld [vmem:[%s6881 + $0x1c] sm:$0xf]
    %v6890 = vld [vmem:[%s6881 + $0x20] sm:$0xf]
    %v6891 = vld [vmem:[%s6881 + $0x24] sm:$0xf]
    %v6892 = vld [vmem:[%s6881 + $0x28] sm:$0xf]
    %v6893 = vld [vmem:[%s6881 + $0x2c] sm:$0xf]
    %v6894 = vld [vmem:[%s6881 + $0x30] sm:$0xf]
    %v6895 = vld [vmem:[%s6881 + $0x34] sm:$0xf]
    %v6896 = vld [vmem:[%s6881 + $0x38] sm:$0xf]
    %v6897 = vld [vmem:[%s6881 + $0x3c] sm:$0xf]
    %v6898 = vld [vmem:[%s2627 + $0x1] sm:$0xff]
    %v6899 = vld [vmem:[%s2627 + $0x9] sm:$0xff]
    %v6900 = vld [vmem:[%s2627 + $0x19] sm:$0xff]
    %v6901 = vld [vmem:[%s2627 + $0x21] sm:$0xff]
    %v6902 = vld [vmem:[%s2627 + $0x31] sm:$0xff]
    %v6903 = vld [vmem:[%s2627 + $0x39] sm:$0xff]
    %v6904 = vld [vmem:[%s2627 + $0x49] sm:$0xff]
    %v6905 = vld [vmem:[%s2627 + $0x51] sm:$0xff]
    %v6906 = vld [vmem:[%s2627 + $0x61] sm:$0xff]
    %v6907 = vld [vmem:[%s2627 + $0x69] sm:$0xff]
    %v6908 = vld [vmem:[%s2627 + $0x79] sm:$0xff]
    %v6909 = vld [vmem:[%s2627 + $0x81] sm:$0xff]
    %v6910 = vld [vmem:[%s2627 + $0x91] sm:$0xff]
    %v6911 = vld [vmem:[%s2627 + $0x99] sm:$0xff]
    %v6912 = vld [vmem:[%s2627 + $0xa9] sm:$0xff]
    %v6913 = vld [vmem:[%s2627 + $0xb1] sm:$0xff]
    %v6914 = vld [vmem:[%s2627 + $0xc1] sm:$0xff]
    %v6915 = vld [vmem:[%s2627 + $0xc9] sm:$0xff]
    %v6916 = vld [vmem:[%s2627 + $0xd9] sm:$0xff]
    %v6917 = vld [vmem:[%s2627 + $0xe1] sm:$0xff]
    %v6918 = vld [vmem:[%s2627 + $0xf1] sm:$0xff]
    %v6919 = vld [vmem:[%s2627 + $0xf9] sm:$0xff]
    %v6920 = vld [vmem:[%s2627 + $0x109] sm:$0xff]
    %v6921 = vld [vmem:[%s2627 + $0x111] sm:$0xff]
    %v6922 = vld [vmem:[%s2627 + $0x121] sm:$0xff]
    %v6923 = vld [vmem:[%s2627 + $0x129] sm:$0xff]
    %v6924 = vld [vmem:[%s2627 + $0x139] sm:$0xff]
    %v6925 = vld [vmem:[%s2627 + $0x141] sm:$0xff]
    %v6926 = vld [vmem:[%s2627 + $0x151] sm:$0xff]
    %v6927 = vld [vmem:[%s2627 + $0x159] sm:$0xff]
    %v6928 = vld [vmem:[%s2627 + $0x169] sm:$0xff]
    %v6929 = vld [vmem:[%s2627 + $0x171] sm:$0xff]
    %v6930 = vld [vmem:[%s2627 + $0x1b1] sm:$0xff]
    %v6931 = vld [vmem:[%s2627 + $0x1b9] sm:$0xff]
    %v6932 = vld [vmem:[%s2627 + $0x1c9] sm:$0xff]
    %v6933 = vld [vmem:[%s2627 + $0x1d1] sm:$0xff]
    %v6934 = vld [vmem:[%s2627 + $0x1e1] sm:$0xff]
    %v6935 = vld [vmem:[%s2627 + $0x1e9] sm:$0xff]
    %v6936 = vld [vmem:[%s2627 + $0x1f9] sm:$0xff]
    %v6937 = vld [vmem:[%s2627 + $0x201] sm:$0xff]
    %v6938 = vld [vmem:[%s2627 + $0x211] sm:$0xff]
    %v6939 = vld [vmem:[%s2627 + $0x219] sm:$0xff]
    %v6940 = vld [vmem:[%s2627 + $0x229] sm:$0xff]
    %v6941 = vld [vmem:[%s2627 + $0x231] sm:$0xff]
    %v6942 = vld [vmem:[%s2627 + $0x241] sm:$0xff]
    %v6943 = vld [vmem:[%s2627 + $0x249] sm:$0xff]
    %v6944 = vld [vmem:[%s2627 + $0x259] sm:$0xff]
    %v6945 = vld [vmem:[%s2627 + $0x261] sm:$0xff]
    %v6946 = vld [vmem:[%s2627 + $0x271] sm:$0xff]
    %v6947 = vld [vmem:[%s2627 + $0x279] sm:$0xff]
    %v6948 = vld [vmem:[%s2627 + $0x289] sm:$0xff]
    %v6949 = vld [vmem:[%s2627 + $0x291] sm:$0xff]
    %v6950 = vld [vmem:[%s2627 + $0x2a1] sm:$0xff]
    %v6951 = vld [vmem:[%s2627 + $0x2a9] sm:$0xff]
    %v6952 = vld [vmem:[%s2627 + $0x2b9] sm:$0xff]
    %v6953 = vld [vmem:[%s2627 + $0x2c1] sm:$0xff]
    %v6954 = vld [vmem:[%s2627 + $0x2d1] sm:$0xff]
    %v6955 = vld [vmem:[%s2627 + $0x2d9] sm:$0xff]
    %v6956 = vld [vmem:[%s2627 + $0x2e9] sm:$0xff]
    %v6957 = vld [vmem:[%s2627 + $0x2f1] sm:$0xff]
    %v6958 = vld [vmem:[%s2627 + $0x301] sm:$0xff]
    %v6959 = vld [vmem:[%s2627 + $0x309] sm:$0xff]
    %v6960 = vld [vmem:[%s2627 + $0x319] sm:$0xff]
    %v6961 = vld [vmem:[%s2627 + $0x321] sm:$0xff]
    %v6962 = vpack.c.bf16 %v6899, %v6898
    %v6963 = vpack.c.bf16 %v6901, %v6900
    %v6964 = vpack.c.bf16 %v6903, %v6902
    %v6965 = vpack.c.bf16 %v6905, %v6904
    %v6966 = vpack.c.bf16 %v6907, %v6906
    %v6967 = vpack.c.bf16 %v6909, %v6908
    %v6968 = vpack.c.bf16 %v6911, %v6910
    %v6969 = vpack.c.bf16 %v6913, %v6912
    %v6970 = vpack.c.bf16 %v6915, %v6914
    %v6971 = vpack.c.bf16 %v6917, %v6916
    %v6972 = vpack.c.bf16 %v6919, %v6918
    %v6973 = vpack.c.bf16 %v6921, %v6920
    %v6974 = vpack.c.bf16 %v6923, %v6922
    %v6975 = vpack.c.bf16 %v6925, %v6924
    %v6976 = vpack.c.bf16 %v6927, %v6926
    %v6977 = vpack.c.bf16 %v6929, %v6928
    %v6978 = vpack.c.bf16 %v6931, %v6930
    %v6979 = vpack.c.bf16 %v6933, %v6932
    %v6980 = vpack.c.bf16 %v6935, %v6934
    %v6981 = vpack.c.bf16 %v6937, %v6936
    %v6982 = vpack.c.bf16 %v6939, %v6938
    %v6983 = vpack.c.bf16 %v6941, %v6940
    %v6984 = vpack.c.bf16 %v6943, %v6942
    %v6985 = vpack.c.bf16 %v6945, %v6944
    %v6986 = vpack.c.bf16 %v6947, %v6946
    %v6987 = vpack.c.bf16 %v6949, %v6948
    %v6988 = vpack.c.bf16 %v6951, %v6950
    %v6989 = vpack.c.bf16 %v6953, %v6952
    %v6990 = vpack.c.bf16 %v6955, %v6954
    %v6991 = vpack.c.bf16 %v6957, %v6956
    %v6992 = vpack.c.bf16 %v6959, %v6958
    %v6993 = vpack.c.bf16 %v6961, %v6960
    %s6994 = scalar_lea.vmem %s2, 448
    %v6995 = vld [vmem:[%s6994] sm:$0xf]
    %v6996 = vld [vmem:[%s6994 + $0x4] sm:$0xf]
    %v6997 = vld [vmem:[%s6994 + $0x8] sm:$0xf]
    %v6998 = vld [vmem:[%s6994 + $0xc] sm:$0xf]
    %v6999 = vld [vmem:[%s6994 + $0x10] sm:$0xf]
    %v7000 = vld [vmem:[%s6994 + $0x14] sm:$0xf]
    %v7001 = vld [vmem:[%s6994 + $0x18] sm:$0xf]
    %v7002 = vld [vmem:[%s6994 + $0x1c] sm:$0xf]
    %v7003 = vld [vmem:[%s6994 + $0x20] sm:$0xf]
    %v7004 = vld [vmem:[%s6994 + $0x24] sm:$0xf]
    %v7005 = vld [vmem:[%s6994 + $0x28] sm:$0xf]
    %v7006 = vld [vmem:[%s6994 + $0x2c] sm:$0xf]
    %v7007 = vld [vmem:[%s6994 + $0x30] sm:$0xf]
    %v7008 = vld [vmem:[%s6994 + $0x34] sm:$0xf]
    %v7009 = vld [vmem:[%s6994 + $0x38] sm:$0xf]
    %v7010 = vld [vmem:[%s6994 + $0x3c] sm:$0xf]
    %v7027 = vunpack.c.l.b16 %v6995
    %v7028 = vunpack.c.l.b16 %v6996
    %v7029 = vunpack.c.l.b16 %v6997
    %v7030 = vunpack.c.l.b16 %v6998
    %v7031 = vunpack.c.l.b16 %v6999
    %v7032 = vunpack.c.l.b16 %v7000
    %v7033 = vunpack.c.l.b16 %v7001
    %v7034 = vunpack.c.l.b16 %v7002
    %v7035 = vunpack.c.l.b16 %v7003
    %v7036 = vunpack.c.l.b16 %v7004
    %v7037 = vunpack.c.l.b16 %v7005
    %v7038 = vunpack.c.l.b16 %v7006
    %v7039 = vunpack.c.l.b16 %v7007
    %v7040 = vunpack.c.l.b16 %v7008
    %v7041 = vunpack.c.l.b16 %v7009
    %v7042 = vunpack.c.l.b16 %v7010
    %v7043 = vpack.c.b16 %v7028, %v7027
    %v7044 = vpack.c.b16 %v7030, %v7029
    %v7045 = vpack.c.b16 %v7032, %v7031
    %v7046 = vpack.c.b16 %v7034, %v7033
    %v7047 = vpack.c.b16 %v7036, %v7035
    %v7048 = vpack.c.b16 %v7038, %v7037
    %v7049 = vpack.c.b16 %v7040, %v7039
    %v7050 = vpack.c.b16 %v7042, %v7041
    %7059 = vmatpush.bf16.msra.mxu0 %v7050
    %7060 = vmatpush.bf16.msra.mxu0 %v7049
    %7061 = vmatpush.bf16.msra.mxu0 %v7048
    %7062 = vmatpush.bf16.msra.mxu0 %v7047
    %7063 = vmatpush.bf16.msra.mxu0 %v7046
    %7064 = vmatpush.bf16.msra.mxu0 %v7045
    %7065 = vmatpush.bf16.msra.mxu0 %v7044
    %7066 = vmatpush.bf16.msra.mxu0 %v7043
    %7067 = vmatmul.bf16.gmra.mxu0 %v6962
    %v7068 = vpop.f32.mrf.mxu0
    %v7069 = vadd.f32 0.0, %v7068
    %v7070 = vpop.f32.mrf.mxu0
    %v7071 = vadd.f32 0.0, %v7070
    %7072 = vmatmul.bf16.gmra.mxu0 %v6963
    %v7073 = vpop.f32.mrf.mxu0
    %v7074 = vadd.f32 0.0, %v7073
    %v7075 = vpop.f32.mrf.mxu0
    %v7076 = vadd.f32 0.0, %v7075
    %7077 = vmatmul.bf16.gmra.mxu0 %v6964
    %v7078 = vpop.f32.mrf.mxu0
    %v7079 = vadd.f32 0.0, %v7078
    %v7080 = vpop.f32.mrf.mxu0
    %v7081 = vadd.f32 0.0, %v7080
    %7082 = vmatmul.bf16.gmra.mxu0 %v6965
    %v7083 = vpop.f32.mrf.mxu0
    %v7084 = vadd.f32 0.0, %v7083
    %v7085 = vpop.f32.mrf.mxu0
    %v7086 = vadd.f32 0.0, %v7085
    %7087 = vmatmul.bf16.gmra.mxu0 %v6966
    %v7088 = vpop.f32.mrf.mxu0
    %v7089 = vadd.f32 0.0, %v7088
    %v7090 = vpop.f32.mrf.mxu0
    %v7091 = vadd.f32 0.0, %v7090
    %7092 = vmatmul.bf16.gmra.mxu0 %v6967
    %v7093 = vpop.f32.mrf.mxu0
    %v7094 = vadd.f32 0.0, %v7093
    %v7095 = vpop.f32.mrf.mxu0
    %v7096 = vadd.f32 0.0, %v7095
    %7097 = vmatmul.bf16.gmra.mxu0 %v6968
    %v7098 = vpop.f32.mrf.mxu0
    %v7099 = vadd.f32 0.0, %v7098
    %v7100 = vpop.f32.mrf.mxu0
    %v7101 = vadd.f32 0.0, %v7100
    %7102 = vmatmul.bf16.gmra.mxu0 %v6969
    %v7103 = vpop.f32.mrf.mxu0
    %v7104 = vadd.f32 0.0, %v7103
    %v7105 = vpop.f32.mrf.mxu0
    %v7106 = vadd.f32 0.0, %v7105
    %7107 = vmatmul.bf16.gmra.mxu0 %v6970
    %v7108 = vpop.f32.mrf.mxu0
    %v7109 = vadd.f32 0.0, %v7108
    %v7110 = vpop.f32.mrf.mxu0
    %v7111 = vadd.f32 0.0, %v7110
    %7112 = vmatmul.bf16.gmra.mxu0 %v6971
    %v7113 = vpop.f32.mrf.mxu0
    %v7114 = vadd.f32 0.0, %v7113
    %v7115 = vpop.f32.mrf.mxu0
    %v7116 = vadd.f32 0.0, %v7115
    %7117 = vmatmul.bf16.gmra.mxu0 %v6972
    %v7118 = vpop.f32.mrf.mxu0
    %v7119 = vadd.f32 0.0, %v7118
    %v7120 = vpop.f32.mrf.mxu0
    %v7121 = vadd.f32 0.0, %v7120
    %7122 = vmatmul.bf16.gmra.mxu0 %v6973
    %v7123 = vpop.f32.mrf.mxu0
    %v7124 = vadd.f32 0.0, %v7123
    %v7125 = vpop.f32.mrf.mxu0
    %v7126 = vadd.f32 0.0, %v7125
    %7127 = vmatmul.bf16.gmra.mxu0 %v6974
    %v7128 = vpop.f32.mrf.mxu0
    %v7129 = vadd.f32 0.0, %v7128
    %v7130 = vpop.f32.mrf.mxu0
    %v7131 = vadd.f32 0.0, %v7130
    %7132 = vmatmul.bf16.gmra.mxu0 %v6975
    %v7133 = vpop.f32.mrf.mxu0
    %v7134 = vadd.f32 0.0, %v7133
    %v7135 = vpop.f32.mrf.mxu0
    %v7136 = vadd.f32 0.0, %v7135
    %7137 = vmatmul.bf16.gmra.mxu0 %v6976
    %v7138 = vpop.f32.mrf.mxu0
    %v7139 = vadd.f32 0.0, %v7138
    %v7140 = vpop.f32.mrf.mxu0
    %v7141 = vadd.f32 0.0, %v7140
    %7142 = vmatmul.bf16.gmra.mxu0 %v6977
    %v7143 = vpop.f32.mrf.mxu0
    %v7144 = vadd.f32 0.0, %v7143
    %v7145 = vpop.f32.mrf.mxu0
    %v7146 = vadd.f32 0.0, %v7145
    %7147 = vmatmul.bf16.gmra.mxu0 %v6978
    %v7148 = vpop.f32.mrf.mxu0
    %v7149 = vadd.f32 0.0, %v7148
    %v7150 = vpop.f32.mrf.mxu0
    %v7151 = vadd.f32 0.0, %v7150
    %7152 = vmatmul.bf16.gmra.mxu0 %v6979
    %v7153 = vpop.f32.mrf.mxu0
    %v7154 = vadd.f32 0.0, %v7153
    %v7155 = vpop.f32.mrf.mxu0
    %v7156 = vadd.f32 0.0, %v7155
    %7157 = vmatmul.bf16.gmra.mxu0 %v6980
    %v7158 = vpop.f32.mrf.mxu0
    %v7159 = vadd.f32 0.0, %v7158
    %v7160 = vpop.f32.mrf.mxu0
    %v7161 = vadd.f32 0.0, %v7160
    %7162 = vmatmul.bf16.gmra.mxu0 %v6981
    %v7163 = vpop.f32.mrf.mxu0
    %v7164 = vadd.f32 0.0, %v7163
    %v7165 = vpop.f32.mrf.mxu0
    %v7166 = vadd.f32 0.0, %v7165
    %7167 = vmatmul.bf16.gmra.mxu0 %v6982
    %v7168 = vpop.f32.mrf.mxu0
    %v7169 = vadd.f32 0.0, %v7168
    %v7170 = vpop.f32.mrf.mxu0
    %v7171 = vadd.f32 0.0, %v7170
    %7172 = vmatmul.bf16.gmra.mxu0 %v6983
    %v7173 = vpop.f32.mrf.mxu0
    %v7174 = vadd.f32 0.0, %v7173
    %v7175 = vpop.f32.mrf.mxu0
    %v7176 = vadd.f32 0.0, %v7175
    %7177 = vmatmul.bf16.gmra.mxu0 %v6984
    %v7178 = vpop.f32.mrf.mxu0
    %v7179 = vadd.f32 0.0, %v7178
    %v7180 = vpop.f32.mrf.mxu0
    %v7181 = vadd.f32 0.0, %v7180
    %7182 = vmatmul.bf16.gmra.mxu0 %v6985
    %v7183 = vpop.f32.mrf.mxu0
    %v7184 = vadd.f32 0.0, %v7183
    %v7185 = vpop.f32.mrf.mxu0
    %v7186 = vadd.f32 0.0, %v7185
    %7187 = vmatmul.bf16.gmra.mxu0 %v6986
    %v7188 = vpop.f32.mrf.mxu0
    %v7189 = vadd.f32 0.0, %v7188
    %v7190 = vpop.f32.mrf.mxu0
    %v7191 = vadd.f32 0.0, %v7190
    %7192 = vmatmul.bf16.gmra.mxu0 %v6987
    %v7193 = vpop.f32.mrf.mxu0
    %v7194 = vadd.f32 0.0, %v7193
    %v7195 = vpop.f32.mrf.mxu0
    %v7196 = vadd.f32 0.0, %v7195
    %7197 = vmatmul.bf16.gmra.mxu0 %v6988
    %v7198 = vpop.f32.mrf.mxu0
    %v7199 = vadd.f32 0.0, %v7198
    %v7200 = vpop.f32.mrf.mxu0
    %v7201 = vadd.f32 0.0, %v7200
    %7202 = vmatmul.bf16.gmra.mxu0 %v6989
    %v7203 = vpop.f32.mrf.mxu0
    %v7204 = vadd.f32 0.0, %v7203
    %v7205 = vpop.f32.mrf.mxu0
    %v7206 = vadd.f32 0.0, %v7205
    %7207 = vmatmul.bf16.gmra.mxu0 %v6990
    %v7208 = vpop.f32.mrf.mxu0
    %v7209 = vadd.f32 0.0, %v7208
    %v7210 = vpop.f32.mrf.mxu0
    %v7211 = vadd.f32 0.0, %v7210
    %7212 = vmatmul.bf16.gmra.mxu0 %v6991
    %v7213 = vpop.f32.mrf.mxu0
    %v7214 = vadd.f32 0.0, %v7213
    %v7215 = vpop.f32.mrf.mxu0
    %v7216 = vadd.f32 0.0, %v7215
    %7217 = vmatmul.bf16.gmra.mxu0 %v6992
    %v7218 = vpop.f32.mrf.mxu0
    %v7219 = vadd.f32 0.0, %v7218
    %v7220 = vpop.f32.mrf.mxu0
    %v7221 = vadd.f32 0.0, %v7220
    %7222 = vmatmul.bf16.gmra.mxu0 %v6993
    %v7223 = vpop.f32.mrf.mxu0
    %v7224 = vadd.f32 0.0, %v7223
    %v7225 = vpop.f32.mrf.mxu0
    %v7226 = vadd.f32 0.0, %v7225
    %7227 = vdwg.mxu0
    %v7244 = vunpack.c.l.b16 %v6882
    %v7245 = vunpack.c.l.b16 %v6883
    %v7246 = vunpack.c.l.b16 %v6884
    %v7247 = vunpack.c.l.b16 %v6885
    %v7248 = vunpack.c.l.b16 %v6886
    %v7249 = vunpack.c.l.b16 %v6887
    %v7250 = vunpack.c.l.b16 %v6888
    %v7251 = vunpack.c.l.b16 %v6889
    %v7252 = vunpack.c.l.b16 %v6890
    %v7253 = vunpack.c.l.b16 %v6891
    %v7254 = vunpack.c.l.b16 %v6892
    %v7255 = vunpack.c.l.b16 %v6893
    %v7256 = vunpack.c.l.b16 %v6894
    %v7257 = vunpack.c.l.b16 %v6895
    %v7258 = vunpack.c.l.b16 %v6896
    %v7259 = vunpack.c.l.b16 %v6897
    %v7260 = vpack.c.b16 %v7245, %v7244
    %v7261 = vpack.c.b16 %v7247, %v7246
    %v7262 = vpack.c.b16 %v7249, %v7248
    %v7263 = vpack.c.b16 %v7251, %v7250
    %v7264 = vpack.c.b16 %v7253, %v7252
    %v7265 = vpack.c.b16 %v7255, %v7254
    %v7266 = vpack.c.b16 %v7257, %v7256
    %v7267 = vpack.c.b16 %v7259, %v7258
    %7276 = vmatpush.bf16.msra.mxu0 %v7267
    %7277 = vmatpush.bf16.msra.mxu0 %v7266
    %7278 = vmatpush.bf16.msra.mxu0 %v7265
    %7279 = vmatpush.bf16.msra.mxu0 %v7264
    %7280 = vmatpush.bf16.msra.mxu0 %v7263
    %7281 = vmatpush.bf16.msra.mxu0 %v7262
    %7282 = vmatpush.bf16.msra.mxu0 %v7261
    %7283 = vmatpush.bf16.msra.mxu0 %v7260
    %7284 = vmatmul.bf16.gmra.mxu0 %v6849
    %v7285 = vpop.f32.mrf.mxu0
    %v7286 = vadd.f32 %v7069, %v7285
    %v7287 = vpop.f32.mrf.mxu0
    %v7288 = vadd.f32 %v7071, %v7287
    %7289 = vmatmul.bf16.gmra.mxu0 %v6850
    %v7290 = vpop.f32.mrf.mxu0
    %v7291 = vadd.f32 %v7074, %v7290
    %v7292 = vpop.f32.mrf.mxu0
    %v7293 = vadd.f32 %v7076, %v7292
    %7294 = vmatmul.bf16.gmra.mxu0 %v6851
    %v7295 = vpop.f32.mrf.mxu0
    %v7296 = vadd.f32 %v7079, %v7295
    %v7297 = vpop.f32.mrf.mxu0
    %v7298 = vadd.f32 %v7081, %v7297
    %7299 = vmatmul.bf16.gmra.mxu0 %v6852
    %v7300 = vpop.f32.mrf.mxu0
    %v7301 = vadd.f32 %v7084, %v7300
    %v7302 = vpop.f32.mrf.mxu0
    %v7303 = vadd.f32 %v7086, %v7302
    %7304 = vmatmul.bf16.gmra.mxu0 %v6853
    %v7305 = vpop.f32.mrf.mxu0
    %v7306 = vadd.f32 %v7089, %v7305
    %v7307 = vpop.f32.mrf.mxu0
    %v7308 = vadd.f32 %v7091, %v7307
    %7309 = vmatmul.bf16.gmra.mxu0 %v6854
    %v7310 = vpop.f32.mrf.mxu0
    %v7311 = vadd.f32 %v7094, %v7310
    %v7312 = vpop.f32.mrf.mxu0
    %v7313 = vadd.f32 %v7096, %v7312
    %7314 = vmatmul.bf16.gmra.mxu0 %v6855
    %v7315 = vpop.f32.mrf.mxu0
    %v7316 = vadd.f32 %v7099, %v7315
    %v7317 = vpop.f32.mrf.mxu0
    %v7318 = vadd.f32 %v7101, %v7317
    %7319 = vmatmul.bf16.gmra.mxu0 %v6856
    %v7320 = vpop.f32.mrf.mxu0
    %v7321 = vadd.f32 %v7104, %v7320
    %v7322 = vpop.f32.mrf.mxu0
    %v7323 = vadd.f32 %v7106, %v7322
    %7324 = vmatmul.bf16.gmra.mxu0 %v6857
    %v7325 = vpop.f32.mrf.mxu0
    %v7326 = vadd.f32 %v7109, %v7325
    %v7327 = vpop.f32.mrf.mxu0
    %v7328 = vadd.f32 %v7111, %v7327
    %7329 = vmatmul.bf16.gmra.mxu0 %v6858
    %v7330 = vpop.f32.mrf.mxu0
    %v7331 = vadd.f32 %v7114, %v7330
    %v7332 = vpop.f32.mrf.mxu0
    %v7333 = vadd.f32 %v7116, %v7332
    %7334 = vmatmul.bf16.gmra.mxu0 %v6859
    %v7335 = vpop.f32.mrf.mxu0
    %v7336 = vadd.f32 %v7119, %v7335
    %v7337 = vpop.f32.mrf.mxu0
    %v7338 = vadd.f32 %v7121, %v7337
    %7339 = vmatmul.bf16.gmra.mxu0 %v6860
    %v7340 = vpop.f32.mrf.mxu0
    %v7341 = vadd.f32 %v7124, %v7340
    %v7342 = vpop.f32.mrf.mxu0
    %v7343 = vadd.f32 %v7126, %v7342
    %7344 = vmatmul.bf16.gmra.mxu0 %v6861
    %v7345 = vpop.f32.mrf.mxu0
    %v7346 = vadd.f32 %v7129, %v7345
    %v7347 = vpop.f32.mrf.mxu0
    %v7348 = vadd.f32 %v7131, %v7347
    %7349 = vmatmul.bf16.gmra.mxu0 %v6862
    %v7350 = vpop.f32.mrf.mxu0
    %v7351 = vadd.f32 %v7134, %v7350
    %v7352 = vpop.f32.mrf.mxu0
    %v7353 = vadd.f32 %v7136, %v7352
    %7354 = vmatmul.bf16.gmra.mxu0 %v6863
    %v7355 = vpop.f32.mrf.mxu0
    %v7356 = vadd.f32 %v7139, %v7355
    %v7357 = vpop.f32.mrf.mxu0
    %v7358 = vadd.f32 %v7141, %v7357
    %7359 = vmatmul.bf16.gmra.mxu0 %v6864
    %v7360 = vpop.f32.mrf.mxu0
    %v7361 = vadd.f32 %v7144, %v7360
    %v7362 = vpop.f32.mrf.mxu0
    %v7363 = vadd.f32 %v7146, %v7362
    %7364 = vmatmul.bf16.gmra.mxu0 %v6865
    %v7365 = vpop.f32.mrf.mxu0
    %v7366 = vadd.f32 %v7149, %v7365
    %v7367 = vpop.f32.mrf.mxu0
    %v7368 = vadd.f32 %v7151, %v7367
    %7369 = vmatmul.bf16.gmra.mxu0 %v6866
    %v7370 = vpop.f32.mrf.mxu0
    %v7371 = vadd.f32 %v7154, %v7370
    %v7372 = vpop.f32.mrf.mxu0
    %v7373 = vadd.f32 %v7156, %v7372
    %7374 = vmatmul.bf16.gmra.mxu0 %v6867
    %v7375 = vpop.f32.mrf.mxu0
    %v7376 = vadd.f32 %v7159, %v7375
    %v7377 = vpop.f32.mrf.mxu0
    %v7378 = vadd.f32 %v7161, %v7377
    %7379 = vmatmul.bf16.gmra.mxu0 %v6868
    %v7380 = vpop.f32.mrf.mxu0
    %v7381 = vadd.f32 %v7164, %v7380
    %v7382 = vpop.f32.mrf.mxu0
    %v7383 = vadd.f32 %v7166, %v7382
    %7384 = vmatmul.bf16.gmra.mxu0 %v6869
    %v7385 = vpop.f32.mrf.mxu0
    %v7386 = vadd.f32 %v7169, %v7385
    %v7387 = vpop.f32.mrf.mxu0
    %v7388 = vadd.f32 %v7171, %v7387
    %7389 = vmatmul.bf16.gmra.mxu0 %v6870
    %v7390 = vpop.f32.mrf.mxu0
    %v7391 = vadd.f32 %v7174, %v7390
    %v7392 = vpop.f32.mrf.mxu0
    %v7393 = vadd.f32 %v7176, %v7392
    %7394 = vmatmul.bf16.gmra.mxu0 %v6871
    %v7395 = vpop.f32.mrf.mxu0
    %v7396 = vadd.f32 %v7179, %v7395
    %v7397 = vpop.f32.mrf.mxu0
    %v7398 = vadd.f32 %v7181, %v7397
    %7399 = vmatmul.bf16.gmra.mxu0 %v6872
    %v7400 = vpop.f32.mrf.mxu0
    %v7401 = vadd.f32 %v7184, %v7400
    %v7402 = vpop.f32.mrf.mxu0
    %v7403 = vadd.f32 %v7186, %v7402
    %7404 = vmatmul.bf16.gmra.mxu0 %v6873
    %v7405 = vpop.f32.mrf.mxu0
    %v7406 = vadd.f32 %v7189, %v7405
    %v7407 = vpop.f32.mrf.mxu0
    %v7408 = vadd.f32 %v7191, %v7407
    %7409 = vmatmul.bf16.gmra.mxu0 %v6874
    %v7410 = vpop.f32.mrf.mxu0
    %v7411 = vadd.f32 %v7194, %v7410
    %v7412 = vpop.f32.mrf.mxu0
    %v7413 = vadd.f32 %v7196, %v7412
    %7414 = vmatmul.bf16.gmra.mxu0 %v6875
    %v7415 = vpop.f32.mrf.mxu0
    %v7416 = vadd.f32 %v7199, %v7415
    %v7417 = vpop.f32.mrf.mxu0
    %v7418 = vadd.f32 %v7201, %v7417
    %7419 = vmatmul.bf16.gmra.mxu0 %v6876
    %v7420 = vpop.f32.mrf.mxu0
    %v7421 = vadd.f32 %v7204, %v7420
    %v7422 = vpop.f32.mrf.mxu0
    %v7423 = vadd.f32 %v7206, %v7422
    %7424 = vmatmul.bf16.gmra.mxu0 %v6877
    %v7425 = vpop.f32.mrf.mxu0
    %v7426 = vadd.f32 %v7209, %v7425
    %v7427 = vpop.f32.mrf.mxu0
    %v7428 = vadd.f32 %v7211, %v7427
    %7429 = vmatmul.bf16.gmra.mxu0 %v6878
    %v7430 = vpop.f32.mrf.mxu0
    %v7431 = vadd.f32 %v7214, %v7430
    %v7432 = vpop.f32.mrf.mxu0
    %v7433 = vadd.f32 %v7216, %v7432
    %7434 = vmatmul.bf16.gmra.mxu0 %v6879
    %v7435 = vpop.f32.mrf.mxu0
    %v7436 = vadd.f32 %v7219, %v7435
    %v7437 = vpop.f32.mrf.mxu0
    %v7438 = vadd.f32 %v7221, %v7437
    %7439 = vmatmul.bf16.gmra.mxu0 %v6880
    %v7440 = vpop.f32.mrf.mxu0
    %v7441 = vadd.f32 %v7224, %v7440
    %v7442 = vpop.f32.mrf.mxu0
    %v7443 = vadd.f32 %v7226, %v7442
    %7444 = vdwg.mxu0
    %v7445 = vld [vmem:[%s2627 + $0x2] sm:$0xff]
    %v7446 = vld [vmem:[%s2627 + $0xa] sm:$0xff]
    %v7447 = vld [vmem:[%s2627 + $0x1a] sm:$0xff]
    %v7448 = vld [vmem:[%s2627 + $0x22] sm:$0xff]
    %v7449 = vld [vmem:[%s2627 + $0x32] sm:$0xff]
    %v7450 = vld [vmem:[%s2627 + $0x3a] sm:$0xff]
    %v7451 = vld [vmem:[%s2627 + $0x4a] sm:$0xff]
    %v7452 = vld [vmem:[%s2627 + $0x52] sm:$0xff]
    %v7453 = vld [vmem:[%s2627 + $0x62] sm:$0xff]
    %v7454 = vld [vmem:[%s2627 + $0x6a] sm:$0xff]
    %v7455 = vld [vmem:[%s2627 + $0x7a] sm:$0xff]
    %v7456 = vld [vmem:[%s2627 + $0x82] sm:$0xff]
    %v7457 = vld [vmem:[%s2627 + $0x92] sm:$0xff]
    %v7458 = vld [vmem:[%s2627 + $0x9a] sm:$0xff]
    %v7459 = vld [vmem:[%s2627 + $0xaa] sm:$0xff]
    %v7460 = vld [vmem:[%s2627 + $0xb2] sm:$0xff]
    %v7461 = vld [vmem:[%s2627 + $0xc2] sm:$0xff]
    %v7462 = vld [vmem:[%s2627 + $0xca] sm:$0xff]
    %v7463 = vld [vmem:[%s2627 + $0xda] sm:$0xff]
    %v7464 = vld [vmem:[%s2627 + $0xe2] sm:$0xff]
    %v7465 = vld [vmem:[%s2627 + $0xf2] sm:$0xff]
    %v7466 = vld [vmem:[%s2627 + $0xfa] sm:$0xff]
    %v7467 = vld [vmem:[%s2627 + $0x10a] sm:$0xff]
    %v7468 = vld [vmem:[%s2627 + $0x112] sm:$0xff]
    %v7469 = vld [vmem:[%s2627 + $0x122] sm:$0xff]
    %v7470 = vld [vmem:[%s2627 + $0x12a] sm:$0xff]
    %v7471 = vld [vmem:[%s2627 + $0x13a] sm:$0xff]
    %v7472 = vld [vmem:[%s2627 + $0x142] sm:$0xff]
    %v7473 = vld [vmem:[%s2627 + $0x152] sm:$0xff]
    %v7474 = vld [vmem:[%s2627 + $0x15a] sm:$0xff]
    %v7475 = vld [vmem:[%s2627 + $0x16a] sm:$0xff]
    %v7476 = vld [vmem:[%s2627 + $0x172] sm:$0xff]
    %v7477 = vld [vmem:[%s2627 + $0x1b2] sm:$0xff]
    %v7478 = vld [vmem:[%s2627 + $0x1ba] sm:$0xff]
    %v7479 = vld [vmem:[%s2627 + $0x1ca] sm:$0xff]
    %v7480 = vld [vmem:[%s2627 + $0x1d2] sm:$0xff]
    %v7481 = vld [vmem:[%s2627 + $0x1e2] sm:$0xff]
    %v7482 = vld [vmem:[%s2627 + $0x1ea] sm:$0xff]
    %v7483 = vld [vmem:[%s2627 + $0x1fa] sm:$0xff]
    %v7484 = vld [vmem:[%s2627 + $0x202] sm:$0xff]
    %v7485 = vld [vmem:[%s2627 + $0x212] sm:$0xff]
    %v7486 = vld [vmem:[%s2627 + $0x21a] sm:$0xff]
    %v7487 = vld [vmem:[%s2627 + $0x22a] sm:$0xff]
    %v7488 = vld [vmem:[%s2627 + $0x232] sm:$0xff]
    %v7489 = vld [vmem:[%s2627 + $0x242] sm:$0xff]
    %v7490 = vld [vmem:[%s2627 + $0x24a] sm:$0xff]
    %v7491 = vld [vmem:[%s2627 + $0x25a] sm:$0xff]
    %v7492 = vld [vmem:[%s2627 + $0x262] sm:$0xff]
    %v7493 = vld [vmem:[%s2627 + $0x272] sm:$0xff]
    %v7494 = vld [vmem:[%s2627 + $0x27a] sm:$0xff]
    %v7495 = vld [vmem:[%s2627 + $0x28a] sm:$0xff]
    %v7496 = vld [vmem:[%s2627 + $0x292] sm:$0xff]
    %v7497 = vld [vmem:[%s2627 + $0x2a2] sm:$0xff]
    %v7498 = vld [vmem:[%s2627 + $0x2aa] sm:$0xff]
    %v7499 = vld [vmem:[%s2627 + $0x2ba] sm:$0xff]
    %v7500 = vld [vmem:[%s2627 + $0x2c2] sm:$0xff]
    %v7501 = vld [vmem:[%s2627 + $0x2d2] sm:$0xff]
    %v7502 = vld [vmem:[%s2627 + $0x2da] sm:$0xff]
    %v7503 = vld [vmem:[%s2627 + $0x2ea] sm:$0xff]
    %v7504 = vld [vmem:[%s2627 + $0x2f2] sm:$0xff]
    %v7505 = vld [vmem:[%s2627 + $0x302] sm:$0xff]
    %v7506 = vld [vmem:[%s2627 + $0x30a] sm:$0xff]
    %v7507 = vld [vmem:[%s2627 + $0x31a] sm:$0xff]
    %v7508 = vld [vmem:[%s2627 + $0x322] sm:$0xff]
    %v7509 = vpack.c.bf16 %v7446, %v7445
    %v7510 = vpack.c.bf16 %v7448, %v7447
    %v7511 = vpack.c.bf16 %v7450, %v7449
    %v7512 = vpack.c.bf16 %v7452, %v7451
    %v7513 = vpack.c.bf16 %v7454, %v7453
    %v7514 = vpack.c.bf16 %v7456, %v7455
    %v7515 = vpack.c.bf16 %v7458, %v7457
    %v7516 = vpack.c.bf16 %v7460, %v7459
    %v7517 = vpack.c.bf16 %v7462, %v7461
    %v7518 = vpack.c.bf16 %v7464, %v7463
    %v7519 = vpack.c.bf16 %v7466, %v7465
    %v7520 = vpack.c.bf16 %v7468, %v7467
    %v7521 = vpack.c.bf16 %v7470, %v7469
    %v7522 = vpack.c.bf16 %v7472, %v7471
    %v7523 = vpack.c.bf16 %v7474, %v7473
    %v7524 = vpack.c.bf16 %v7476, %v7475
    %v7525 = vpack.c.bf16 %v7478, %v7477
    %v7526 = vpack.c.bf16 %v7480, %v7479
    %v7527 = vpack.c.bf16 %v7482, %v7481
    %v7528 = vpack.c.bf16 %v7484, %v7483
    %v7529 = vpack.c.bf16 %v7486, %v7485
    %v7530 = vpack.c.bf16 %v7488, %v7487
    %v7531 = vpack.c.bf16 %v7490, %v7489
    %v7532 = vpack.c.bf16 %v7492, %v7491
    %v7533 = vpack.c.bf16 %v7494, %v7493
    %v7534 = vpack.c.bf16 %v7496, %v7495
    %v7535 = vpack.c.bf16 %v7498, %v7497
    %v7536 = vpack.c.bf16 %v7500, %v7499
    %v7537 = vpack.c.bf16 %v7502, %v7501
    %v7538 = vpack.c.bf16 %v7504, %v7503
    %v7539 = vpack.c.bf16 %v7506, %v7505
    %v7540 = vpack.c.bf16 %v7508, %v7507
    %s7541 = scalar_lea.vmem %s2, 512
    %v7542 = vld [vmem:[%s7541] sm:$0xf]
    %v7543 = vld [vmem:[%s7541 + $0x4] sm:$0xf]
    %v7544 = vld [vmem:[%s7541 + $0x8] sm:$0xf]
    %v7545 = vld [vmem:[%s7541 + $0xc] sm:$0xf]
    %v7546 = vld [vmem:[%s7541 + $0x10] sm:$0xf]
    %v7547 = vld [vmem:[%s7541 + $0x14] sm:$0xf]
    %v7548 = vld [vmem:[%s7541 + $0x18] sm:$0xf]
    %v7549 = vld [vmem:[%s7541 + $0x1c] sm:$0xf]
    %v7550 = vld [vmem:[%s7541 + $0x20] sm:$0xf]
    %v7551 = vld [vmem:[%s7541 + $0x24] sm:$0xf]
    %v7552 = vld [vmem:[%s7541 + $0x28] sm:$0xf]
    %v7553 = vld [vmem:[%s7541 + $0x2c] sm:$0xf]
    %v7554 = vld [vmem:[%s7541 + $0x30] sm:$0xf]
    %v7555 = vld [vmem:[%s7541 + $0x34] sm:$0xf]
    %v7556 = vld [vmem:[%s7541 + $0x38] sm:$0xf]
    %v7557 = vld [vmem:[%s7541 + $0x3c] sm:$0xf]
    %v7574 = vunpack.c.l.b16 %v7542
    %v7575 = vunpack.c.l.b16 %v7543
    %v7576 = vunpack.c.l.b16 %v7544
    %v7577 = vunpack.c.l.b16 %v7545
    %v7578 = vunpack.c.l.b16 %v7546
    %v7579 = vunpack.c.l.b16 %v7547
    %v7580 = vunpack.c.l.b16 %v7548
    %v7581 = vunpack.c.l.b16 %v7549
    %v7582 = vunpack.c.l.b16 %v7550
    %v7583 = vunpack.c.l.b16 %v7551
    %v7584 = vunpack.c.l.b16 %v7552
    %v7585 = vunpack.c.l.b16 %v7553
    %v7586 = vunpack.c.l.b16 %v7554
    %v7587 = vunpack.c.l.b16 %v7555
    %v7588 = vunpack.c.l.b16 %v7556
    %v7589 = vunpack.c.l.b16 %v7557
    %v7590 = vpack.c.b16 %v7575, %v7574
    %v7591 = vpack.c.b16 %v7577, %v7576
    %v7592 = vpack.c.b16 %v7579, %v7578
    %v7593 = vpack.c.b16 %v7581, %v7580
    %v7594 = vpack.c.b16 %v7583, %v7582
    %v7595 = vpack.c.b16 %v7585, %v7584
    %v7596 = vpack.c.b16 %v7587, %v7586
    %v7597 = vpack.c.b16 %v7589, %v7588
    %7606 = vmatpush.bf16.msra.mxu0 %v7597
    %7607 = vmatpush.bf16.msra.mxu0 %v7596
    %7608 = vmatpush.bf16.msra.mxu0 %v7595
    %7609 = vmatpush.bf16.msra.mxu0 %v7594
    %7610 = vmatpush.bf16.msra.mxu0 %v7593
    %7611 = vmatpush.bf16.msra.mxu0 %v7592
    %7612 = vmatpush.bf16.msra.mxu0 %v7591
    %7613 = vmatpush.bf16.msra.mxu0 %v7590
    %7614 = vmatmul.bf16.gmra.mxu0 %v7509
    %v7615 = vpop.f32.mrf.mxu0
    %v7616 = vadd.f32 0.0, %v7615
    %v7617 = vpop.f32.mrf.mxu0
    %v7618 = vadd.f32 0.0, %v7617
    %7619 = vmatmul.bf16.gmra.mxu0 %v7510
    %v7620 = vpop.f32.mrf.mxu0
    %v7621 = vadd.f32 0.0, %v7620
    %v7622 = vpop.f32.mrf.mxu0
    %v7623 = vadd.f32 0.0, %v7622
    %7624 = vmatmul.bf16.gmra.mxu0 %v7511
    %v7625 = vpop.f32.mrf.mxu0
    %v7626 = vadd.f32 0.0, %v7625
    %v7627 = vpop.f32.mrf.mxu0
    %v7628 = vadd.f32 0.0, %v7627
    %7629 = vmatmul.bf16.gmra.mxu0 %v7512
    %v7630 = vpop.f32.mrf.mxu0
    %v7631 = vadd.f32 0.0, %v7630
    %v7632 = vpop.f32.mrf.mxu0
    %v7633 = vadd.f32 0.0, %v7632
    %7634 = vmatmul.bf16.gmra.mxu0 %v7513
    %v7635 = vpop.f32.mrf.mxu0
    %v7636 = vadd.f32 0.0, %v7635
    %v7637 = vpop.f32.mrf.mxu0
    %v7638 = vadd.f32 0.0, %v7637
    %7639 = vmatmul.bf16.gmra.mxu0 %v7514
    %v7640 = vpop.f32.mrf.mxu0
    %v7641 = vadd.f32 0.0, %v7640
    %v7642 = vpop.f32.mrf.mxu0
    %v7643 = vadd.f32 0.0, %v7642
    %7644 = vmatmul.bf16.gmra.mxu0 %v7515
    %v7645 = vpop.f32.mrf.mxu0
    %v7646 = vadd.f32 0.0, %v7645
    %v7647 = vpop.f32.mrf.mxu0
    %v7648 = vadd.f32 0.0, %v7647
    %7649 = vmatmul.bf16.gmra.mxu0 %v7516
    %v7650 = vpop.f32.mrf.mxu0
    %v7651 = vadd.f32 0.0, %v7650
    %v7652 = vpop.f32.mrf.mxu0
    %v7653 = vadd.f32 0.0, %v7652
    %7654 = vmatmul.bf16.gmra.mxu0 %v7517
    %v7655 = vpop.f32.mrf.mxu0
    %v7656 = vadd.f32 0.0, %v7655
    %v7657 = vpop.f32.mrf.mxu0
    %v7658 = vadd.f32 0.0, %v7657
    %7659 = vmatmul.bf16.gmra.mxu0 %v7518
    %v7660 = vpop.f32.mrf.mxu0
    %v7661 = vadd.f32 0.0, %v7660
    %v7662 = vpop.f32.mrf.mxu0
    %v7663 = vadd.f32 0.0, %v7662
    %7664 = vmatmul.bf16.gmra.mxu0 %v7519
    %v7665 = vpop.f32.mrf.mxu0
    %v7666 = vadd.f32 0.0, %v7665
    %v7667 = vpop.f32.mrf.mxu0
    %v7668 = vadd.f32 0.0, %v7667
    %7669 = vmatmul.bf16.gmra.mxu0 %v7520
    %v7670 = vpop.f32.mrf.mxu0
    %v7671 = vadd.f32 0.0, %v7670
    %v7672 = vpop.f32.mrf.mxu0
    %v7673 = vadd.f32 0.0, %v7672
    %7674 = vmatmul.bf16.gmra.mxu0 %v7521
    %v7675 = vpop.f32.mrf.mxu0
    %v7676 = vadd.f32 0.0, %v7675
    %v7677 = vpop.f32.mrf.mxu0
    %v7678 = vadd.f32 0.0, %v7677
    %7679 = vmatmul.bf16.gmra.mxu0 %v7522
    %v7680 = vpop.f32.mrf.mxu0
    %v7681 = vadd.f32 0.0, %v7680
    %v7682 = vpop.f32.mrf.mxu0
    %v7683 = vadd.f32 0.0, %v7682
    %7684 = vmatmul.bf16.gmra.mxu0 %v7523
    %v7685 = vpop.f32.mrf.mxu0
    %v7686 = vadd.f32 0.0, %v7685
    %v7687 = vpop.f32.mrf.mxu0
    %v7688 = vadd.f32 0.0, %v7687
    %7689 = vmatmul.bf16.gmra.mxu0 %v7524
    %v7690 = vpop.f32.mrf.mxu0
    %v7691 = vadd.f32 0.0, %v7690
    %v7692 = vpop.f32.mrf.mxu0
    %v7693 = vadd.f32 0.0, %v7692
    %7694 = vmatmul.bf16.gmra.mxu0 %v7525
    %v7695 = vpop.f32.mrf.mxu0
    %v7696 = vadd.f32 0.0, %v7695
    %v7697 = vpop.f32.mrf.mxu0
    %v7698 = vadd.f32 0.0, %v7697
    %7699 = vmatmul.bf16.gmra.mxu0 %v7526
    %v7700 = vpop.f32.mrf.mxu0
    %v7701 = vadd.f32 0.0, %v7700
    %v7702 = vpop.f32.mrf.mxu0
    %v7703 = vadd.f32 0.0, %v7702
    %7704 = vmatmul.bf16.gmra.mxu0 %v7527
    %v7705 = vpop.f32.mrf.mxu0
    %v7706 = vadd.f32 0.0, %v7705
    %v7707 = vpop.f32.mrf.mxu0
    %v7708 = vadd.f32 0.0, %v7707
    %7709 = vmatmul.bf16.gmra.mxu0 %v7528
    %v7710 = vpop.f32.mrf.mxu0
    %v7711 = vadd.f32 0.0, %v7710
    %v7712 = vpop.f32.mrf.mxu0
    %v7713 = vadd.f32 0.0, %v7712
    %7714 = vmatmul.bf16.gmra.mxu0 %v7529
    %v7715 = vpop.f32.mrf.mxu0
    %v7716 = vadd.f32 0.0, %v7715
    %v7717 = vpop.f32.mrf.mxu0
    %v7718 = vadd.f32 0.0, %v7717
    %7719 = vmatmul.bf16.gmra.mxu0 %v7530
    %v7720 = vpop.f32.mrf.mxu0
    %v7721 = vadd.f32 0.0, %v7720
    %v7722 = vpop.f32.mrf.mxu0
    %v7723 = vadd.f32 0.0, %v7722
    %7724 = vmatmul.bf16.gmra.mxu0 %v7531
    %v7725 = vpop.f32.mrf.mxu0
    %v7726 = vadd.f32 0.0, %v7725
    %v7727 = vpop.f32.mrf.mxu0
    %v7728 = vadd.f32 0.0, %v7727
    %7729 = vmatmul.bf16.gmra.mxu0 %v7532
    %v7730 = vpop.f32.mrf.mxu0
    %v7731 = vadd.f32 0.0, %v7730
    %v7732 = vpop.f32.mrf.mxu0
    %v7733 = vadd.f32 0.0, %v7732
    %7734 = vmatmul.bf16.gmra.mxu0 %v7533
    %v7735 = vpop.f32.mrf.mxu0
    %v7736 = vadd.f32 0.0, %v7735
    %v7737 = vpop.f32.mrf.mxu0
    %v7738 = vadd.f32 0.0, %v7737
    %7739 = vmatmul.bf16.gmra.mxu0 %v7534
    %v7740 = vpop.f32.mrf.mxu0
    %v7741 = vadd.f32 0.0, %v7740
    %v7742 = vpop.f32.mrf.mxu0
    %v7743 = vadd.f32 0.0, %v7742
    %7744 = vmatmul.bf16.gmra.mxu0 %v7535
    %v7745 = vpop.f32.mrf.mxu0
    %v7746 = vadd.f32 0.0, %v7745
    %v7747 = vpop.f32.mrf.mxu0
    %v7748 = vadd.f32 0.0, %v7747
    %7749 = vmatmul.bf16.gmra.mxu0 %v7536
    %v7750 = vpop.f32.mrf.mxu0
    %v7751 = vadd.f32 0.0, %v7750
    %v7752 = vpop.f32.mrf.mxu0
    %v7753 = vadd.f32 0.0, %v7752
    %7754 = vmatmul.bf16.gmra.mxu0 %v7537
    %v7755 = vpop.f32.mrf.mxu0
    %v7756 = vadd.f32 0.0, %v7755
    %v7757 = vpop.f32.mrf.mxu0
    %v7758 = vadd.f32 0.0, %v7757
    %7759 = vmatmul.bf16.gmra.mxu0 %v7538
    %v7760 = vpop.f32.mrf.mxu0
    %v7761 = vadd.f32 0.0, %v7760
    %v7762 = vpop.f32.mrf.mxu0
    %v7763 = vadd.f32 0.0, %v7762
    %7764 = vmatmul.bf16.gmra.mxu0 %v7539
    %v7765 = vpop.f32.mrf.mxu0
    %v7766 = vadd.f32 0.0, %v7765
    %v7767 = vpop.f32.mrf.mxu0
    %v7768 = vadd.f32 0.0, %v7767
    %7769 = vmatmul.bf16.gmra.mxu0 %v7540
    %v7770 = vpop.f32.mrf.mxu0
    %v7771 = vadd.f32 0.0, %v7770
    %v7772 = vpop.f32.mrf.mxu0
    %v7773 = vadd.f32 0.0, %v7772
    %7774 = vdwg.mxu0
    %v7775 = vadd.f32 %v7286, %v7616
    %v7776 = vadd.f32 %v7288, %v7618
    %v7777 = vadd.f32 %v7291, %v7621
    %v7778 = vadd.f32 %v7293, %v7623
    %v7779 = vadd.f32 %v7296, %v7626
    %v7780 = vadd.f32 %v7298, %v7628
    %v7781 = vadd.f32 %v7301, %v7631
    %v7782 = vadd.f32 %v7303, %v7633
    %v7783 = vadd.f32 %v7306, %v7636
    %v7784 = vadd.f32 %v7308, %v7638
    %v7785 = vadd.f32 %v7311, %v7641
    %v7786 = vadd.f32 %v7313, %v7643
    %v7787 = vadd.f32 %v7316, %v7646
    %v7788 = vadd.f32 %v7318, %v7648
    %v7789 = vadd.f32 %v7321, %v7651
    %v7790 = vadd.f32 %v7323, %v7653
    %v7791 = vadd.f32 %v7326, %v7656
    %v7792 = vadd.f32 %v7328, %v7658
    %v7793 = vadd.f32 %v7331, %v7661
    %v7794 = vadd.f32 %v7333, %v7663
    %v7795 = vadd.f32 %v7336, %v7666
    %v7796 = vadd.f32 %v7338, %v7668
    %v7797 = vadd.f32 %v7341, %v7671
    %v7798 = vadd.f32 %v7343, %v7673
    %v7799 = vadd.f32 %v7346, %v7676
    %v7800 = vadd.f32 %v7348, %v7678
    %v7801 = vadd.f32 %v7351, %v7681
    %v7802 = vadd.f32 %v7353, %v7683
    %v7803 = vadd.f32 %v7356, %v7686
    %v7804 = vadd.f32 %v7358, %v7688
    %v7805 = vadd.f32 %v7361, %v7691
    %v7806 = vadd.f32 %v7363, %v7693
    %v7807 = vadd.f32 %v7366, %v7696
    %v7808 = vadd.f32 %v7368, %v7698
    %v7809 = vadd.f32 %v7371, %v7701
    %v7810 = vadd.f32 %v7373, %v7703
    %v7811 = vadd.f32 %v7376, %v7706
    %v7812 = vadd.f32 %v7378, %v7708
    %v7813 = vadd.f32 %v7381, %v7711
    %v7814 = vadd.f32 %v7383, %v7713
    %v7815 = vadd.f32 %v7386, %v7716
    %v7816 = vadd.f32 %v7388, %v7718
    %v7817 = vadd.f32 %v7391, %v7721
    %v7818 = vadd.f32 %v7393, %v7723
    %v7819 = vadd.f32 %v7396, %v7726
    %v7820 = vadd.f32 %v7398, %v7728
    %v7821 = vadd.f32 %v7401, %v7731
    %v7822 = vadd.f32 %v7403, %v7733
    %v7823 = vadd.f32 %v7406, %v7736
    %v7824 = vadd.f32 %v7408, %v7738
    %v7825 = vadd.f32 %v7411, %v7741
    %v7826 = vadd.f32 %v7413, %v7743
    %v7827 = vadd.f32 %v7416, %v7746
    %v7828 = vadd.f32 %v7418, %v7748
    %v7829 = vadd.f32 %v7421, %v7751
    %v7830 = vadd.f32 %v7423, %v7753
    %v7831 = vadd.f32 %v7426, %v7756
    %v7832 = vadd.f32 %v7428, %v7758
    %v7833 = vadd.f32 %v7431, %v7761
    %v7834 = vadd.f32 %v7433, %v7763
    %v7835 = vadd.f32 %v7436, %v7766
    %v7836 = vadd.f32 %v7438, %v7768
    %v7837 = vadd.f32 %v7441, %v7771
    %v7838 = vadd.f32 %v7443, %v7773
    %v7839 = vld [vmem:[#allocation3] sm:$0xff]
    %v7840 = vld [vmem:[#allocation3 + $0x8] sm:$0xff]
    %v7841 = vld [vmem:[#allocation3 + $0x10] sm:$0xff]
    %v7842 = vld [vmem:[#allocation3 + $0x18] sm:$0xff]
    %v7843 = vld [vmem:[#allocation3 + $0x20] sm:$0xff]
    %v7844 = vld [vmem:[#allocation3 + $0x28] sm:$0xff]
    %v7845 = vld [vmem:[#allocation3 + $0x30] sm:$0xff]
    %v7846 = vld [vmem:[#allocation3 + $0x38] sm:$0xff]
    %v7847 = vld [vmem:[#allocation3 + $0x40] sm:$0xff]
    %v7848 = vld [vmem:[#allocation3 + $0x48] sm:$0xff]
    %v7849 = vld [vmem:[#allocation3 + $0x50] sm:$0xff]
    %v7850 = vld [vmem:[#allocation3 + $0x58] sm:$0xff]
    %v7851 = vld [vmem:[#allocation3 + $0x60] sm:$0xff]
    %v7852 = vld [vmem:[#allocation3 + $0x68] sm:$0xff]
    %v7853 = vld [vmem:[#allocation3 + $0x70] sm:$0xff]
    %v7854 = vld [vmem:[#allocation3 + $0x78] sm:$0xff]
    %v7855 = vld [vmem:[#allocation3 + $0x80] sm:$0xff]
    %v7856 = vld [vmem:[#allocation3 + $0x88] sm:$0xff]
    %v7857 = vld [vmem:[#allocation3 + $0x90] sm:$0xff]
    %v7858 = vld [vmem:[#allocation3 + $0x98] sm:$0xff]
    %v7859 = vld [vmem:[#allocation3 + $0xa0] sm:$0xff]
    %v7860 = vld [vmem:[#allocation3 + $0xa8] sm:$0xff]
    %v7861 = vld [vmem:[#allocation3 + $0xb0] sm:$0xff]
    %v7862 = vld [vmem:[#allocation3 + $0xb8] sm:$0xff]
    %v7863 = vld [vmem:[#allocation3 + $0xc0] sm:$0xff]
    %v7864 = vld [vmem:[#allocation3 + $0xc8] sm:$0xff]
    %v7865 = vld [vmem:[#allocation3 + $0xd0] sm:$0xff]
    %v7866 = vld [vmem:[#allocation3 + $0xd8] sm:$0xff]
    %v7867 = vld [vmem:[#allocation3 + $0xe0] sm:$0xff]
    %v7868 = vld [vmem:[#allocation3 + $0xe8] sm:$0xff]
    %v7869 = vld [vmem:[#allocation3 + $0xf0] sm:$0xff]
    %v7870 = vld [vmem:[#allocation3 + $0xf8] sm:$0xff]
    %v7871 = vld [vmem:[#allocation3 + $0x100] sm:$0xff]
    %v7872 = vld [vmem:[#allocation3 + $0x108] sm:$0xff]
    %v7873 = vld [vmem:[#allocation3 + $0x110] sm:$0xff]
    %v7874 = vld [vmem:[#allocation3 + $0x118] sm:$0xff]
    %v7875 = vld [vmem:[#allocation3 + $0x120] sm:$0xff]
    %v7876 = vld [vmem:[#allocation3 + $0x128] sm:$0xff]
    %v7877 = vld [vmem:[#allocation3 + $0x130] sm:$0xff]
    %v7878 = vld [vmem:[#allocation3 + $0x138] sm:$0xff]
    %v7879 = vld [vmem:[#allocation3 + $0x140] sm:$0xff]
    %v7880 = vld [vmem:[#allocation3 + $0x148] sm:$0xff]
    %v7881 = vld [vmem:[#allocation3 + $0x150] sm:$0xff]
    %v7882 = vld [vmem:[#allocation3 + $0x158] sm:$0xff]
    %v7883 = vld [vmem:[#allocation3 + $0x160] sm:$0xff]
    %v7884 = vld [vmem:[#allocation3 + $0x168] sm:$0xff]
    %v7885 = vld [vmem:[#allocation3 + $0x170] sm:$0xff]
    %v7886 = vld [vmem:[#allocation3 + $0x178] sm:$0xff]
    %v7887 = vld [vmem:[#allocation3 + $0x180] sm:$0xff]
    %v7888 = vld [vmem:[#allocation3 + $0x188] sm:$0xff]
    %v7889 = vld [vmem:[#allocation3 + $0x190] sm:$0xff]
    %v7890 = vld [vmem:[#allocation3 + $0x198] sm:$0xff]
    %v7891 = vld [vmem:[#allocation3 + $0x1a0] sm:$0xff]
    %v7892 = vld [vmem:[#allocation3 + $0x1a8] sm:$0xff]
    %v7893 = vld [vmem:[#allocation3 + $0x1b0] sm:$0xff]
    %v7894 = vld [vmem:[#allocation3 + $0x1b8] sm:$0xff]
    %v7895 = vld [vmem:[#allocation3 + $0x1c0] sm:$0xff]
    %v7896 = vld [vmem:[#allocation3 + $0x1c8] sm:$0xff]
    %v7897 = vld [vmem:[#allocation3 + $0x1d0] sm:$0xff]
    %v7898 = vld [vmem:[#allocation3 + $0x1d8] sm:$0xff]
    %v7899 = vld [vmem:[#allocation3 + $0x1e0] sm:$0xff]
    %v7900 = vld [vmem:[#allocation3 + $0x1e8] sm:$0xff]
    %v7901 = vld [vmem:[#allocation3 + $0x1f0] sm:$0xff]
    %v7902 = vld [vmem:[#allocation3 + $0x1f8] sm:$0xff]
    %v7903 = vadd.f32 %v7839, %v7775
    %v7904 = vadd.f32 %v7840, %v7776
    %v7905 = vadd.f32 %v7841, %v7777
    %v7906 = vadd.f32 %v7842, %v7778
    %v7907 = vadd.f32 %v7843, %v7779
    %v7908 = vadd.f32 %v7844, %v7780
    %v7909 = vadd.f32 %v7845, %v7781
    %v7910 = vadd.f32 %v7846, %v7782
    %v7911 = vadd.f32 %v7847, %v7783
    %v7912 = vadd.f32 %v7848, %v7784
    %v7913 = vadd.f32 %v7849, %v7785
    %v7914 = vadd.f32 %v7850, %v7786
    %v7915 = vadd.f32 %v7851, %v7787
    %v7916 = vadd.f32 %v7852, %v7788
    %v7917 = vadd.f32 %v7853, %v7789
    %v7918 = vadd.f32 %v7854, %v7790
    %v7919 = vadd.f32 %v7855, %v7791
    %v7920 = vadd.f32 %v7856, %v7792
    %v7921 = vadd.f32 %v7857, %v7793
    %v7922 = vadd.f32 %v7858, %v7794
    %v7923 = vadd.f32 %v7859, %v7795
    %v7924 = vadd.f32 %v7860, %v7796
    %v7925 = vadd.f32 %v7861, %v7797
    %v7926 = vadd.f32 %v7862, %v7798
    %v7927 = vadd.f32 %v7863, %v7799
    %v7928 = vadd.f32 %v7864, %v7800
    %v7929 = vadd.f32 %v7865, %v7801
    %v7930 = vadd.f32 %v7866, %v7802
    %v7931 = vadd.f32 %v7867, %v7803
    %v7932 = vadd.f32 %v7868, %v7804
    %v7933 = vadd.f32 %v7869, %v7805
    %v7934 = vadd.f32 %v7870, %v7806
    %v7935 = vadd.f32 %v7871, %v7807
    %v7936 = vadd.f32 %v7872, %v7808
    %v7937 = vadd.f32 %v7873, %v7809
    %v7938 = vadd.f32 %v7874, %v7810
    %v7939 = vadd.f32 %v7875, %v7811
    %v7940 = vadd.f32 %v7876, %v7812
    %v7941 = vadd.f32 %v7877, %v7813
    %v7942 = vadd.f32 %v7878, %v7814
    %v7943 = vadd.f32 %v7879, %v7815
    %v7944 = vadd.f32 %v7880, %v7816
    %v7945 = vadd.f32 %v7881, %v7817
    %v7946 = vadd.f32 %v7882, %v7818
    %v7947 = vadd.f32 %v7883, %v7819
    %v7948 = vadd.f32 %v7884, %v7820
    %v7949 = vadd.f32 %v7885, %v7821
    %v7950 = vadd.f32 %v7886, %v7822
    %v7951 = vadd.f32 %v7887, %v7823
    %v7952 = vadd.f32 %v7888, %v7824
    %v7953 = vadd.f32 %v7889, %v7825
    %v7954 = vadd.f32 %v7890, %v7826
    %v7955 = vadd.f32 %v7891, %v7827
    %v7956 = vadd.f32 %v7892, %v7828
    %v7957 = vadd.f32 %v7893, %v7829
    %v7958 = vadd.f32 %v7894, %v7830
    %v7959 = vadd.f32 %v7895, %v7831
    %v7960 = vadd.f32 %v7896, %v7832
    %v7961 = vadd.f32 %v7897, %v7833
    %v7962 = vadd.f32 %v7898, %v7834
    %v7963 = vadd.f32 %v7899, %v7835
    %v7964 = vadd.f32 %v7900, %v7836
    %v7965 = vadd.f32 %v7901, %v7837
    %v7966 = vadd.f32 %v7902, %v7838
    %7967 = vst [vmem:[#allocation3] sm:$0xff] %v7903
    %7968 = vst [vmem:[#allocation3 + $0x8] sm:$0xff] %v7904
    %7969 = vst [vmem:[#allocation3 + $0x10] sm:$0xff] %v7905
    %7970 = vst [vmem:[#allocation3 + $0x18] sm:$0xff] %v7906
    %7971 = vst [vmem:[#allocation3 + $0x20] sm:$0xff] %v7907
    %7972 = vst [vmem:[#allocation3 + $0x28] sm:$0xff] %v7908
    %7973 = vst [vmem:[#allocation3 + $0x30] sm:$0xff] %v7909
    %7974 = vst [vmem:[#allocation3 + $0x38] sm:$0xff] %v7910
    %7975 = vst [vmem:[#allocation3 + $0x40] sm:$0xff] %v7911
    %7976 = vst [vmem:[#allocation3 + $0x48] sm:$0xff] %v7912
    %7977 = vst [vmem:[#allocation3 + $0x50] sm:$0xff] %v7913
    %7978 = vst [vmem:[#allocation3 + $0x58] sm:$0xff] %v7914
    %7979 = vst [vmem:[#allocation3 + $0x60] sm:$0xff] %v7915
    %7980 = vst [vmem:[#allocation3 + $0x68] sm:$0xff] %v7916
    %7981 = vst [vmem:[#allocation3 + $0x70] sm:$0xff] %v7917
    %7982 = vst [vmem:[#allocation3 + $0x78] sm:$0xff] %v7918
    %7983 = vst [vmem:[#allocation3 + $0x80] sm:$0xff] %v7919
    %7984 = vst [vmem:[#allocation3 + $0x88] sm:$0xff] %v7920
    %7985 = vst [vmem:[#allocation3 + $0x90] sm:$0xff] %v7921
    %7986 = vst [vmem:[#allocation3 + $0x98] sm:$0xff] %v7922
    %7987 = vst [vmem:[#allocation3 + $0xa0] sm:$0xff] %v7923
    %7988 = vst [vmem:[#allocation3 + $0xa8] sm:$0xff] %v7924
    %7989 = vst [vmem:[#allocation3 + $0xb0] sm:$0xff] %v7925
    %7990 = vst [vmem:[#allocation3 + $0xb8] sm:$0xff] %v7926
    %7991 = vst [vmem:[#allocation3 + $0xc0] sm:$0xff] %v7927
    %7992 = vst [vmem:[#allocation3 + $0xc8] sm:$0xff] %v7928
    %7993 = vst [vmem:[#allocation3 + $0xd0] sm:$0xff] %v7929
    %7994 = vst [vmem:[#allocation3 + $0xd8] sm:$0xff] %v7930
    %7995 = vst [vmem:[#allocation3 + $0xe0] sm:$0xff] %v7931
    %7996 = vst [vmem:[#allocation3 + $0xe8] sm:$0xff] %v7932
    %7997 = vst [vmem:[#allocation3 + $0xf0] sm:$0xff] %v7933
    %7998 = vst [vmem:[#allocation3 + $0xf8] sm:$0xff] %v7934
    %7999 = vst [vmem:[#allocation3 + $0x100] sm:$0xff] %v7935
    %8000 = vst [vmem:[#allocation3 + $0x108] sm:$0xff] %v7936
    %8001 = vst [vmem:[#allocation3 + $0x110] sm:$0xff] %v7937
    %8002 = vst [vmem:[#allocation3 + $0x118] sm:$0xff] %v7938
    %8003 = vst [vmem:[#allocation3 + $0x120] sm:$0xff] %v7939
    %8004 = vst [vmem:[#allocation3 + $0x128] sm:$0xff] %v7940
    %8005 = vst [vmem:[#allocation3 + $0x130] sm:$0xff] %v7941
    %8006 = vst [vmem:[#allocation3 + $0x138] sm:$0xff] %v7942
    %8007 = vst [vmem:[#allocation3 + $0x140] sm:$0xff] %v7943
    %8008 = vst [vmem:[#allocation3 + $0x148] sm:$0xff] %v7944
    %8009 = vst [vmem:[#allocation3 + $0x150] sm:$0xff] %v7945
    %8010 = vst [vmem:[#allocation3 + $0x158] sm:$0xff] %v7946
    %8011 = vst [vmem:[#allocation3 + $0x160] sm:$0xff] %v7947
    %8012 = vst [vmem:[#allocation3 + $0x168] sm:$0xff] %v7948
    %8013 = vst [vmem:[#allocation3 + $0x170] sm:$0xff] %v7949
    %8014 = vst [vmem:[#allocation3 + $0x178] sm:$0xff] %v7950
    %8015 = vst [vmem:[#allocation3 + $0x180] sm:$0xff] %v7951
    %8016 = vst [vmem:[#allocation3 + $0x188] sm:$0xff] %v7952
    %8017 = vst [vmem:[#allocation3 + $0x190] sm:$0xff] %v7953
    %8018 = vst [vmem:[#allocation3 + $0x198] sm:$0xff] %v7954
    %8019 = vst [vmem:[#allocation3 + $0x1a0] sm:$0xff] %v7955
    %8020 = vst [vmem:[#allocation3 + $0x1a8] sm:$0xff] %v7956
    %8021 = vst [vmem:[#allocation3 + $0x1b0] sm:$0xff] %v7957
    %8022 = vst [vmem:[#allocation3 + $0x1b8] sm:$0xff] %v7958
    %8023 = vst [vmem:[#allocation3 + $0x1c0] sm:$0xff] %v7959
    %8024 = vst [vmem:[#allocation3 + $0x1c8] sm:$0xff] %v7960
    %8025 = vst [vmem:[#allocation3 + $0x1d0] sm:$0xff] %v7961
    %8026 = vst [vmem:[#allocation3 + $0x1d8] sm:$0xff] %v7962
    %8027 = vst [vmem:[#allocation3 + $0x1e0] sm:$0xff] %v7963
    %8028 = vst [vmem:[#allocation3 + $0x1e8] sm:$0xff] %v7964
    %8029 = vst [vmem:[#allocation3 + $0x1f0] sm:$0xff] %v7965
    %8030 = vst [vmem:[#allocation3 + $0x1f8] sm:$0xff] %v7966
    %v8031 = vld [vmem:[#allocation3] sm:$0xff]
    %v8032 = vld [vmem:[#allocation3 + $0x8] sm:$0xff]
    %v8033 = vld [vmem:[#allocation3 + $0x10] sm:$0xff]
    %v8034 = vld [vmem:[#allocation3 + $0x18] sm:$0xff]
    %v8035 = vld [vmem:[#allocation3 + $0x20] sm:$0xff]
    %v8036 = vld [vmem:[#allocation3 + $0x28] sm:$0xff]
    %v8037 = vld [vmem:[#allocation3 + $0x30] sm:$0xff]
    %v8038 = vld [vmem:[#allocation3 + $0x38] sm:$0xff]
    %v8039 = vld [vmem:[#allocation3 + $0x40] sm:$0xff]
    %v8040 = vld [vmem:[#allocation3 + $0x48] sm:$0xff]
    %v8041 = vld [vmem:[#allocation3 + $0x50] sm:$0xff]
    %v8042 = vld [vmem:[#allocation3 + $0x58] sm:$0xff]
    %v8043 = vld [vmem:[#allocation3 + $0x60] sm:$0xff]
    %v8044 = vld [vmem:[#allocation3 + $0x68] sm:$0xff]
    %v8045 = vld [vmem:[#allocation3 + $0x70] sm:$0xff]
    %v8046 = vld [vmem:[#allocation3 + $0x78] sm:$0xff]
    %v8047 = vld [vmem:[#allocation3 + $0x80] sm:$0xff]
    %v8048 = vld [vmem:[#allocation3 + $0x88] sm:$0xff]
    %v8049 = vld [vmem:[#allocation3 + $0x90] sm:$0xff]
    %v8050 = vld [vmem:[#allocation3 + $0x98] sm:$0xff]
    %v8051 = vld [vmem:[#allocation3 + $0xa0] sm:$0xff]
    %v8052 = vld [vmem:[#allocation3 + $0xa8] sm:$0xff]
    %v8053 = vld [vmem:[#allocation3 + $0xb0] sm:$0xff]
    %v8054 = vld [vmem:[#allocation3 + $0xb8] sm:$0xff]
    %v8055 = vld [vmem:[#allocation3 + $0xc0] sm:$0xff]
    %v8056 = vld [vmem:[#allocation3 + $0xc8] sm:$0xff]
    %v8057 = vld [vmem:[#allocation3 + $0xd0] sm:$0xff]
    %v8058 = vld [vmem:[#allocation3 + $0xd8] sm:$0xff]
    %v8059 = vld [vmem:[#allocation3 + $0xe0] sm:$0xff]
    %v8060 = vld [vmem:[#allocation3 + $0xe8] sm:$0xff]
    %v8061 = vld [vmem:[#allocation3 + $0xf0] sm:$0xff]
    %v8062 = vld [vmem:[#allocation3 + $0xf8] sm:$0xff]
    %v8063 = vld [vmem:[#allocation3 + $0x100] sm:$0xff]
    %v8064 = vld [vmem:[#allocation3 + $0x108] sm:$0xff]
    %v8065 = vld [vmem:[#allocation3 + $0x110] sm:$0xff]
    %v8066 = vld [vmem:[#allocation3 + $0x118] sm:$0xff]
    %v8067 = vld [vmem:[#allocation3 + $0x120] sm:$0xff]
    %v8068 = vld [vmem:[#allocation3 + $0x128] sm:$0xff]
    %v8069 = vld [vmem:[#allocation3 + $0x130] sm:$0xff]
    %v8070 = vld [vmem:[#allocation3 + $0x138] sm:$0xff]
    %v8071 = vld [vmem:[#allocation3 + $0x140] sm:$0xff]
    %v8072 = vld [vmem:[#allocation3 + $0x148] sm:$0xff]
    %v8073 = vld [vmem:[#allocation3 + $0x150] sm:$0xff]
    %v8074 = vld [vmem:[#allocation3 + $0x158] sm:$0xff]
    %v8075 = vld [vmem:[#allocation3 + $0x160] sm:$0xff]
    %v8076 = vld [vmem:[#allocation3 + $0x168] sm:$0xff]
    %v8077 = vld [vmem:[#allocation3 + $0x170] sm:$0xff]
    %v8078 = vld [vmem:[#allocation3 + $0x178] sm:$0xff]
    %v8079 = vld [vmem:[#allocation3 + $0x180] sm:$0xff]
    %v8080 = vld [vmem:[#allocation3 + $0x188] sm:$0xff]
    %v8081 = vld [vmem:[#allocation3 + $0x190] sm:$0xff]
    %v8082 = vld [vmem:[#allocation3 + $0x198] sm:$0xff]
    %v8083 = vld [vmem:[#allocation3 + $0x1a0] sm:$0xff]
    %v8084 = vld [vmem:[#allocation3 + $0x1a8] sm:$0xff]
    %v8085 = vld [vmem:[#allocation3 + $0x1b0] sm:$0xff]
    %v8086 = vld [vmem:[#allocation3 + $0x1b8] sm:$0xff]
    %v8087 = vld [vmem:[#allocation3 + $0x1c0] sm:$0xff]
    %v8088 = vld [vmem:[#allocation3 + $0x1c8] sm:$0xff]
    %v8089 = vld [vmem:[#allocation3 + $0x1d0] sm:$0xff]
    %v8090 = vld [vmem:[#allocation3 + $0x1d8] sm:$0xff]
    %v8091 = vld [vmem:[#allocation3 + $0x1e0] sm:$0xff]
    %v8092 = vld [vmem:[#allocation3 + $0x1e8] sm:$0xff]
    %v8093 = vld [vmem:[#allocation3 + $0x1f0] sm:$0xff]
    %v8094 = vld [vmem:[#allocation3 + $0x1f8] sm:$0xff]
    %v8095 = vadd.f32 %v8031, %v8032
    %v8096 = vadd.f32 %v8095, %v8033
    %v8097 = vadd.f32 %v8096, %v8034
    %v8098 = vadd.f32 %v8097, %v8035
    %v8099 = vadd.f32 %v8098, %v8036
    %v8100 = vadd.f32 %v8099, %v8037
    %v8101 = vadd.f32 %v8100, %v8038
    %v8102 = vadd.f32 %v8101, %v8039
    %v8103 = vadd.f32 %v8102, %v8040
    %v8104 = vadd.f32 %v8103, %v8041
    %v8105 = vadd.f32 %v8104, %v8042
    %v8106 = vadd.f32 %v8105, %v8043
    %v8107 = vadd.f32 %v8106, %v8044
    %v8108 = vadd.f32 %v8107, %v8045
    %v8109 = vadd.f32 %v8108, %v8046
    %v8110 = vadd.f32 %v8109, %v8047
    %v8111 = vadd.f32 %v8110, %v8048
    %v8112 = vadd.f32 %v8111, %v8049
    %v8113 = vadd.f32 %v8112, %v8050
    %v8114 = vadd.f32 %v8113, %v8051
    %v8115 = vadd.f32 %v8114, %v8052
    %v8116 = vadd.f32 %v8115, %v8053
    %v8117 = vadd.f32 %v8116, %v8054
    %v8118 = vadd.f32 %v8117, %v8055
    %v8119 = vadd.f32 %v8118, %v8056
    %v8120 = vadd.f32 %v8119, %v8057
    %v8121 = vadd.f32 %v8120, %v8058
    %v8122 = vadd.f32 %v8121, %v8059
    %v8123 = vadd.f32 %v8122, %v8060
    %v8124 = vadd.f32 %v8123, %v8061
    %v8125 = vadd.f32 %v8124, %v8062
    %v8126 = vadd.f32 %v8125, %v8063
    %v8127 = vadd.f32 %v8126, %v8064
    %v8128 = vadd.f32 %v8127, %v8065
    %v8129 = vadd.f32 %v8128, %v8066
    %v8130 = vadd.f32 %v8129, %v8067
    %v8131 = vadd.f32 %v8130, %v8068
    %v8132 = vadd.f32 %v8131, %v8069
    %v8133 = vadd.f32 %v8132, %v8070
    %v8134 = vadd.f32 %v8133, %v8071
    %v8135 = vadd.f32 %v8134, %v8072
    %v8136 = vadd.f32 %v8135, %v8073
    %v8137 = vadd.f32 %v8136, %v8074
    %v8138 = vadd.f32 %v8137, %v8075
    %v8139 = vadd.f32 %v8138, %v8076
    %v8140 = vadd.f32 %v8139, %v8077
    %v8141 = vadd.f32 %v8140, %v8078
    %v8142 = vadd.f32 %v8141, %v8079
    %v8143 = vadd.f32 %v8142, %v8080
    %v8144 = vadd.f32 %v8143, %v8081
    %v8145 = vadd.f32 %v8144, %v8082
    %v8146 = vadd.f32 %v8145, %v8083
    %v8147 = vadd.f32 %v8146, %v8084
    %v8148 = vadd.f32 %v8147, %v8085
    %v8149 = vadd.f32 %v8148, %v8086
    %v8150 = vadd.f32 %v8149, %v8087
    %v8151 = vadd.f32 %v8150, %v8088
    %v8152 = vadd.f32 %v8151, %v8089
    %v8153 = vadd.f32 %v8152, %v8090
    %v8154 = vadd.f32 %v8153, %v8091
    %v8155 = vadd.f32 %v8154, %v8092
    %v8156 = vadd.f32 %v8155, %v8093
    %v8157 = vadd.f32 %v8156, %v8094
    %v8158 = vrot.slane %v8157, 4
    %v8159 = vadd.f32 %v8157, %v8158
    %v8160 = vrot.slane %v8159, 2
    %v8161 = vadd.f32 %v8159, %v8160
    %v8162 = vrot.slane %v8161, 1
    %v8163 = vadd.f32 %v8161, %v8162
    %v8164 = vmul.f32 %v8163, 0.001953125
    %v8165 = vmul.f32 %v8031, %v8031
    %v8166 = vmul.f32 %v8032, %v8032
    %v8167 = vmul.f32 %v8033, %v8033
    %v8168 = vmul.f32 %v8034, %v8034
    %v8169 = vmul.f32 %v8035, %v8035
    %v8170 = vmul.f32 %v8036, %v8036
    %v8171 = vmul.f32 %v8037, %v8037
    %v8172 = vmul.f32 %v8038, %v8038
    %v8173 = vmul.f32 %v8039, %v8039
    %v8174 = vmul.f32 %v8040, %v8040
    %v8175 = vmul.f32 %v8041, %v8041
    %v8176 = vmul.f32 %v8042, %v8042
    %v8177 = vmul.f32 %v8043, %v8043
    %v8178 = vmul.f32 %v8044, %v8044
    %v8179 = vmul.f32 %v8045, %v8045
    %v8180 = vmul.f32 %v8046, %v8046
    %v8181 = vmul.f32 %v8047, %v8047
    %v8182 = vmul.f32 %v8048, %v8048
    %v8183 = vmul.f32 %v8049, %v8049
    %v8184 = vmul.f32 %v8050, %v8050
    %v8185 = vmul.f32 %v8051, %v8051
    %v8186 = vmul.f32 %v8052, %v8052
    %v8187 = vmul.f32 %v8053, %v8053
    %v8188 = vmul.f32 %v8054, %v8054
    %v8189 = vmul.f32 %v8055, %v8055
    %v8190 = vmul.f32 %v8056, %v8056
    %v8191 = vmul.f32 %v8057, %v8057
    %v8192 = vmul.f32 %v8058, %v8058
    %v8193 = vmul.f32 %v8059, %v8059
    %v8194 = vmul.f32 %v8060, %v8060
    %v8195 = vmul.f32 %v8061, %v8061
    %v8196 = vmul.f32 %v8062, %v8062
    %v8197 = vmul.f32 %v8063, %v8063
    %v8198 = vmul.f32 %v8064, %v8064
    %v8199 = vmul.f32 %v8065, %v8065
    %v8200 = vmul.f32 %v8066, %v8066
    %v8201 = vmul.f32 %v8067, %v8067
    %v8202 = vmul.f32 %v8068, %v8068
    %v8203 = vmul.f32 %v8069, %v8069
    %v8204 = vmul.f32 %v8070, %v8070
    %v8205 = vmul.f32 %v8071, %v8071
    %v8206 = vmul.f32 %v8072, %v8072
    %v8207 = vmul.f32 %v8073, %v8073
    %v8208 = vmul.f32 %v8074, %v8074
    %v8209 = vmul.f32 %v8075, %v8075
    %v8210 = vmul.f32 %v8076, %v8076
    %v8211 = vmul.f32 %v8077, %v8077
    %v8212 = vmul.f32 %v8078, %v8078
    %v8213 = vmul.f32 %v8079, %v8079
    %v8214 = vmul.f32 %v8080, %v8080
    %v8215 = vmul.f32 %v8081, %v8081
    %v8216 = vmul.f32 %v8082, %v8082
    %v8217 = vmul.f32 %v8083, %v8083
    %v8218 = vmul.f32 %v8084, %v8084
    %v8219 = vmul.f32 %v8085, %v8085
    %v8220 = vmul.f32 %v8086, %v8086
    %v8221 = vmul.f32 %v8087, %v8087
    %v8222 = vmul.f32 %v8088, %v8088
    %v8223 = vmul.f32 %v8089, %v8089
    %v8224 = vmul.f32 %v8090, %v8090
    %v8225 = vmul.f32 %v8091, %v8091
    %v8226 = vmul.f32 %v8092, %v8092
    %v8227 = vmul.f32 %v8093, %v8093
    %v8228 = vmul.f32 %v8094, %v8094
    %v8229 = vadd.f32 %v8165, %v8166
    %v8230 = vadd.f32 %v8229, %v8167
    %v8231 = vadd.f32 %v8230, %v8168
    %v8232 = vadd.f32 %v8231, %v8169
    %v8233 = vadd.f32 %v8232, %v8170
    %v8234 = vadd.f32 %v8233, %v8171
    %v8235 = vadd.f32 %v8234, %v8172
    %v8236 = vadd.f32 %v8235, %v8173
    %v8237 = vadd.f32 %v8236, %v8174
    %v8238 = vadd.f32 %v8237, %v8175
    %v8239 = vadd.f32 %v8238, %v8176
    %v8240 = vadd.f32 %v8239, %v8177
    %v8241 = vadd.f32 %v8240, %v8178
    %v8242 = vadd.f32 %v8241, %v8179
    %v8243 = vadd.f32 %v8242, %v8180
    %v8244 = vadd.f32 %v8243, %v8181
    %v8245 = vadd.f32 %v8244, %v8182
    %v8246 = vadd.f32 %v8245, %v8183
    %v8247 = vadd.f32 %v8246, %v8184
    %v8248 = vadd.f32 %v8247, %v8185
    %v8249 = vadd.f32 %v8248, %v8186
    %v8250 = vadd.f32 %v8249, %v8187
    %v8251 = vadd.f32 %v8250, %v8188
    %v8252 = vadd.f32 %v8251, %v8189
    %v8253 = vadd.f32 %v8252, %v8190
    %v8254 = vadd.f32 %v8253, %v8191
    %v8255 = vadd.f32 %v8254, %v8192
    %v8256 = vadd.f32 %v8255, %v8193
    %v8257 = vadd.f32 %v8256, %v8194
    %v8258 = vadd.f32 %v8257, %v8195
    %v8259 = vadd.f32 %v8258, %v8196
    %v8260 = vadd.f32 %v8259, %v8197
    %v8261 = vadd.f32 %v8260, %v8198
    %v8262 = vadd.f32 %v8261, %v8199
    %v8263 = vadd.f32 %v8262, %v8200
    %v8264 = vadd.f32 %v8263, %v8201
    %v8265 = vadd.f32 %v8264, %v8202
    %v8266 = vadd.f32 %v8265, %v8203
    %v8267 = vadd.f32 %v8266, %v8204
    %v8268 = vadd.f32 %v8267, %v8205
    %v8269 = vadd.f32 %v8268, %v8206
    %v8270 = vadd.f32 %v8269, %v8207
    %v8271 = vadd.f32 %v8270, %v8208
    %v8272 = vadd.f32 %v8271, %v8209
    %v8273 = vadd.f32 %v8272, %v8210
    %v8274 = vadd.f32 %v8273, %v8211
    %v8275 = vadd.f32 %v8274, %v8212
    %v8276 = vadd.f32 %v8275, %v8213
    %v8277 = vadd.f32 %v8276, %v8214
    %v8278 = vadd.f32 %v8277, %v8215
    %v8279 = vadd.f32 %v8278, %v8216
    %v8280 = vadd.f32 %v8279, %v8217
    %v8281 = vadd.f32 %v8280, %v8218
    %v8282 = vadd.f32 %v8281, %v8219
    %v8283 = vadd.f32 %v8282, %v8220
    %v8284 = vadd.f32 %v8283, %v8221
    %v8285 = vadd.f32 %v8284, %v8222
    %v8286 = vadd.f32 %v8285, %v8223
    %v8287 = vadd.f32 %v8286, %v8224
    %v8288 = vadd.f32 %v8287, %v8225
    %v8289 = vadd.f32 %v8288, %v8226
    %v8290 = vadd.f32 %v8289, %v8227
    %v8291 = vadd.f32 %v8290, %v8228
    %v8292 = vrot.slane %v8291, 4
    %v8293 = vadd.f32 %v8291, %v8292
    %v8294 = vrot.slane %v8293, 2
    %v8295 = vadd.f32 %v8293, %v8294
    %v8296 = vrot.slane %v8295, 1
    %v8297 = vadd.f32 %v8295, %v8296
    %v8298 = vmul.f32 %v8297, 0.001953125
    %v8299 = vmul.f32 %v8164, %v8164
    %v8300 = vsub.f32 %v8298, %v8299
    %v8301 = vld [vmem:[%s5] sm:$0x1]
    %v8302 = vadd.f32 %v8300, 1e-05
    %v8303 = vrsqrt.pop %v8302
    %v8304 = vmul.f32 %v8303, %v8302
    %v8305 = vmul.f32 %v8304, %v8303
    %v8306 = vmul.f32 0.5, %v8305
    %v8307 = vsub.f32 1.5, %v8306
    %v8308 = vmul.f32 %v8303, %v8307
    %vm8309 = vweird.f32 %v8302
    %vm8310 = vweird.f32 %v8303
    %vm8311 = vmor %vm8309, %vm8310
    %v8312 = vsel %vm8311, %v8303, %v8308
    %v8313 = vmul.f32 %v8301, %v8312
    %v8314 = vld [vmem:[%s6] sm:$0x1]
    %v8315 = vmul.f32 %v8164, %v8313
    %v8316 = vsub.f32 %v8314, %v8315
    %v8318 = vperm.slane %v8313, 0
    %v8320 = vmul.f32 %v8031, %v8318
    %v8321 = vmul.f32 %v8032, %v8318
    %v8322 = vmul.f32 %v8033, %v8318
    %v8323 = vmul.f32 %v8034, %v8318
    %v8324 = vmul.f32 %v8035, %v8318
    %v8325 = vmul.f32 %v8036, %v8318
    %v8326 = vmul.f32 %v8037, %v8318
    %v8327 = vmul.f32 %v8038, %v8318
    %v8328 = vmul.f32 %v8039, %v8318
    %v8329 = vmul.f32 %v8040, %v8318
    %v8330 = vmul.f32 %v8041, %v8318
    %v8331 = vmul.f32 %v8042, %v8318
    %v8332 = vmul.f32 %v8043, %v8318
    %v8333 = vmul.f32 %v8044, %v8318
    %v8334 = vmul.f32 %v8045, %v8318
    %v8335 = vmul.f32 %v8046, %v8318
    %v8336 = vmul.f32 %v8047, %v8318
    %v8337 = vmul.f32 %v8048, %v8318
    %v8338 = vmul.f32 %v8049, %v8318
    %v8339 = vmul.f32 %v8050, %v8318
    %v8340 = vmul.f32 %v8051, %v8318
    %v8341 = vmul.f32 %v8052, %v8318
    %v8342 = vmul.f32 %v8053, %v8318
    %v8343 = vmul.f32 %v8054, %v8318
    %v8344 = vmul.f32 %v8055, %v8318
    %v8345 = vmul.f32 %v8056, %v8318
    %v8346 = vmul.f32 %v8057, %v8318
    %v8347 = vmul.f32 %v8058, %v8318
    %v8348 = vmul.f32 %v8059, %v8318
    %v8349 = vmul.f32 %v8060, %v8318
    %v8350 = vmul.f32 %v8061, %v8318
    %v8351 = vmul.f32 %v8062, %v8318
    %v8352 = vmul.f32 %v8063, %v8318
    %v8353 = vmul.f32 %v8064, %v8318
    %v8354 = vmul.f32 %v8065, %v8318
    %v8355 = vmul.f32 %v8066, %v8318
    %v8356 = vmul.f32 %v8067, %v8318
    %v8357 = vmul.f32 %v8068, %v8318
    %v8358 = vmul.f32 %v8069, %v8318
    %v8359 = vmul.f32 %v8070, %v8318
    %v8360 = vmul.f32 %v8071, %v8318
    %v8361 = vmul.f32 %v8072, %v8318
    %v8362 = vmul.f32 %v8073, %v8318
    %v8363 = vmul.f32 %v8074, %v8318
    %v8364 = vmul.f32 %v8075, %v8318
    %v8365 = vmul.f32 %v8076, %v8318
    %v8366 = vmul.f32 %v8077, %v8318
    %v8367 = vmul.f32 %v8078, %v8318
    %v8368 = vmul.f32 %v8079, %v8318
    %v8369 = vmul.f32 %v8080, %v8318
    %v8370 = vmul.f32 %v8081, %v8318
    %v8371 = vmul.f32 %v8082, %v8318
    %v8372 = vmul.f32 %v8083, %v8318
    %v8373 = vmul.f32 %v8084, %v8318
    %v8374 = vmul.f32 %v8085, %v8318
    %v8375 = vmul.f32 %v8086, %v8318
    %v8376 = vmul.f32 %v8087, %v8318
    %v8377 = vmul.f32 %v8088, %v8318
    %v8378 = vmul.f32 %v8089, %v8318
    %v8379 = vmul.f32 %v8090, %v8318
    %v8380 = vmul.f32 %v8091, %v8318
    %v8381 = vmul.f32 %v8092, %v8318
    %v8382 = vmul.f32 %v8093, %v8318
    %v8383 = vmul.f32 %v8094, %v8318
    %v8385 = vperm.slane %v8316, 0
    %v8387 = vadd.f32 %v8320, %v8385
    %v8388 = vadd.f32 %v8321, %v8385
    %v8389 = vadd.f32 %v8322, %v8385
    %v8390 = vadd.f32 %v8323, %v8385
    %v8391 = vadd.f32 %v8324, %v8385
    %v8392 = vadd.f32 %v8325, %v8385
    %v8393 = vadd.f32 %v8326, %v8385
    %v8394 = vadd.f32 %v8327, %v8385
    %v8395 = vadd.f32 %v8328, %v8385
    %v8396 = vadd.f32 %v8329, %v8385
    %v8397 = vadd.f32 %v8330, %v8385
    %v8398 = vadd.f32 %v8331, %v8385
    %v8399 = vadd.f32 %v8332, %v8385
    %v8400 = vadd.f32 %v8333, %v8385
    %v8401 = vadd.f32 %v8334, %v8385
    %v8402 = vadd.f32 %v8335, %v8385
    %v8403 = vadd.f32 %v8336, %v8385
    %v8404 = vadd.f32 %v8337, %v8385
    %v8405 = vadd.f32 %v8338, %v8385
    %v8406 = vadd.f32 %v8339, %v8385
    %v8407 = vadd.f32 %v8340, %v8385
    %v8408 = vadd.f32 %v8341, %v8385
    %v8409 = vadd.f32 %v8342, %v8385
    %v8410 = vadd.f32 %v8343, %v8385
    %v8411 = vadd.f32 %v8344, %v8385
    %v8412 = vadd.f32 %v8345, %v8385
    %v8413 = vadd.f32 %v8346, %v8385
    %v8414 = vadd.f32 %v8347, %v8385
    %v8415 = vadd.f32 %v8348, %v8385
    %v8416 = vadd.f32 %v8349, %v8385
    %v8417 = vadd.f32 %v8350, %v8385
    %v8418 = vadd.f32 %v8351, %v8385
    %v8419 = vadd.f32 %v8352, %v8385
    %v8420 = vadd.f32 %v8353, %v8385
    %v8421 = vadd.f32 %v8354, %v8385
    %v8422 = vadd.f32 %v8355, %v8385
    %v8423 = vadd.f32 %v8356, %v8385
    %v8424 = vadd.f32 %v8357, %v8385
    %v8425 = vadd.f32 %v8358, %v8385
    %v8426 = vadd.f32 %v8359, %v8385
    %v8427 = vadd.f32 %v8360, %v8385
    %v8428 = vadd.f32 %v8361, %v8385
    %v8429 = vadd.f32 %v8362, %v8385
    %v8430 = vadd.f32 %v8363, %v8385
    %v8431 = vadd.f32 %v8364, %v8385
    %v8432 = vadd.f32 %v8365, %v8385
    %v8433 = vadd.f32 %v8366, %v8385
    %v8434 = vadd.f32 %v8367, %v8385
    %v8435 = vadd.f32 %v8368, %v8385
    %v8436 = vadd.f32 %v8369, %v8385
    %v8437 = vadd.f32 %v8370, %v8385
    %v8438 = vadd.f32 %v8371, %v8385
    %v8439 = vadd.f32 %v8372, %v8385
    %v8440 = vadd.f32 %v8373, %v8385
    %v8441 = vadd.f32 %v8374, %v8385
    %v8442 = vadd.f32 %v8375, %v8385
    %v8443 = vadd.f32 %v8376, %v8385
    %v8444 = vadd.f32 %v8377, %v8385
    %v8445 = vadd.f32 %v8378, %v8385
    %v8446 = vadd.f32 %v8379, %v8385
    %v8447 = vadd.f32 %v8380, %v8385
    %v8448 = vadd.f32 %v8381, %v8385
    %v8449 = vadd.f32 %v8382, %v8385
    %v8450 = vadd.f32 %v8383, %v8385
    %v8451 = vld [vmem:[%s0] sm:$0xff]
    %v8452 = vld [vmem:[%s0 + $0x8] sm:$0xff]
    %v8453 = vld [vmem:[%s0 + $0x10] sm:$0xff]
    %v8454 = vld [vmem:[%s0 + $0x18] sm:$0xff]
    %v8455 = vld [vmem:[%s0 + $0x20] sm:$0xff]
    %v8456 = vld [vmem:[%s0 + $0x28] sm:$0xff]
    %v8457 = vld [vmem:[%s0 + $0x30] sm:$0xff]
    %v8458 = vld [vmem:[%s0 + $0x38] sm:$0xff]
    %v8459 = vld [vmem:[%s0 + $0x40] sm:$0xff]
    %v8460 = vld [vmem:[%s0 + $0x48] sm:$0xff]
    %v8461 = vld [vmem:[%s0 + $0x50] sm:$0xff]
    %v8462 = vld [vmem:[%s0 + $0x58] sm:$0xff]
    %v8463 = vld [vmem:[%s0 + $0x60] sm:$0xff]
    %v8464 = vld [vmem:[%s0 + $0x68] sm:$0xff]
    %v8465 = vld [vmem:[%s0 + $0x70] sm:$0xff]
    %v8466 = vld [vmem:[%s0 + $0x78] sm:$0xff]
    %v8467 = vld [vmem:[%s0 + $0x80] sm:$0xff]
    %v8468 = vld [vmem:[%s0 + $0x88] sm:$0xff]
    %v8469 = vld [vmem:[%s0 + $0x90] sm:$0xff]
    %v8470 = vld [vmem:[%s0 + $0x98] sm:$0xff]
    %v8471 = vld [vmem:[%s0 + $0xa0] sm:$0xff]
    %v8472 = vld [vmem:[%s0 + $0xa8] sm:$0xff]
    %v8473 = vld [vmem:[%s0 + $0xb0] sm:$0xff]
    %v8474 = vld [vmem:[%s0 + $0xb8] sm:$0xff]
    %v8475 = vld [vmem:[%s0 + $0xc0] sm:$0xff]
    %v8476 = vld [vmem:[%s0 + $0xc8] sm:$0xff]
    %v8477 = vld [vmem:[%s0 + $0xd0] sm:$0xff]
    %v8478 = vld [vmem:[%s0 + $0xd8] sm:$0xff]
    %v8479 = vld [vmem:[%s0 + $0xe0] sm:$0xff]
    %v8480 = vld [vmem:[%s0 + $0xe8] sm:$0xff]
    %v8481 = vld [vmem:[%s0 + $0xf0] sm:$0xff]
    %v8482 = vld [vmem:[%s0 + $0xf8] sm:$0xff]
    %v8483 = vld [vmem:[%s0 + $0x100] sm:$0xff]
    %v8484 = vld [vmem:[%s0 + $0x108] sm:$0xff]
    %v8485 = vld [vmem:[%s0 + $0x110] sm:$0xff]
    %v8486 = vld [vmem:[%s0 + $0x118] sm:$0xff]
    %v8487 = vld [vmem:[%s0 + $0x120] sm:$0xff]
    %v8488 = vld [vmem:[%s0 + $0x128] sm:$0xff]
    %v8489 = vld [vmem:[%s0 + $0x130] sm:$0xff]
    %v8490 = vld [vmem:[%s0 + $0x138] sm:$0xff]
    %v8491 = vld [vmem:[%s0 + $0x140] sm:$0xff]
    %v8492 = vld [vmem:[%s0 + $0x148] sm:$0xff]
    %v8493 = vld [vmem:[%s0 + $0x150] sm:$0xff]
    %v8494 = vld [vmem:[%s0 + $0x158] sm:$0xff]
    %v8495 = vld [vmem:[%s0 + $0x160] sm:$0xff]
    %v8496 = vld [vmem:[%s0 + $0x168] sm:$0xff]
    %v8497 = vld [vmem:[%s0 + $0x170] sm:$0xff]
    %v8498 = vld [vmem:[%s0 + $0x178] sm:$0xff]
    %v8499 = vld [vmem:[%s0 + $0x180] sm:$0xff]
    %v8500 = vld [vmem:[%s0 + $0x188] sm:$0xff]
    %v8501 = vld [vmem:[%s0 + $0x190] sm:$0xff]
    %v8502 = vld [vmem:[%s0 + $0x198] sm:$0xff]
    %v8503 = vld [vmem:[%s0 + $0x1a0] sm:$0xff]
    %v8504 = vld [vmem:[%s0 + $0x1a8] sm:$0xff]
    %v8505 = vld [vmem:[%s0 + $0x1b0] sm:$0xff]
    %v8506 = vld [vmem:[%s0 + $0x1b8] sm:$0xff]
    %v8507 = vld [vmem:[%s0 + $0x1c0] sm:$0xff]
    %v8508 = vld [vmem:[%s0 + $0x1c8] sm:$0xff]
    %v8509 = vld [vmem:[%s0 + $0x1d0] sm:$0xff]
    %v8510 = vld [vmem:[%s0 + $0x1d8] sm:$0xff]
    %v8511 = vld [vmem:[%s0 + $0x1e0] sm:$0xff]
    %v8512 = vld [vmem:[%s0 + $0x1e8] sm:$0xff]
    %v8513 = vld [vmem:[%s0 + $0x1f0] sm:$0xff]
    %v8514 = vld [vmem:[%s0 + $0x1f8] sm:$0xff]
    %v8515 = vadd.f32 %v8387, %v8451
    %v8516 = vadd.f32 %v8388, %v8452
    %v8517 = vadd.f32 %v8389, %v8453
    %v8518 = vadd.f32 %v8390, %v8454
    %v8519 = vadd.f32 %v8391, %v8455
    %v8520 = vadd.f32 %v8392, %v8456
    %v8521 = vadd.f32 %v8393, %v8457
    %v8522 = vadd.f32 %v8394, %v8458
    %v8523 = vadd.f32 %v8395, %v8459
    %v8524 = vadd.f32 %v8396, %v8460
    %v8525 = vadd.f32 %v8397, %v8461
    %v8526 = vadd.f32 %v8398, %v8462
    %v8527 = vadd.f32 %v8399, %v8463
    %v8528 = vadd.f32 %v8400, %v8464
    %v8529 = vadd.f32 %v8401, %v8465
    %v8530 = vadd.f32 %v8402, %v8466
    %v8531 = vadd.f32 %v8403, %v8467
    %v8532 = vadd.f32 %v8404, %v8468
    %v8533 = vadd.f32 %v8405, %v8469
    %v8534 = vadd.f32 %v8406, %v8470
    %v8535 = vadd.f32 %v8407, %v8471
    %v8536 = vadd.f32 %v8408, %v8472
    %v8537 = vadd.f32 %v8409, %v8473
    %v8538 = vadd.f32 %v8410, %v8474
    %v8539 = vadd.f32 %v8411, %v8475
    %v8540 = vadd.f32 %v8412, %v8476
    %v8541 = vadd.f32 %v8413, %v8477
    %v8542 = vadd.f32 %v8414, %v8478
    %v8543 = vadd.f32 %v8415, %v8479
    %v8544 = vadd.f32 %v8416, %v8480
    %v8545 = vadd.f32 %v8417, %v8481
    %v8546 = vadd.f32 %v8418, %v8482
    %v8547 = vadd.f32 %v8419, %v8483
    %v8548 = vadd.f32 %v8420, %v8484
    %v8549 = vadd.f32 %v8421, %v8485
    %v8550 = vadd.f32 %v8422, %v8486
    %v8551 = vadd.f32 %v8423, %v8487
    %v8552 = vadd.f32 %v8424, %v8488
    %v8553 = vadd.f32 %v8425, %v8489
    %v8554 = vadd.f32 %v8426, %v8490
    %v8555 = vadd.f32 %v8427, %v8491
    %v8556 = vadd.f32 %v8428, %v8492
    %v8557 = vadd.f32 %v8429, %v8493
    %v8558 = vadd.f32 %v8430, %v8494
    %v8559 = vadd.f32 %v8431, %v8495
    %v8560 = vadd.f32 %v8432, %v8496
    %v8561 = vadd.f32 %v8433, %v8497
    %v8562 = vadd.f32 %v8434, %v8498
    %v8563 = vadd.f32 %v8435, %v8499
    %v8564 = vadd.f32 %v8436, %v8500
    %v8565 = vadd.f32 %v8437, %v8501
    %v8566 = vadd.f32 %v8438, %v8502
    %v8567 = vadd.f32 %v8439, %v8503
    %v8568 = vadd.f32 %v8440, %v8504
    %v8569 = vadd.f32 %v8441, %v8505
    %v8570 = vadd.f32 %v8442, %v8506
    %v8571 = vadd.f32 %v8443, %v8507
    %v8572 = vadd.f32 %v8444, %v8508
    %v8573 = vadd.f32 %v8445, %v8509
    %v8574 = vadd.f32 %v8446, %v8510
    %v8575 = vadd.f32 %v8447, %v8511
    %v8576 = vadd.f32 %v8448, %v8512
    %v8577 = vadd.f32 %v8449, %v8513
    %v8578 = vadd.f32 %v8450, %v8514
    %v8579 = vmax.f32 %v8515, 0.0
    %v8580 = vmax.f32 %v8516, 0.0
    %v8581 = vmax.f32 %v8517, 0.0
    %v8582 = vmax.f32 %v8518, 0.0
    %v8583 = vmax.f32 %v8519, 0.0
    %v8584 = vmax.f32 %v8520, 0.0
    %v8585 = vmax.f32 %v8521, 0.0
    %v8586 = vmax.f32 %v8522, 0.0
    %v8587 = vmax.f32 %v8523, 0.0
    %v8588 = vmax.f32 %v8524, 0.0
    %v8589 = vmax.f32 %v8525, 0.0
    %v8590 = vmax.f32 %v8526, 0.0
    %v8591 = vmax.f32 %v8527, 0.0
    %v8592 = vmax.f32 %v8528, 0.0
    %v8593 = vmax.f32 %v8529, 0.0
    %v8594 = vmax.f32 %v8530, 0.0
    %v8595 = vmax.f32 %v8531, 0.0
    %v8596 = vmax.f32 %v8532, 0.0
    %v8597 = vmax.f32 %v8533, 0.0
    %v8598 = vmax.f32 %v8534, 0.0
    %v8599 = vmax.f32 %v8535, 0.0
    %v8600 = vmax.f32 %v8536, 0.0
    %v8601 = vmax.f32 %v8537, 0.0
    %v8602 = vmax.f32 %v8538, 0.0
    %v8603 = vmax.f32 %v8539, 0.0
    %v8604 = vmax.f32 %v8540, 0.0
    %v8605 = vmax.f32 %v8541, 0.0
    %v8606 = vmax.f32 %v8542, 0.0
    %v8607 = vmax.f32 %v8543, 0.0
    %v8608 = vmax.f32 %v8544, 0.0
    %v8609 = vmax.f32 %v8545, 0.0
    %v8610 = vmax.f32 %v8546, 0.0
    %v8611 = vmax.f32 %v8547, 0.0
    %v8612 = vmax.f32 %v8548, 0.0
    %v8613 = vmax.f32 %v8549, 0.0
    %v8614 = vmax.f32 %v8550, 0.0
    %v8615 = vmax.f32 %v8551, 0.0
    %v8616 = vmax.f32 %v8552, 0.0
    %v8617 = vmax.f32 %v8553, 0.0
    %v8618 = vmax.f32 %v8554, 0.0
    %v8619 = vmax.f32 %v8555, 0.0
    %v8620 = vmax.f32 %v8556, 0.0
    %v8621 = vmax.f32 %v8557, 0.0
    %v8622 = vmax.f32 %v8558, 0.0
    %v8623 = vmax.f32 %v8559, 0.0
    %v8624 = vmax.f32 %v8560, 0.0
    %v8625 = vmax.f32 %v8561, 0.0
    %v8626 = vmax.f32 %v8562, 0.0
    %v8627 = vmax.f32 %v8563, 0.0
    %v8628 = vmax.f32 %v8564, 0.0
    %v8629 = vmax.f32 %v8565, 0.0
    %v8630 = vmax.f32 %v8566, 0.0
    %v8631 = vmax.f32 %v8567, 0.0
    %v8632 = vmax.f32 %v8568, 0.0
    %v8633 = vmax.f32 %v8569, 0.0
    %v8634 = vmax.f32 %v8570, 0.0
    %v8635 = vmax.f32 %v8571, 0.0
    %v8636 = vmax.f32 %v8572, 0.0
    %v8637 = vmax.f32 %v8573, 0.0
    %v8638 = vmax.f32 %v8574, 0.0
    %v8639 = vmax.f32 %v8575, 0.0
    %v8640 = vmax.f32 %v8576, 0.0
    %v8641 = vmax.f32 %v8577, 0.0
    %v8642 = vmax.f32 %v8578, 0.0
    %8643 = vst [vmem:[#allocation4] sm:$0xff] %v8579
    %8644 = vst [vmem:[#allocation4 + $0x8] sm:$0xff] %v8580
    %8645 = vst [vmem:[#allocation4 + $0x10] sm:$0xff] %v8581
    %8646 = vst [vmem:[#allocation4 + $0x18] sm:$0xff] %v8582
    %8647 = vst [vmem:[#allocation4 + $0x20] sm:$0xff] %v8583
    %8648 = vst [vmem:[#allocation4 + $0x28] sm:$0xff] %v8584
    %8649 = vst [vmem:[#allocation4 + $0x30] sm:$0xff] %v8585
    %8650 = vst [vmem:[#allocation4 + $0x38] sm:$0xff] %v8586
    %8651 = vst [vmem:[#allocation4 + $0x40] sm:$0xff] %v8587
    %8652 = vst [vmem:[#allocation4 + $0x48] sm:$0xff] %v8588
    %8653 = vst [vmem:[#allocation4 + $0x50] sm:$0xff] %v8589
    %8654 = vst [vmem:[#allocation4 + $0x58] sm:$0xff] %v8590
    %8655 = vst [vmem:[#allocation4 + $0x60] sm:$0xff] %v8591
    %8656 = vst [vmem:[#allocation4 + $0x68] sm:$0xff] %v8592
    %8657 = vst [vmem:[#allocation4 + $0x70] sm:$0xff] %v8593
    %8658 = vst [vmem:[#allocation4 + $0x78] sm:$0xff] %v8594
    %8659 = vst [vmem:[#allocation4 + $0x80] sm:$0xff] %v8595
    %8660 = vst [vmem:[#allocation4 + $0x88] sm:$0xff] %v8596
    %8661 = vst [vmem:[#allocation4 + $0x90] sm:$0xff] %v8597
    %8662 = vst [vmem:[#allocation4 + $0x98] sm:$0xff] %v8598
    %8663 = vst [vmem:[#allocation4 + $0xa0] sm:$0xff] %v8599
    %8664 = vst [vmem:[#allocation4 + $0xa8] sm:$0xff] %v8600
    %8665 = vst [vmem:[#allocation4 + $0xb0] sm:$0xff] %v8601
    %8666 = vst [vmem:[#allocation4 + $0xb8] sm:$0xff] %v8602
    %8667 = vst [vmem:[#allocation4 + $0xc0] sm:$0xff] %v8603
    %8668 = vst [vmem:[#allocation4 + $0xc8] sm:$0xff] %v8604
    %8669 = vst [vmem:[#allocation4 + $0xd0] sm:$0xff] %v8605
    %8670 = vst [vmem:[#allocation4 + $0xd8] sm:$0xff] %v8606
    %8671 = vst [vmem:[#allocation4 + $0xe0] sm:$0xff] %v8607
    %8672 = vst [vmem:[#allocation4 + $0xe8] sm:$0xff] %v8608
    %8673 = vst [vmem:[#allocation4 + $0xf0] sm:$0xff] %v8609
    %8674 = vst [vmem:[#allocation4 + $0xf8] sm:$0xff] %v8610
    %8675 = vst [vmem:[#allocation4 + $0x100] sm:$0xff] %v8611
    %8676 = vst [vmem:[#allocation4 + $0x108] sm:$0xff] %v8612
    %8677 = vst [vmem:[#allocation4 + $0x110] sm:$0xff] %v8613
    %8678 = vst [vmem:[#allocation4 + $0x118] sm:$0xff] %v8614
    %8679 = vst [vmem:[#allocation4 + $0x120] sm:$0xff] %v8615
    %8680 = vst [vmem:[#allocation4 + $0x128] sm:$0xff] %v8616
    %8681 = vst [vmem:[#allocation4 + $0x130] sm:$0xff] %v8617
    %8682 = vst [vmem:[#allocation4 + $0x138] sm:$0xff] %v8618
    %8683 = vst [vmem:[#allocation4 + $0x140] sm:$0xff] %v8619
    %8684 = vst [vmem:[#allocation4 + $0x148] sm:$0xff] %v8620
    %8685 = vst [vmem:[#allocation4 + $0x150] sm:$0xff] %v8621
    %8686 = vst [vmem:[#allocation4 + $0x158] sm:$0xff] %v8622
    %8687 = vst [vmem:[#allocation4 + $0x160] sm:$0xff] %v8623
    %8688 = vst [vmem:[#allocation4 + $0x168] sm:$0xff] %v8624
    %8689 = vst [vmem:[#allocation4 + $0x170] sm:$0xff] %v8625
    %8690 = vst [vmem:[#allocation4 + $0x178] sm:$0xff] %v8626
    %8691 = vst [vmem:[#allocation4 + $0x180] sm:$0xff] %v8627
    %8692 = vst [vmem:[#allocation4 + $0x188] sm:$0xff] %v8628
    %8693 = vst [vmem:[#allocation4 + $0x190] sm:$0xff] %v8629
    %8694 = vst [vmem:[#allocation4 + $0x198] sm:$0xff] %v8630
    %8695 = vst [vmem:[#allocation4 + $0x1a0] sm:$0xff] %v8631
    %8696 = vst [vmem:[#allocation4 + $0x1a8] sm:$0xff] %v8632
    %8697 = vst [vmem:[#allocation4 + $0x1b0] sm:$0xff] %v8633
    %8698 = vst [vmem:[#allocation4 + $0x1b8] sm:$0xff] %v8634
    %8699 = vst [vmem:[#allocation4 + $0x1c0] sm:$0xff] %v8635
    %8700 = vst [vmem:[#allocation4 + $0x1c8] sm:$0xff] %v8636
    %8701 = vst [vmem:[#allocation4 + $0x1d0] sm:$0xff] %v8637
    %8702 = vst [vmem:[#allocation4 + $0x1d8] sm:$0xff] %v8638
    %8703 = vst [vmem:[#allocation4 + $0x1e0] sm:$0xff] %v8639
    %8704 = vst [vmem:[#allocation4 + $0x1e8] sm:$0xff] %v8640
    %8705 = vst [vmem:[#allocation4 + $0x1f0] sm:$0xff] %v8641
    %8706 = vst [vmem:[#allocation4 + $0x1f8] sm:$0xff] %v8642
    // Predicated region
    $region30: #{resnet_block_enc_forward.1} parent=1 // pred_check
      _
    $region31: #{resnet_block_enc_forward.1} parent=1 // pred_check_branch
      %8708 = sbr.rel (0) target = $region33
    $region32: #{resnet_block_enc_forward.1} parent=1 // pred_region
      %8710 = vsyncadd [#allocation5], 0
      %s8711 = sshll.u32 [#allocation4], 4
      %s8712 = int_to_ptr.vmem [resolvable:$true] %s8711
      %s8713 = sshll.u32 %s7, 4
      %s8714 = int_to_ptr.hbm [resolvable:$true] %s8713
      %8719 = dma.vmem_to_hbm [thread:$0]  %s8712, 8192, %s8714, [#allocation5], 128, 128, 8
    $region33: #{resnet_block_enc_forward.1} parent=1 // pred_fallthru
      _
    // Predicated region
    $region34: #{resnet_block_enc_forward.1} parent=1 // pred_check
      _
    $region35: #{resnet_block_enc_forward.1} parent=1 // pred_check_branch
      %8721 = sbr.rel (0) target = $region37
    $region36: #{resnet_block_enc_forward.1} parent=1 // pred_region
      %8723 = dma.done [#allocation5], 8192
    $region37: #{resnet_block_enc_forward.1} parent=1 // pred_fallthru
      _
    %8724 = vsyncpa [#allocation5], 1

</llo_original>
